<compile_context>
chip_gen: v5e
topology: v5e:2x2
jax: 0.10.0
libtpu: 0.0.40
codegen_flags: <defaults>
</compile_context>

<pallas_src>
import functools

import numpy as np
import jax
import jax.numpy as jnp
from jax.experimental import pallas as pl
from jax.experimental.pallas import tpu as pltpu

F32 = jnp.float32
MM = jnp.bfloat16           # MXU operand dtype (accumulation stays f32)
NEG_INF = -1e9              # cross-window / cross-image logit mask
EPS = 1e-5

# ---------------- tiny Swin configuration ----------------
IMG = 16          # input spatial size
IN_CH = 3         # RGB
PATCH = 4         # patch-embed stride
EMBED = 32        # embed dim of stage 0
WINDOW = 2        # window size
DEPTHS = (2, 2)   # blocks per stage
HEADS = (2, 4)    # attention heads per stage
MLP_RATIO = 4
FINAL_DIM = EMBED * 2 ** (len(DEPTHS) - 1)


# ---------------- in-kernel helpers ----------------

def _ln(x, g, b, eps=EPS):
    mu = jnp.mean(x, axis=-1, keepdims=True)
    var = jnp.mean(jnp.square(x - mu), axis=-1, keepdims=True)
    return (x - mu) * jax.lax.rsqrt(var + eps) * g + b


def _mm(a16, w16):
    """MXU matmul: bf16 operands, f32 accumulation."""
    return jnp.dot(a16, w16, preferred_element_type=F32)


# ---------------- single fused kernel ----------------

def _fused_forward_kernel(*refs, batch):
    x_ref, o_ref = refs[0], refs[-1]
    it = iter(refs[1:-1])

    # ---- patch embed (per-channel normalize folded into weights) + LN ----
    pe_w = next(it)
    pe_c = next(it)[...]                          # rows: [bias, ln_g, ln_b]
    x = _mm(x_ref[...].astype(MM), pe_w[...]) + pe_c[0:1]
    x = _ln(x, pe_c[1:2], pe_c[2:3])              # (B*L0, EMBED) f32

    # ---- Swin stages ----
    for s, (depth, nh) in enumerate(zip(DEPTHS, HEADS)):
        for _bi in range(depth):
            wqkv = next(it)                       # (3, nh, dim, hd) bf16
            qb = next(it)[...]                    # (nh, hd) f32 (scale folded)
            bias = next(it)                       # (nh, R, R) f32, perm-folded
            wproj = next(it)                      # (nh, hd, dim) bf16
            wfc1 = next(it)                       # (dim, 4*dim) bf16
            wfc2 = next(it)                       # (4*dim, dim) bf16
            vc = next(it)[...]                    # (6, dim): ln1g,ln1b,ln2g,ln2b,proj_b,fc2_b
            fc1b = next(it)[...]                  # (1, 4*dim) f32

            # LN1; shift + window-partition permutation already folded into
            # `bias`, so attention runs directly on row-major tokens.
            x16 = _ln(x, vc[0:1], vc[1:2]).astype(MM)

            attn = None
            for h in range(nh):
                qh = (_mm(x16, wqkv[0, h]) + qb[h:h + 1]).astype(MM)
                kh = _mm(x16, wqkv[1, h]).astype(MM)
                vh = _mm(x16, wqkv[2, h]).astype(MM)
                # q @ k^T without an explicit transpose (contract last dims)
                logits = jax.lax.dot_general(
                    qh, kh, (((1,), (1,)), ((), ())),
                    preferred_element_type=F32) + bias[h]
                logits = logits - jnp.max(logits, axis=-1, keepdims=True)
                p = jnp.exp(logits)
                p = p / jnp.sum(p, axis=-1, keepdims=True)
                oh = _mm(p.astype(MM), vh)                      # (R, hd)
                ph = _mm(oh.astype(MM), wproj[h])               # (R, dim)
                attn = ph if attn is None else attn + ph
            # residual + proj bias (v-bias folded in at init)
            x = x + attn + vc[4:5]

            # MLP + residual
            h1 = _mm(_ln(x, vc[2:3], vc[3:4]).astype(MM), wfc1[...]) + fc1b
            # TODO(synk): timm's nn.GELU is exact erf-GELU; tanh approximation
            # used here for Mosaic-safe lowering (max deviation ~1e-3).
            h1 = jax.nn.gelu(h1, approximate=True)
            x = x + _mm(h1.astype(MM), wfc2[...]) + vc[5:6]

        if s < len(DEPTHS) - 1:
            # PatchMerging: batched 2x2 neighborhood gather (0/1 selection
            # matmuls), channel concat, LN, bias-free reduction linear.
            sel = next(it)                        # (4, R/4, R) f32 0/1
            mc = next(it)[...]                    # (2, 4*dim): ln_g, ln_b
            red_w = next(it)                      # (4*dim, 2*dim) bf16
            parts = [jnp.dot(sel[j], x, preferred_element_type=F32)
                     for j in range(4)]
            xm = jnp.concatenate(parts, axis=-1)
            x = _mm(_ln(xm, mc[0:1], mc[1:2]).astype(MM), red_w[...])

    # ---- final norm + forward_head(pre_logits=True): per-image mean pool ----
    head_c = next(it)[...]                        # (2, dim): ln_g, ln_b
    xn = _ln(x, head_c[0:1], head_c[1:2])
    tok = xn.shape[0] // batch
    pooled = [jnp.mean(xn[b * tok:(b + 1) * tok], axis=0, keepdims=True)
              for b in range(batch)]
    o_ref[...] = jnp.concatenate(pooled, axis=0)


# ---------------- wrapper ----------------

def swin_forward(x_nchw, flat_params):
    B = x_nchw.shape[0]
    Hc = Wc = IMG // PATCH
    # im2col for the patch-embed conv (pure layout; done once in XLA so the
    # kernel input is already a lane-dense (B*L, 48) slab).
    x = jnp.transpose(x_nchw, (0, 2, 3, 1))
    x = x.reshape(B, Hc, PATCH, Wc, PATCH, IN_CH).transpose(0, 1, 3, 2, 4, 5)
    x = x.reshape(B * Hc * Wc, PATCH * PATCH * IN_CH)

    vmem = pl.BlockSpec(memory_space=pltpu.MemorySpace.VMEM)
    return pl.pallas_call(
        functools.partial(_fused_forward_kernel, batch=B),
        out_shape=jax.ShapeDtypeStruct((B, FINAL_DIM), F32),
        in_specs=[vmem] * (1 + len(flat_params)),
        out_specs=vmem,
    )(x, *flat_params)


# ---------------- static (init-time) constructions ----------------

def relative_position_index(ws):
    coords = np.stack(np.meshgrid(np.arange(ws), np.arange(ws), indexing="ij"))
    coords_flat = coords.reshape(2, -1)
    rel = coords_flat[:, :, None] - coords_flat[:, None, :]
    rel = rel.transpose(1, 2, 0).astype(np.int64)
    rel[:, :, 0] += ws - 1
    rel[:, :, 1] += ws - 1
    rel[:, :, 0] *= 2 * ws - 1
    return rel.sum(-1)  # (N, N)


def shifted_attn_mask(H, W, ws, shift):
    img_mask = np.zeros((H, W), dtype=np.float32)
    cnt = 0
    for hs in (slice(0, -ws), slice(-ws, -shift), slice(-shift, None)):
        for wsl in (slice(0, -ws), slice(-ws, -shift), slice(-shift, None)):
            img_mask[hs, wsl] = cnt
            cnt += 1
    mw = img_mask.reshape(H // ws, ws, W // ws, ws).transpose(0, 2, 1, 3)
    mw = mw.reshape(-1, ws * ws)
    am = mw[:, None, :] - mw[:, :, None]
    return np.where(am != 0, -100.0, 0.0).astype(np.float32)  # (nW, N, N)


def window_permutation(H, W, ws, shift):
    """P with P[r, h*W+w]=1 : (P @ x_rowmajor) == roll(-shift) + window split."""
    L = H * W
    P = np.zeros((L, L), np.float32)
    r = 0
    for wh in range(H // ws):
        for ww in range(W // ws):
            for ph in range(ws):
                for pw in range(ws):
                    h = (wh * ws + ph + shift) % H
                    w = (ww * ws + pw + shift) % W
                    P[r, h * W + w] = 1.0
                    r += 1
    return P


def build_block_bias(rel_table, ws, nh, H, W, shift, attn_mask, batch):
    """(nh, batch*L, batch*L) additive bias: rel-pos bias (+ shift mask) on
    the window-diagonal blocks, NEG_INF elsewhere, with the shift+window
    permutation folded in (exact integer reindexing, so tokens stay in
    original row-major order) and block-diagonal over the batch."""
    N = ws * ws
    nW = (H // ws) * (W // ws)
    L = H * W
    ridx = relative_position_index(ws).reshape(-1)
    rb = rel_table[ridx].reshape(N, N, nh).transpose(2, 0, 1)   # (nh, N, N)
    bw = np.full((nh, L, L), NEG_INF, np.float32)
    for w in range(nW):
        blk = rb.copy()
        if attn_mask is not None:
            blk = blk + attn_mask[w][None]
        bw[:, w * N:(w + 1) * N, w * N:(w + 1) * N] = blk
    # fold permutation: bias' = P^T bias P  (softmax is permutation-equivariant)
    perm = window_permutation(H, W, ws, shift)
    src = perm.argmax(axis=1)                 # permuted row r <- token src[r]
    dst = np.empty_like(src)
    dst[src] = np.arange(L)                   # token i -> permuted row dst[i]
    bo = bw[:, dst[:, None], dst[None, :]]
    bb = np.full((nh, batch * L, batch * L), NEG_INF, np.float32)
    for b in range(batch):
        bb[:, b * L:(b + 1) * L, b * L:(b + 1) * L] = bo
    return jnp.asarray(bb)


def merge_selection(H, W):
    """4 selection matrices gathering the (0,0),(1,0),(0,1),(1,1) sub-grids."""
    H2, W2 = H // 2, W // 2
    L2, L = H2 * W2, H * W
    sel = np.zeros((4, L2, L), np.float32)
    for j, (dh, dw) in enumerate(((0, 0), (1, 0), (0, 1), (1, 1))):
        for t in range(L2):
            h2, w2 = divmod(t, W2)
            sel[j, t, (2 * h2 + dh) * W + (2 * w2 + dw)] = 1.0
    return sel


def merge_selection_batched(H, W, batch):
    sel = merge_selection(H, W)
    _, L2, L = sel.shape
    out = np.zeros((4, batch * L2, batch * L), np.float32)
    for b in range(batch):
        out[:, b * L2:(b + 1) * L2, b * L:(b + 1) * L] = sel
    return jnp.asarray(out)


# ---------------- deterministic synthetic parameters ----------------

def init_params(key, batch):
    keys = iter(jax.random.split(key, 64))

    def nrm(shape, scale=0.02):
        return (scale * jax.random.normal(next(keys), shape)).astype(F32)

    flat = []

    # patch embed with the per-channel (x-mean)*inv_std affine folded in
    mean = jnp.array([0.485, 0.456, 0.406], F32)
    inv_std = 1.0 / jnp.array([0.229, 0.224, 0.225], F32)
    pe_w = nrm((PATCH * PATCH * IN_CH, EMBED))
    pe_b = jnp.zeros((EMBED,), F32)
    inv_rows = jnp.tile(inv_std, PATCH * PATCH)[:, None]   # channel fastest
    mean_rows = jnp.tile(mean, PATCH * PATCH)[:, None]
    pe_w = pe_w * inv_rows
    pe_b = pe_b - jnp.sum(mean_rows * pe_w, axis=0)
    pe_c = jnp.stack([pe_b, jnp.ones((EMBED,), F32), jnp.zeros((EMBED,), F32)])
    flat += [pe_w.astype(MM), pe_c]

    Hc = Wc = IMG // PATCH
    dim = EMBED
    for s in range(len(DEPTHS)):
        nh = HEADS[s]
        hd = dim // nh
        ws = min(WINDOW, Hc, Wc)
        scale = hd ** -0.5
        can_shift = ws < min(Hc, Wc)
        amask = shifted_attn_mask(Hc, Wc, ws, ws // 2) if can_shift else None
        for bi in range(DEPTHS[s]):
            shift = (ws // 2) if (bi % 2 == 1 and can_shift) else 0
            qkv_w = nrm((dim, 3 * dim))
            qkv_b = jnp.zeros((3 * dim,), F32)
            proj_w = nrm((dim, dim))
            proj_b = jnp.zeros((dim,), F32)
            rel_table = nrm(((2 * ws - 1) ** 2, nh))

            # fold q*scale into q weights/bias; drop k-bias (softmax shift
            # invariant); fold v-bias into the proj bias (softmax rows sum to 1)
            qw = qkv_w[:, :dim] * scale
            kw = qkv_w[:, dim:2 * dim]
            vw = qkv_w[:, 2 * dim:]
            qb = qkv_b[:dim] * scale
            vb = qkv_b[2 * dim:]
            proj_b_eff = proj_b + vb @ proj_w

            def to_heads(w):
                return jnp.transpose(w.reshape(dim, nh, hd), (1, 0, 2))
            wqkv = jnp.stack([to_heads(qw), to_heads(kw), to_heads(vw)])
            wproj = proj_w.reshape(nh, hd, dim)

            fc1_w = nrm((dim, MLP_RATIO * dim))
            fc2_w = nrm((MLP_RATIO * dim, dim))
            fc1_b = jnp.zeros((MLP_RATIO * dim,), F32)
            fc2_b = jnp.zeros((dim,), F32)

            ones = jnp.ones((dim,), F32)
            zeros = jnp.zeros((dim,), F32)
            vc = jnp.stack([ones, zeros, ones, zeros, proj_b_eff, fc2_b])

            bias = build_block_bias(np.asarray(rel_table), ws, nh, Hc, Wc,
                                    shift, amask if shift > 0 else None, batch)
            flat += [wqkv.astype(MM), qb.reshape(nh, hd), bias,
                     wproj.astype(MM), fc1_w.astype(MM), fc2_w.astype(MM),
                     vc, fc1_b.reshape(1, -1)]
        if s < len(DEPTHS) - 1:
            red_w = nrm((4 * dim, 2 * dim))     # timm PatchMerging: bias-free
            mc = jnp.stack([jnp.ones((4 * dim,), F32),
                            jnp.zeros((4 * dim,), F32)])
            flat += [merge_selection_batched(Hc, Wc, batch), mc,
                     red_w.astype(MM)]
            Hc //= 2
            Wc //= 2
            dim *= 2

    flat.append(jnp.stack([jnp.ones((dim,), F32), jnp.zeros((dim,), F32)]))
    return flat


if __name__ == "__main__":
    key = jax.random.PRNGKey(0)
    pkey, xkey = jax.random.split(key)
    B = 2
    flat_params = init_params(pkey, B)

    # input image batch, NCHW like PyTorch, values in [0, 1)
    x = jax.random.uniform(xkey, (B, IN_CH, IMG, IMG), dtype=F32)

    fwd = jax.jit(lambda a: swin_forward(a, flat_params))
    out = jax.block_until_ready(fwd(x))

    assert out.shape == (B, FINAL_DIM), out.shape
    assert out.dtype == F32
    assert bool(jnp.all(jnp.isfinite(out)))
    print("KERNEL_OK")
</pallas_src>

<mosaic_0001>
module attributes {stable_mosaic.version = 11 : i64} {
  func.func @_fused_forward_kernel(%arg0: memref<32x48xf32, #tpu.memory_space<vmem>>, %arg1: memref<48x32xbf16, #tpu.memory_space<vmem>>, %arg2: memref<3x32xf32, #tpu.memory_space<vmem>>, %arg3: memref<3x2x32x16xbf16, #tpu.memory_space<vmem>>, %arg4: memref<2x16xf32, #tpu.memory_space<vmem>>, %arg5: memref<2x32x32xf32, #tpu.memory_space<vmem>>, %arg6: memref<2x16x32xbf16, #tpu.memory_space<vmem>>, %arg7: memref<32x128xbf16, #tpu.memory_space<vmem>>, %arg8: memref<128x32xbf16, #tpu.memory_space<vmem>>, %arg9: memref<6x32xf32, #tpu.memory_space<vmem>>, %arg10: memref<1x128xf32, #tpu.memory_space<vmem>>, %arg11: memref<3x2x32x16xbf16, #tpu.memory_space<vmem>>, %arg12: memref<2x16xf32, #tpu.memory_space<vmem>>, %arg13: memref<2x32x32xf32, #tpu.memory_space<vmem>>, %arg14: memref<2x16x32xbf16, #tpu.memory_space<vmem>>, %arg15: memref<32x128xbf16, #tpu.memory_space<vmem>>, %arg16: memref<128x32xbf16, #tpu.memory_space<vmem>>, %arg17: memref<6x32xf32, #tpu.memory_space<vmem>>, %arg18: memref<1x128xf32, #tpu.memory_space<vmem>>, %arg19: memref<4x8x32xf32, #tpu.memory_space<vmem>>, %arg20: memref<2x128xf32, #tpu.memory_space<vmem>>, %arg21: memref<128x64xbf16, #tpu.memory_space<vmem>>, %arg22: memref<3x4x64x16xbf16, #tpu.memory_space<vmem>>, %arg23: memref<4x16xf32, #tpu.memory_space<vmem>>, %arg24: memref<4x8x8xf32, #tpu.memory_space<vmem>>, %arg25: memref<4x16x64xbf16, #tpu.memory_space<vmem>>, %arg26: memref<64x256xbf16, #tpu.memory_space<vmem>>, %arg27: memref<256x64xbf16, #tpu.memory_space<vmem>>, %arg28: memref<6x64xf32, #tpu.memory_space<vmem>>, %arg29: memref<1x256xf32, #tpu.memory_space<vmem>>, %arg30: memref<3x4x64x16xbf16, #tpu.memory_space<vmem>>, %arg31: memref<4x16xf32, #tpu.memory_space<vmem>>, %arg32: memref<4x8x8xf32, #tpu.memory_space<vmem>>, %arg33: memref<4x16x64xbf16, #tpu.memory_space<vmem>>, %arg34: memref<64x256xbf16, #tpu.memory_space<vmem>>, %arg35: memref<256x64xbf16, #tpu.memory_space<vmem>>, %arg36: memref<6x64xf32, #tpu.memory_space<vmem>>, %arg37: memref<1x256xf32, #tpu.memory_space<vmem>>, %arg38: memref<2x64xf32, #tpu.memory_space<vmem>>, %arg39: memref<2x64xf32, #tpu.memory_space<vmem>>) attributes {dimension_semantics = [], scalar_prefetch = 0 : i64, scratch_operands = 0 : i64, tpu.core_type = #tpu.core_type<tc>} {
    %c0 = arith.constant 0 : index
    %c0_0 = arith.constant 0 : index
    %0 = vector.load %arg2[%c0, %c0_0] : memref<3x32xf32, #tpu.memory_space<vmem>>, vector<3x32xf32>
    %c0_1 = arith.constant 0 : index
    %c0_2 = arith.constant 0 : index
    %1 = vector.load %arg0[%c0_1, %c0_2] : memref<32x48xf32, #tpu.memory_space<vmem>>, vector<32x48xf32>
    %2 = arith.truncf %1 : vector<32x48xf32> to vector<32x48xbf16>
    %c0_3 = arith.constant 0 : index
    %c0_4 = arith.constant 0 : index
    %3 = vector.load %arg1[%c0_3, %c0_4] : memref<48x32xbf16, #tpu.memory_space<vmem>>, vector<48x32xbf16>
    %cst = arith.constant dense<0.000000e+00> : vector<32x32xf32>
    %4 = tpu.matmul %2, %3, %cst {dimension_numbers = #tpu.dot_dimension_numbers<[1], [0], [0], [1], [0, 0, 1, 1], [], []>} : vector<32x48xbf16>, vector<48x32xbf16>, vector<32x32xf32> -> vector<32x32xf32>
    %5 = vector.extract_strided_slice %0 {offsets = [0, 0], sizes = [1, 32], strides = [1, 1]} : vector<3x32xf32> to vector<1x32xf32>
    %6 = vector.broadcast %5 : vector<1x32xf32> to vector<32x32xf32>
    %7 = arith.addf %4, %6 : vector<32x32xf32>
    %8 = vector.extract_strided_slice %0 {offsets = [1, 0], sizes = [1, 32], strides = [1, 1]} : vector<3x32xf32> to vector<1x32xf32>
    %9 = vector.extract_strided_slice %0 {offsets = [2, 0], sizes = [1, 32], strides = [1, 1]} : vector<3x32xf32> to vector<1x32xf32>
    %cst_5 = arith.constant dense<0.000000e+00> : vector<32xf32>
    %10 = vector.multi_reduction <add>, %7, %cst_5 [1] : vector<32x32xf32> to vector<32xf32>
    %11 = vector.shape_cast %10 : vector<32xf32> to vector<32x1xf32>
    %cst_6 = arith.constant 3.200000e+01 : f32
    %12 = vector.broadcast %cst_6 : f32 to vector<32x1xf32>
    %13 = arith.divf %11, %12 : vector<32x1xf32>
    %14 = vector.broadcast %13 : vector<32x1xf32> to vector<32x32xf32>
    %15 = arith.subf %7, %14 : vector<32x32xf32>
    %16 = arith.mulf %15, %15 : vector<32x32xf32>
    %cst_7 = arith.constant dense<0.000000e+00> : vector<32xf32>
    %17 = vector.multi_reduction <add>, %16, %cst_7 [1] : vector<32x32xf32> to vector<32xf32>
    %18 = vector.shape_cast %17 : vector<32xf32> to vector<32x1xf32>
    %cst_8 = arith.constant 3.200000e+01 : f32
    %19 = vector.broadcast %cst_8 : f32 to vector<32x1xf32>
    %20 = arith.divf %18, %19 : vector<32x1xf32>
    %21 = vector.broadcast %13 : vector<32x1xf32> to vector<32x32xf32>
    %22 = arith.subf %7, %21 : vector<32x32xf32>
    %cst_9 = arith.constant 9.99999974E-6 : f32
    %23 = vector.broadcast %cst_9 : f32 to vector<32x1xf32>
    %24 = arith.addf %20, %23 : vector<32x1xf32>
    %25 = math.rsqrt %24 : vector<32x1xf32>
    %26 = vector.broadcast %25 : vector<32x1xf32> to vector<32x32xf32>
    %27 = arith.mulf %22, %26 : vector<32x32xf32>
    %28 = vector.broadcast %8 : vector<1x32xf32> to vector<32x32xf32>
    %29 = arith.mulf %27, %28 : vector<32x32xf32>
    %30 = vector.broadcast %9 : vector<1x32xf32> to vector<32x32xf32>
    %31 = arith.addf %29, %30 : vector<32x32xf32>
    %c0_10 = arith.constant 0 : index
    %c0_11 = arith.constant 0 : index
    %32 = vector.load %arg4[%c0_10, %c0_11] : memref<2x16xf32, #tpu.memory_space<vmem>>, vector<2x16xf32>
    %c0_12 = arith.constant 0 : index
    %c0_13 = arith.constant 0 : index
    %33 = vector.load %arg9[%c0_12, %c0_13] : memref<6x32xf32, #tpu.memory_space<vmem>>, vector<6x32xf32>
    %c0_14 = arith.constant 0 : index
    %c0_15 = arith.constant 0 : index
    %34 = vector.load %arg10[%c0_14, %c0_15] : memref<1x128xf32, #tpu.memory_space<vmem>>, vector<1x128xf32>
    %35 = vector.extract_strided_slice %33 {offsets = [0, 0], sizes = [1, 32], strides = [1, 1]} : vector<6x32xf32> to vector<1x32xf32>
    %36 = vector.extract_strided_slice %33 {offsets = [1, 0], sizes = [1, 32], strides = [1, 1]} : vector<6x32xf32> to vector<1x32xf32>
    %cst_16 = arith.constant dense<0.000000e+00> : vector<32xf32>
    %37 = vector.multi_reduction <add>, %31, %cst_16 [1] : vector<32x32xf32> to vector<32xf32>
    %38 = vector.shape_cast %37 : vector<32xf32> to vector<32x1xf32>
    %cst_17 = arith.constant 3.200000e+01 : f32
    %39 = vector.broadcast %cst_17 : f32 to vector<32x1xf32>
    %40 = arith.divf %38, %39 : vector<32x1xf32>
    %41 = vector.broadcast %40 : vector<32x1xf32> to vector<32x32xf32>
    %42 = arith.subf %31, %41 : vector<32x32xf32>
    %43 = arith.mulf %42, %42 : vector<32x32xf32>
    %cst_18 = arith.constant dense<0.000000e+00> : vector<32xf32>
    %44 = vector.multi_reduction <add>, %43, %cst_18 [1] : vector<32x32xf32> to vector<32xf32>
    %45 = vector.shape_cast %44 : vector<32xf32> to vector<32x1xf32>
    %cst_19 = arith.constant 3.200000e+01 : f32
    %46 = vector.broadcast %cst_19 : f32 to vector<32x1xf32>
    %47 = arith.divf %45, %46 : vector<32x1xf32>
    %48 = vector.broadcast %40 : vector<32x1xf32> to vector<32x32xf32>
    %49 = arith.subf %31, %48 : vector<32x32xf32>
    %cst_20 = arith.constant 9.99999974E-6 : f32
    %50 = vector.broadcast %cst_20 : f32 to vector<32x1xf32>
    %51 = arith.addf %47, %50 : vector<32x1xf32>
    %52 = math.rsqrt %51 : vector<32x1xf32>
    %53 = vector.broadcast %52 : vector<32x1xf32> to vector<32x32xf32>
    %54 = arith.mulf %49, %53 : vector<32x32xf32>
    %55 = vector.broadcast %35 : vector<1x32xf32> to vector<32x32xf32>
    %56 = arith.mulf %54, %55 : vector<32x32xf32>
    %57 = vector.broadcast %36 : vector<1x32xf32> to vector<32x32xf32>
    %58 = arith.addf %56, %57 : vector<32x32xf32>
    %59 = arith.truncf %58 : vector<32x32xf32> to vector<32x32xbf16>
    %c0_21 = arith.constant 0 : index
    %c0_22 = arith.constant 0 : index
    %c0_23 = arith.constant 0 : index
    %c0_24 = arith.constant 0 : index
    %60 = vector.load %arg3[%c0_21, %c0_22, %c0_23, %c0_24] : memref<3x2x32x16xbf16, #tpu.memory_space<vmem>>, vector<1x1x32x16xbf16>
    %61 = vector.shape_cast %60 : vector<1x1x32x16xbf16> to vector<32x16xbf16>
    %cst_25 = arith.constant dense<0.000000e+00> : vector<32x16xf32>
    %62 = tpu.matmul %59, %61, %cst_25 {dimension_numbers = #tpu.dot_dimension_numbers<[1], [0], [0], [1], [0, 0, 1, 1], [], []>} : vector<32x32xbf16>, vector<32x16xbf16>, vector<32x16xf32> -> vector<32x16xf32>
    %63 = vector.extract_strided_slice %32 {offsets = [0, 0], sizes = [1, 16], strides = [1, 1]} : vector<2x16xf32> to vector<1x16xf32>
    %64 = vector.broadcast %63 : vector<1x16xf32> to vector<32x16xf32>
    %65 = arith.addf %62, %64 : vector<32x16xf32>
    %66 = arith.truncf %65 : vector<32x16xf32> to vector<32x16xbf16>
    %c1 = arith.constant 1 : index
    %c0_26 = arith.constant 0 : index
    %c0_27 = arith.constant 0 : index
    %c0_28 = arith.constant 0 : index
    %67 = vector.load %arg3[%c1, %c0_26, %c0_27, %c0_28] : memref<3x2x32x16xbf16, #tpu.memory_space<vmem>>, vector<1x1x32x16xbf16>
    %68 = vector.shape_cast %67 : vector<1x1x32x16xbf16> to vector<32x16xbf16>
    %cst_29 = arith.constant dense<0.000000e+00> : vector<32x16xf32>
    %69 = tpu.matmul %59, %68, %cst_29 {dimension_numbers = #tpu.dot_dimension_numbers<[1], [0], [0], [1], [0, 0, 1, 1], [], []>} : vector<32x32xbf16>, vector<32x16xbf16>, vector<32x16xf32> -> vector<32x16xf32>
    %70 = arith.truncf %69 : vector<32x16xf32> to vector<32x16xbf16>
    %c2 = arith.constant 2 : index
    %c0_30 = arith.constant 0 : index
    %c0_31 = arith.constant 0 : index
    %c0_32 = arith.constant 0 : index
    %71 = vector.load %arg3[%c2, %c0_30, %c0_31, %c0_32] : memref<3x2x32x16xbf16, #tpu.memory_space<vmem>>, vector<1x1x32x16xbf16>
    %72 = vector.shape_cast %71 : vector<1x1x32x16xbf16> to vector<32x16xbf16>
    %cst_33 = arith.constant dense<0.000000e+00> : vector<32x16xf32>
    %73 = tpu.matmul %59, %72, %cst_33 {dimension_numbers = #tpu.dot_dimension_numbers<[1], [0], [0], [1], [0, 0, 1, 1], [], []>} : vector<32x32xbf16>, vector<32x16xbf16>, vector<32x16xf32> -> vector<32x16xf32>
    %74 = arith.truncf %73 : vector<32x16xf32> to vector<32x16xbf16>
    %cst_34 = arith.constant dense<0.000000e+00> : vector<32x32xf32>
    %75 = tpu.matmul %66, %70, %cst_34 {dimension_numbers = #tpu.dot_dimension_numbers<[1], [1], [0], [0], [0, 0, 1, 0], [], []>} : vector<32x16xbf16>, vector<32x16xbf16>, vector<32x32xf32> -> vector<32x32xf32>
    %c0_35 = arith.constant 0 : index
    %c0_36 = arith.constant 0 : index
    %c0_37 = arith.constant 0 : index
    %76 = vector.load %arg5[%c0_35, %c0_36, %c0_37] : memref<2x32x32xf32, #tpu.memory_space<vmem>>, vector<1x32x32xf32>
    %77 = vector.shape_cast %76 : vector<1x32x32xf32> to vector<32x32xf32>
    %78 = arith.addf %75, %77 : vector<32x32xf32>
    %cst_38 = arith.constant dense<0xFF800000> : vector<32xf32>
    %79 = vector.multi_reduction <maximumf>, %78, %cst_38 [1] : vector<32x32xf32> to vector<32xf32>
    %80 = vector.shape_cast %79 : vector<32xf32> to vector<32x1xf32>
    %81 = vector.broadcast %80 : vector<32x1xf32> to vector<32x32xf32>
    %82 = arith.subf %78, %81 : vector<32x32xf32>
    %83 = math.exp %82 : vector<32x32xf32>
    %cst_39 = arith.constant dense<0.000000e+00> : vector<32xf32>
    %84 = vector.multi_reduction <add>, %83, %cst_39 [1] : vector<32x32xf32> to vector<32xf32>
    %85 = vector.shape_cast %84 : vector<32xf32> to vector<32x1xf32>
    %86 = vector.broadcast %85 : vector<32x1xf32> to vector<32x32xf32>
    %87 = arith.divf %83, %86 : vector<32x32xf32>
    %88 = arith.truncf %87 : vector<32x32xf32> to vector<32x32xbf16>
    %cst_40 = arith.constant dense<0.000000e+00> : vector<32x16xf32>
    %89 = tpu.matmul %88, %74, %cst_40 {dimension_numbers = #tpu.dot_dimension_numbers<[1], [0], [0], [1], [0, 0, 1, 1], [], []>} : vector<32x32xbf16>, vector<32x16xbf16>, vector<32x16xf32> -> vector<32x16xf32>
    %90 = arith.truncf %89 : vector<32x16xf32> to vector<32x16xbf16>
    %c0_41 = arith.constant 0 : index
    %c0_42 = arith.constant 0 : index
    %c0_43 = arith.constant 0 : index
    %91 = vector.load %arg6[%c0_41, %c0_42, %c0_43] : memref<2x16x32xbf16, #tpu.memory_space<vmem>>, vector<1x16x32xbf16>
    %92 = vector.shape_cast %91 : vector<1x16x32xbf16> to vector<16x32xbf16>
    %cst_44 = arith.constant dense<0.000000e+00> : vector<32x32xf32>
    %93 = tpu.matmul %90, %92, %cst_44 {dimension_numbers = #tpu.dot_dimension_numbers<[1], [0], [0], [1], [0, 0, 1, 1], [], []>} : vector<32x16xbf16>, vector<16x32xbf16>, vector<32x32xf32> -> vector<32x32xf32>
    %c0_45 = arith.constant 0 : index
    %c1_46 = arith.constant 1 : index
    %c0_47 = arith.constant 0 : index
    %c0_48 = arith.constant 0 : index
    %94 = vector.load %arg3[%c0_45, %c1_46, %c0_47, %c0_48] : memref<3x2x32x16xbf16, #tpu.memory_space<vmem>>, vector<1x1x32x16xbf16>
    %95 = vector.shape_cast %94 : vector<1x1x32x16xbf16> to vector<32x16xbf16>
    %cst_49 = arith.constant dense<0.000000e+00> : vector<32x16xf32>
    %96 = tpu.matmul %59, %95, %cst_49 {dimension_numbers = #tpu.dot_dimension_numbers<[1], [0], [0], [1], [0, 0, 1, 1], [], []>} : vector<32x32xbf16>, vector<32x16xbf16>, vector<32x16xf32> -> vector<32x16xf32>
    %97 = vector.extract_strided_slice %32 {offsets = [1, 0], sizes = [1, 16], strides = [1, 1]} : vector<2x16xf32> to vector<1x16xf32>
    %98 = vector.broadcast %97 : vector<1x16xf32> to vector<32x16xf32>
    %99 = arith.addf %96, %98 : vector<32x16xf32>
    %100 = arith.truncf %99 : vector<32x16xf32> to vector<32x16xbf16>
    %c1_50 = arith.constant 1 : index
    %c1_51 = arith.constant 1 : index
    %c0_52 = arith.constant 0 : index
    %c0_53 = arith.constant 0 : index
    %101 = vector.load %arg3[%c1_50, %c1_51, %c0_52, %c0_53] : memref<3x2x32x16xbf16, #tpu.memory_space<vmem>>, vector<1x1x32x16xbf16>
    %102 = vector.shape_cast %101 : vector<1x1x32x16xbf16> to vector<32x16xbf16>
    %cst_54 = arith.constant dense<0.000000e+00> : vector<32x16xf32>
    %103 = tpu.matmul %59, %102, %cst_54 {dimension_numbers = #tpu.dot_dimension_numbers<[1], [0], [0], [1], [0, 0, 1, 1], [], []>} : vector<32x32xbf16>, vector<32x16xbf16>, vector<32x16xf32> -> vector<32x16xf32>
    %104 = arith.truncf %103 : vector<32x16xf32> to vector<32x16xbf16>
    %c2_55 = arith.constant 2 : index
    %c1_56 = arith.constant 1 : index
    %c0_57 = arith.constant 0 : index
    %c0_58 = arith.constant 0 : index
    %105 = vector.load %arg3[%c2_55, %c1_56, %c0_57, %c0_58] : memref<3x2x32x16xbf16, #tpu.memory_space<vmem>>, vector<1x1x32x16xbf16>
    %106 = vector.shape_cast %105 : vector<1x1x32x16xbf16> to vector<32x16xbf16>
    %cst_59 = arith.constant dense<0.000000e+00> : vector<32x16xf32>
    %107 = tpu.matmul %59, %106, %cst_59 {dimension_numbers = #tpu.dot_dimension_numbers<[1], [0], [0], [1], [0, 0, 1, 1], [], []>} : vector<32x32xbf16>, vector<32x16xbf16>, vector<32x16xf32> -> vector<32x16xf32>
    %108 = arith.truncf %107 : vector<32x16xf32> to vector<32x16xbf16>
    %cst_60 = arith.constant dense<0.000000e+00> : vector<32x32xf32>
    %109 = tpu.matmul %100, %104, %cst_60 {dimension_numbers = #tpu.dot_dimension_numbers<[1], [1], [0], [0], [0, 0, 1, 0], [], []>} : vector<32x16xbf16>, vector<32x16xbf16>, vector<32x32xf32> -> vector<32x32xf32>
    %c1_61 = arith.constant 1 : index
    %c0_62 = arith.constant 0 : index
    %c0_63 = arith.constant 0 : index
    %110 = vector.load %arg5[%c1_61, %c0_62, %c0_63] : memref<2x32x32xf32, #tpu.memory_space<vmem>>, vector<1x32x32xf32>
    %111 = vector.shape_cast %110 : vector<1x32x32xf32> to vector<32x32xf32>
    %112 = arith.addf %109, %111 : vector<32x32xf32>
    %cst_64 = arith.constant dense<0xFF800000> : vector<32xf32>
    %113 = vector.multi_reduction <maximumf>, %112, %cst_64 [1] : vector<32x32xf32> to vector<32xf32>
    %114 = vector.shape_cast %113 : vector<32xf32> to vector<32x1xf32>
    %115 = vector.broadcast %114 : vector<32x1xf32> to vector<32x32xf32>
    %116 = arith.subf %112, %115 : vector<32x32xf32>
    %117 = math.exp %116 : vector<32x32xf32>
    %cst_65 = arith.constant dense<0.000000e+00> : vector<32xf32>
    %118 = vector.multi_reduction <add>, %117, %cst_65 [1] : vector<32x32xf32> to vector<32xf32>
    %119 = vector.shape_cast %118 : vector<32xf32> to vector<32x1xf32>
    %120 = vector.broadcast %119 : vector<32x1xf32> to vector<32x32xf32>
    %121 = arith.divf %117, %120 : vector<32x32xf32>
    %122 = arith.truncf %121 : vector<32x32xf32> to vector<32x32xbf16>
    %cst_66 = arith.constant dense<0.000000e+00> : vector<32x16xf32>
    %123 = tpu.matmul %122, %108, %cst_66 {dimension_numbers = #tpu.dot_dimension_numbers<[1], [0], [0], [1], [0, 0, 1, 1], [], []>} : vector<32x32xbf16>, vector<32x16xbf16>, vector<32x16xf32> -> vector<32x16xf32>
    %124 = arith.truncf %123 : vector<32x16xf32> to vector<32x16xbf16>
    %c1_67 = arith.constant 1 : index
    %c0_68 = arith.constant 0 : index
    %c0_69 = arith.constant 0 : index
    %125 = vector.load %arg6[%c1_67, %c0_68, %c0_69] : memref<2x16x32xbf16, #tpu.memory_space<vmem>>, vector<1x16x32xbf16>
    %126 = vector.shape_cast %125 : vector<1x16x32xbf16> to vector<16x32xbf16>
    %cst_70 = arith.constant dense<0.000000e+00> : vector<32x32xf32>
    %127 = tpu.matmul %124, %126, %cst_70 {dimension_numbers = #tpu.dot_dimension_numbers<[1], [0], [0], [1], [0, 0, 1, 1], [], []>} : vector<32x16xbf16>, vector<16x32xbf16>, vector<32x32xf32> -> vector<32x32xf32>
    %128 = arith.addf %93, %127 : vector<32x32xf32>
    %129 = arith.addf %31, %128 : vector<32x32xf32>
    %130 = vector.extract_strided_slice %33 {offsets = [4, 0], sizes = [1, 32], strides = [1, 1]} : vector<6x32xf32> to vector<1x32xf32>
    %131 = vector.broadcast %130 : vector<1x32xf32> to vector<32x32xf32>
    %132 = arith.addf %129, %131 : vector<32x32xf32>
    %133 = vector.extract_strided_slice %33 {offsets = [2, 0], sizes = [1, 32], strides = [1, 1]} : vector<6x32xf32> to vector<1x32xf32>
    %134 = vector.extract_strided_slice %33 {offsets = [3, 0], sizes = [1, 32], strides = [1, 1]} : vector<6x32xf32> to vector<1x32xf32>
    %cst_71 = arith.constant dense<0.000000e+00> : vector<32xf32>
    %135 = vector.multi_reduction <add>, %132, %cst_71 [1] : vector<32x32xf32> to vector<32xf32>
    %136 = vector.shape_cast %135 : vector<32xf32> to vector<32x1xf32>
    %cst_72 = arith.constant 3.200000e+01 : f32
    %137 = vector.broadcast %cst_72 : f32 to vector<32x1xf32>
    %138 = arith.divf %136, %137 : vector<32x1xf32>
    %139 = vector.broadcast %138 : vector<32x1xf32> to vector<32x32xf32>
    %140 = arith.subf %132, %139 : vector<32x32xf32>
    %141 = arith.mulf %140, %140 : vector<32x32xf32>
    %cst_73 = arith.constant dense<0.000000e+00> : vector<32xf32>
    %142 = vector.multi_reduction <add>, %141, %cst_73 [1] : vector<32x32xf32> to vector<32xf32>
    %143 = vector.shape_cast %142 : vector<32xf32> to vector<32x1xf32>
    %cst_74 = arith.constant 3.200000e+01 : f32
    %144 = vector.broadcast %cst_74 : f32 to vector<32x1xf32>
    %145 = arith.divf %143, %144 : vector<32x1xf32>
    %146 = vector.broadcast %138 : vector<32x1xf32> to vector<32x32xf32>
    %147 = arith.subf %132, %146 : vector<32x32xf32>
    %cst_75 = arith.constant 9.99999974E-6 : f32
    %148 = vector.broadcast %cst_75 : f32 to vector<32x1xf32>
    %149 = arith.addf %145, %148 : vector<32x1xf32>
    %150 = math.rsqrt %149 : vector<32x1xf32>
    %151 = vector.broadcast %150 : vector<32x1xf32> to vector<32x32xf32>
    %152 = arith.mulf %147, %151 : vector<32x32xf32>
    %153 = vector.broadcast %133 : vector<1x32xf32> to vector<32x32xf32>
    %154 = arith.mulf %152, %153 : vector<32x32xf32>
    %155 = vector.broadcast %134 : vector<1x32xf32> to vector<32x32xf32>
    %156 = arith.addf %154, %155 : vector<32x32xf32>
    %157 = arith.truncf %156 : vector<32x32xf32> to vector<32x32xbf16>
    %c0_76 = arith.constant 0 : index
    %c0_77 = arith.constant 0 : index
    %158 = vector.load %arg7[%c0_76, %c0_77] : memref<32x128xbf16, #tpu.memory_space<vmem>>, vector<32x128xbf16>
    %cst_78 = arith.constant dense<0.000000e+00> : vector<32x128xf32>
    %159 = tpu.matmul %157, %158, %cst_78 {dimension_numbers = #tpu.dot_dimension_numbers<[1], [0], [0], [1], [0, 0, 1, 1], [], []>} : vector<32x32xbf16>, vector<32x128xbf16>, vector<32x128xf32> -> vector<32x128xf32>
    %160 = vector.broadcast %34 : vector<1x128xf32> to vector<32x128xf32>
    %161 = arith.addf %159, %160 : vector<32x128xf32>
    %162 = arith.mulf %161, %161 : vector<32x128xf32>
    %163 = arith.mulf %161, %162 : vector<32x128xf32>
    %cst_79 = arith.constant 4.471500e-02 : f32
    %164 = vector.broadcast %cst_79 : f32 to vector<32x128xf32>
    %165 = arith.mulf %164, %163 : vector<32x128xf32>
    %166 = arith.addf %161, %165 : vector<32x128xf32>
    %cst_80 = arith.constant 0.797884583 : f32
    %167 = vector.broadcast %cst_80 : f32 to vector<32x128xf32>
    %168 = arith.mulf %167, %166 : vector<32x128xf32>
    %169 = math.tanh %168 : vector<32x128xf32>
    %cst_81 = arith.constant 1.000000e+00 : f32
    %170 = vector.broadcast %cst_81 : f32 to vector<32x128xf32>
    %171 = arith.addf %170, %169 : vector<32x128xf32>
    %cst_82 = arith.constant 5.000000e-01 : f32
    %172 = vector.broadcast %cst_82 : f32 to vector<32x128xf32>
    %173 = arith.mulf %172, %171 : vector<32x128xf32>
    %174 = arith.mulf %161, %173 : vector<32x128xf32>
    %175 = arith.truncf %174 : vector<32x128xf32> to vector<32x128xbf16>
    %c0_83 = arith.constant 0 : index
    %c0_84 = arith.constant 0 : index
    %176 = vector.load %arg8[%c0_83, %c0_84] : memref<128x32xbf16, #tpu.memory_space<vmem>>, vector<128x32xbf16>
    %cst_85 = arith.constant dense<0.000000e+00> : vector<32x32xf32>
    %177 = tpu.matmul %175, %176, %cst_85 {dimension_numbers = #tpu.dot_dimension_numbers<[1], [0], [0], [1], [0, 0, 1, 1], [], []>} : vector<32x128xbf16>, vector<128x32xbf16>, vector<32x32xf32> -> vector<32x32xf32>
    %178 = arith.addf %132, %177 : vector<32x32xf32>
    %179 = vector.extract_strided_slice %33 {offsets = [5, 0], sizes = [1, 32], strides = [1, 1]} : vector<6x32xf32> to vector<1x32xf32>
    %180 = vector.broadcast %179 : vector<1x32xf32> to vector<32x32xf32>
    %181 = arith.addf %178, %180 : vector<32x32xf32>
    %c0_86 = arith.constant 0 : index
    %c0_87 = arith.constant 0 : index
    %182 = vector.load %arg12[%c0_86, %c0_87] : memref<2x16xf32, #tpu.memory_space<vmem>>, vector<2x16xf32>
    %c0_88 = arith.constant 0 : index
    %c0_89 = arith.constant 0 : index
    %183 = vector.load %arg17[%c0_88, %c0_89] : memref<6x32xf32, #tpu.memory_space<vmem>>, vector<6x32xf32>
    %c0_90 = arith.constant 0 : index
    %c0_91 = arith.constant 0 : index
    %184 = vector.load %arg18[%c0_90, %c0_91] : memref<1x128xf32, #tpu.memory_space<vmem>>, vector<1x128xf32>
    %185 = vector.extract_strided_slice %183 {offsets = [0, 0], sizes = [1, 32], strides = [1, 1]} : vector<6x32xf32> to vector<1x32xf32>
    %186 = vector.extract_strided_slice %183 {offsets = [1, 0], sizes = [1, 32], strides = [1, 1]} : vector<6x32xf32> to vector<1x32xf32>
    %cst_92 = arith.constant dense<0.000000e+00> : vector<32xf32>
    %187 = vector.multi_reduction <add>, %181, %cst_92 [1] : vector<32x32xf32> to vector<32xf32>
    %188 = vector.shape_cast %187 : vector<32xf32> to vector<32x1xf32>
    %cst_93 = arith.constant 3.200000e+01 : f32
    %189 = vector.broadcast %cst_93 : f32 to vector<32x1xf32>
    %190 = arith.divf %188, %189 : vector<32x1xf32>
    %191 = vector.broadcast %190 : vector<32x1xf32> to vector<32x32xf32>
    %192 = arith.subf %181, %191 : vector<32x32xf32>
    %193 = arith.mulf %192, %192 : vector<32x32xf32>
    %cst_94 = arith.constant dense<0.000000e+00> : vector<32xf32>
    %194 = vector.multi_reduction <add>, %193, %cst_94 [1] : vector<32x32xf32> to vector<32xf32>
    %195 = vector.shape_cast %194 : vector<32xf32> to vector<32x1xf32>
    %cst_95 = arith.constant 3.200000e+01 : f32
    %196 = vector.broadcast %cst_95 : f32 to vector<32x1xf32>
    %197 = arith.divf %195, %196 : vector<32x1xf32>
    %198 = vector.broadcast %190 : vector<32x1xf32> to vector<32x32xf32>
    %199 = arith.subf %181, %198 : vector<32x32xf32>
    %cst_96 = arith.constant 9.99999974E-6 : f32
    %200 = vector.broadcast %cst_96 : f32 to vector<32x1xf32>
    %201 = arith.addf %197, %200 : vector<32x1xf32>
    %202 = math.rsqrt %201 : vector<32x1xf32>
    %203 = vector.broadcast %202 : vector<32x1xf32> to vector<32x32xf32>
    %204 = arith.mulf %199, %203 : vector<32x32xf32>
    %205 = vector.broadcast %185 : vector<1x32xf32> to vector<32x32xf32>
    %206 = arith.mulf %204, %205 : vector<32x32xf32>
    %207 = vector.broadcast %186 : vector<1x32xf32> to vector<32x32xf32>
    %208 = arith.addf %206, %207 : vector<32x32xf32>
    %209 = arith.truncf %208 : vector<32x32xf32> to vector<32x32xbf16>
    %c0_97 = arith.constant 0 : index
    %c0_98 = arith.constant 0 : index
    %c0_99 = arith.constant 0 : index
    %c0_100 = arith.constant 0 : index
    %210 = vector.load %arg11[%c0_97, %c0_98, %c0_99, %c0_100] : memref<3x2x32x16xbf16, #tpu.memory_space<vmem>>, vector<1x1x32x16xbf16>
    %211 = vector.shape_cast %210 : vector<1x1x32x16xbf16> to vector<32x16xbf16>
    %cst_101 = arith.constant dense<0.000000e+00> : vector<32x16xf32>
    %212 = tpu.matmul %209, %211, %cst_101 {dimension_numbers = #tpu.dot_dimension_numbers<[1], [0], [0], [1], [0, 0, 1, 1], [], []>} : vector<32x32xbf16>, vector<32x16xbf16>, vector<32x16xf32> -> vector<32x16xf32>
    %213 = vector.extract_strided_slice %182 {offsets = [0, 0], sizes = [1, 16], strides = [1, 1]} : vector<2x16xf32> to vector<1x16xf32>
    %214 = vector.broadcast %213 : vector<1x16xf32> to vector<32x16xf32>
    %215 = arith.addf %212, %214 : vector<32x16xf32>
    %216 = arith.truncf %215 : vector<32x16xf32> to vector<32x16xbf16>
    %c1_102 = arith.constant 1 : index
    %c0_103 = arith.constant 0 : index
    %c0_104 = arith.constant 0 : index
    %c0_105 = arith.constant 0 : index
    %217 = vector.load %arg11[%c1_102, %c0_103, %c0_104, %c0_105] : memref<3x2x32x16xbf16, #tpu.memory_space<vmem>>, vector<1x1x32x16xbf16>
    %218 = vector.shape_cast %217 : vector<1x1x32x16xbf16> to vector<32x16xbf16>
    %cst_106 = arith.constant dense<0.000000e+00> : vector<32x16xf32>
    %219 = tpu.matmul %209, %218, %cst_106 {dimension_numbers = #tpu.dot_dimension_numbers<[1], [0], [0], [1], [0, 0, 1, 1], [], []>} : vector<32x32xbf16>, vector<32x16xbf16>, vector<32x16xf32> -> vector<32x16xf32>
    %220 = arith.truncf %219 : vector<32x16xf32> to vector<32x16xbf16>
    %c2_107 = arith.constant 2 : index
    %c0_108 = arith.constant 0 : index
    %c0_109 = arith.constant 0 : index
    %c0_110 = arith.constant 0 : index
    %221 = vector.load %arg11[%c2_107, %c0_108, %c0_109, %c0_110] : memref<3x2x32x16xbf16, #tpu.memory_space<vmem>>, vector<1x1x32x16xbf16>
    %222 = vector.shape_cast %221 : vector<1x1x32x16xbf16> to vector<32x16xbf16>
    %cst_111 = arith.constant dense<0.000000e+00> : vector<32x16xf32>
    %223 = tpu.matmul %209, %222, %cst_111 {dimension_numbers = #tpu.dot_dimension_numbers<[1], [0], [0], [1], [0, 0, 1, 1], [], []>} : vector<32x32xbf16>, vector<32x16xbf16>, vector<32x16xf32> -> vector<32x16xf32>
    %224 = arith.truncf %223 : vector<32x16xf32> to vector<32x16xbf16>
    %cst_112 = arith.constant dense<0.000000e+00> : vector<32x32xf32>
    %225 = tpu.matmul %216, %220, %cst_112 {dimension_numbers = #tpu.dot_dimension_numbers<[1], [1], [0], [0], [0, 0, 1, 0], [], []>} : vector<32x16xbf16>, vector<32x16xbf16>, vector<32x32xf32> -> vector<32x32xf32>
    %c0_113 = arith.constant 0 : index
    %c0_114 = arith.constant 0 : index
    %c0_115 = arith.constant 0 : index
    %226 = vector.load %arg13[%c0_113, %c0_114, %c0_115] : memref<2x32x32xf32, #tpu.memory_space<vmem>>, vector<1x32x32xf32>
    %227 = vector.shape_cast %226 : vector<1x32x32xf32> to vector<32x32xf32>
    %228 = arith.addf %225, %227 : vector<32x32xf32>
    %cst_116 = arith.constant dense<0xFF800000> : vector<32xf32>
    %229 = vector.multi_reduction <maximumf>, %228, %cst_116 [1] : vector<32x32xf32> to vector<32xf32>
    %230 = vector.shape_cast %229 : vector<32xf32> to vector<32x1xf32>
    %231 = vector.broadcast %230 : vector<32x1xf32> to vector<32x32xf32>
    %232 = arith.subf %228, %231 : vector<32x32xf32>
    %233 = math.exp %232 : vector<32x32xf32>
    %cst_117 = arith.constant dense<0.000000e+00> : vector<32xf32>
    %234 = vector.multi_reduction <add>, %233, %cst_117 [1] : vector<32x32xf32> to vector<32xf32>
    %235 = vector.shape_cast %234 : vector<32xf32> to vector<32x1xf32>
    %236 = vector.broadcast %235 : vector<32x1xf32> to vector<32x32xf32>
    %237 = arith.divf %233, %236 : vector<32x32xf32>
    %238 = arith.truncf %237 : vector<32x32xf32> to vector<32x32xbf16>
    %cst_118 = arith.constant dense<0.000000e+00> : vector<32x16xf32>
    %239 = tpu.matmul %238, %224, %cst_118 {dimension_numbers = #tpu.dot_dimension_numbers<[1], [0], [0], [1], [0, 0, 1, 1], [], []>} : vector<32x32xbf16>, vector<32x16xbf16>, vector<32x16xf32> -> vector<32x16xf32>
    %240 = arith.truncf %239 : vector<32x16xf32> to vector<32x16xbf16>
    %c0_119 = arith.constant 0 : index
    %c0_120 = arith.constant 0 : index
    %c0_121 = arith.constant 0 : index
    %241 = vector.load %arg14[%c0_119, %c0_120, %c0_121] : memref<2x16x32xbf16, #tpu.memory_space<vmem>>, vector<1x16x32xbf16>
    %242 = vector.shape_cast %241 : vector<1x16x32xbf16> to vector<16x32xbf16>
    %cst_122 = arith.constant dense<0.000000e+00> : vector<32x32xf32>
    %243 = tpu.matmul %240, %242, %cst_122 {dimension_numbers = #tpu.dot_dimension_numbers<[1], [0], [0], [1], [0, 0, 1, 1], [], []>} : vector<32x16xbf16>, vector<16x32xbf16>, vector<32x32xf32> -> vector<32x32xf32>
    %c0_123 = arith.constant 0 : index
    %c1_124 = arith.constant 1 : index
    %c0_125 = arith.constant 0 : index
    %c0_126 = arith.constant 0 : index
    %244 = vector.load %arg11[%c0_123, %c1_124, %c0_125, %c0_126] : memref<3x2x32x16xbf16, #tpu.memory_space<vmem>>, vector<1x1x32x16xbf16>
    %245 = vector.shape_cast %244 : vector<1x1x32x16xbf16> to vector<32x16xbf16>
    %cst_127 = arith.constant dense<0.000000e+00> : vector<32x16xf32>
    %246 = tpu.matmul %209, %245, %cst_127 {dimension_numbers = #tpu.dot_dimension_numbers<[1], [0], [0], [1], [0, 0, 1, 1], [], []>} : vector<32x32xbf16>, vector<32x16xbf16>, vector<32x16xf32> -> vector<32x16xf32>
    %247 = vector.extract_strided_slice %182 {offsets = [1, 0], sizes = [1, 16], strides = [1, 1]} : vector<2x16xf32> to vector<1x16xf32>
    %248 = vector.broadcast %247 : vector<1x16xf32> to vector<32x16xf32>
    %249 = arith.addf %246, %248 : vector<32x16xf32>
    %250 = arith.truncf %249 : vector<32x16xf32> to vector<32x16xbf16>
    %c1_128 = arith.constant 1 : index
    %c1_129 = arith.constant 1 : index
    %c0_130 = arith.constant 0 : index
    %c0_131 = arith.constant 0 : index
    %251 = vector.load %arg11[%c1_128, %c1_129, %c0_130, %c0_131] : memref<3x2x32x16xbf16, #tpu.memory_space<vmem>>, vector<1x1x32x16xbf16>
    %252 = vector.shape_cast %251 : vector<1x1x32x16xbf16> to vector<32x16xbf16>
    %cst_132 = arith.constant dense<0.000000e+00> : vector<32x16xf32>
    %253 = tpu.matmul %209, %252, %cst_132 {dimension_numbers = #tpu.dot_dimension_numbers<[1], [0], [0], [1], [0, 0, 1, 1], [], []>} : vector<32x32xbf16>, vector<32x16xbf16>, vector<32x16xf32> -> vector<32x16xf32>
    %254 = arith.truncf %253 : vector<32x16xf32> to vector<32x16xbf16>
    %c2_133 = arith.constant 2 : index
    %c1_134 = arith.constant 1 : index
    %c0_135 = arith.constant 0 : index
    %c0_136 = arith.constant 0 : index
    %255 = vector.load %arg11[%c2_133, %c1_134, %c0_135, %c0_136] : memref<3x2x32x16xbf16, #tpu.memory_space<vmem>>, vector<1x1x32x16xbf16>
    %256 = vector.shape_cast %255 : vector<1x1x32x16xbf16> to vector<32x16xbf16>
    %cst_137 = arith.constant dense<0.000000e+00> : vector<32x16xf32>
    %257 = tpu.matmul %209, %256, %cst_137 {dimension_numbers = #tpu.dot_dimension_numbers<[1], [0], [0], [1], [0, 0, 1, 1], [], []>} : vector<32x32xbf16>, vector<32x16xbf16>, vector<32x16xf32> -> vector<32x16xf32>
    %258 = arith.truncf %257 : vector<32x16xf32> to vector<32x16xbf16>
    %cst_138 = arith.constant dense<0.000000e+00> : vector<32x32xf32>
    %259 = tpu.matmul %250, %254, %cst_138 {dimension_numbers = #tpu.dot_dimension_numbers<[1], [1], [0], [0], [0, 0, 1, 0], [], []>} : vector<32x16xbf16>, vector<32x16xbf16>, vector<32x32xf32> -> vector<32x32xf32>
    %c1_139 = arith.constant 1 : index
    %c0_140 = arith.constant 0 : index
    %c0_141 = arith.constant 0 : index
    %260 = vector.load %arg13[%c1_139, %c0_140, %c0_141] : memref<2x32x32xf32, #tpu.memory_space<vmem>>, vector<1x32x32xf32>
    %261 = vector.shape_cast %260 : vector<1x32x32xf32> to vector<32x32xf32>
    %262 = arith.addf %259, %261 : vector<32x32xf32>
    %cst_142 = arith.constant dense<0xFF800000> : vector<32xf32>
    %263 = vector.multi_reduction <maximumf>, %262, %cst_142 [1] : vector<32x32xf32> to vector<32xf32>
    %264 = vector.shape_cast %263 : vector<32xf32> to vector<32x1xf32>
    %265 = vector.broadcast %264 : vector<32x1xf32> to vector<32x32xf32>
    %266 = arith.subf %262, %265 : vector<32x32xf32>
    %267 = math.exp %266 : vector<32x32xf32>
    %cst_143 = arith.constant dense<0.000000e+00> : vector<32xf32>
    %268 = vector.multi_reduction <add>, %267, %cst_143 [1] : vector<32x32xf32> to vector<32xf32>
    %269 = vector.shape_cast %268 : vector<32xf32> to vector<32x1xf32>
    %270 = vector.broadcast %269 : vector<32x1xf32> to vector<32x32xf32>
    %271 = arith.divf %267, %270 : vector<32x32xf32>
    %272 = arith.truncf %271 : vector<32x32xf32> to vector<32x32xbf16>
    %cst_144 = arith.constant dense<0.000000e+00> : vector<32x16xf32>
    %273 = tpu.matmul %272, %258, %cst_144 {dimension_numbers = #tpu.dot_dimension_numbers<[1], [0], [0], [1], [0, 0, 1, 1], [], []>} : vector<32x32xbf16>, vector<32x16xbf16>, vector<32x16xf32> -> vector<32x16xf32>
    %274 = arith.truncf %273 : vector<32x16xf32> to vector<32x16xbf16>
    %c1_145 = arith.constant 1 : index
    %c0_146 = arith.constant 0 : index
    %c0_147 = arith.constant 0 : index
    %275 = vector.load %arg14[%c1_145, %c0_146, %c0_147] : memref<2x16x32xbf16, #tpu.memory_space<vmem>>, vector<1x16x32xbf16>
    %276 = vector.shape_cast %275 : vector<1x16x32xbf16> to vector<16x32xbf16>
    %cst_148 = arith.constant dense<0.000000e+00> : vector<32x32xf32>
    %277 = tpu.matmul %274, %276, %cst_148 {dimension_numbers = #tpu.dot_dimension_numbers<[1], [0], [0], [1], [0, 0, 1, 1], [], []>} : vector<32x16xbf16>, vector<16x32xbf16>, vector<32x32xf32> -> vector<32x32xf32>
    %278 = arith.addf %243, %277 : vector<32x32xf32>
    %279 = arith.addf %181, %278 : vector<32x32xf32>
    %280 = vector.extract_strided_slice %183 {offsets = [4, 0], sizes = [1, 32], strides = [1, 1]} : vector<6x32xf32> to vector<1x32xf32>
    %281 = vector.broadcast %280 : vector<1x32xf32> to vector<32x32xf32>
    %282 = arith.addf %279, %281 : vector<32x32xf32>
    %283 = vector.extract_strided_slice %183 {offsets = [2, 0], sizes = [1, 32], strides = [1, 1]} : vector<6x32xf32> to vector<1x32xf32>
    %284 = vector.extract_strided_slice %183 {offsets = [3, 0], sizes = [1, 32], strides = [1, 1]} : vector<6x32xf32> to vector<1x32xf32>
    %cst_149 = arith.constant dense<0.000000e+00> : vector<32xf32>
    %285 = vector.multi_reduction <add>, %282, %cst_149 [1] : vector<32x32xf32> to vector<32xf32>
    %286 = vector.shape_cast %285 : vector<32xf32> to vector<32x1xf32>
    %cst_150 = arith.constant 3.200000e+01 : f32
    %287 = vector.broadcast %cst_150 : f32 to vector<32x1xf32>
    %288 = arith.divf %286, %287 : vector<32x1xf32>
    %289 = vector.broadcast %288 : vector<32x1xf32> to vector<32x32xf32>
    %290 = arith.subf %282, %289 : vector<32x32xf32>
    %291 = arith.mulf %290, %290 : vector<32x32xf32>
    %cst_151 = arith.constant dense<0.000000e+00> : vector<32xf32>
    %292 = vector.multi_reduction <add>, %291, %cst_151 [1] : vector<32x32xf32> to vector<32xf32>
    %293 = vector.shape_cast %292 : vector<32xf32> to vector<32x1xf32>
    %cst_152 = arith.constant 3.200000e+01 : f32
    %294 = vector.broadcast %cst_152 : f32 to vector<32x1xf32>
    %295 = arith.divf %293, %294 : vector<32x1xf32>
    %296 = vector.broadcast %288 : vector<32x1xf32> to vector<32x32xf32>
    %297 = arith.subf %282, %296 : vector<32x32xf32>
    %cst_153 = arith.constant 9.99999974E-6 : f32
    %298 = vector.broadcast %cst_153 : f32 to vector<32x1xf32>
    %299 = arith.addf %295, %298 : vector<32x1xf32>
    %300 = math.rsqrt %299 : vector<32x1xf32>
    %301 = vector.broadcast %300 : vector<32x1xf32> to vector<32x32xf32>
    %302 = arith.mulf %297, %301 : vector<32x32xf32>
    %303 = vector.broadcast %283 : vector<1x32xf32> to vector<32x32xf32>
    %304 = arith.mulf %302, %303 : vector<32x32xf32>
    %305 = vector.broadcast %284 : vector<1x32xf32> to vector<32x32xf32>
    %306 = arith.addf %304, %305 : vector<32x32xf32>
    %307 = arith.truncf %306 : vector<32x32xf32> to vector<32x32xbf16>
    %c0_154 = arith.constant 0 : index
    %c0_155 = arith.constant 0 : index
    %308 = vector.load %arg15[%c0_154, %c0_155] : memref<32x128xbf16, #tpu.memory_space<vmem>>, vector<32x128xbf16>
    %cst_156 = arith.constant dense<0.000000e+00> : vector<32x128xf32>
    %309 = tpu.matmul %307, %308, %cst_156 {dimension_numbers = #tpu.dot_dimension_numbers<[1], [0], [0], [1], [0, 0, 1, 1], [], []>} : vector<32x32xbf16>, vector<32x128xbf16>, vector<32x128xf32> -> vector<32x128xf32>
    %310 = vector.broadcast %184 : vector<1x128xf32> to vector<32x128xf32>
    %311 = arith.addf %309, %310 : vector<32x128xf32>
    %312 = arith.mulf %311, %311 : vector<32x128xf32>
    %313 = arith.mulf %311, %312 : vector<32x128xf32>
    %cst_157 = arith.constant 4.471500e-02 : f32
    %314 = vector.broadcast %cst_157 : f32 to vector<32x128xf32>
    %315 = arith.mulf %314, %313 : vector<32x128xf32>
    %316 = arith.addf %311, %315 : vector<32x128xf32>
    %cst_158 = arith.constant 0.797884583 : f32
    %317 = vector.broadcast %cst_158 : f32 to vector<32x128xf32>
    %318 = arith.mulf %317, %316 : vector<32x128xf32>
    %319 = math.tanh %318 : vector<32x128xf32>
    %cst_159 = arith.constant 1.000000e+00 : f32
    %320 = vector.broadcast %cst_159 : f32 to vector<32x128xf32>
    %321 = arith.addf %320, %319 : vector<32x128xf32>
    %cst_160 = arith.constant 5.000000e-01 : f32
    %322 = vector.broadcast %cst_160 : f32 to vector<32x128xf32>
    %323 = arith.mulf %322, %321 : vector<32x128xf32>
    %324 = arith.mulf %311, %323 : vector<32x128xf32>
    %325 = arith.truncf %324 : vector<32x128xf32> to vector<32x128xbf16>
    %c0_161 = arith.constant 0 : index
    %c0_162 = arith.constant 0 : index
    %326 = vector.load %arg16[%c0_161, %c0_162] : memref<128x32xbf16, #tpu.memory_space<vmem>>, vector<128x32xbf16>
    %cst_163 = arith.constant dense<0.000000e+00> : vector<32x32xf32>
    %327 = tpu.matmul %325, %326, %cst_163 {dimension_numbers = #tpu.dot_dimension_numbers<[1], [0], [0], [1], [0, 0, 1, 1], [], []>} : vector<32x128xbf16>, vector<128x32xbf16>, vector<32x32xf32> -> vector<32x32xf32>
    %328 = arith.addf %282, %327 : vector<32x32xf32>
    %329 = vector.extract_strided_slice %183 {offsets = [5, 0], sizes = [1, 32], strides = [1, 1]} : vector<6x32xf32> to vector<1x32xf32>
    %330 = vector.broadcast %329 : vector<1x32xf32> to vector<32x32xf32>
    %331 = arith.addf %328, %330 : vector<32x32xf32>
    %c0_164 = arith.constant 0 : index
    %c0_165 = arith.constant 0 : index
    %332 = vector.load %arg20[%c0_164, %c0_165] : memref<2x128xf32, #tpu.memory_space<vmem>>, vector<2x128xf32>
    %c0_166 = arith.constant 0 : index
    %c0_167 = arith.constant 0 : index
    %c0_168 = arith.constant 0 : index
    %333 = vector.load %arg19[%c0_166, %c0_167, %c0_168] : memref<4x8x32xf32, #tpu.memory_space<vmem>>, vector<1x8x32xf32>
    %334 = vector.shape_cast %333 : vector<1x8x32xf32> to vector<8x32xf32>
    %cst_169 = arith.constant dense<0.000000e+00> : vector<8x32xf32>
    %335 = tpu.matmul %334, %331, %cst_169 {dimension_numbers = #tpu.dot_dimension_numbers<[1], [0], [0], [1], [0, 0, 1, 1], [], []>} : vector<8x32xf32>, vector<32x32xf32>, vector<8x32xf32> -> vector<8x32xf32>
    %c1_170 = arith.constant 1 : index
    %c0_171 = arith.constant 0 : index
    %c0_172 = arith.constant 0 : index
    %336 = vector.load %arg19[%c1_170, %c0_171, %c0_172] : memref<4x8x32xf32, #tpu.memory_space<vmem>>, vector<1x8x32xf32>
    %337 = vector.shape_cast %336 : vector<1x8x32xf32> to vector<8x32xf32>
    %cst_173 = arith.constant dense<0.000000e+00> : vector<8x32xf32>
    %338 = tpu.matmul %337, %331, %cst_173 {dimension_numbers = #tpu.dot_dimension_numbers<[1], [0], [0], [1], [0, 0, 1, 1], [], []>} : vector<8x32xf32>, vector<32x32xf32>, vector<8x32xf32> -> vector<8x32xf32>
    %c2_174 = arith.constant 2 : index
    %c0_175 = arith.constant 0 : index
    %c0_176 = arith.constant 0 : index
    %339 = vector.load %arg19[%c2_174, %c0_175, %c0_176] : memref<4x8x32xf32, #tpu.memory_space<vmem>>, vector<1x8x32xf32>
    %340 = vector.shape_cast %339 : vector<1x8x32xf32> to vector<8x32xf32>
    %cst_177 = arith.constant dense<0.000000e+00> : vector<8x32xf32>
    %341 = tpu.matmul %340, %331, %cst_177 {dimension_numbers = #tpu.dot_dimension_numbers<[1], [0], [0], [1], [0, 0, 1, 1], [], []>} : vector<8x32xf32>, vector<32x32xf32>, vector<8x32xf32> -> vector<8x32xf32>
    %c3 = arith.constant 3 : index
    %c0_178 = arith.constant 0 : index
    %c0_179 = arith.constant 0 : index
    %342 = vector.load %arg19[%c3, %c0_178, %c0_179] : memref<4x8x32xf32, #tpu.memory_space<vmem>>, vector<1x8x32xf32>
    %343 = vector.shape_cast %342 : vector<1x8x32xf32> to vector<8x32xf32>
    %cst_180 = arith.constant dense<0.000000e+00> : vector<8x32xf32>
    %344 = tpu.matmul %343, %331, %cst_180 {dimension_numbers = #tpu.dot_dimension_numbers<[1], [0], [0], [1], [0, 0, 1, 1], [], []>} : vector<8x32xf32>, vector<32x32xf32>, vector<8x32xf32> -> vector<8x32xf32>
    %345 = tpu.concatenate %335, %338, %341, %344 in 1 : vector<8x32xf32>, vector<8x32xf32>, vector<8x32xf32>, vector<8x32xf32> -> vector<8x128xf32>
    %346 = vector.extract_strided_slice %332 {offsets = [0, 0], sizes = [1, 128], strides = [1, 1]} : vector<2x128xf32> to vector<1x128xf32>
    %347 = vector.extract_strided_slice %332 {offsets = [1, 0], sizes = [1, 128], strides = [1, 1]} : vector<2x128xf32> to vector<1x128xf32>
    %cst_181 = arith.constant dense<0.000000e+00> : vector<8xf32>
    %348 = vector.multi_reduction <add>, %345, %cst_181 [1] : vector<8x128xf32> to vector<8xf32>
    %349 = vector.shape_cast %348 : vector<8xf32> to vector<8x1xf32>
    %cst_182 = arith.constant 1.280000e+02 : f32
    %350 = vector.broadcast %cst_182 : f32 to vector<8x1xf32>
    %351 = arith.divf %349, %350 : vector<8x1xf32>
    %352 = vector.broadcast %351 : vector<8x1xf32> to vector<8x128xf32>
    %353 = arith.subf %345, %352 : vector<8x128xf32>
    %354 = arith.mulf %353, %353 : vector<8x128xf32>
    %cst_183 = arith.constant dense<0.000000e+00> : vector<8xf32>
    %355 = vector.multi_reduction <add>, %354, %cst_183 [1] : vector<8x128xf32> to vector<8xf32>
    %356 = vector.shape_cast %355 : vector<8xf32> to vector<8x1xf32>
    %cst_184 = arith.constant 1.280000e+02 : f32
    %357 = vector.broadcast %cst_184 : f32 to vector<8x1xf32>
    %358 = arith.divf %356, %357 : vector<8x1xf32>
    %359 = vector.broadcast %351 : vector<8x1xf32> to vector<8x128xf32>
    %360 = arith.subf %345, %359 : vector<8x128xf32>
    %cst_185 = arith.constant 9.99999974E-6 : f32
    %361 = vector.broadcast %cst_185 : f32 to vector<8x1xf32>
    %362 = arith.addf %358, %361 : vector<8x1xf32>
    %363 = math.rsqrt %362 : vector<8x1xf32>
    %364 = vector.broadcast %363 : vector<8x1xf32> to vector<8x128xf32>
    %365 = arith.mulf %360, %364 : vector<8x128xf32>
    %366 = vector.broadcast %346 : vector<1x128xf32> to vector<8x128xf32>
    %367 = arith.mulf %365, %366 : vector<8x128xf32>
    %368 = vector.broadcast %347 : vector<1x128xf32> to vector<8x128xf32>
    %369 = arith.addf %367, %368 : vector<8x128xf32>
    %370 = arith.truncf %369 : vector<8x128xf32> to vector<8x128xbf16>
    %c0_186 = arith.constant 0 : index
    %c0_187 = arith.constant 0 : index
    %371 = vector.load %arg21[%c0_186, %c0_187] : memref<128x64xbf16, #tpu.memory_space<vmem>>, vector<128x64xbf16>
    %cst_188 = arith.constant dense<0.000000e+00> : vector<8x64xf32>
    %372 = tpu.matmul %370, %371, %cst_188 {dimension_numbers = #tpu.dot_dimension_numbers<[1], [0], [0], [1], [0, 0, 1, 1], [], []>} : vector<8x128xbf16>, vector<128x64xbf16>, vector<8x64xf32> -> vector<8x64xf32>
    %c0_189 = arith.constant 0 : index
    %c0_190 = arith.constant 0 : index
    %373 = vector.load %arg23[%c0_189, %c0_190] : memref<4x16xf32, #tpu.memory_space<vmem>>, vector<4x16xf32>
    %c0_191 = arith.constant 0 : index
    %c0_192 = arith.constant 0 : index
    %374 = vector.load %arg28[%c0_191, %c0_192] : memref<6x64xf32, #tpu.memory_space<vmem>>, vector<6x64xf32>
    %c0_193 = arith.constant 0 : index
    %c0_194 = arith.constant 0 : index
    %375 = vector.load %arg29[%c0_193, %c0_194] : memref<1x256xf32, #tpu.memory_space<vmem>>, vector<1x256xf32>
    %376 = vector.extract_strided_slice %374 {offsets = [0, 0], sizes = [1, 64], strides = [1, 1]} : vector<6x64xf32> to vector<1x64xf32>
    %377 = vector.extract_strided_slice %374 {offsets = [1, 0], sizes = [1, 64], strides = [1, 1]} : vector<6x64xf32> to vector<1x64xf32>
    %cst_195 = arith.constant dense<0.000000e+00> : vector<8xf32>
    %378 = vector.multi_reduction <add>, %372, %cst_195 [1] : vector<8x64xf32> to vector<8xf32>
    %379 = vector.shape_cast %378 : vector<8xf32> to vector<8x1xf32>
    %cst_196 = arith.constant 6.400000e+01 : f32
    %380 = vector.broadcast %cst_196 : f32 to vector<8x1xf32>
    %381 = arith.divf %379, %380 : vector<8x1xf32>
    %382 = vector.broadcast %381 : vector<8x1xf32> to vector<8x64xf32>
    %383 = arith.subf %372, %382 : vector<8x64xf32>
    %384 = arith.mulf %383, %383 : vector<8x64xf32>
    %cst_197 = arith.constant dense<0.000000e+00> : vector<8xf32>
    %385 = vector.multi_reduction <add>, %384, %cst_197 [1] : vector<8x64xf32> to vector<8xf32>
    %386 = vector.shape_cast %385 : vector<8xf32> to vector<8x1xf32>
    %cst_198 = arith.constant 6.400000e+01 : f32
    %387 = vector.broadcast %cst_198 : f32 to vector<8x1xf32>
    %388 = arith.divf %386, %387 : vector<8x1xf32>
    %389 = vector.broadcast %381 : vector<8x1xf32> to vector<8x64xf32>
    %390 = arith.subf %372, %389 : vector<8x64xf32>
    %cst_199 = arith.constant 9.99999974E-6 : f32
    %391 = vector.broadcast %cst_199 : f32 to vector<8x1xf32>
    %392 = arith.addf %388, %391 : vector<8x1xf32>
    %393 = math.rsqrt %392 : vector<8x1xf32>
    %394 = vector.broadcast %393 : vector<8x1xf32> to vector<8x64xf32>
    %395 = arith.mulf %390, %394 : vector<8x64xf32>
    %396 = vector.broadcast %376 : vector<1x64xf32> to vector<8x64xf32>
    %397 = arith.mulf %395, %396 : vector<8x64xf32>
    %398 = vector.broadcast %377 : vector<1x64xf32> to vector<8x64xf32>
    %399 = arith.addf %397, %398 : vector<8x64xf32>
    %400 = arith.truncf %399 : vector<8x64xf32> to vector<8x64xbf16>
    %c0_200 = arith.constant 0 : index
    %c0_201 = arith.constant 0 : index
    %c0_202 = arith.constant 0 : index
    %c0_203 = arith.constant 0 : index
    %401 = vector.load %arg22[%c0_200, %c0_201, %c0_202, %c0_203] : memref<3x4x64x16xbf16, #tpu.memory_space<vmem>>, vector<1x1x64x16xbf16>
    %402 = vector.shape_cast %401 : vector<1x1x64x16xbf16> to vector<64x16xbf16>
    %cst_204 = arith.constant dense<0.000000e+00> : vector<8x16xf32>
    %403 = tpu.matmul %400, %402, %cst_204 {dimension_numbers = #tpu.dot_dimension_numbers<[1], [0], [0], [1], [0, 0, 1, 1], [], []>} : vector<8x64xbf16>, vector<64x16xbf16>, vector<8x16xf32> -> vector<8x16xf32>
    %404 = vector.extract_strided_slice %373 {offsets = [0, 0], sizes = [1, 16], strides = [1, 1]} : vector<4x16xf32> to vector<1x16xf32>
    %405 = vector.broadcast %404 : vector<1x16xf32> to vector<8x16xf32>
    %406 = arith.addf %403, %405 : vector<8x16xf32>
    %407 = arith.truncf %406 : vector<8x16xf32> to vector<8x16xbf16>
    %c1_205 = arith.constant 1 : index
    %c0_206 = arith.constant 0 : index
    %c0_207 = arith.constant 0 : index
    %c0_208 = arith.constant 0 : index
    %408 = vector.load %arg22[%c1_205, %c0_206, %c0_207, %c0_208] : memref<3x4x64x16xbf16, #tpu.memory_space<vmem>>, vector<1x1x64x16xbf16>
    %409 = vector.shape_cast %408 : vector<1x1x64x16xbf16> to vector<64x16xbf16>
    %cst_209 = arith.constant dense<0.000000e+00> : vector<8x16xf32>
    %410 = tpu.matmul %400, %409, %cst_209 {dimension_numbers = #tpu.dot_dimension_numbers<[1], [0], [0], [1], [0, 0, 1, 1], [], []>} : vector<8x64xbf16>, vector<64x16xbf16>, vector<8x16xf32> -> vector<8x16xf32>
    %411 = arith.truncf %410 : vector<8x16xf32> to vector<8x16xbf16>
    %c2_210 = arith.constant 2 : index
    %c0_211 = arith.constant 0 : index
    %c0_212 = arith.constant 0 : index
    %c0_213 = arith.constant 0 : index
    %412 = vector.load %arg22[%c2_210, %c0_211, %c0_212, %c0_213] : memref<3x4x64x16xbf16, #tpu.memory_space<vmem>>, vector<1x1x64x16xbf16>
    %413 = vector.shape_cast %412 : vector<1x1x64x16xbf16> to vector<64x16xbf16>
    %cst_214 = arith.constant dense<0.000000e+00> : vector<8x16xf32>
    %414 = tpu.matmul %400, %413, %cst_214 {dimension_numbers = #tpu.dot_dimension_numbers<[1], [0], [0], [1], [0, 0, 1, 1], [], []>} : vector<8x64xbf16>, vector<64x16xbf16>, vector<8x16xf32> -> vector<8x16xf32>
    %415 = arith.truncf %414 : vector<8x16xf32> to vector<8x16xbf16>
    %cst_215 = arith.constant dense<0.000000e+00> : vector<8x8xf32>
    %416 = tpu.matmul %407, %411, %cst_215 {dimension_numbers = #tpu.dot_dimension_numbers<[1], [1], [0], [0], [0, 0, 1, 0], [], []>} : vector<8x16xbf16>, vector<8x16xbf16>, vector<8x8xf32> -> vector<8x8xf32>
    %c0_216 = arith.constant 0 : index
    %c0_217 = arith.constant 0 : index
    %c0_218 = arith.constant 0 : index
    %417 = vector.load %arg24[%c0_216, %c0_217, %c0_218] : memref<4x8x8xf32, #tpu.memory_space<vmem>>, vector<1x8x8xf32>
    %418 = vector.shape_cast %417 : vector<1x8x8xf32> to vector<8x8xf32>
    %419 = arith.addf %416, %418 : vector<8x8xf32>
    %cst_219 = arith.constant dense<0xFF800000> : vector<8xf32>
    %420 = vector.multi_reduction <maximumf>, %419, %cst_219 [1] : vector<8x8xf32> to vector<8xf32>
    %421 = vector.shape_cast %420 : vector<8xf32> to vector<8x1xf32>
    %422 = vector.broadcast %421 : vector<8x1xf32> to vector<8x8xf32>
    %423 = arith.subf %419, %422 : vector<8x8xf32>
    %424 = math.exp %423 : vector<8x8xf32>
    %cst_220 = arith.constant dense<0.000000e+00> : vector<8xf32>
    %425 = vector.multi_reduction <add>, %424, %cst_220 [1] : vector<8x8xf32> to vector<8xf32>
    %426 = vector.shape_cast %425 : vector<8xf32> to vector<8x1xf32>
    %427 = vector.broadcast %426 : vector<8x1xf32> to vector<8x8xf32>
    %428 = arith.divf %424, %427 : vector<8x8xf32>
    %429 = arith.truncf %428 : vector<8x8xf32> to vector<8x8xbf16>
    %cst_221 = arith.constant dense<0.000000e+00> : vector<8x16xf32>
    %430 = tpu.matmul %429, %415, %cst_221 {dimension_numbers = #tpu.dot_dimension_numbers<[1], [0], [0], [1], [0, 0, 1, 1], [], []>} : vector<8x8xbf16>, vector<8x16xbf16>, vector<8x16xf32> -> vector<8x16xf32>
    %431 = arith.truncf %430 : vector<8x16xf32> to vector<8x16xbf16>
    %c0_222 = arith.constant 0 : index
    %c0_223 = arith.constant 0 : index
    %c0_224 = arith.constant 0 : index
    %432 = vector.load %arg25[%c0_222, %c0_223, %c0_224] : memref<4x16x64xbf16, #tpu.memory_space<vmem>>, vector<1x16x64xbf16>
    %433 = vector.shape_cast %432 : vector<1x16x64xbf16> to vector<16x64xbf16>
    %cst_225 = arith.constant dense<0.000000e+00> : vector<8x64xf32>
    %434 = tpu.matmul %431, %433, %cst_225 {dimension_numbers = #tpu.dot_dimension_numbers<[1], [0], [0], [1], [0, 0, 1, 1], [], []>} : vector<8x16xbf16>, vector<16x64xbf16>, vector<8x64xf32> -> vector<8x64xf32>
    %c0_226 = arith.constant 0 : index
    %c1_227 = arith.constant 1 : index
    %c0_228 = arith.constant 0 : index
    %c0_229 = arith.constant 0 : index
    %435 = vector.load %arg22[%c0_226, %c1_227, %c0_228, %c0_229] : memref<3x4x64x16xbf16, #tpu.memory_space<vmem>>, vector<1x1x64x16xbf16>
    %436 = vector.shape_cast %435 : vector<1x1x64x16xbf16> to vector<64x16xbf16>
    %cst_230 = arith.constant dense<0.000000e+00> : vector<8x16xf32>
    %437 = tpu.matmul %400, %436, %cst_230 {dimension_numbers = #tpu.dot_dimension_numbers<[1], [0], [0], [1], [0, 0, 1, 1], [], []>} : vector<8x64xbf16>, vector<64x16xbf16>, vector<8x16xf32> -> vector<8x16xf32>
    %438 = vector.extract_strided_slice %373 {offsets = [1, 0], sizes = [1, 16], strides = [1, 1]} : vector<4x16xf32> to vector<1x16xf32>
    %439 = vector.broadcast %438 : vector<1x16xf32> to vector<8x16xf32>
    %440 = arith.addf %437, %439 : vector<8x16xf32>
    %441 = arith.truncf %440 : vector<8x16xf32> to vector<8x16xbf16>
    %c1_231 = arith.constant 1 : index
    %c1_232 = arith.constant 1 : index
    %c0_233 = arith.constant 0 : index
    %c0_234 = arith.constant 0 : index
    %442 = vector.load %arg22[%c1_231, %c1_232, %c0_233, %c0_234] : memref<3x4x64x16xbf16, #tpu.memory_space<vmem>>, vector<1x1x64x16xbf16>
    %443 = vector.shape_cast %442 : vector<1x1x64x16xbf16> to vector<64x16xbf16>
    %cst_235 = arith.constant dense<0.000000e+00> : vector<8x16xf32>
    %444 = tpu.matmul %400, %443, %cst_235 {dimension_numbers = #tpu.dot_dimension_numbers<[1], [0], [0], [1], [0, 0, 1, 1], [], []>} : vector<8x64xbf16>, vector<64x16xbf16>, vector<8x16xf32> -> vector<8x16xf32>
    %445 = arith.truncf %444 : vector<8x16xf32> to vector<8x16xbf16>
    %c2_236 = arith.constant 2 : index
    %c1_237 = arith.constant 1 : index
    %c0_238 = arith.constant 0 : index
    %c0_239 = arith.constant 0 : index
    %446 = vector.load %arg22[%c2_236, %c1_237, %c0_238, %c0_239] : memref<3x4x64x16xbf16, #tpu.memory_space<vmem>>, vector<1x1x64x16xbf16>
    %447 = vector.shape_cast %446 : vector<1x1x64x16xbf16> to vector<64x16xbf16>
    %cst_240 = arith.constant dense<0.000000e+00> : vector<8x16xf32>
    %448 = tpu.matmul %400, %447, %cst_240 {dimension_numbers = #tpu.dot_dimension_numbers<[1], [0], [0], [1], [0, 0, 1, 1], [], []>} : vector<8x64xbf16>, vector<64x16xbf16>, vector<8x16xf32> -> vector<8x16xf32>
    %449 = arith.truncf %448 : vector<8x16xf32> to vector<8x16xbf16>
    %cst_241 = arith.constant dense<0.000000e+00> : vector<8x8xf32>
    %450 = tpu.matmul %441, %445, %cst_241 {dimension_numbers = #tpu.dot_dimension_numbers<[1], [1], [0], [0], [0, 0, 1, 0], [], []>} : vector<8x16xbf16>, vector<8x16xbf16>, vector<8x8xf32> -> vector<8x8xf32>
    %c1_242 = arith.constant 1 : index
    %c0_243 = arith.constant 0 : index
    %c0_244 = arith.constant 0 : index
    %451 = vector.load %arg24[%c1_242, %c0_243, %c0_244] : memref<4x8x8xf32, #tpu.memory_space<vmem>>, vector<1x8x8xf32>
    %452 = vector.shape_cast %451 : vector<1x8x8xf32> to vector<8x8xf32>
    %453 = arith.addf %450, %452 : vector<8x8xf32>
    %cst_245 = arith.constant dense<0xFF800000> : vector<8xf32>
    %454 = vector.multi_reduction <maximumf>, %453, %cst_245 [1] : vector<8x8xf32> to vector<8xf32>
    %455 = vector.shape_cast %454 : vector<8xf32> to vector<8x1xf32>
    %456 = vector.broadcast %455 : vector<8x1xf32> to vector<8x8xf32>
    %457 = arith.subf %453, %456 : vector<8x8xf32>
    %458 = math.exp %457 : vector<8x8xf32>
    %cst_246 = arith.constant dense<0.000000e+00> : vector<8xf32>
    %459 = vector.multi_reduction <add>, %458, %cst_246 [1] : vector<8x8xf32> to vector<8xf32>
    %460 = vector.shape_cast %459 : vector<8xf32> to vector<8x1xf32>
    %461 = vector.broadcast %460 : vector<8x1xf32> to vector<8x8xf32>
    %462 = arith.divf %458, %461 : vector<8x8xf32>
    %463 = arith.truncf %462 : vector<8x8xf32> to vector<8x8xbf16>
    %cst_247 = arith.constant dense<0.000000e+00> : vector<8x16xf32>
    %464 = tpu.matmul %463, %449, %cst_247 {dimension_numbers = #tpu.dot_dimension_numbers<[1], [0], [0], [1], [0, 0, 1, 1], [], []>} : vector<8x8xbf16>, vector<8x16xbf16>, vector<8x16xf32> -> vector<8x16xf32>
    %465 = arith.truncf %464 : vector<8x16xf32> to vector<8x16xbf16>
    %c1_248 = arith.constant 1 : index
    %c0_249 = arith.constant 0 : index
    %c0_250 = arith.constant 0 : index
    %466 = vector.load %arg25[%c1_248, %c0_249, %c0_250] : memref<4x16x64xbf16, #tpu.memory_space<vmem>>, vector<1x16x64xbf16>
    %467 = vector.shape_cast %466 : vector<1x16x64xbf16> to vector<16x64xbf16>
    %cst_251 = arith.constant dense<0.000000e+00> : vector<8x64xf32>
    %468 = tpu.matmul %465, %467, %cst_251 {dimension_numbers = #tpu.dot_dimension_numbers<[1], [0], [0], [1], [0, 0, 1, 1], [], []>} : vector<8x16xbf16>, vector<16x64xbf16>, vector<8x64xf32> -> vector<8x64xf32>
    %469 = arith.addf %434, %468 : vector<8x64xf32>
    %c0_252 = arith.constant 0 : index
    %c2_253 = arith.constant 2 : index
    %c0_254 = arith.constant 0 : index
    %c0_255 = arith.constant 0 : index
    %470 = vector.load %arg22[%c0_252, %c2_253, %c0_254, %c0_255] : memref<3x4x64x16xbf16, #tpu.memory_space<vmem>>, vector<1x1x64x16xbf16>
    %471 = vector.shape_cast %470 : vector<1x1x64x16xbf16> to vector<64x16xbf16>
    %cst_256 = arith.constant dense<0.000000e+00> : vector<8x16xf32>
    %472 = tpu.matmul %400, %471, %cst_256 {dimension_numbers = #tpu.dot_dimension_numbers<[1], [0], [0], [1], [0, 0, 1, 1], [], []>} : vector<8x64xbf16>, vector<64x16xbf16>, vector<8x16xf32> -> vector<8x16xf32>
    %473 = vector.extract_strided_slice %373 {offsets = [2, 0], sizes = [1, 16], strides = [1, 1]} : vector<4x16xf32> to vector<1x16xf32>
    %474 = vector.broadcast %473 : vector<1x16xf32> to vector<8x16xf32>
    %475 = arith.addf %472, %474 : vector<8x16xf32>
    %476 = arith.truncf %475 : vector<8x16xf32> to vector<8x16xbf16>
    %c1_257 = arith.constant 1 : index
    %c2_258 = arith.constant 2 : index
    %c0_259 = arith.constant 0 : index
    %c0_260 = arith.constant 0 : index
    %477 = vector.load %arg22[%c1_257, %c2_258, %c0_259, %c0_260] : memref<3x4x64x16xbf16, #tpu.memory_space<vmem>>, vector<1x1x64x16xbf16>
    %478 = vector.shape_cast %477 : vector<1x1x64x16xbf16> to vector<64x16xbf16>
    %cst_261 = arith.constant dense<0.000000e+00> : vector<8x16xf32>
    %479 = tpu.matmul %400, %478, %cst_261 {dimension_numbers = #tpu.dot_dimension_numbers<[1], [0], [0], [1], [0, 0, 1, 1], [], []>} : vector<8x64xbf16>, vector<64x16xbf16>, vector<8x16xf32> -> vector<8x16xf32>
    %480 = arith.truncf %479 : vector<8x16xf32> to vector<8x16xbf16>
    %c2_262 = arith.constant 2 : index
    %c2_263 = arith.constant 2 : index
    %c0_264 = arith.constant 0 : index
    %c0_265 = arith.constant 0 : index
    %481 = vector.load %arg22[%c2_262, %c2_263, %c0_264, %c0_265] : memref<3x4x64x16xbf16, #tpu.memory_space<vmem>>, vector<1x1x64x16xbf16>
    %482 = vector.shape_cast %481 : vector<1x1x64x16xbf16> to vector<64x16xbf16>
    %cst_266 = arith.constant dense<0.000000e+00> : vector<8x16xf32>
    %483 = tpu.matmul %400, %482, %cst_266 {dimension_numbers = #tpu.dot_dimension_numbers<[1], [0], [0], [1], [0, 0, 1, 1], [], []>} : vector<8x64xbf16>, vector<64x16xbf16>, vector<8x16xf32> -> vector<8x16xf32>
    %484 = arith.truncf %483 : vector<8x16xf32> to vector<8x16xbf16>
    %cst_267 = arith.constant dense<0.000000e+00> : vector<8x8xf32>
    %485 = tpu.matmul %476, %480, %cst_267 {dimension_numbers = #tpu.dot_dimension_numbers<[1], [1], [0], [0], [0, 0, 1, 0], [], []>} : vector<8x16xbf16>, vector<8x16xbf16>, vector<8x8xf32> -> vector<8x8xf32>
    %c2_268 = arith.constant 2 : index
    %c0_269 = arith.constant 0 : index
    %c0_270 = arith.constant 0 : index
    %486 = vector.load %arg24[%c2_268, %c0_269, %c0_270] : memref<4x8x8xf32, #tpu.memory_space<vmem>>, vector<1x8x8xf32>
    %487 = vector.shape_cast %486 : vector<1x8x8xf32> to vector<8x8xf32>
    %488 = arith.addf %485, %487 : vector<8x8xf32>
    %cst_271 = arith.constant dense<0xFF800000> : vector<8xf32>
    %489 = vector.multi_reduction <maximumf>, %488, %cst_271 [1] : vector<8x8xf32> to vector<8xf32>
    %490 = vector.shape_cast %489 : vector<8xf32> to vector<8x1xf32>
    %491 = vector.broadcast %490 : vector<8x1xf32> to vector<8x8xf32>
    %492 = arith.subf %488, %491 : vector<8x8xf32>
    %493 = math.exp %492 : vector<8x8xf32>
    %cst_272 = arith.constant dense<0.000000e+00> : vector<8xf32>
    %494 = vector.multi_reduction <add>, %493, %cst_272 [1] : vector<8x8xf32> to vector<8xf32>
    %495 = vector.shape_cast %494 : vector<8xf32> to vector<8x1xf32>
    %496 = vector.broadcast %495 : vector<8x1xf32> to vector<8x8xf32>
    %497 = arith.divf %493, %496 : vector<8x8xf32>
    %498 = arith.truncf %497 : vector<8x8xf32> to vector<8x8xbf16>
    %cst_273 = arith.constant dense<0.000000e+00> : vector<8x16xf32>
    %499 = tpu.matmul %498, %484, %cst_273 {dimension_numbers = #tpu.dot_dimension_numbers<[1], [0], [0], [1], [0, 0, 1, 1], [], []>} : vector<8x8xbf16>, vector<8x16xbf16>, vector<8x16xf32> -> vector<8x16xf32>
    %500 = arith.truncf %499 : vector<8x16xf32> to vector<8x16xbf16>
    %c2_274 = arith.constant 2 : index
    %c0_275 = arith.constant 0 : index
    %c0_276 = arith.constant 0 : index
    %501 = vector.load %arg25[%c2_274, %c0_275, %c0_276] : memref<4x16x64xbf16, #tpu.memory_space<vmem>>, vector<1x16x64xbf16>
    %502 = vector.shape_cast %501 : vector<1x16x64xbf16> to vector<16x64xbf16>
    %cst_277 = arith.constant dense<0.000000e+00> : vector<8x64xf32>
    %503 = tpu.matmul %500, %502, %cst_277 {dimension_numbers = #tpu.dot_dimension_numbers<[1], [0], [0], [1], [0, 0, 1, 1], [], []>} : vector<8x16xbf16>, vector<16x64xbf16>, vector<8x64xf32> -> vector<8x64xf32>
    %504 = arith.addf %469, %503 : vector<8x64xf32>
    %c0_278 = arith.constant 0 : index
    %c3_279 = arith.constant 3 : index
    %c0_280 = arith.constant 0 : index
    %c0_281 = arith.constant 0 : index
    %505 = vector.load %arg22[%c0_278, %c3_279, %c0_280, %c0_281] : memref<3x4x64x16xbf16, #tpu.memory_space<vmem>>, vector<1x1x64x16xbf16>
    %506 = vector.shape_cast %505 : vector<1x1x64x16xbf16> to vector<64x16xbf16>
    %cst_282 = arith.constant dense<0.000000e+00> : vector<8x16xf32>
    %507 = tpu.matmul %400, %506, %cst_282 {dimension_numbers = #tpu.dot_dimension_numbers<[1], [0], [0], [1], [0, 0, 1, 1], [], []>} : vector<8x64xbf16>, vector<64x16xbf16>, vector<8x16xf32> -> vector<8x16xf32>
    %508 = vector.extract_strided_slice %373 {offsets = [3, 0], sizes = [1, 16], strides = [1, 1]} : vector<4x16xf32> to vector<1x16xf32>
    %509 = vector.broadcast %508 : vector<1x16xf32> to vector<8x16xf32>
    %510 = arith.addf %507, %509 : vector<8x16xf32>
    %511 = arith.truncf %510 : vector<8x16xf32> to vector<8x16xbf16>
    %c1_283 = arith.constant 1 : index
    %c3_284 = arith.constant 3 : index
    %c0_285 = arith.constant 0 : index
    %c0_286 = arith.constant 0 : index
    %512 = vector.load %arg22[%c1_283, %c3_284, %c0_285, %c0_286] : memref<3x4x64x16xbf16, #tpu.memory_space<vmem>>, vector<1x1x64x16xbf16>
    %513 = vector.shape_cast %512 : vector<1x1x64x16xbf16> to vector<64x16xbf16>
    %cst_287 = arith.constant dense<0.000000e+00> : vector<8x16xf32>
    %514 = tpu.matmul %400, %513, %cst_287 {dimension_numbers = #tpu.dot_dimension_numbers<[1], [0], [0], [1], [0, 0, 1, 1], [], []>} : vector<8x64xbf16>, vector<64x16xbf16>, vector<8x16xf32> -> vector<8x16xf32>
    %515 = arith.truncf %514 : vector<8x16xf32> to vector<8x16xbf16>
    %c2_288 = arith.constant 2 : index
    %c3_289 = arith.constant 3 : index
    %c0_290 = arith.constant 0 : index
    %c0_291 = arith.constant 0 : index
    %516 = vector.load %arg22[%c2_288, %c3_289, %c0_290, %c0_291] : memref<3x4x64x16xbf16, #tpu.memory_space<vmem>>, vector<1x1x64x16xbf16>
    %517 = vector.shape_cast %516 : vector<1x1x64x16xbf16> to vector<64x16xbf16>
    %cst_292 = arith.constant dense<0.000000e+00> : vector<8x16xf32>
    %518 = tpu.matmul %400, %517, %cst_292 {dimension_numbers = #tpu.dot_dimension_numbers<[1], [0], [0], [1], [0, 0, 1, 1], [], []>} : vector<8x64xbf16>, vector<64x16xbf16>, vector<8x16xf32> -> vector<8x16xf32>
    %519 = arith.truncf %518 : vector<8x16xf32> to vector<8x16xbf16>
    %cst_293 = arith.constant dense<0.000000e+00> : vector<8x8xf32>
    %520 = tpu.matmul %511, %515, %cst_293 {dimension_numbers = #tpu.dot_dimension_numbers<[1], [1], [0], [0], [0, 0, 1, 0], [], []>} : vector<8x16xbf16>, vector<8x16xbf16>, vector<8x8xf32> -> vector<8x8xf32>
    %c3_294 = arith.constant 3 : index
    %c0_295 = arith.constant 0 : index
    %c0_296 = arith.constant 0 : index
    %521 = vector.load %arg24[%c3_294, %c0_295, %c0_296] : memref<4x8x8xf32, #tpu.memory_space<vmem>>, vector<1x8x8xf32>
    %522 = vector.shape_cast %521 : vector<1x8x8xf32> to vector<8x8xf32>
    %523 = arith.addf %520, %522 : vector<8x8xf32>
    %cst_297 = arith.constant dense<0xFF800000> : vector<8xf32>
    %524 = vector.multi_reduction <maximumf>, %523, %cst_297 [1] : vector<8x8xf32> to vector<8xf32>
    %525 = vector.shape_cast %524 : vector<8xf32> to vector<8x1xf32>
    %526 = vector.broadcast %525 : vector<8x1xf32> to vector<8x8xf32>
    %527 = arith.subf %523, %526 : vector<8x8xf32>
    %528 = math.exp %527 : vector<8x8xf32>
    %cst_298 = arith.constant dense<0.000000e+00> : vector<8xf32>
    %529 = vector.multi_reduction <add>, %528, %cst_298 [1] : vector<8x8xf32> to vector<8xf32>
    %530 = vector.shape_cast %529 : vector<8xf32> to vector<8x1xf32>
    %531 = vector.broadcast %530 : vector<8x1xf32> to vector<8x8xf32>
    %532 = arith.divf %528, %531 : vector<8x8xf32>
    %533 = arith.truncf %532 : vector<8x8xf32> to vector<8x8xbf16>
    %cst_299 = arith.constant dense<0.000000e+00> : vector<8x16xf32>
    %534 = tpu.matmul %533, %519, %cst_299 {dimension_numbers = #tpu.dot_dimension_numbers<[1], [0], [0], [1], [0, 0, 1, 1], [], []>} : vector<8x8xbf16>, vector<8x16xbf16>, vector<8x16xf32> -> vector<8x16xf32>
    %535 = arith.truncf %534 : vector<8x16xf32> to vector<8x16xbf16>
    %c3_300 = arith.constant 3 : index
    %c0_301 = arith.constant 0 : index
    %c0_302 = arith.constant 0 : index
    %536 = vector.load %arg25[%c3_300, %c0_301, %c0_302] : memref<4x16x64xbf16, #tpu.memory_space<vmem>>, vector<1x16x64xbf16>
    %537 = vector.shape_cast %536 : vector<1x16x64xbf16> to vector<16x64xbf16>
    %cst_303 = arith.constant dense<0.000000e+00> : vector<8x64xf32>
    %538 = tpu.matmul %535, %537, %cst_303 {dimension_numbers = #tpu.dot_dimension_numbers<[1], [0], [0], [1], [0, 0, 1, 1], [], []>} : vector<8x16xbf16>, vector<16x64xbf16>, vector<8x64xf32> -> vector<8x64xf32>
    %539 = arith.addf %504, %538 : vector<8x64xf32>
    %540 = arith.addf %372, %539 : vector<8x64xf32>
    %541 = vector.extract_strided_slice %374 {offsets = [4, 0], sizes = [1, 64], strides = [1, 1]} : vector<6x64xf32> to vector<1x64xf32>
    %542 = vector.broadcast %541 : vector<1x64xf32> to vector<8x64xf32>
    %543 = arith.addf %540, %542 : vector<8x64xf32>
    %544 = vector.extract_strided_slice %374 {offsets = [2, 0], sizes = [1, 64], strides = [1, 1]} : vector<6x64xf32> to vector<1x64xf32>
    %545 = vector.extract_strided_slice %374 {offsets = [3, 0], sizes = [1, 64], strides = [1, 1]} : vector<6x64xf32> to vector<1x64xf32>
    %cst_304 = arith.constant dense<0.000000e+00> : vector<8xf32>
    %546 = vector.multi_reduction <add>, %543, %cst_304 [1] : vector<8x64xf32> to vector<8xf32>
    %547 = vector.shape_cast %546 : vector<8xf32> to vector<8x1xf32>
    %cst_305 = arith.constant 6.400000e+01 : f32
    %548 = vector.broadcast %cst_305 : f32 to vector<8x1xf32>
    %549 = arith.divf %547, %548 : vector<8x1xf32>
    %550 = vector.broadcast %549 : vector<8x1xf32> to vector<8x64xf32>
    %551 = arith.subf %543, %550 : vector<8x64xf32>
    %552 = arith.mulf %551, %551 : vector<8x64xf32>
    %cst_306 = arith.constant dense<0.000000e+00> : vector<8xf32>
    %553 = vector.multi_reduction <add>, %552, %cst_306 [1] : vector<8x64xf32> to vector<8xf32>
    %554 = vector.shape_cast %553 : vector<8xf32> to vector<8x1xf32>
    %cst_307 = arith.constant 6.400000e+01 : f32
    %555 = vector.broadcast %cst_307 : f32 to vector<8x1xf32>
    %556 = arith.divf %554, %555 : vector<8x1xf32>
    %557 = vector.broadcast %549 : vector<8x1xf32> to vector<8x64xf32>
    %558 = arith.subf %543, %557 : vector<8x64xf32>
    %cst_308 = arith.constant 9.99999974E-6 : f32
    %559 = vector.broadcast %cst_308 : f32 to vector<8x1xf32>
    %560 = arith.addf %556, %559 : vector<8x1xf32>
    %561 = math.rsqrt %560 : vector<8x1xf32>
    %562 = vector.broadcast %561 : vector<8x1xf32> to vector<8x64xf32>
    %563 = arith.mulf %558, %562 : vector<8x64xf32>
    %564 = vector.broadcast %544 : vector<1x64xf32> to vector<8x64xf32>
    %565 = arith.mulf %563, %564 : vector<8x64xf32>
    %566 = vector.broadcast %545 : vector<1x64xf32> to vector<8x64xf32>
    %567 = arith.addf %565, %566 : vector<8x64xf32>
    %568 = arith.truncf %567 : vector<8x64xf32> to vector<8x64xbf16>
    %c0_309 = arith.constant 0 : index
    %c0_310 = arith.constant 0 : index
    %569 = vector.load %arg26[%c0_309, %c0_310] : memref<64x256xbf16, #tpu.memory_space<vmem>>, vector<64x256xbf16>
    %cst_311 = arith.constant dense<0.000000e+00> : vector<8x256xf32>
    %570 = tpu.matmul %568, %569, %cst_311 {dimension_numbers = #tpu.dot_dimension_numbers<[1], [0], [0], [1], [0, 0, 1, 1], [], []>} : vector<8x64xbf16>, vector<64x256xbf16>, vector<8x256xf32> -> vector<8x256xf32>
    %571 = vector.broadcast %375 : vector<1x256xf32> to vector<8x256xf32>
    %572 = arith.addf %570, %571 : vector<8x256xf32>
    %573 = arith.mulf %572, %572 : vector<8x256xf32>
    %574 = arith.mulf %572, %573 : vector<8x256xf32>
    %cst_312 = arith.constant 4.471500e-02 : f32
    %575 = vector.broadcast %cst_312 : f32 to vector<8x256xf32>
    %576 = arith.mulf %575, %574 : vector<8x256xf32>
    %577 = arith.addf %572, %576 : vector<8x256xf32>
    %cst_313 = arith.constant 0.797884583 : f32
    %578 = vector.broadcast %cst_313 : f32 to vector<8x256xf32>
    %579 = arith.mulf %578, %577 : vector<8x256xf32>
    %580 = math.tanh %579 : vector<8x256xf32>
    %cst_314 = arith.constant 1.000000e+00 : f32
    %581 = vector.broadcast %cst_314 : f32 to vector<8x256xf32>
    %582 = arith.addf %581, %580 : vector<8x256xf32>
    %cst_315 = arith.constant 5.000000e-01 : f32
    %583 = vector.broadcast %cst_315 : f32 to vector<8x256xf32>
    %584 = arith.mulf %583, %582 : vector<8x256xf32>
    %585 = arith.mulf %572, %584 : vector<8x256xf32>
    %586 = arith.truncf %585 : vector<8x256xf32> to vector<8x256xbf16>
    %c0_316 = arith.constant 0 : index
    %c0_317 = arith.constant 0 : index
    %587 = vector.load %arg27[%c0_316, %c0_317] : memref<256x64xbf16, #tpu.memory_space<vmem>>, vector<256x64xbf16>
    %cst_318 = arith.constant dense<0.000000e+00> : vector<8x64xf32>
    %588 = tpu.matmul %586, %587, %cst_318 {dimension_numbers = #tpu.dot_dimension_numbers<[1], [0], [0], [1], [0, 0, 1, 1], [], []>} : vector<8x256xbf16>, vector<256x64xbf16>, vector<8x64xf32> -> vector<8x64xf32>
    %589 = arith.addf %543, %588 : vector<8x64xf32>
    %590 = vector.extract_strided_slice %374 {offsets = [5, 0], sizes = [1, 64], strides = [1, 1]} : vector<6x64xf32> to vector<1x64xf32>
    %591 = vector.broadcast %590 : vector<1x64xf32> to vector<8x64xf32>
    %592 = arith.addf %589, %591 : vector<8x64xf32>
    %c0_319 = arith.constant 0 : index
    %c0_320 = arith.constant 0 : index
    %593 = vector.load %arg31[%c0_319, %c0_320] : memref<4x16xf32, #tpu.memory_space<vmem>>, vector<4x16xf32>
    %c0_321 = arith.constant 0 : index
    %c0_322 = arith.constant 0 : index
    %594 = vector.load %arg36[%c0_321, %c0_322] : memref<6x64xf32, #tpu.memory_space<vmem>>, vector<6x64xf32>
    %c0_323 = arith.constant 0 : index
    %c0_324 = arith.constant 0 : index
    %595 = vector.load %arg37[%c0_323, %c0_324] : memref<1x256xf32, #tpu.memory_space<vmem>>, vector<1x256xf32>
    %596 = vector.extract_strided_slice %594 {offsets = [0, 0], sizes = [1, 64], strides = [1, 1]} : vector<6x64xf32> to vector<1x64xf32>
    %597 = vector.extract_strided_slice %594 {offsets = [1, 0], sizes = [1, 64], strides = [1, 1]} : vector<6x64xf32> to vector<1x64xf32>
    %cst_325 = arith.constant dense<0.000000e+00> : vector<8xf32>
    %598 = vector.multi_reduction <add>, %592, %cst_325 [1] : vector<8x64xf32> to vector<8xf32>
    %599 = vector.shape_cast %598 : vector<8xf32> to vector<8x1xf32>
    %cst_326 = arith.constant 6.400000e+01 : f32
    %600 = vector.broadcast %cst_326 : f32 to vector<8x1xf32>
    %601 = arith.divf %599, %600 : vector<8x1xf32>
    %602 = vector.broadcast %601 : vector<8x1xf32> to vector<8x64xf32>
    %603 = arith.subf %592, %602 : vector<8x64xf32>
    %604 = arith.mulf %603, %603 : vector<8x64xf32>
    %cst_327 = arith.constant dense<0.000000e+00> : vector<8xf32>
    %605 = vector.multi_reduction <add>, %604, %cst_327 [1] : vector<8x64xf32> to vector<8xf32>
    %606 = vector.shape_cast %605 : vector<8xf32> to vector<8x1xf32>
    %cst_328 = arith.constant 6.400000e+01 : f32
    %607 = vector.broadcast %cst_328 : f32 to vector<8x1xf32>
    %608 = arith.divf %606, %607 : vector<8x1xf32>
    %609 = vector.broadcast %601 : vector<8x1xf32> to vector<8x64xf32>
    %610 = arith.subf %592, %609 : vector<8x64xf32>
    %cst_329 = arith.constant 9.99999974E-6 : f32
    %611 = vector.broadcast %cst_329 : f32 to vector<8x1xf32>
    %612 = arith.addf %608, %611 : vector<8x1xf32>
    %613 = math.rsqrt %612 : vector<8x1xf32>
    %614 = vector.broadcast %613 : vector<8x1xf32> to vector<8x64xf32>
    %615 = arith.mulf %610, %614 : vector<8x64xf32>
    %616 = vector.broadcast %596 : vector<1x64xf32> to vector<8x64xf32>
    %617 = arith.mulf %615, %616 : vector<8x64xf32>
    %618 = vector.broadcast %597 : vector<1x64xf32> to vector<8x64xf32>
    %619 = arith.addf %617, %618 : vector<8x64xf32>
    %620 = arith.truncf %619 : vector<8x64xf32> to vector<8x64xbf16>
    %c0_330 = arith.constant 0 : index
    %c0_331 = arith.constant 0 : index
    %c0_332 = arith.constant 0 : index
    %c0_333 = arith.constant 0 : index
    %621 = vector.load %arg30[%c0_330, %c0_331, %c0_332, %c0_333] : memref<3x4x64x16xbf16, #tpu.memory_space<vmem>>, vector<1x1x64x16xbf16>
    %622 = vector.shape_cast %621 : vector<1x1x64x16xbf16> to vector<64x16xbf16>
    %cst_334 = arith.constant dense<0.000000e+00> : vector<8x16xf32>
    %623 = tpu.matmul %620, %622, %cst_334 {dimension_numbers = #tpu.dot_dimension_numbers<[1], [0], [0], [1], [0, 0, 1, 1], [], []>} : vector<8x64xbf16>, vector<64x16xbf16>, vector<8x16xf32> -> vector<8x16xf32>
    %624 = vector.extract_strided_slice %593 {offsets = [0, 0], sizes = [1, 16], strides = [1, 1]} : vector<4x16xf32> to vector<1x16xf32>
    %625 = vector.broadcast %624 : vector<1x16xf32> to vector<8x16xf32>
    %626 = arith.addf %623, %625 : vector<8x16xf32>
    %627 = arith.truncf %626 : vector<8x16xf32> to vector<8x16xbf16>
    %c1_335 = arith.constant 1 : index
    %c0_336 = arith.constant 0 : index
    %c0_337 = arith.constant 0 : index
    %c0_338 = arith.constant 0 : index
    %628 = vector.load %arg30[%c1_335, %c0_336, %c0_337, %c0_338] : memref<3x4x64x16xbf16, #tpu.memory_space<vmem>>, vector<1x1x64x16xbf16>
    %629 = vector.shape_cast %628 : vector<1x1x64x16xbf16> to vector<64x16xbf16>
    %cst_339 = arith.constant dense<0.000000e+00> : vector<8x16xf32>
    %630 = tpu.matmul %620, %629, %cst_339 {dimension_numbers = #tpu.dot_dimension_numbers<[1], [0], [0], [1], [0, 0, 1, 1], [], []>} : vector<8x64xbf16>, vector<64x16xbf16>, vector<8x16xf32> -> vector<8x16xf32>
    %631 = arith.truncf %630 : vector<8x16xf32> to vector<8x16xbf16>
    %c2_340 = arith.constant 2 : index
    %c0_341 = arith.constant 0 : index
    %c0_342 = arith.constant 0 : index
    %c0_343 = arith.constant 0 : index
    %632 = vector.load %arg30[%c2_340, %c0_341, %c0_342, %c0_343] : memref<3x4x64x16xbf16, #tpu.memory_space<vmem>>, vector<1x1x64x16xbf16>
    %633 = vector.shape_cast %632 : vector<1x1x64x16xbf16> to vector<64x16xbf16>
    %cst_344 = arith.constant dense<0.000000e+00> : vector<8x16xf32>
    %634 = tpu.matmul %620, %633, %cst_344 {dimension_numbers = #tpu.dot_dimension_numbers<[1], [0], [0], [1], [0, 0, 1, 1], [], []>} : vector<8x64xbf16>, vector<64x16xbf16>, vector<8x16xf32> -> vector<8x16xf32>
    %635 = arith.truncf %634 : vector<8x16xf32> to vector<8x16xbf16>
    %cst_345 = arith.constant dense<0.000000e+00> : vector<8x8xf32>
    %636 = tpu.matmul %627, %631, %cst_345 {dimension_numbers = #tpu.dot_dimension_numbers<[1], [1], [0], [0], [0, 0, 1, 0], [], []>} : vector<8x16xbf16>, vector<8x16xbf16>, vector<8x8xf32> -> vector<8x8xf32>
    %c0_346 = arith.constant 0 : index
    %c0_347 = arith.constant 0 : index
    %c0_348 = arith.constant 0 : index
    %637 = vector.load %arg32[%c0_346, %c0_347, %c0_348] : memref<4x8x8xf32, #tpu.memory_space<vmem>>, vector<1x8x8xf32>
    %638 = vector.shape_cast %637 : vector<1x8x8xf32> to vector<8x8xf32>
    %639 = arith.addf %636, %638 : vector<8x8xf32>
    %cst_349 = arith.constant dense<0xFF800000> : vector<8xf32>
    %640 = vector.multi_reduction <maximumf>, %639, %cst_349 [1] : vector<8x8xf32> to vector<8xf32>
    %641 = vector.shape_cast %640 : vector<8xf32> to vector<8x1xf32>
    %642 = vector.broadcast %641 : vector<8x1xf32> to vector<8x8xf32>
    %643 = arith.subf %639, %642 : vector<8x8xf32>
    %644 = math.exp %643 : vector<8x8xf32>
    %cst_350 = arith.constant dense<0.000000e+00> : vector<8xf32>
    %645 = vector.multi_reduction <add>, %644, %cst_350 [1] : vector<8x8xf32> to vector<8xf32>
    %646 = vector.shape_cast %645 : vector<8xf32> to vector<8x1xf32>
    %647 = vector.broadcast %646 : vector<8x1xf32> to vector<8x8xf32>
    %648 = arith.divf %644, %647 : vector<8x8xf32>
    %649 = arith.truncf %648 : vector<8x8xf32> to vector<8x8xbf16>
    %cst_351 = arith.constant dense<0.000000e+00> : vector<8x16xf32>
    %650 = tpu.matmul %649, %635, %cst_351 {dimension_numbers = #tpu.dot_dimension_numbers<[1], [0], [0], [1], [0, 0, 1, 1], [], []>} : vector<8x8xbf16>, vector<8x16xbf16>, vector<8x16xf32> -> vector<8x16xf32>
    %651 = arith.truncf %650 : vector<8x16xf32> to vector<8x16xbf16>
    %c0_352 = arith.constant 0 : index
    %c0_353 = arith.constant 0 : index
    %c0_354 = arith.constant 0 : index
    %652 = vector.load %arg33[%c0_352, %c0_353, %c0_354] : memref<4x16x64xbf16, #tpu.memory_space<vmem>>, vector<1x16x64xbf16>
    %653 = vector.shape_cast %652 : vector<1x16x64xbf16> to vector<16x64xbf16>
    %cst_355 = arith.constant dense<0.000000e+00> : vector<8x64xf32>
    %654 = tpu.matmul %651, %653, %cst_355 {dimension_numbers = #tpu.dot_dimension_numbers<[1], [0], [0], [1], [0, 0, 1, 1], [], []>} : vector<8x16xbf16>, vector<16x64xbf16>, vector<8x64xf32> -> vector<8x64xf32>
    %c0_356 = arith.constant 0 : index
    %c1_357 = arith.constant 1 : index
    %c0_358 = arith.constant 0 : index
    %c0_359 = arith.constant 0 : index
    %655 = vector.load %arg30[%c0_356, %c1_357, %c0_358, %c0_359] : memref<3x4x64x16xbf16, #tpu.memory_space<vmem>>, vector<1x1x64x16xbf16>
    %656 = vector.shape_cast %655 : vector<1x1x64x16xbf16> to vector<64x16xbf16>
    %cst_360 = arith.constant dense<0.000000e+00> : vector<8x16xf32>
    %657 = tpu.matmul %620, %656, %cst_360 {dimension_numbers = #tpu.dot_dimension_numbers<[1], [0], [0], [1], [0, 0, 1, 1], [], []>} : vector<8x64xbf16>, vector<64x16xbf16>, vector<8x16xf32> -> vector<8x16xf32>
    %658 = vector.extract_strided_slice %593 {offsets = [1, 0], sizes = [1, 16], strides = [1, 1]} : vector<4x16xf32> to vector<1x16xf32>
    %659 = vector.broadcast %658 : vector<1x16xf32> to vector<8x16xf32>
    %660 = arith.addf %657, %659 : vector<8x16xf32>
    %661 = arith.truncf %660 : vector<8x16xf32> to vector<8x16xbf16>
    %c1_361 = arith.constant 1 : index
    %c1_362 = arith.constant 1 : index
    %c0_363 = arith.constant 0 : index
    %c0_364 = arith.constant 0 : index
    %662 = vector.load %arg30[%c1_361, %c1_362, %c0_363, %c0_364] : memref<3x4x64x16xbf16, #tpu.memory_space<vmem>>, vector<1x1x64x16xbf16>
    %663 = vector.shape_cast %662 : vector<1x1x64x16xbf16> to vector<64x16xbf16>
    %cst_365 = arith.constant dense<0.000000e+00> : vector<8x16xf32>
    %664 = tpu.matmul %620, %663, %cst_365 {dimension_numbers = #tpu.dot_dimension_numbers<[1], [0], [0], [1], [0, 0, 1, 1], [], []>} : vector<8x64xbf16>, vector<64x16xbf16>, vector<8x16xf32> -> vector<8x16xf32>
    %665 = arith.truncf %664 : vector<8x16xf32> to vector<8x16xbf16>
    %c2_366 = arith.constant 2 : index
    %c1_367 = arith.constant 1 : index
    %c0_368 = arith.constant 0 : index
    %c0_369 = arith.constant 0 : index
    %666 = vector.load %arg30[%c2_366, %c1_367, %c0_368, %c0_369] : memref<3x4x64x16xbf16, #tpu.memory_space<vmem>>, vector<1x1x64x16xbf16>
    %667 = vector.shape_cast %666 : vector<1x1x64x16xbf16> to vector<64x16xbf16>
    %cst_370 = arith.constant dense<0.000000e+00> : vector<8x16xf32>
    %668 = tpu.matmul %620, %667, %cst_370 {dimension_numbers = #tpu.dot_dimension_numbers<[1], [0], [0], [1], [0, 0, 1, 1], [], []>} : vector<8x64xbf16>, vector<64x16xbf16>, vector<8x16xf32> -> vector<8x16xf32>
    %669 = arith.truncf %668 : vector<8x16xf32> to vector<8x16xbf16>
    %cst_371 = arith.constant dense<0.000000e+00> : vector<8x8xf32>
    %670 = tpu.matmul %661, %665, %cst_371 {dimension_numbers = #tpu.dot_dimension_numbers<[1], [1], [0], [0], [0, 0, 1, 0], [], []>} : vector<8x16xbf16>, vector<8x16xbf16>, vector<8x8xf32> -> vector<8x8xf32>
    %c1_372 = arith.constant 1 : index
    %c0_373 = arith.constant 0 : index
    %c0_374 = arith.constant 0 : index
    %671 = vector.load %arg32[%c1_372, %c0_373, %c0_374] : memref<4x8x8xf32, #tpu.memory_space<vmem>>, vector<1x8x8xf32>
    %672 = vector.shape_cast %671 : vector<1x8x8xf32> to vector<8x8xf32>
    %673 = arith.addf %670, %672 : vector<8x8xf32>
    %cst_375 = arith.constant dense<0xFF800000> : vector<8xf32>
    %674 = vector.multi_reduction <maximumf>, %673, %cst_375 [1] : vector<8x8xf32> to vector<8xf32>
    %675 = vector.shape_cast %674 : vector<8xf32> to vector<8x1xf32>
    %676 = vector.broadcast %675 : vector<8x1xf32> to vector<8x8xf32>
    %677 = arith.subf %673, %676 : vector<8x8xf32>
    %678 = math.exp %677 : vector<8x8xf32>
    %cst_376 = arith.constant dense<0.000000e+00> : vector<8xf32>
    %679 = vector.multi_reduction <add>, %678, %cst_376 [1] : vector<8x8xf32> to vector<8xf32>
    %680 = vector.shape_cast %679 : vector<8xf32> to vector<8x1xf32>
    %681 = vector.broadcast %680 : vector<8x1xf32> to vector<8x8xf32>
    %682 = arith.divf %678, %681 : vector<8x8xf32>
    %683 = arith.truncf %682 : vector<8x8xf32> to vector<8x8xbf16>
    %cst_377 = arith.constant dense<0.000000e+00> : vector<8x16xf32>
    %684 = tpu.matmul %683, %669, %cst_377 {dimension_numbers = #tpu.dot_dimension_numbers<[1], [0], [0], [1], [0, 0, 1, 1], [], []>} : vector<8x8xbf16>, vector<8x16xbf16>, vector<8x16xf32> -> vector<8x16xf32>
    %685 = arith.truncf %684 : vector<8x16xf32> to vector<8x16xbf16>
    %c1_378 = arith.constant 1 : index
    %c0_379 = arith.constant 0 : index
    %c0_380 = arith.constant 0 : index
    %686 = vector.load %arg33[%c1_378, %c0_379, %c0_380] : memref<4x16x64xbf16, #tpu.memory_space<vmem>>, vector<1x16x64xbf16>
    %687 = vector.shape_cast %686 : vector<1x16x64xbf16> to vector<16x64xbf16>
    %cst_381 = arith.constant dense<0.000000e+00> : vector<8x64xf32>
    %688 = tpu.matmul %685, %687, %cst_381 {dimension_numbers = #tpu.dot_dimension_numbers<[1], [0], [0], [1], [0, 0, 1, 1], [], []>} : vector<8x16xbf16>, vector<16x64xbf16>, vector<8x64xf32> -> vector<8x64xf32>
    %689 = arith.addf %654, %688 : vector<8x64xf32>
    %c0_382 = arith.constant 0 : index
    %c2_383 = arith.constant 2 : index
    %c0_384 = arith.constant 0 : index
    %c0_385 = arith.constant 0 : index
    %690 = vector.load %arg30[%c0_382, %c2_383, %c0_384, %c0_385] : memref<3x4x64x16xbf16, #tpu.memory_space<vmem>>, vector<1x1x64x16xbf16>
    %691 = vector.shape_cast %690 : vector<1x1x64x16xbf16> to vector<64x16xbf16>
    %cst_386 = arith.constant dense<0.000000e+00> : vector<8x16xf32>
    %692 = tpu.matmul %620, %691, %cst_386 {dimension_numbers = #tpu.dot_dimension_numbers<[1], [0], [0], [1], [0, 0, 1, 1], [], []>} : vector<8x64xbf16>, vector<64x16xbf16>, vector<8x16xf32> -> vector<8x16xf32>
    %693 = vector.extract_strided_slice %593 {offsets = [2, 0], sizes = [1, 16], strides = [1, 1]} : vector<4x16xf32> to vector<1x16xf32>
    %694 = vector.broadcast %693 : vector<1x16xf32> to vector<8x16xf32>
    %695 = arith.addf %692, %694 : vector<8x16xf32>
    %696 = arith.truncf %695 : vector<8x16xf32> to vector<8x16xbf16>
    %c1_387 = arith.constant 1 : index
    %c2_388 = arith.constant 2 : index
    %c0_389 = arith.constant 0 : index
    %c0_390 = arith.constant 0 : index
    %697 = vector.load %arg30[%c1_387, %c2_388, %c0_389, %c0_390] : memref<3x4x64x16xbf16, #tpu.memory_space<vmem>>, vector<1x1x64x16xbf16>
    %698 = vector.shape_cast %697 : vector<1x1x64x16xbf16> to vector<64x16xbf16>
    %cst_391 = arith.constant dense<0.000000e+00> : vector<8x16xf32>
    %699 = tpu.matmul %620, %698, %cst_391 {dimension_numbers = #tpu.dot_dimension_numbers<[1], [0], [0], [1], [0, 0, 1, 1], [], []>} : vector<8x64xbf16>, vector<64x16xbf16>, vector<8x16xf32> -> vector<8x16xf32>
    %700 = arith.truncf %699 : vector<8x16xf32> to vector<8x16xbf16>
    %c2_392 = arith.constant 2 : index
    %c2_393 = arith.constant 2 : index
    %c0_394 = arith.constant 0 : index
    %c0_395 = arith.constant 0 : index
    %701 = vector.load %arg30[%c2_392, %c2_393, %c0_394, %c0_395] : memref<3x4x64x16xbf16, #tpu.memory_space<vmem>>, vector<1x1x64x16xbf16>
    %702 = vector.shape_cast %701 : vector<1x1x64x16xbf16> to vector<64x16xbf16>
    %cst_396 = arith.constant dense<0.000000e+00> : vector<8x16xf32>
    %703 = tpu.matmul %620, %702, %cst_396 {dimension_numbers = #tpu.dot_dimension_numbers<[1], [0], [0], [1], [0, 0, 1, 1], [], []>} : vector<8x64xbf16>, vector<64x16xbf16>, vector<8x16xf32> -> vector<8x16xf32>
    %704 = arith.truncf %703 : vector<8x16xf32> to vector<8x16xbf16>
    %cst_397 = arith.constant dense<0.000000e+00> : vector<8x8xf32>
    %705 = tpu.matmul %696, %700, %cst_397 {dimension_numbers = #tpu.dot_dimension_numbers<[1], [1], [0], [0], [0, 0, 1, 0], [], []>} : vector<8x16xbf16>, vector<8x16xbf16>, vector<8x8xf32> -> vector<8x8xf32>
    %c2_398 = arith.constant 2 : index
    %c0_399 = arith.constant 0 : index
    %c0_400 = arith.constant 0 : index
    %706 = vector.load %arg32[%c2_398, %c0_399, %c0_400] : memref<4x8x8xf32, #tpu.memory_space<vmem>>, vector<1x8x8xf32>
    %707 = vector.shape_cast %706 : vector<1x8x8xf32> to vector<8x8xf32>
    %708 = arith.addf %705, %707 : vector<8x8xf32>
    %cst_401 = arith.constant dense<0xFF800000> : vector<8xf32>
    %709 = vector.multi_reduction <maximumf>, %708, %cst_401 [1] : vector<8x8xf32> to vector<8xf32>
    %710 = vector.shape_cast %709 : vector<8xf32> to vector<8x1xf32>
    %711 = vector.broadcast %710 : vector<8x1xf32> to vector<8x8xf32>
    %712 = arith.subf %708, %711 : vector<8x8xf32>
    %713 = math.exp %712 : vector<8x8xf32>
    %cst_402 = arith.constant dense<0.000000e+00> : vector<8xf32>
    %714 = vector.multi_reduction <add>, %713, %cst_402 [1] : vector<8x8xf32> to vector<8xf32>
    %715 = vector.shape_cast %714 : vector<8xf32> to vector<8x1xf32>
    %716 = vector.broadcast %715 : vector<8x1xf32> to vector<8x8xf32>
    %717 = arith.divf %713, %716 : vector<8x8xf32>
    %718 = arith.truncf %717 : vector<8x8xf32> to vector<8x8xbf16>
    %cst_403 = arith.constant dense<0.000000e+00> : vector<8x16xf32>
    %719 = tpu.matmul %718, %704, %cst_403 {dimension_numbers = #tpu.dot_dimension_numbers<[1], [0], [0], [1], [0, 0, 1, 1], [], []>} : vector<8x8xbf16>, vector<8x16xbf16>, vector<8x16xf32> -> vector<8x16xf32>
    %720 = arith.truncf %719 : vector<8x16xf32> to vector<8x16xbf16>
    %c2_404 = arith.constant 2 : index
    %c0_405 = arith.constant 0 : index
    %c0_406 = arith.constant 0 : index
    %721 = vector.load %arg33[%c2_404, %c0_405, %c0_406] : memref<4x16x64xbf16, #tpu.memory_space<vmem>>, vector<1x16x64xbf16>
    %722 = vector.shape_cast %721 : vector<1x16x64xbf16> to vector<16x64xbf16>
    %cst_407 = arith.constant dense<0.000000e+00> : vector<8x64xf32>
    %723 = tpu.matmul %720, %722, %cst_407 {dimension_numbers = #tpu.dot_dimension_numbers<[1], [0], [0], [1], [0, 0, 1, 1], [], []>} : vector<8x16xbf16>, vector<16x64xbf16>, vector<8x64xf32> -> vector<8x64xf32>
    %724 = arith.addf %689, %723 : vector<8x64xf32>
    %c0_408 = arith.constant 0 : index
    %c3_409 = arith.constant 3 : index
    %c0_410 = arith.constant 0 : index
    %c0_411 = arith.constant 0 : index
    %725 = vector.load %arg30[%c0_408, %c3_409, %c0_410, %c0_411] : memref<3x4x64x16xbf16, #tpu.memory_space<vmem>>, vector<1x1x64x16xbf16>
    %726 = vector.shape_cast %725 : vector<1x1x64x16xbf16> to vector<64x16xbf16>
    %cst_412 = arith.constant dense<0.000000e+00> : vector<8x16xf32>
    %727 = tpu.matmul %620, %726, %cst_412 {dimension_numbers = #tpu.dot_dimension_numbers<[1], [0], [0], [1], [0, 0, 1, 1], [], []>} : vector<8x64xbf16>, vector<64x16xbf16>, vector<8x16xf32> -> vector<8x16xf32>
    %728 = vector.extract_strided_slice %593 {offsets = [3, 0], sizes = [1, 16], strides = [1, 1]} : vector<4x16xf32> to vector<1x16xf32>
    %729 = vector.broadcast %728 : vector<1x16xf32> to vector<8x16xf32>
    %730 = arith.addf %727, %729 : vector<8x16xf32>
    %731 = arith.truncf %730 : vector<8x16xf32> to vector<8x16xbf16>
    %c1_413 = arith.constant 1 : index
    %c3_414 = arith.constant 3 : index
    %c0_415 = arith.constant 0 : index
    %c0_416 = arith.constant 0 : index
    %732 = vector.load %arg30[%c1_413, %c3_414, %c0_415, %c0_416] : memref<3x4x64x16xbf16, #tpu.memory_space<vmem>>, vector<1x1x64x16xbf16>
    %733 = vector.shape_cast %732 : vector<1x1x64x16xbf16> to vector<64x16xbf16>
    %cst_417 = arith.constant dense<0.000000e+00> : vector<8x16xf32>
    %734 = tpu.matmul %620, %733, %cst_417 {dimension_numbers = #tpu.dot_dimension_numbers<[1], [0], [0], [1], [0, 0, 1, 1], [], []>} : vector<8x64xbf16>, vector<64x16xbf16>, vector<8x16xf32> -> vector<8x16xf32>
    %735 = arith.truncf %734 : vector<8x16xf32> to vector<8x16xbf16>
    %c2_418 = arith.constant 2 : index
    %c3_419 = arith.constant 3 : index
    %c0_420 = arith.constant 0 : index
    %c0_421 = arith.constant 0 : index
    %736 = vector.load %arg30[%c2_418, %c3_419, %c0_420, %c0_421] : memref<3x4x64x16xbf16, #tpu.memory_space<vmem>>, vector<1x1x64x16xbf16>
    %737 = vector.shape_cast %736 : vector<1x1x64x16xbf16> to vector<64x16xbf16>
    %cst_422 = arith.constant dense<0.000000e+00> : vector<8x16xf32>
    %738 = tpu.matmul %620, %737, %cst_422 {dimension_numbers = #tpu.dot_dimension_numbers<[1], [0], [0], [1], [0, 0, 1, 1], [], []>} : vector<8x64xbf16>, vector<64x16xbf16>, vector<8x16xf32> -> vector<8x16xf32>
    %739 = arith.truncf %738 : vector<8x16xf32> to vector<8x16xbf16>
    %cst_423 = arith.constant dense<0.000000e+00> : vector<8x8xf32>
    %740 = tpu.matmul %731, %735, %cst_423 {dimension_numbers = #tpu.dot_dimension_numbers<[1], [1], [0], [0], [0, 0, 1, 0], [], []>} : vector<8x16xbf16>, vector<8x16xbf16>, vector<8x8xf32> -> vector<8x8xf32>
    %c3_424 = arith.constant 3 : index
    %c0_425 = arith.constant 0 : index
    %c0_426 = arith.constant 0 : index
    %741 = vector.load %arg32[%c3_424, %c0_425, %c0_426] : memref<4x8x8xf32, #tpu.memory_space<vmem>>, vector<1x8x8xf32>
    %742 = vector.shape_cast %741 : vector<1x8x8xf32> to vector<8x8xf32>
    %743 = arith.addf %740, %742 : vector<8x8xf32>
    %cst_427 = arith.constant dense<0xFF800000> : vector<8xf32>
    %744 = vector.multi_reduction <maximumf>, %743, %cst_427 [1] : vector<8x8xf32> to vector<8xf32>
    %745 = vector.shape_cast %744 : vector<8xf32> to vector<8x1xf32>
    %746 = vector.broadcast %745 : vector<8x1xf32> to vector<8x8xf32>
    %747 = arith.subf %743, %746 : vector<8x8xf32>
    %748 = math.exp %747 : vector<8x8xf32>
    %cst_428 = arith.constant dense<0.000000e+00> : vector<8xf32>
    %749 = vector.multi_reduction <add>, %748, %cst_428 [1] : vector<8x8xf32> to vector<8xf32>
    %750 = vector.shape_cast %749 : vector<8xf32> to vector<8x1xf32>
    %751 = vector.broadcast %750 : vector<8x1xf32> to vector<8x8xf32>
    %752 = arith.divf %748, %751 : vector<8x8xf32>
    %753 = arith.truncf %752 : vector<8x8xf32> to vector<8x8xbf16>
    %cst_429 = arith.constant dense<0.000000e+00> : vector<8x16xf32>
    %754 = tpu.matmul %753, %739, %cst_429 {dimension_numbers = #tpu.dot_dimension_numbers<[1], [0], [0], [1], [0, 0, 1, 1], [], []>} : vector<8x8xbf16>, vector<8x16xbf16>, vector<8x16xf32> -> vector<8x16xf32>
    %755 = arith.truncf %754 : vector<8x16xf32> to vector<8x16xbf16>
    %c3_430 = arith.constant 3 : index
    %c0_431 = arith.constant 0 : index
    %c0_432 = arith.constant 0 : index
    %756 = vector.load %arg33[%c3_430, %c0_431, %c0_432] : memref<4x16x64xbf16, #tpu.memory_space<vmem>>, vector<1x16x64xbf16>
    %757 = vector.shape_cast %756 : vector<1x16x64xbf16> to vector<16x64xbf16>
    %cst_433 = arith.constant dense<0.000000e+00> : vector<8x64xf32>
    %758 = tpu.matmul %755, %757, %cst_433 {dimension_numbers = #tpu.dot_dimension_numbers<[1], [0], [0], [1], [0, 0, 1, 1], [], []>} : vector<8x16xbf16>, vector<16x64xbf16>, vector<8x64xf32> -> vector<8x64xf32>
    %759 = arith.addf %724, %758 : vector<8x64xf32>
    %760 = arith.addf %592, %759 : vector<8x64xf32>
    %761 = vector.extract_strided_slice %594 {offsets = [4, 0], sizes = [1, 64], strides = [1, 1]} : vector<6x64xf32> to vector<1x64xf32>
    %762 = vector.broadcast %761 : vector<1x64xf32> to vector<8x64xf32>
    %763 = arith.addf %760, %762 : vector<8x64xf32>
    %764 = vector.extract_strided_slice %594 {offsets = [2, 0], sizes = [1, 64], strides = [1, 1]} : vector<6x64xf32> to vector<1x64xf32>
    %765 = vector.extract_strided_slice %594 {offsets = [3, 0], sizes = [1, 64], strides = [1, 1]} : vector<6x64xf32> to vector<1x64xf32>
    %cst_434 = arith.constant dense<0.000000e+00> : vector<8xf32>
    %766 = vector.multi_reduction <add>, %763, %cst_434 [1] : vector<8x64xf32> to vector<8xf32>
    %767 = vector.shape_cast %766 : vector<8xf32> to vector<8x1xf32>
    %cst_435 = arith.constant 6.400000e+01 : f32
    %768 = vector.broadcast %cst_435 : f32 to vector<8x1xf32>
    %769 = arith.divf %767, %768 : vector<8x1xf32>
    %770 = vector.broadcast %769 : vector<8x1xf32> to vector<8x64xf32>
    %771 = arith.subf %763, %770 : vector<8x64xf32>
    %772 = arith.mulf %771, %771 : vector<8x64xf32>
    %cst_436 = arith.constant dense<0.000000e+00> : vector<8xf32>
    %773 = vector.multi_reduction <add>, %772, %cst_436 [1] : vector<8x64xf32> to vector<8xf32>
    %774 = vector.shape_cast %773 : vector<8xf32> to vector<8x1xf32>
    %cst_437 = arith.constant 6.400000e+01 : f32
    %775 = vector.broadcast %cst_437 : f32 to vector<8x1xf32>
    %776 = arith.divf %774, %775 : vector<8x1xf32>
    %777 = vector.broadcast %769 : vector<8x1xf32> to vector<8x64xf32>
    %778 = arith.subf %763, %777 : vector<8x64xf32>
    %cst_438 = arith.constant 9.99999974E-6 : f32
    %779 = vector.broadcast %cst_438 : f32 to vector<8x1xf32>
    %780 = arith.addf %776, %779 : vector<8x1xf32>
    %781 = math.rsqrt %780 : vector<8x1xf32>
    %782 = vector.broadcast %781 : vector<8x1xf32> to vector<8x64xf32>
    %783 = arith.mulf %778, %782 : vector<8x64xf32>
    %784 = vector.broadcast %764 : vector<1x64xf32> to vector<8x64xf32>
    %785 = arith.mulf %783, %784 : vector<8x64xf32>
    %786 = vector.broadcast %765 : vector<1x64xf32> to vector<8x64xf32>
    %787 = arith.addf %785, %786 : vector<8x64xf32>
    %788 = arith.truncf %787 : vector<8x64xf32> to vector<8x64xbf16>
    %c0_439 = arith.constant 0 : index
    %c0_440 = arith.constant 0 : index
    %789 = vector.load %arg34[%c0_439, %c0_440] : memref<64x256xbf16, #tpu.memory_space<vmem>>, vector<64x256xbf16>
    %cst_441 = arith.constant dense<0.000000e+00> : vector<8x256xf32>
    %790 = tpu.matmul %788, %789, %cst_441 {dimension_numbers = #tpu.dot_dimension_numbers<[1], [0], [0], [1], [0, 0, 1, 1], [], []>} : vector<8x64xbf16>, vector<64x256xbf16>, vector<8x256xf32> -> vector<8x256xf32>
    %791 = vector.broadcast %595 : vector<1x256xf32> to vector<8x256xf32>
    %792 = arith.addf %790, %791 : vector<8x256xf32>
    %793 = arith.mulf %792, %792 : vector<8x256xf32>
    %794 = arith.mulf %792, %793 : vector<8x256xf32>
    %cst_442 = arith.constant 4.471500e-02 : f32
    %795 = vector.broadcast %cst_442 : f32 to vector<8x256xf32>
    %796 = arith.mulf %795, %794 : vector<8x256xf32>
    %797 = arith.addf %792, %796 : vector<8x256xf32>
    %cst_443 = arith.constant 0.797884583 : f32
    %798 = vector.broadcast %cst_443 : f32 to vector<8x256xf32>
    %799 = arith.mulf %798, %797 : vector<8x256xf32>
    %800 = math.tanh %799 : vector<8x256xf32>
    %cst_444 = arith.constant 1.000000e+00 : f32
    %801 = vector.broadcast %cst_444 : f32 to vector<8x256xf32>
    %802 = arith.addf %801, %800 : vector<8x256xf32>
    %cst_445 = arith.constant 5.000000e-01 : f32
    %803 = vector.broadcast %cst_445 : f32 to vector<8x256xf32>
    %804 = arith.mulf %803, %802 : vector<8x256xf32>
    %805 = arith.mulf %792, %804 : vector<8x256xf32>
    %806 = arith.truncf %805 : vector<8x256xf32> to vector<8x256xbf16>
    %c0_446 = arith.constant 0 : index
    %c0_447 = arith.constant 0 : index
    %807 = vector.load %arg35[%c0_446, %c0_447] : memref<256x64xbf16, #tpu.memory_space<vmem>>, vector<256x64xbf16>
    %cst_448 = arith.constant dense<0.000000e+00> : vector<8x64xf32>
    %808 = tpu.matmul %806, %807, %cst_448 {dimension_numbers = #tpu.dot_dimension_numbers<[1], [0], [0], [1], [0, 0, 1, 1], [], []>} : vector<8x256xbf16>, vector<256x64xbf16>, vector<8x64xf32> -> vector<8x64xf32>
    %809 = arith.addf %763, %808 : vector<8x64xf32>
    %810 = vector.extract_strided_slice %594 {offsets = [5, 0], sizes = [1, 64], strides = [1, 1]} : vector<6x64xf32> to vector<1x64xf32>
    %811 = vector.broadcast %810 : vector<1x64xf32> to vector<8x64xf32>
    %812 = arith.addf %809, %811 : vector<8x64xf32>
    %c0_449 = arith.constant 0 : index
    %c0_450 = arith.constant 0 : index
    %813 = vector.load %arg38[%c0_449, %c0_450] : memref<2x64xf32, #tpu.memory_space<vmem>>, vector<2x64xf32>
    %814 = vector.extract_strided_slice %813 {offsets = [0, 0], sizes = [1, 64], strides = [1, 1]} : vector<2x64xf32> to vector<1x64xf32>
    %815 = vector.extract_strided_slice %813 {offsets = [1, 0], sizes = [1, 64], strides = [1, 1]} : vector<2x64xf32> to vector<1x64xf32>
    %cst_451 = arith.constant dense<0.000000e+00> : vector<8xf32>
    %816 = vector.multi_reduction <add>, %812, %cst_451 [1] : vector<8x64xf32> to vector<8xf32>
    %817 = vector.shape_cast %816 : vector<8xf32> to vector<8x1xf32>
    %cst_452 = arith.constant 6.400000e+01 : f32
    %818 = vector.broadcast %cst_452 : f32 to vector<8x1xf32>
    %819 = arith.divf %817, %818 : vector<8x1xf32>
    %820 = vector.broadcast %819 : vector<8x1xf32> to vector<8x64xf32>
    %821 = arith.subf %812, %820 : vector<8x64xf32>
    %822 = arith.mulf %821, %821 : vector<8x64xf32>
    %cst_453 = arith.constant dense<0.000000e+00> : vector<8xf32>
    %823 = vector.multi_reduction <add>, %822, %cst_453 [1] : vector<8x64xf32> to vector<8xf32>
    %824 = vector.shape_cast %823 : vector<8xf32> to vector<8x1xf32>
    %cst_454 = arith.constant 6.400000e+01 : f32
    %825 = vector.broadcast %cst_454 : f32 to vector<8x1xf32>
    %826 = arith.divf %824, %825 : vector<8x1xf32>
    %827 = vector.broadcast %819 : vector<8x1xf32> to vector<8x64xf32>
    %828 = arith.subf %812, %827 : vector<8x64xf32>
    %cst_455 = arith.constant 9.99999974E-6 : f32
    %829 = vector.broadcast %cst_455 : f32 to vector<8x1xf32>
    %830 = arith.addf %826, %829 : vector<8x1xf32>
    %831 = math.rsqrt %830 : vector<8x1xf32>
    %832 = vector.broadcast %831 : vector<8x1xf32> to vector<8x64xf32>
    %833 = arith.mulf %828, %832 : vector<8x64xf32>
    %834 = vector.broadcast %814 : vector<1x64xf32> to vector<8x64xf32>
    %835 = arith.mulf %833, %834 : vector<8x64xf32>
    %836 = vector.broadcast %815 : vector<1x64xf32> to vector<8x64xf32>
    %837 = arith.addf %835, %836 : vector<8x64xf32>
    %838 = vector.extract_strided_slice %837 {offsets = [0, 0], sizes = [4, 64], strides = [1, 1]} : vector<8x64xf32> to vector<4x64xf32>
    %cst_456 = arith.constant dense<0.000000e+00> : vector<64xf32>
    %839 = vector.multi_reduction <add>, %838, %cst_456 [0] : vector<4x64xf32> to vector<64xf32>
    %840 = vector.shape_cast %839 : vector<64xf32> to vector<1x64xf32>
    %cst_457 = arith.constant 4.000000e+00 : f32
    %841 = vector.broadcast %cst_457 : f32 to vector<1x64xf32>
    %842 = arith.divf %840, %841 : vector<1x64xf32>
    %843 = vector.extract_strided_slice %837 {offsets = [4, 0], sizes = [4, 64], strides = [1, 1]} : vector<8x64xf32> to vector<4x64xf32>
    %cst_458 = arith.constant dense<0.000000e+00> : vector<64xf32>
    %844 = vector.multi_reduction <add>, %843, %cst_458 [0] : vector<4x64xf32> to vector<64xf32>
    %845 = vector.shape_cast %844 : vector<64xf32> to vector<1x64xf32>
    %cst_459 = arith.constant 4.000000e+00 : f32
    %846 = vector.broadcast %cst_459 : f32 to vector<1x64xf32>
    %847 = arith.divf %845, %846 : vector<1x64xf32>
    %848 = tpu.concatenate %842, %847 in 0 : vector<1x64xf32>, vector<1x64xf32> -> vector<2x64xf32>
    %c0_460 = arith.constant 0 : index
    %c0_461 = arith.constant 0 : index
    %849 = vector.load %arg39[%c0_460, %c0_461] : memref<2x64xf32, #tpu.memory_space<vmem>>, vector<2x64xf32>
    tpu.vector_store %arg39[%c0_460, %c0_461], %848 {strides = array<i32>} : memref<2x64xf32, #tpu.memory_space<vmem>>, vector<2x64xf32>,
    return
  }
}

</mosaic_0001>

<llo_original>
// kernel: _lambda_.1
$region0: #{_lambda_.1}
  #allocation0 [shape = 'u32[]', space=smem, size = 0x4, offset = 0x4, fixed_abs, tag = 'smem constant byte address 0x4 - core index']
  #allocation1 [shape = 'u32[72,128]{1,0:T(1,128)}', space=vmem, size = 0x9000, scoped, tag = 'internal scratch']
  %s0 = inlined_call_operand.smem [shape: u32[40], index: -1, kind: input, shape index: {}]
  %s1 = sld [smem:[%s0]]
  %s2 = scalar_lea.smem %s0, 1
  %s3 = sld [smem:[%s2]]
  %s4 = scalar_lea.smem %s0, 2
  %s5 = sld [smem:[%s4]]
  %s6 = scalar_lea.smem %s0, 3
  %s7 = sld [smem:[%s6]]
  %s8 = scalar_lea.smem %s0, 4
  %s9 = sld [smem:[%s8]]
  %s10 = scalar_lea.smem %s0, 5
  %s11 = sld [smem:[%s10]]
  %s12 = scalar_lea.smem %s0, 6
  %s13 = sld [smem:[%s12]]
  %s14 = scalar_lea.smem %s0, 7
  %s15 = sld [smem:[%s14]]
  %s16 = scalar_lea.smem %s0, 8
  %s17 = sld [smem:[%s16]]
  %s18 = scalar_lea.smem %s0, 9
  %s19 = sld [smem:[%s18]]
  %s20 = scalar_lea.smem %s0, 10
  %s21 = sld [smem:[%s20]]
  %s22 = scalar_lea.smem %s0, 11
  %s23 = sld [smem:[%s22]]
  %s24 = scalar_lea.smem %s0, 12
  %s25 = sld [smem:[%s24]]
  %s26 = scalar_lea.smem %s0, 13
  %s27 = sld [smem:[%s26]]
  %s28 = scalar_lea.smem %s0, 14
  %s29 = sld [smem:[%s28]]
  %s30 = scalar_lea.smem %s0, 15
  %s31 = sld [smem:[%s30]]
  %s32 = scalar_lea.smem %s0, 16
  %s33 = sld [smem:[%s32]]
  %s34 = scalar_lea.smem %s0, 17
  %s35 = sld [smem:[%s34]]
  %s36 = scalar_lea.smem %s0, 18
  %s37 = sld [smem:[%s36]]
  %s38 = scalar_lea.smem %s0, 19
  %s39 = sld [smem:[%s38]]
  %s40 = scalar_lea.smem %s0, 20
  %s41 = sld [smem:[%s40]]
  %s42 = scalar_lea.smem %s0, 21
  %s43 = sld [smem:[%s42]]
  %s44 = scalar_lea.smem %s0, 22
  %s45 = sld [smem:[%s44]]
  %s46 = scalar_lea.smem %s0, 23
  %s47 = sld [smem:[%s46]]
  %s48 = scalar_lea.smem %s0, 24
  %s49 = sld [smem:[%s48]]
  %s50 = scalar_lea.smem %s0, 25
  %s51 = sld [smem:[%s50]]
  %s52 = scalar_lea.smem %s0, 26
  %s53 = sld [smem:[%s52]]
  %s54 = scalar_lea.smem %s0, 27
  %s55 = sld [smem:[%s54]]
  %s56 = scalar_lea.smem %s0, 28
  %s57 = sld [smem:[%s56]]
  %s58 = scalar_lea.smem %s0, 29
  %s59 = sld [smem:[%s58]]
  %s60 = scalar_lea.smem %s0, 30
  %s61 = sld [smem:[%s60]]
  %s62 = scalar_lea.smem %s0, 31
  %s63 = sld [smem:[%s62]]
  %s64 = scalar_lea.smem %s0, 32
  %s65 = sld [smem:[%s64]]
  %s66 = scalar_lea.smem %s0, 33
  %s67 = sld [smem:[%s66]]
  %s68 = scalar_lea.smem %s0, 34
  %s69 = sld [smem:[%s68]]
  %s70 = scalar_lea.smem %s0, 35
  %s71 = sld [smem:[%s70]]
  %s72 = scalar_lea.smem %s0, 36
  %s73 = sld [smem:[%s72]]
  %s74 = scalar_lea.smem %s0, 37
  %s75 = sld [smem:[%s74]]
  %s76 = scalar_lea.smem %s0, 38
  %s77 = sld [smem:[%s76]]
  %s78 = scalar_lea.smem %s0, 39
  %s79 = sld [smem:[%s78]]
  %s80 = sld [smem:[#allocation0]]
  $region210: #{_lambda_.1} parent=0
    _
  %s82 = ssub.s32 1, %s80
  %s83 = scalar_select 0, %s82, %s80
  $region1: #{_lambda_.1} parent=0
    #allocation2 [shape = 'u8[2048]{0}', space=vmem, size = 0x800, scoped, tag = 'input window, operand 2, single buffered']
    #allocation3 [shape = 's32[1]{0}', space=sflag, size = 0x4, scoped, tag = 'scoped memory for _lambda_.1']
    #allocation4 [shape = 's32[1]{0}', space=sflag, size = 0x4, scoped, tag = 'scoped memory for _lambda_.1']
    #allocation5 [shape = 'u8[8192]{0}', space=vmem, size = 0x2000, scoped, tag = 'input window, operand 6, single buffered']
    #allocation6 [shape = 's32[1]{0}', space=sflag, size = 0x4, scoped, tag = 'scoped memory for _lambda_.1']
    #allocation7 [shape = 'u8[8192]{0}', space=vmem, size = 0x2000, scoped, tag = 'input window, operand 7, single buffered']
    #allocation8 [shape = 'u8[8192]{0}', space=vmem, size = 0x2000, scoped, tag = 'input window, operand 14, single buffered']
    #allocation9 [shape = 's32[1]{0}', space=sflag, size = 0x4, scoped, tag = 'scoped memory for _lambda_.1']
    #allocation10 [shape = 'u8[8192]{0}', space=vmem, size = 0x2000, scoped, tag = 'input window, operand 15, single buffered']
    #allocation11 [shape = 'u8[1024]{0}', space=vmem, size = 0x400, scoped, tag = 'input window, operand 20, single buffered']
    #allocation12 [shape = 's32[1]{0}', space=sflag, size = 0x4, scoped, tag = 'scoped memory for _lambda_.1']
    #allocation13 [shape = 'u8[4096]{0}', space=vmem, size = 0x1000, scoped, tag = 'input window, operand 28, single buffered']
    #allocation14 [shape = 'u8[16384]{0}', space=vmem, size = 0x4000, scoped, tag = 'input window, operand 32, single buffered']
    #allocation15 [shape = 's32[1]{0}', space=sflag, size = 0x4, scoped, tag = 'scoped memory for _lambda_.1']
    #allocation16 [shape = 'u8[16384]{0}', space=vmem, size = 0x4000, scoped, tag = 'input window, operand 33, single buffered']
    #allocation17 [shape = 'u8[4096]{0}', space=vmem, size = 0x1000, scoped, tag = 'input window, operand 36, single buffered']
    #allocation18 [shape = 's32[1]{0}', space=sflag, size = 0x4, scoped, tag = 'scoped memory for _lambda_.1']
    #allocation19 [shape = 'u8[1024]{0}', space=vmem, size = 0x400, scoped, tag = 'input window, operand 38, single buffered']
    #allocation20 [shape = 'u8[1024]{0}', space=vmem, size = 0x400, scoped, tag = 'output window, operand 0, single buffered']
    %84 = vsyncpa [#allocation3], 0
    %85 = vsyncpa [#allocation6], 0
    %86 = vsyncpa [#allocation9], 0
    %87 = vsyncpa [#allocation12], 0
    %88 = vsyncpa [#allocation15], 0
    %89 = vsyncpa [#allocation18], 0
    %90 = vsyncpa [#allocation4], 0
    // Predicated region
    $region2: #{_lambda_.1} parent=1 // pred_check
      _
    $region3: #{_lambda_.1} parent=1 // pred_check_branch
      %92 = sbr.rel (0) target = $region5
    $region4: #{_lambda_.1} parent=1 // pred_region
      _
    $region5: #{_lambda_.1} parent=1 // pred_fallthru
      _
    // Predicated region
    $region6: #{_lambda_.1} parent=1 // pred_check
      _
    $region7: #{_lambda_.1} parent=1 // pred_check_branch
      %94 = sbr.rel (0) target = $region9
    $region8: #{_lambda_.1} parent=1 // pred_region
      _
    $region9: #{_lambda_.1} parent=1 // pred_fallthru
      _
    // Predicated region
    $region10: #{_lambda_.1} parent=1 // pred_check
      _
    $region11: #{_lambda_.1} parent=1 // pred_check_branch
      %96 = sbr.rel (0) target = $region13
    $region12: #{_lambda_.1} parent=1 // pred_region
      %98 = vsyncadd [#allocation3], 0
      %s100 = sshll.u32 %s5, 4
      %s101 = int_to_ptr.hbm [resolvable:$true] %s100
      %s102 = sshll.u32 [#allocation2], 4
      %s103 = int_to_ptr.vmem [resolvable:$true] %s102
      %105 = dma.hbm_to_vmem [thread:$0]  %s101, 64, %s103, [#allocation3]
    $region13: #{_lambda_.1} parent=1 // pred_fallthru
      _
    // Predicated region
    $region14: #{_lambda_.1} parent=1 // pred_check
      _
    $region15: #{_lambda_.1} parent=1 // pred_check_branch
      %107 = sbr.rel (0) target = $region17
    $region16: #{_lambda_.1} parent=1 // pred_region
      _
    $region17: #{_lambda_.1} parent=1 // pred_fallthru
      _
    // Predicated region
    $region18: #{_lambda_.1} parent=1 // pred_check
      _
    $region19: #{_lambda_.1} parent=1 // pred_check_branch
      %109 = sbr.rel (0) target = $region21
    $region20: #{_lambda_.1} parent=1 // pred_region
      _
    $region21: #{_lambda_.1} parent=1 // pred_fallthru
      _
    // Predicated region
    $region22: #{_lambda_.1} parent=1 // pred_check
      _
    $region23: #{_lambda_.1} parent=1 // pred_check_branch
      %111 = sbr.rel (0) target = $region25
    $region24: #{_lambda_.1} parent=1 // pred_region
      _
    $region25: #{_lambda_.1} parent=1 // pred_fallthru
      _
    // Predicated region
    $region26: #{_lambda_.1} parent=1 // pred_check
      _
    $region27: #{_lambda_.1} parent=1 // pred_check_branch
      %113 = sbr.rel (0) target = $region29
    $region28: #{_lambda_.1} parent=1 // pred_region
      %115 = vsyncadd [#allocation6], 0
      %s116 = sshll.u32 %s13, 4
      %s117 = int_to_ptr.hbm [resolvable:$true] %s116
      %s118 = sshll.u32 [#allocation5], 4
      %s119 = int_to_ptr.vmem [resolvable:$true] %s118
      %124 = dma.hbm_to_vmem [thread:$0]  %s117, 256, %s119, [#allocation6], 64, 64, 4
    $region29: #{_lambda_.1} parent=1 // pred_fallthru
      _
    // Predicated region
    $region30: #{_lambda_.1} parent=1 // pred_check
      _
    $region31: #{_lambda_.1} parent=1 // pred_check_branch
      %126 = sbr.rel (0) target = $region33
    $region32: #{_lambda_.1} parent=1 // pred_region
      %128 = vsyncadd [#allocation6], 0
      %s129 = sshll.u32 %s15, 4
      %s130 = int_to_ptr.hbm [resolvable:$true] %s129
      %s131 = sshll.u32 [#allocation7], 4
      %s132 = int_to_ptr.vmem [resolvable:$true] %s131
      %137 = dma.hbm_to_vmem [thread:$0]  %s130, 256, %s132, [#allocation6], 64, 64, 4
    $region33: #{_lambda_.1} parent=1 // pred_fallthru
      _
    // Predicated region
    $region34: #{_lambda_.1} parent=1 // pred_check
      _
    $region35: #{_lambda_.1} parent=1 // pred_check_branch
      %139 = sbr.rel (0) target = $region37
    $region36: #{_lambda_.1} parent=1 // pred_region
      _
    $region37: #{_lambda_.1} parent=1 // pred_fallthru
      _
    // Predicated region
    $region38: #{_lambda_.1} parent=1 // pred_check
      _
    $region39: #{_lambda_.1} parent=1 // pred_check_branch
      %141 = sbr.rel (0) target = $region41
    $region40: #{_lambda_.1} parent=1 // pred_region
      _
    $region41: #{_lambda_.1} parent=1 // pred_fallthru
      _
    // Predicated region
    $region42: #{_lambda_.1} parent=1 // pred_check
      _
    $region43: #{_lambda_.1} parent=1 // pred_check_branch
      %143 = sbr.rel (0) target = $region45
    $region44: #{_lambda_.1} parent=1 // pred_region
      _
    $region45: #{_lambda_.1} parent=1 // pred_fallthru
      _
    // Predicated region
    $region46: #{_lambda_.1} parent=1 // pred_check
      _
    $region47: #{_lambda_.1} parent=1 // pred_check_branch
      %145 = sbr.rel (0) target = $region49
    $region48: #{_lambda_.1} parent=1 // pred_region
      _
    $region49: #{_lambda_.1} parent=1 // pred_fallthru
      _
    // Predicated region
    $region50: #{_lambda_.1} parent=1 // pred_check
      _
    $region51: #{_lambda_.1} parent=1 // pred_check_branch
      %147 = sbr.rel (0) target = $region53
    $region52: #{_lambda_.1} parent=1 // pred_region
      _
    $region53: #{_lambda_.1} parent=1 // pred_fallthru
      _
    // Predicated region
    $region54: #{_lambda_.1} parent=1 // pred_check
      _
    $region55: #{_lambda_.1} parent=1 // pred_check_branch
      %149 = sbr.rel (0) target = $region57
    $region56: #{_lambda_.1} parent=1 // pred_region
      _
    $region57: #{_lambda_.1} parent=1 // pred_fallthru
      _
    // Predicated region
    $region58: #{_lambda_.1} parent=1 // pred_check
      _
    $region59: #{_lambda_.1} parent=1 // pred_check_branch
      %151 = sbr.rel (0) target = $region61
    $region60: #{_lambda_.1} parent=1 // pred_region
      %153 = vsyncadd [#allocation9], 0
      %s154 = sshll.u32 %s29, 4
      %s155 = int_to_ptr.hbm [resolvable:$true] %s154
      %s156 = sshll.u32 [#allocation8], 4
      %s157 = int_to_ptr.vmem [resolvable:$true] %s156
      %162 = dma.hbm_to_vmem [thread:$0]  %s155, 256, %s157, [#allocation9], 64, 64, 4
    $region61: #{_lambda_.1} parent=1 // pred_fallthru
      _
    // Predicated region
    $region62: #{_lambda_.1} parent=1 // pred_check
      _
    $region63: #{_lambda_.1} parent=1 // pred_check_branch
      %164 = sbr.rel (0) target = $region65
    $region64: #{_lambda_.1} parent=1 // pred_region
      %166 = vsyncadd [#allocation9], 0
      %s167 = sshll.u32 %s31, 4
      %s168 = int_to_ptr.hbm [resolvable:$true] %s167
      %s169 = sshll.u32 [#allocation10], 4
      %s170 = int_to_ptr.vmem [resolvable:$true] %s169
      %175 = dma.hbm_to_vmem [thread:$0]  %s168, 256, %s170, [#allocation9], 64, 64, 4
    $region65: #{_lambda_.1} parent=1 // pred_fallthru
      _
    // Predicated region
    $region66: #{_lambda_.1} parent=1 // pred_check
      _
    $region67: #{_lambda_.1} parent=1 // pred_check_branch
      %177 = sbr.rel (0) target = $region69
    $region68: #{_lambda_.1} parent=1 // pred_region
      _
    $region69: #{_lambda_.1} parent=1 // pred_fallthru
      _
    // Predicated region
    $region70: #{_lambda_.1} parent=1 // pred_check
      _
    $region71: #{_lambda_.1} parent=1 // pred_check_branch
      %179 = sbr.rel (0) target = $region73
    $region72: #{_lambda_.1} parent=1 // pred_region
      _
    $region73: #{_lambda_.1} parent=1 // pred_fallthru
      _
    // Predicated region
    $region74: #{_lambda_.1} parent=1 // pred_check
      _
    $region75: #{_lambda_.1} parent=1 // pred_check_branch
      %181 = sbr.rel (0) target = $region77
    $region76: #{_lambda_.1} parent=1 // pred_region
      _
    $region77: #{_lambda_.1} parent=1 // pred_fallthru
      _
    // Predicated region
    $region78: #{_lambda_.1} parent=1 // pred_check
      _
    $region79: #{_lambda_.1} parent=1 // pred_check_branch
      %183 = sbr.rel (0) target = $region81
    $region80: #{_lambda_.1} parent=1 // pred_region
      _
    $region81: #{_lambda_.1} parent=1 // pred_fallthru
      _
    // Predicated region
    $region82: #{_lambda_.1} parent=1 // pred_check
      _
    $region83: #{_lambda_.1} parent=1 // pred_check_branch
      %185 = sbr.rel (0) target = $region85
    $region84: #{_lambda_.1} parent=1 // pred_region
      %187 = vsyncadd [#allocation12], 0
      %s189 = sshll.u32 %s41, 4
      %s190 = int_to_ptr.hbm [resolvable:$true] %s189
      %s191 = sshll.u32 [#allocation11], 4
      %s192 = int_to_ptr.vmem [resolvable:$true] %s191
      %194 = dma.hbm_to_vmem [thread:$0]  %s190, 32, %s192, [#allocation12]
    $region85: #{_lambda_.1} parent=1 // pred_fallthru
      _
    // Predicated region
    $region86: #{_lambda_.1} parent=1 // pred_check
      _
    $region87: #{_lambda_.1} parent=1 // pred_check_branch
      %196 = sbr.rel (0) target = $region89
    $region88: #{_lambda_.1} parent=1 // pred_region
      _
    $region89: #{_lambda_.1} parent=1 // pred_fallthru
      _
    // Predicated region
    $region90: #{_lambda_.1} parent=1 // pred_check
      _
    $region91: #{_lambda_.1} parent=1 // pred_check_branch
      %198 = sbr.rel (0) target = $region93
    $region92: #{_lambda_.1} parent=1 // pred_region
      _
    $region93: #{_lambda_.1} parent=1 // pred_fallthru
      _
    // Predicated region
    $region94: #{_lambda_.1} parent=1 // pred_check
      _
    $region95: #{_lambda_.1} parent=1 // pred_check_branch
      %200 = sbr.rel (0) target = $region97
    $region96: #{_lambda_.1} parent=1 // pred_region
      _
    $region97: #{_lambda_.1} parent=1 // pred_fallthru
      _
    // Predicated region
    $region98: #{_lambda_.1} parent=1 // pred_check
      _
    $region99: #{_lambda_.1} parent=1 // pred_check_branch
      %202 = sbr.rel (0) target = $region101
    $region100: #{_lambda_.1} parent=1 // pred_region
      _
    $region101: #{_lambda_.1} parent=1 // pred_fallthru
      _
    // Predicated region
    $region102: #{_lambda_.1} parent=1 // pred_check
      _
    $region103: #{_lambda_.1} parent=1 // pred_check_branch
      %204 = sbr.rel (0) target = $region105
    $region104: #{_lambda_.1} parent=1 // pred_region
      _
    $region105: #{_lambda_.1} parent=1 // pred_fallthru
      _
    // Predicated region
    $region106: #{_lambda_.1} parent=1 // pred_check
      _
    $region107: #{_lambda_.1} parent=1 // pred_check_branch
      %206 = sbr.rel (0) target = $region109
    $region108: #{_lambda_.1} parent=1 // pred_region
      _
    $region109: #{_lambda_.1} parent=1 // pred_fallthru
      _
    // Predicated region
    $region110: #{_lambda_.1} parent=1 // pred_check
      _
    $region111: #{_lambda_.1} parent=1 // pred_check_branch
      %208 = sbr.rel (0) target = $region113
    $region112: #{_lambda_.1} parent=1 // pred_region
      _
    $region113: #{_lambda_.1} parent=1 // pred_fallthru
      _
    // Predicated region
    $region114: #{_lambda_.1} parent=1 // pred_check
      _
    $region115: #{_lambda_.1} parent=1 // pred_check_branch
      %210 = sbr.rel (0) target = $region117
    $region116: #{_lambda_.1} parent=1 // pred_region
      %212 = vsyncadd [#allocation12], 0
      %s214 = sshll.u32 %s57, 4
      %s215 = int_to_ptr.hbm [resolvable:$true] %s214
      %s216 = sshll.u32 [#allocation13], 4
      %s217 = int_to_ptr.vmem [resolvable:$true] %s216
      %219 = dma.hbm_to_vmem [thread:$0]  %s215, 128, %s217, [#allocation12]
    $region117: #{_lambda_.1} parent=1 // pred_fallthru
      _
    // Predicated region
    $region118: #{_lambda_.1} parent=1 // pred_check
      _
    $region119: #{_lambda_.1} parent=1 // pred_check_branch
      %221 = sbr.rel (0) target = $region121
    $region120: #{_lambda_.1} parent=1 // pred_region
      _
    $region121: #{_lambda_.1} parent=1 // pred_fallthru
      _
    // Predicated region
    $region122: #{_lambda_.1} parent=1 // pred_check
      _
    $region123: #{_lambda_.1} parent=1 // pred_check_branch
      %223 = sbr.rel (0) target = $region125
    $region124: #{_lambda_.1} parent=1 // pred_region
      _
    $region125: #{_lambda_.1} parent=1 // pred_fallthru
      _
    // Predicated region
    $region126: #{_lambda_.1} parent=1 // pred_check
      _
    $region127: #{_lambda_.1} parent=1 // pred_check_branch
      %225 = sbr.rel (0) target = $region129
    $region128: #{_lambda_.1} parent=1 // pred_region
      _
    $region129: #{_lambda_.1} parent=1 // pred_fallthru
      _
    // Predicated region
    $region130: #{_lambda_.1} parent=1 // pred_check
      _
    $region131: #{_lambda_.1} parent=1 // pred_check_branch
      %227 = sbr.rel (0) target = $region133
    $region132: #{_lambda_.1} parent=1 // pred_region
      %229 = vsyncadd [#allocation15], 0
      %s230 = sshll.u32 %s65, 4
      %s231 = int_to_ptr.hbm [resolvable:$true] %s230
      %s232 = sshll.u32 [#allocation14], 4
      %s233 = int_to_ptr.vmem [resolvable:$true] %s232
      %238 = dma.hbm_to_vmem [thread:$0]  %s231, 512, %s233, [#allocation15], 128, 128, 8
    $region133: #{_lambda_.1} parent=1 // pred_fallthru
      _
    // Predicated region
    $region134: #{_lambda_.1} parent=1 // pred_check
      _
    $region135: #{_lambda_.1} parent=1 // pred_check_branch
      %240 = sbr.rel (0) target = $region137
    $region136: #{_lambda_.1} parent=1 // pred_region
      %242 = vsyncadd [#allocation15], 0
      %s243 = sshll.u32 %s67, 4
      %s244 = int_to_ptr.hbm [resolvable:$true] %s243
      %s245 = sshll.u32 [#allocation16], 4
      %s246 = int_to_ptr.vmem [resolvable:$true] %s245
      %251 = dma.hbm_to_vmem [thread:$0]  %s244, 512, %s246, [#allocation15], 64, 64, 4
    $region137: #{_lambda_.1} parent=1 // pred_fallthru
      _
    // Predicated region
    $region138: #{_lambda_.1} parent=1 // pred_check
      _
    $region139: #{_lambda_.1} parent=1 // pred_check_branch
      %253 = sbr.rel (0) target = $region141
    $region140: #{_lambda_.1} parent=1 // pred_region
      _
    $region141: #{_lambda_.1} parent=1 // pred_fallthru
      _
    // Predicated region
    $region142: #{_lambda_.1} parent=1 // pred_check
      _
    $region143: #{_lambda_.1} parent=1 // pred_check_branch
      %255 = sbr.rel (0) target = $region145
    $region144: #{_lambda_.1} parent=1 // pred_region
      _
    $region145: #{_lambda_.1} parent=1 // pred_fallthru
      _
    // Predicated region
    $region146: #{_lambda_.1} parent=1 // pred_check
      _
    $region147: #{_lambda_.1} parent=1 // pred_check_branch
      %257 = sbr.rel (0) target = $region149
    $region148: #{_lambda_.1} parent=1 // pred_region
      %259 = vsyncadd [#allocation18], 0
      %s261 = sshll.u32 %s73, 4
      %s262 = int_to_ptr.hbm [resolvable:$true] %s261
      %s263 = sshll.u32 [#allocation17], 4
      %s264 = int_to_ptr.vmem [resolvable:$true] %s263
      %266 = dma.hbm_to_vmem [thread:$0]  %s262, 128, %s264, [#allocation18]
    $region149: #{_lambda_.1} parent=1 // pred_fallthru
      _
    // Predicated region
    $region150: #{_lambda_.1} parent=1 // pred_check
      _
    $region151: #{_lambda_.1} parent=1 // pred_check_branch
      %268 = sbr.rel (0) target = $region153
    $region152: #{_lambda_.1} parent=1 // pred_region
      _
    $region153: #{_lambda_.1} parent=1 // pred_fallthru
      _
    // Predicated region
    $region154: #{_lambda_.1} parent=1 // pred_check
      _
    $region155: #{_lambda_.1} parent=1 // pred_check_branch
      %270 = sbr.rel (0) target = $region157
    $region156: #{_lambda_.1} parent=1 // pred_region
      %272 = vsyncadd [#allocation18], 0
      %s274 = sshll.u32 %s77, 4
      %s275 = int_to_ptr.hbm [resolvable:$true] %s274
      %s276 = sshll.u32 [#allocation19], 4
      %s277 = int_to_ptr.vmem [resolvable:$true] %s276
      %279 = dma.hbm_to_vmem [thread:$0]  %s275, 32, %s277, [#allocation18]
    $region157: #{_lambda_.1} parent=1 // pred_fallthru
      _
    // Predicated region
    $region158: #{_lambda_.1} parent=1 // pred_check
      _
    $region159: #{_lambda_.1} parent=1 // pred_check_branch
      %281 = sbr.rel (0) target = $region161
    $region160: #{_lambda_.1} parent=1 // pred_region
      %283 = dma.done [#allocation3], 64
    $region161: #{_lambda_.1} parent=1 // pred_fallthru
      _
    // Predicated region
    $region162: #{_lambda_.1} parent=1 // pred_check
      _
    $region163: #{_lambda_.1} parent=1 // pred_check_branch
      %285 = sbr.rel (0) target = $region165
    $region164: #{_lambda_.1} parent=1 // pred_region
      %287 = dma.done [#allocation6], 256
    $region165: #{_lambda_.1} parent=1 // pred_fallthru
      _
    // Predicated region
    $region166: #{_lambda_.1} parent=1 // pred_check
      _
    $region167: #{_lambda_.1} parent=1 // pred_check_branch
      %289 = sbr.rel (0) target = $region169
    $region168: #{_lambda_.1} parent=1 // pred_region
      %291 = dma.done [#allocation6], 256
    $region169: #{_lambda_.1} parent=1 // pred_fallthru
      _
    // Predicated region
    $region170: #{_lambda_.1} parent=1 // pred_check
      _
    $region171: #{_lambda_.1} parent=1 // pred_check_branch
      %293 = sbr.rel (0) target = $region173
    $region172: #{_lambda_.1} parent=1 // pred_region
      %295 = dma.done [#allocation9], 256
    $region173: #{_lambda_.1} parent=1 // pred_fallthru
      _
    // Predicated region
    $region174: #{_lambda_.1} parent=1 // pred_check
      _
    $region175: #{_lambda_.1} parent=1 // pred_check_branch
      %297 = sbr.rel (0) target = $region177
    $region176: #{_lambda_.1} parent=1 // pred_region
      %299 = dma.done [#allocation9], 256
    $region177: #{_lambda_.1} parent=1 // pred_fallthru
      _
    // Predicated region
    $region178: #{_lambda_.1} parent=1 // pred_check
      _
    $region179: #{_lambda_.1} parent=1 // pred_check_branch
      %301 = sbr.rel (0) target = $region181
    $region180: #{_lambda_.1} parent=1 // pred_region
      %303 = dma.done [#allocation12], 32
    $region181: #{_lambda_.1} parent=1 // pred_fallthru
      _
    // Predicated region
    $region182: #{_lambda_.1} parent=1 // pred_check
      _
    $region183: #{_lambda_.1} parent=1 // pred_check_branch
      %305 = sbr.rel (0) target = $region185
    $region184: #{_lambda_.1} parent=1 // pred_region
      %307 = dma.done [#allocation12], 128
    $region185: #{_lambda_.1} parent=1 // pred_fallthru
      _
    // Predicated region
    $region186: #{_lambda_.1} parent=1 // pred_check
      _
    $region187: #{_lambda_.1} parent=1 // pred_check_branch
      %309 = sbr.rel (0) target = $region189
    $region188: #{_lambda_.1} parent=1 // pred_region
      %311 = dma.done [#allocation15], 512
    $region189: #{_lambda_.1} parent=1 // pred_fallthru
      _
    // Predicated region
    $region190: #{_lambda_.1} parent=1 // pred_check
      _
    $region191: #{_lambda_.1} parent=1 // pred_check_branch
      %313 = sbr.rel (0) target = $region193
    $region192: #{_lambda_.1} parent=1 // pred_region
      %315 = dma.done [#allocation15], 512
    $region193: #{_lambda_.1} parent=1 // pred_fallthru
      _
    // Predicated region
    $region194: #{_lambda_.1} parent=1 // pred_check
      _
    $region195: #{_lambda_.1} parent=1 // pred_check_branch
      %317 = sbr.rel (0) target = $region197
    $region196: #{_lambda_.1} parent=1 // pred_region
      %319 = dma.done [#allocation18], 128
    $region197: #{_lambda_.1} parent=1 // pred_fallthru
      _
    // Predicated region
    $region198: #{_lambda_.1} parent=1 // pred_check
      _
    $region199: #{_lambda_.1} parent=1 // pred_check_branch
      %321 = sbr.rel (0) target = $region201
    $region200: #{_lambda_.1} parent=1 // pred_region
      %323 = dma.done [#allocation18], 32
    $region201: #{_lambda_.1} parent=1 // pred_fallthru
      _
    %v325 = vld [vmem:[#allocation2] sm:$0x7]
    %v326 = vld [vmem:[%s1] sm:$0xff]
    %v327 = vld [vmem:[%s1 + $0x8] sm:$0xff]
    %v328 = vld [vmem:[%s1 + $0x10] sm:$0xff]
    %v329 = vld [vmem:[%s1 + $0x18] sm:$0xff]
    %v330 = vpack.c.bf16 %v327, %v326
    %v331 = vpack.c.bf16 %v329, %v328
    %v332 = vld [vmem:[%s3] sm:$0xf]
    %v333 = vld [vmem:[%s3 + $0x4] sm:$0xf]
    %v334 = vld [vmem:[%s3 + $0x8] sm:$0xf]
    %v335 = vld [vmem:[%s3 + $0xc] sm:$0xf]
    %v336 = vld [vmem:[%s3 + $0x10] sm:$0xf]
    %v337 = vld [vmem:[%s3 + $0x14] sm:$0xf]
    %v338 = vperm.slane %v325, 0
    %v345 = vunpack.c.l.b16 %v332
    %v346 = vunpack.c.l.b16 %v333
    %v347 = vunpack.c.l.b16 %v334
    %v348 = vunpack.c.l.b16 %v335
    %v349 = vunpack.c.l.b16 %v336
    %v350 = vunpack.c.l.b16 %v337
    %v351 = vpack.c.b16 %v346, %v345
    %v352 = vpack.c.b16 %v348, %v347
    %v353 = vpack.c.b16 %v350, %v349
    %vm357 = vcmask 392192
    %v359 = vsel %vm357, %v330, 0
    %v362 = vsel %vm357, %v331, 0
    %364 = vmatpush.bf16.msra.mxu0 0
    %365 = vmatpush.bf16.msra.mxu0 0
    %366 = vmatpush.bf16.msra.mxu0 0
    %367 = vmatpush.bf16.msra.mxu0 0
    %368 = vmatpush.bf16.msra.mxu0 0
    %369 = vmatpush.bf16.msra.mxu0 %v353
    %370 = vmatpush.bf16.msra.mxu0 %v352
    %371 = vmatpush.bf16.msra.mxu0 %v351
    %372 = vmatmul.bf16.gmra.mxu0 %v359
    %v373 = vpop.f32.mrf.mxu0
    %v374 = vadd.f32 %v338, %v373
    %v375 = vpop.f32.mrf.mxu0
    %v376 = vadd.f32 %v338, %v375
    %377 = vmatmul.bf16.gmra.mxu0 %v362
    %v378 = vpop.f32.mrf.mxu0
    %v379 = vadd.f32 %v338, %v378
    %v380 = vpop.f32.mrf.mxu0
    %v381 = vadd.f32 %v338, %v380
    %382 = vdwg.mxu0
    %vm383 = vcmask 261120
    %v384 = vsel %vm383, %v374, 0.0
    %385 = vadd.xlane.f32.xlu0 %v384
    %v386 = vpop.xlane.xlu0 %385
    %v387 = vsel %vm383, %v376, 0.0
    %388 = vadd.xlane.f32.xlu0 %v387
    %v389 = vpop.xlane.xlu0 %388
    %v390 = vsel %vm383, %v379, 0.0
    %391 = vadd.xlane.f32.xlu0 %v390
    %v392 = vpop.xlane.xlu0 %391
    %v393 = vsel %vm383, %v381, 0.0
    %394 = vadd.xlane.f32.xlu0 %v393
    %v395 = vpop.xlane.xlu0 %394
    %v396 = vrcp.pop 32.0
    %v397 = vmul.f32 32.0, %v396
    %v398 = vsub.f32 1.0, %v397
    %v399 = vmul.f32 %v396, %v398
    %v400 = vadd.f32 %v396, %v399
    %vm401 = vweird.f32 %v396
    %v402 = vsel %vm401, %v396, %v400
    %v403 = vmul.f32 %v386, %v402
    %v404 = vmul.f32 %v389, %v402
    %v405 = vmul.f32 %v392, %v402
    %v406 = vmul.f32 %v395, %v402
    %v407 = vsub.f32 %v374, %v403
    %v408 = vsub.f32 %v376, %v404
    %v409 = vsub.f32 %v379, %v405
    %v410 = vsub.f32 %v381, %v406
    %v411 = vmul.f32 %v407, %v407
    %v412 = vmul.f32 %v408, %v408
    %v413 = vmul.f32 %v409, %v409
    %v414 = vmul.f32 %v410, %v410
    %v415 = vsel %vm383, %v411, 0.0
    %416 = vadd.xlane.f32.xlu0 %v415
    %v417 = vpop.xlane.xlu0 %416
    %v418 = vsel %vm383, %v412, 0.0
    %419 = vadd.xlane.f32.xlu0 %v418
    %v420 = vpop.xlane.xlu0 %419
    %v421 = vsel %vm383, %v413, 0.0
    %422 = vadd.xlane.f32.xlu0 %v421
    %v423 = vpop.xlane.xlu0 %422
    %v424 = vsel %vm383, %v414, 0.0
    %425 = vadd.xlane.f32.xlu0 %v424
    %v426 = vpop.xlane.xlu0 %425
    %v427 = vmul.f32 %v417, %v402
    %v428 = vmul.f32 %v420, %v402
    %v429 = vmul.f32 %v423, %v402
    %v430 = vmul.f32 %v426, %v402
    %v431 = vadd.f32 %v427, 1e-05
    %v432 = vadd.f32 %v428, 1e-05
    %v433 = vadd.f32 %v429, 1e-05
    %v434 = vadd.f32 %v430, 1e-05
    %v435 = vrsqrt.pop %v431
    %v436 = vmul.f32 %v435, %v431
    %v437 = vmul.f32 %v436, %v435
    %v438 = vmul.f32 0.5, %v437
    %v439 = vsub.f32 1.5, %v438
    %v440 = vmul.f32 %v435, %v439
    %vm441 = vweird.f32 %v431
    %vm442 = vweird.f32 %v435
    %vm443 = vmor %vm441, %vm442
    %v444 = vsel %vm443, %v435, %v440
    %v445 = vrsqrt.pop %v432
    %v446 = vmul.f32 %v445, %v432
    %v447 = vmul.f32 %v446, %v445
    %v448 = vmul.f32 0.5, %v447
    %v449 = vsub.f32 1.5, %v448
    %v450 = vmul.f32 %v445, %v449
    %vm451 = vweird.f32 %v432
    %vm452 = vweird.f32 %v445
    %vm453 = vmor %vm451, %vm452
    %v454 = vsel %vm453, %v445, %v450
    %v455 = vrsqrt.pop %v433
    %v456 = vmul.f32 %v455, %v433
    %v457 = vmul.f32 %v456, %v455
    %v458 = vmul.f32 0.5, %v457
    %v459 = vsub.f32 1.5, %v458
    %v460 = vmul.f32 %v455, %v459
    %vm461 = vweird.f32 %v433
    %vm462 = vweird.f32 %v455
    %vm463 = vmor %vm461, %vm462
    %v464 = vsel %vm463, %v455, %v460
    %v465 = vrsqrt.pop %v434
    %v466 = vmul.f32 %v465, %v434
    %v467 = vmul.f32 %v466, %v465
    %v468 = vmul.f32 0.5, %v467
    %v469 = vsub.f32 1.5, %v468
    %v470 = vmul.f32 %v465, %v469
    %vm471 = vweird.f32 %v434
    %vm472 = vweird.f32 %v465
    %vm473 = vmor %vm471, %vm472
    %v474 = vsel %vm473, %v465, %v470
    %v475 = vmul.f32 %v407, %v444
    %v476 = vmul.f32 %v408, %v454
    %v477 = vmul.f32 %v409, %v464
    %v478 = vmul.f32 %v410, %v474
    %v479 = vperm.slane %v325, 1
    %v480 = vmul.f32 %v475, %v479
    %v481 = vmul.f32 %v476, %v479
    %v482 = vmul.f32 %v477, %v479
    %v483 = vmul.f32 %v478, %v479
    %v484 = vperm.slane %v325, 2
    %v485 = vadd.f32 %v480, %v484
    %v486 = vadd.f32 %v481, %v484
    %v487 = vadd.f32 %v482, %v484
    %v488 = vadd.f32 %v483, %v484
    %v489 = vld [vmem:[%s9] sm:$0x3]
    %v490 = vld [vmem:[%s19] sm:$0x3f]
    %v491 = vld [vmem:[%s21] sm:$0x1]
    %v492 = vsel %vm383, %v485, 0.0
    %493 = vadd.xlane.f32.xlu0 %v492
    %v494 = vpop.xlane.xlu0 %493
    %v495 = vsel %vm383, %v486, 0.0
    %496 = vadd.xlane.f32.xlu0 %v495
    %v497 = vpop.xlane.xlu0 %496
    %v498 = vsel %vm383, %v487, 0.0
    %499 = vadd.xlane.f32.xlu0 %v498
    %v500 = vpop.xlane.xlu0 %499
    %v501 = vsel %vm383, %v488, 0.0
    %502 = vadd.xlane.f32.xlu0 %v501
    %v503 = vpop.xlane.xlu0 %502
    %v504 = vmul.f32 %v494, %v402
    %v505 = vmul.f32 %v497, %v402
    %v506 = vmul.f32 %v500, %v402
    %v507 = vmul.f32 %v503, %v402
    %v508 = vsub.f32 %v485, %v504
    %v509 = vsub.f32 %v486, %v505
    %v510 = vsub.f32 %v487, %v506
    %v511 = vsub.f32 %v488, %v507
    %v512 = vmul.f32 %v508, %v508
    %v513 = vmul.f32 %v509, %v509
    %v514 = vmul.f32 %v510, %v510
    %v515 = vmul.f32 %v511, %v511
    %v516 = vsel %vm383, %v512, 0.0
    %517 = vadd.xlane.f32.xlu0 %v516
    %v518 = vpop.xlane.xlu0 %517
    %v519 = vsel %vm383, %v513, 0.0
    %520 = vadd.xlane.f32.xlu0 %v519
    %v521 = vpop.xlane.xlu0 %520
    %v522 = vsel %vm383, %v514, 0.0
    %523 = vadd.xlane.f32.xlu0 %v522
    %v524 = vpop.xlane.xlu0 %523
    %v525 = vsel %vm383, %v515, 0.0
    %526 = vadd.xlane.f32.xlu0 %v525
    %v527 = vpop.xlane.xlu0 %526
    %v528 = vmul.f32 %v518, %v402
    %v529 = vmul.f32 %v521, %v402
    %v530 = vmul.f32 %v524, %v402
    %v531 = vmul.f32 %v527, %v402
    %v532 = vadd.f32 %v528, 1e-05
    %v533 = vadd.f32 %v529, 1e-05
    %v534 = vadd.f32 %v530, 1e-05
    %v535 = vadd.f32 %v531, 1e-05
    %v536 = vrsqrt.pop %v532
    %v537 = vmul.f32 %v536, %v532
    %v538 = vmul.f32 %v537, %v536
    %v539 = vmul.f32 0.5, %v538
    %v540 = vsub.f32 1.5, %v539
    %v541 = vmul.f32 %v536, %v540
    %vm542 = vweird.f32 %v532
    %vm543 = vweird.f32 %v536
    %vm544 = vmor %vm542, %vm543
    %v545 = vsel %vm544, %v536, %v541
    %v546 = vrsqrt.pop %v533
    %v547 = vmul.f32 %v546, %v533
    %v548 = vmul.f32 %v547, %v546
    %v549 = vmul.f32 0.5, %v548
    %v550 = vsub.f32 1.5, %v549
    %v551 = vmul.f32 %v546, %v550
    %vm552 = vweird.f32 %v533
    %vm553 = vweird.f32 %v546
    %vm554 = vmor %vm552, %vm553
    %v555 = vsel %vm554, %v546, %v551
    %v556 = vrsqrt.pop %v534
    %v557 = vmul.f32 %v556, %v534
    %v558 = vmul.f32 %v557, %v556
    %v559 = vmul.f32 0.5, %v558
    %v560 = vsub.f32 1.5, %v559
    %v561 = vmul.f32 %v556, %v560
    %vm562 = vweird.f32 %v534
    %vm563 = vweird.f32 %v556
    %vm564 = vmor %vm562, %vm563
    %v565 = vsel %vm564, %v556, %v561
    %v566 = vrsqrt.pop %v535
    %v567 = vmul.f32 %v566, %v535
    %v568 = vmul.f32 %v567, %v566
    %v569 = vmul.f32 0.5, %v568
    %v570 = vsub.f32 1.5, %v569
    %v571 = vmul.f32 %v566, %v570
    %vm572 = vweird.f32 %v535
    %vm573 = vweird.f32 %v566
    %vm574 = vmor %vm572, %vm573
    %v575 = vsel %vm574, %v566, %v571
    %v576 = vmul.f32 %v508, %v545
    %v577 = vmul.f32 %v509, %v555
    %v578 = vmul.f32 %v510, %v565
    %v579 = vmul.f32 %v511, %v575
    %v580 = vperm.slane %v490, 0
    %v581 = vmul.f32 %v576, %v580
    %v582 = vmul.f32 %v577, %v580
    %v583 = vmul.f32 %v578, %v580
    %v584 = vmul.f32 %v579, %v580
    %v585 = vperm.slane %v490, 1
    %v586 = vadd.f32 %v581, %v585
    %v587 = vadd.f32 %v582, %v585
    %v588 = vadd.f32 %v583, %v585
    %v589 = vadd.f32 %v584, %v585
    %v590 = vpack.c.bf16 %v587, %v586
    %v591 = vpack.c.bf16 %v589, %v588
    %v592 = vld [vmem:[%s7] sm:$0xf]
    %v593 = vld [vmem:[%s7 + $0x4] sm:$0xf]
    %v594 = vld [vmem:[%s7 + $0x8] sm:$0xf]
    %v595 = vld [vmem:[%s7 + $0xc] sm:$0xf]
    %v596 = vperm.slane %v489, 0
    %v601 = vunpack.c.l.b16 %v592
    %v602 = vunpack.c.l.b16 %v593
    %v603 = vunpack.c.l.b16 %v594
    %v604 = vunpack.c.l.b16 %v595
    %v605 = vpack.c.b16 %v602, %v601
    %v606 = vpack.c.b16 %v604, %v603
    %v610 = vsel %vm383, %v590, 0
    %v613 = vsel %vm383, %v591, 0
    %615 = vmatpush.bf16.msra.mxu0 0
    %616 = vmatpush.bf16.msra.mxu0 0
    %617 = vmatpush.bf16.msra.mxu0 0
    %618 = vmatpush.bf16.msra.mxu0 0
    %619 = vmatpush.bf16.msra.mxu0 0
    %620 = vmatpush.bf16.msra.mxu0 0
    %621 = vmatpush.bf16.msra.mxu0 %v606
    %622 = vmatpush.bf16.msra.mxu0 %v605
    %623 = vmatmul.bf16.gmra.mxu0 %v610
    %v624 = vpop.f32.mrf.mxu0
    %v625 = vadd.f32 %v596, %v624
    %v626 = vpop.f32.mrf.mxu0
    %v627 = vadd.f32 %v596, %v626
    %628 = vmatmul.bf16.gmra.mxu0 %v613
    %v629 = vpop.f32.mrf.mxu0
    %v630 = vadd.f32 %v596, %v629
    %v631 = vpop.f32.mrf.mxu0
    %v632 = vadd.f32 %v596, %v631
    %633 = vdwg.mxu0
    %v634 = vpack.c.bf16 %v627, %v625
    %v635 = vpack.c.bf16 %v632, %v630
    %s636 = scalar_lea.vmem %s7, 32
    %v637 = vld [vmem:[%s636] sm:$0xf]
    %v638 = vld [vmem:[%s636 + $0x4] sm:$0xf]
    %v639 = vld [vmem:[%s636 + $0x8] sm:$0xf]
    %v640 = vld [vmem:[%s636 + $0xc] sm:$0xf]
    %v645 = vunpack.c.l.b16 %v637
    %v646 = vunpack.c.l.b16 %v638
    %v647 = vunpack.c.l.b16 %v639
    %v648 = vunpack.c.l.b16 %v640
    %v649 = vpack.c.b16 %v646, %v645
    %v650 = vpack.c.b16 %v648, %v647
    %653 = vmatpush.bf16.msra.mxu0 0
    %654 = vmatpush.bf16.msra.mxu0 0
    %655 = vmatpush.bf16.msra.mxu0 0
    %656 = vmatpush.bf16.msra.mxu0 0
    %657 = vmatpush.bf16.msra.mxu0 0
    %658 = vmatpush.bf16.msra.mxu0 0
    %659 = vmatpush.bf16.msra.mxu0 %v650
    %660 = vmatpush.bf16.msra.mxu0 %v649
    %661 = vmatmul.bf16.gmra.mxu0 %v610
    %v662 = vpop.f32.mrf.mxu0
    %v663 = vadd.f32 0.0, %v662
    %v664 = vpop.f32.mrf.mxu0
    %v665 = vadd.f32 0.0, %v664
    %666 = vmatmul.bf16.gmra.mxu0 %v613
    %v667 = vpop.f32.mrf.mxu0
    %v668 = vadd.f32 0.0, %v667
    %v669 = vpop.f32.mrf.mxu0
    %v670 = vadd.f32 0.0, %v669
    %671 = vdwg.mxu0
    %v672 = vpack.c.bf16 %v665, %v663
    %v673 = vpack.c.bf16 %v670, %v668
    %s674 = scalar_lea.vmem %s7, 64
    %v675 = vld [vmem:[%s674] sm:$0xf]
    %v676 = vld [vmem:[%s674 + $0x4] sm:$0xf]
    %v677 = vld [vmem:[%s674 + $0x8] sm:$0xf]
    %v678 = vld [vmem:[%s674 + $0xc] sm:$0xf]
    %v683 = vunpack.c.l.b16 %v675
    %v684 = vunpack.c.l.b16 %v676
    %v685 = vunpack.c.l.b16 %v677
    %v686 = vunpack.c.l.b16 %v678
    %v687 = vpack.c.b16 %v684, %v683
    %v688 = vpack.c.b16 %v686, %v685
    %691 = vmatpush.bf16.msra.mxu0 0
    %692 = vmatpush.bf16.msra.mxu0 0
    %693 = vmatpush.bf16.msra.mxu0 0
    %694 = vmatpush.bf16.msra.mxu0 0
    %695 = vmatpush.bf16.msra.mxu0 0
    %696 = vmatpush.bf16.msra.mxu0 0
    %697 = vmatpush.bf16.msra.mxu0 %v688
    %698 = vmatpush.bf16.msra.mxu0 %v687
    %699 = vmatmul.bf16.gmra.mxu0 %v610
    %v700 = vpop.f32.mrf.mxu0
    %v701 = vadd.f32 0.0, %v700
    %v702 = vpop.f32.mrf.mxu0
    %v703 = vadd.f32 0.0, %v702
    %704 = vmatmul.bf16.gmra.mxu0 %v613
    %v705 = vpop.f32.mrf.mxu0
    %v706 = vadd.f32 0.0, %v705
    %v707 = vpop.f32.mrf.mxu0
    %v708 = vadd.f32 0.0, %v707
    %709 = vdwg.mxu0
    %v710 = vpack.c.bf16 %v703, %v701
    %v711 = vpack.c.bf16 %v708, %v706
    %v712 = vld [vmem:[%s11] sm:$0xff]
    %v713 = vld [vmem:[%s11 + $0x8] sm:$0xff]
    %v714 = vld [vmem:[%s11 + $0x10] sm:$0xff]
    %v715 = vld [vmem:[%s11 + $0x18] sm:$0xff]
    %vm716 = vcmask 130048
    %v718 = vsel %vm716, %v634, 0
    %v721 = vsel %vm716, %v635, 0
    %v724 = vsel %vm716, %v672, 0
    %v727 = vsel %vm716, %v673, 0
    %729 = vmatpush.bf16.xpose.msra.mxu0 0
    %730 = vmatpush.bf16.xpose.msra.mxu0 0
    %731 = vmatpush.bf16.xpose.msra.mxu0 0
    %732 = vmatpush.bf16.xpose.msra.mxu0 0
    %733 = vmatpush.bf16.xpose.msra.mxu0 0
    %734 = vmatpush.bf16.xpose.msra.mxu0 0
    %735 = vmatpush.bf16.xpose.msra.mxu0 %v727
    %736 = vmatpush.bf16.xpose.msra.mxu0 %v724
    %737 = vmatmul.bf16.gmra.mxu0 %v718
    %v738 = vpop.f32.mrf.mxu0
    %v739 = vadd.f32 %v712, %v738
    %v740 = vpop.f32.mrf.mxu0
    %v741 = vadd.f32 %v713, %v740
    %742 = vmatmul.bf16.gmra.mxu0 %v721
    %v743 = vpop.f32.mrf.mxu0
    %v744 = vadd.f32 %v714, %v743
    %v745 = vpop.f32.mrf.mxu0
    %v746 = vadd.f32 %v715, %v745
    %747 = vdwg.mxu0
    %v748 = vsel %vm383, %v739, -inf
    %749 = vmax.xlane.f32.xlu0 %v748
    %v750 = vpop.xlane.xlu0 %749
    %v751 = vsel %vm383, %v741, -inf
    %752 = vmax.xlane.f32.xlu0 %v751
    %v753 = vpop.xlane.xlu0 %752
    %v754 = vsel %vm383, %v744, -inf
    %755 = vmax.xlane.f32.xlu0 %v754
    %v756 = vpop.xlane.xlu0 %755
    %v757 = vsel %vm383, %v746, -inf
    %758 = vmax.xlane.f32.xlu0 %v757
    %v759 = vpop.xlane.xlu0 %758
    %v760 = vsub.f32 %v739, %v750
    %v761 = vsub.f32 %v741, %v753
    %v762 = vsub.f32 %v744, %v756
    %v763 = vsub.f32 %v746, %v759
    %v764 = vmul.f32 %v760, 1.442695
    %v765 = vpow.pop %v764
    %v766 = vmul.f32 %v761, 1.442695
    %v767 = vpow.pop %v766
    %v768 = vmul.f32 %v762, 1.442695
    %v769 = vpow.pop %v768
    %v770 = vmul.f32 %v763, 1.442695
    %v771 = vpow.pop %v770
    %v772 = vsel %vm383, %v765, 0.0
    %773 = vadd.xlane.f32.xlu0 %v772
    %v774 = vpop.xlane.xlu0 %773
    %v775 = vsel %vm383, %v767, 0.0
    %776 = vadd.xlane.f32.xlu0 %v775
    %v777 = vpop.xlane.xlu0 %776
    %v778 = vsel %vm383, %v769, 0.0
    %779 = vadd.xlane.f32.xlu0 %v778
    %v780 = vpop.xlane.xlu0 %779
    %v781 = vsel %vm383, %v771, 0.0
    %782 = vadd.xlane.f32.xlu0 %v781
    %v783 = vpop.xlane.xlu0 %782
    %v784 = vrcp.pop %v774
    %v785 = vmul.f32 %v774, %v784
    %v786 = vsub.f32 1.0, %v785
    %v787 = vmul.f32 %v784, %v786
    %v788 = vadd.f32 %v784, %v787
    %vm789 = vweird.f32 %v774
    %vm790 = vweird.f32 %v784
    %vm791 = vmor %vm789, %vm790
    %v792 = vsel %vm791, %v784, %v788
    %v793 = vand.u32 2147483647, %v774
    %vm794 = vcmp.eq.f32.partialorder %v793, 8.507059e+37
    %v795 = vand.u32 %v774, 2147483648
    %v796 = vor.u32 1.1754944e-38, %v795
    %v797 = vsel %vm794, %v796, %v792
    %v798 = vmul.f32 %v765, %v797
    %v799 = vrcp.pop %v777
    %v800 = vmul.f32 %v777, %v799
    %v801 = vsub.f32 1.0, %v800
    %v802 = vmul.f32 %v799, %v801
    %v803 = vadd.f32 %v799, %v802
    %vm804 = vweird.f32 %v777
    %vm805 = vweird.f32 %v799
    %vm806 = vmor %vm804, %vm805
    %v807 = vsel %vm806, %v799, %v803
    %v808 = vand.u32 2147483647, %v777
    %vm809 = vcmp.eq.f32.partialorder %v808, 8.507059e+37
    %v810 = vand.u32 %v777, 2147483648
    %v811 = vor.u32 1.1754944e-38, %v810
    %v812 = vsel %vm809, %v811, %v807
    %v813 = vmul.f32 %v767, %v812
    %v814 = vrcp.pop %v780
    %v815 = vmul.f32 %v780, %v814
    %v816 = vsub.f32 1.0, %v815
    %v817 = vmul.f32 %v814, %v816
    %v818 = vadd.f32 %v814, %v817
    %vm819 = vweird.f32 %v780
    %vm820 = vweird.f32 %v814
    %vm821 = vmor %vm819, %vm820
    %v822 = vsel %vm821, %v814, %v818
    %v823 = vand.u32 2147483647, %v780
    %vm824 = vcmp.eq.f32.partialorder %v823, 8.507059e+37
    %v825 = vand.u32 %v780, 2147483648
    %v826 = vor.u32 1.1754944e-38, %v825
    %v827 = vsel %vm824, %v826, %v822
    %v828 = vmul.f32 %v769, %v827
    %v829 = vrcp.pop %v783
    %v830 = vmul.f32 %v783, %v829
    %v831 = vsub.f32 1.0, %v830
    %v832 = vmul.f32 %v829, %v831
    %v833 = vadd.f32 %v829, %v832
    %vm834 = vweird.f32 %v783
    %vm835 = vweird.f32 %v829
    %vm836 = vmor %vm834, %vm835
    %v837 = vsel %vm836, %v829, %v833
    %v838 = vand.u32 2147483647, %v783
    %vm839 = vcmp.eq.f32.partialorder %v838, 8.507059e+37
    %v840 = vand.u32 %v783, 2147483648
    %v841 = vor.u32 1.1754944e-38, %v840
    %v842 = vsel %vm839, %v841, %v837
    %v843 = vmul.f32 %v771, %v842
    %v844 = vpack.c.bf16 %v813, %v798
    %v845 = vpack.c.bf16 %v843, %v828
    %v847 = vsel %vm383, %v844, 0
    %v850 = vsel %vm383, %v845, 0
    %852 = vmatpush.bf16.msra.mxu0 0
    %853 = vmatpush.bf16.msra.mxu0 0
    %854 = vmatpush.bf16.msra.mxu0 0
    %855 = vmatpush.bf16.msra.mxu0 0
    %856 = vmatpush.bf16.msra.mxu0 0
    %857 = vmatpush.bf16.msra.mxu0 0
    %858 = vmatpush.bf16.msra.mxu0 %v711
    %859 = vmatpush.bf16.msra.mxu0 %v710
    %860 = vmatmul.bf16.gmra.mxu0 %v847
    %v861 = vpop.f32.mrf.mxu0
    %v862 = vadd.f32 0.0, %v861
    %v863 = vpop.f32.mrf.mxu0
    %v864 = vadd.f32 0.0, %v863
    %865 = vmatmul.bf16.gmra.mxu0 %v850
    %v866 = vpop.f32.mrf.mxu0
    %v867 = vadd.f32 0.0, %v866
    %v868 = vpop.f32.mrf.mxu0
    %v869 = vadd.f32 0.0, %v868
    %870 = vdwg.mxu0
    %v871 = vpack.c.bf16 %v864, %v862
    %v872 = vpack.c.bf16 %v869, %v867
    %v873 = vld [vmem:[#allocation5] sm:$0xf]
    %v874 = vld [vmem:[#allocation5 + $0x4] sm:$0xf]
    %s875 = scalar_lea.vmem %s7, 16
    %v876 = vld [vmem:[%s875] sm:$0xf]
    %v877 = vld [vmem:[%s875 + $0x4] sm:$0xf]
    %v878 = vld [vmem:[%s875 + $0x8] sm:$0xf]
    %v879 = vld [vmem:[%s875 + $0xc] sm:$0xf]
    %v880 = vperm.slane %v489, 1
    %v885 = vunpack.c.l.b16 %v876
    %v886 = vunpack.c.l.b16 %v877
    %v887 = vunpack.c.l.b16 %v878
    %v888 = vunpack.c.l.b16 %v879
    %v889 = vpack.c.b16 %v886, %v885
    %v890 = vpack.c.b16 %v888, %v887
    %893 = vmatpush.bf16.msra.mxu0 0
    %894 = vmatpush.bf16.msra.mxu0 0
    %895 = vmatpush.bf16.msra.mxu0 0
    %896 = vmatpush.bf16.msra.mxu0 0
    %897 = vmatpush.bf16.msra.mxu0 0
    %898 = vmatpush.bf16.msra.mxu0 0
    %899 = vmatpush.bf16.msra.mxu0 %v890
    %900 = vmatpush.bf16.msra.mxu0 %v889
    %901 = vmatmul.bf16.gmra.mxu0 %v610
    %v902 = vpop.f32.mrf.mxu0
    %v903 = vadd.f32 %v880, %v902
    %v904 = vpop.f32.mrf.mxu0
    %v905 = vadd.f32 %v880, %v904
    %906 = vmatmul.bf16.gmra.mxu0 %v613
    %v907 = vpop.f32.mrf.mxu0
    %v908 = vadd.f32 %v880, %v907
    %v909 = vpop.f32.mrf.mxu0
    %v910 = vadd.f32 %v880, %v909
    %911 = vdwg.mxu0
    %v912 = vpack.c.bf16 %v905, %v903
    %v913 = vpack.c.bf16 %v910, %v908
    %s914 = scalar_lea.vmem %s7, 48
    %v915 = vld [vmem:[%s914] sm:$0xf]
    %v916 = vld [vmem:[%s914 + $0x4] sm:$0xf]
    %v917 = vld [vmem:[%s914 + $0x8] sm:$0xf]
    %v918 = vld [vmem:[%s914 + $0xc] sm:$0xf]
    %v923 = vunpack.c.l.b16 %v915
    %v924 = vunpack.c.l.b16 %v916
    %v925 = vunpack.c.l.b16 %v917
    %v926 = vunpack.c.l.b16 %v918
    %v927 = vpack.c.b16 %v924, %v923
    %v928 = vpack.c.b16 %v926, %v925
    %931 = vmatpush.bf16.msra.mxu0 0
    %932 = vmatpush.bf16.msra.mxu0 0
    %933 = vmatpush.bf16.msra.mxu0 0
    %934 = vmatpush.bf16.msra.mxu0 0
    %935 = vmatpush.bf16.msra.mxu0 0
    %936 = vmatpush.bf16.msra.mxu0 0
    %937 = vmatpush.bf16.msra.mxu0 %v928
    %938 = vmatpush.bf16.msra.mxu0 %v927
    %939 = vmatmul.bf16.gmra.mxu0 %v610
    %v940 = vpop.f32.mrf.mxu0
    %v941 = vadd.f32 0.0, %v940
    %v942 = vpop.f32.mrf.mxu0
    %v943 = vadd.f32 0.0, %v942
    %944 = vmatmul.bf16.gmra.mxu0 %v613
    %v945 = vpop.f32.mrf.mxu0
    %v946 = vadd.f32 0.0, %v945
    %v947 = vpop.f32.mrf.mxu0
    %v948 = vadd.f32 0.0, %v947
    %949 = vdwg.mxu0
    %v950 = vpack.c.bf16 %v943, %v941
    %v951 = vpack.c.bf16 %v948, %v946
    %s952 = scalar_lea.vmem %s7, 80
    %v953 = vld [vmem:[%s952] sm:$0xf]
    %v954 = vld [vmem:[%s952 + $0x4] sm:$0xf]
    %v955 = vld [vmem:[%s952 + $0x8] sm:$0xf]
    %v956 = vld [vmem:[%s952 + $0xc] sm:$0xf]
    %v961 = vunpack.c.l.b16 %v953
    %v962 = vunpack.c.l.b16 %v954
    %v963 = vunpack.c.l.b16 %v955
    %v964 = vunpack.c.l.b16 %v956
    %v965 = vpack.c.b16 %v962, %v961
    %v966 = vpack.c.b16 %v964, %v963
    %969 = vmatpush.bf16.msra.mxu0 0
    %970 = vmatpush.bf16.msra.mxu0 0
    %971 = vmatpush.bf16.msra.mxu0 0
    %972 = vmatpush.bf16.msra.mxu0 0
    %973 = vmatpush.bf16.msra.mxu0 0
    %974 = vmatpush.bf16.msra.mxu0 0
    %975 = vmatpush.bf16.msra.mxu0 %v966
    %976 = vmatpush.bf16.msra.mxu0 %v965
    %977 = vmatmul.bf16.gmra.mxu0 %v610
    %v978 = vpop.f32.mrf.mxu0
    %v979 = vadd.f32 0.0, %v978
    %v980 = vpop.f32.mrf.mxu0
    %v981 = vadd.f32 0.0, %v980
    %982 = vmatmul.bf16.gmra.mxu0 %v613
    %v983 = vpop.f32.mrf.mxu0
    %v984 = vadd.f32 0.0, %v983
    %v985 = vpop.f32.mrf.mxu0
    %v986 = vadd.f32 0.0, %v985
    %987 = vdwg.mxu0
    %v988 = vpack.c.bf16 %v981, %v979
    %v989 = vpack.c.bf16 %v986, %v984
    %s990 = scalar_lea.vmem %s11, 32
    %v991 = vld [vmem:[%s990] sm:$0xff]
    %v992 = vld [vmem:[%s990 + $0x8] sm:$0xff]
    %v993 = vld [vmem:[%s990 + $0x10] sm:$0xff]
    %v994 = vld [vmem:[%s990 + $0x18] sm:$0xff]
    %v996 = vsel %vm716, %v912, 0
    %v999 = vsel %vm716, %v913, 0
    %v1002 = vsel %vm716, %v950, 0
    %v1005 = vsel %vm716, %v951, 0
    %1007 = vmatpush.bf16.xpose.msra.mxu0 0
    %1008 = vmatpush.bf16.xpose.msra.mxu0 0
    %1009 = vmatpush.bf16.xpose.msra.mxu0 0
    %1010 = vmatpush.bf16.xpose.msra.mxu0 0
    %1011 = vmatpush.bf16.xpose.msra.mxu0 0
    %1012 = vmatpush.bf16.xpose.msra.mxu0 0
    %1013 = vmatpush.bf16.xpose.msra.mxu0 %v1005
    %1014 = vmatpush.bf16.xpose.msra.mxu0 %v1002
    %1015 = vmatmul.bf16.gmra.mxu0 %v996
    %v1016 = vpop.f32.mrf.mxu0
    %v1017 = vadd.f32 %v991, %v1016
    %v1018 = vpop.f32.mrf.mxu0
    %v1019 = vadd.f32 %v992, %v1018
    %1020 = vmatmul.bf16.gmra.mxu0 %v999
    %v1021 = vpop.f32.mrf.mxu0
    %v1022 = vadd.f32 %v993, %v1021
    %v1023 = vpop.f32.mrf.mxu0
    %v1024 = vadd.f32 %v994, %v1023
    %1025 = vdwg.mxu0
    %v1026 = vsel %vm383, %v1017, -inf
    %1027 = vmax.xlane.f32.xlu0 %v1026
    %v1028 = vpop.xlane.xlu0 %1027
    %v1029 = vsel %vm383, %v1019, -inf
    %1030 = vmax.xlane.f32.xlu0 %v1029
    %v1031 = vpop.xlane.xlu0 %1030
    %v1032 = vsel %vm383, %v1022, -inf
    %1033 = vmax.xlane.f32.xlu0 %v1032
    %v1034 = vpop.xlane.xlu0 %1033
    %v1035 = vsel %vm383, %v1024, -inf
    %1036 = vmax.xlane.f32.xlu0 %v1035
    %v1037 = vpop.xlane.xlu0 %1036
    %v1038 = vsub.f32 %v1017, %v1028
    %v1039 = vsub.f32 %v1019, %v1031
    %v1040 = vsub.f32 %v1022, %v1034
    %v1041 = vsub.f32 %v1024, %v1037
    %v1042 = vmul.f32 %v1038, 1.442695
    %v1043 = vpow.pop %v1042
    %v1044 = vmul.f32 %v1039, 1.442695
    %v1045 = vpow.pop %v1044
    %v1046 = vmul.f32 %v1040, 1.442695
    %v1047 = vpow.pop %v1046
    %v1048 = vmul.f32 %v1041, 1.442695
    %v1049 = vpow.pop %v1048
    %v1050 = vsel %vm383, %v1043, 0.0
    %1051 = vadd.xlane.f32.xlu0 %v1050
    %v1052 = vpop.xlane.xlu0 %1051
    %v1053 = vsel %vm383, %v1045, 0.0
    %1054 = vadd.xlane.f32.xlu0 %v1053
    %v1055 = vpop.xlane.xlu0 %1054
    %v1056 = vsel %vm383, %v1047, 0.0
    %1057 = vadd.xlane.f32.xlu0 %v1056
    %v1058 = vpop.xlane.xlu0 %1057
    %v1059 = vsel %vm383, %v1049, 0.0
    %1060 = vadd.xlane.f32.xlu0 %v1059
    %v1061 = vpop.xlane.xlu0 %1060
    %v1062 = vrcp.pop %v1052
    %v1063 = vmul.f32 %v1052, %v1062
    %v1064 = vsub.f32 1.0, %v1063
    %v1065 = vmul.f32 %v1062, %v1064
    %v1066 = vadd.f32 %v1062, %v1065
    %vm1067 = vweird.f32 %v1052
    %vm1068 = vweird.f32 %v1062
    %vm1069 = vmor %vm1067, %vm1068
    %v1070 = vsel %vm1069, %v1062, %v1066
    %v1071 = vand.u32 2147483647, %v1052
    %vm1072 = vcmp.eq.f32.partialorder %v1071, 8.507059e+37
    %v1073 = vand.u32 %v1052, 2147483648
    %v1074 = vor.u32 1.1754944e-38, %v1073
    %v1075 = vsel %vm1072, %v1074, %v1070
    %v1076 = vmul.f32 %v1043, %v1075
    %v1077 = vrcp.pop %v1055
    %v1078 = vmul.f32 %v1055, %v1077
    %v1079 = vsub.f32 1.0, %v1078
    %v1080 = vmul.f32 %v1077, %v1079
    %v1081 = vadd.f32 %v1077, %v1080
    %vm1082 = vweird.f32 %v1055
    %vm1083 = vweird.f32 %v1077
    %vm1084 = vmor %vm1082, %vm1083
    %v1085 = vsel %vm1084, %v1077, %v1081
    %v1086 = vand.u32 2147483647, %v1055
    %vm1087 = vcmp.eq.f32.partialorder %v1086, 8.507059e+37
    %v1088 = vand.u32 %v1055, 2147483648
    %v1089 = vor.u32 1.1754944e-38, %v1088
    %v1090 = vsel %vm1087, %v1089, %v1085
    %v1091 = vmul.f32 %v1045, %v1090
    %v1092 = vrcp.pop %v1058
    %v1093 = vmul.f32 %v1058, %v1092
    %v1094 = vsub.f32 1.0, %v1093
    %v1095 = vmul.f32 %v1092, %v1094
    %v1096 = vadd.f32 %v1092, %v1095
    %vm1097 = vweird.f32 %v1058
    %vm1098 = vweird.f32 %v1092
    %vm1099 = vmor %vm1097, %vm1098
    %v1100 = vsel %vm1099, %v1092, %v1096
    %v1101 = vand.u32 2147483647, %v1058
    %vm1102 = vcmp.eq.f32.partialorder %v1101, 8.507059e+37
    %v1103 = vand.u32 %v1058, 2147483648
    %v1104 = vor.u32 1.1754944e-38, %v1103
    %v1105 = vsel %vm1102, %v1104, %v1100
    %v1106 = vmul.f32 %v1047, %v1105
    %v1107 = vrcp.pop %v1061
    %v1108 = vmul.f32 %v1061, %v1107
    %v1109 = vsub.f32 1.0, %v1108
    %v1110 = vmul.f32 %v1107, %v1109
    %v1111 = vadd.f32 %v1107, %v1110
    %vm1112 = vweird.f32 %v1061
    %vm1113 = vweird.f32 %v1107
    %vm1114 = vmor %vm1112, %vm1113
    %v1115 = vsel %vm1114, %v1107, %v1111
    %v1116 = vand.u32 2147483647, %v1061
    %vm1117 = vcmp.eq.f32.partialorder %v1116, 8.507059e+37
    %v1118 = vand.u32 %v1061, 2147483648
    %v1119 = vor.u32 1.1754944e-38, %v1118
    %v1120 = vsel %vm1117, %v1119, %v1115
    %v1121 = vmul.f32 %v1049, %v1120
    %v1122 = vpack.c.bf16 %v1091, %v1076
    %v1123 = vpack.c.bf16 %v1121, %v1106
    %v1125 = vsel %vm383, %v1122, 0
    %v1128 = vsel %vm383, %v1123, 0
    %1130 = vmatpush.bf16.msra.mxu0 0
    %1131 = vmatpush.bf16.msra.mxu0 0
    %1132 = vmatpush.bf16.msra.mxu0 0
    %1133 = vmatpush.bf16.msra.mxu0 0
    %1134 = vmatpush.bf16.msra.mxu0 0
    %1135 = vmatpush.bf16.msra.mxu0 0
    %1136 = vmatpush.bf16.msra.mxu0 %v989
    %1137 = vmatpush.bf16.msra.mxu0 %v988
    %1138 = vmatmul.bf16.gmra.mxu0 %v1125
    %v1139 = vpop.f32.mrf.mxu0
    %v1140 = vadd.f32 0.0, %v1139
    %v1141 = vpop.f32.mrf.mxu0
    %v1142 = vadd.f32 0.0, %v1141
    %1143 = vmatmul.bf16.gmra.mxu0 %v1128
    %v1144 = vpop.f32.mrf.mxu0
    %v1145 = vadd.f32 0.0, %v1144
    %v1146 = vpop.f32.mrf.mxu0
    %v1147 = vadd.f32 0.0, %v1146
    %1148 = vdwg.mxu0
    %v1149 = vpack.c.bf16 %v1142, %v1140
    %v1150 = vpack.c.bf16 %v1147, %v1145
    %s1151 = scalar_lea.vmem [#allocation5], 8
    %v1152 = vld [vmem:[%s1151] sm:$0xf]
    %v1153 = vld [vmem:[%s1151 + $0x4] sm:$0xf]
    %v1156 = vunpack.c.l.b16 %v1152
    %v1157 = vunpack.c.l.b16 %v1153
    %v1158 = vpack.c.b16 %v1157, %v1156
    %v1161 = vsel %vm716, %v1149, 0
    %v1164 = vsel %vm716, %v1150, 0
    %1166 = vmatpush.bf16.msra.mxu0 0
    %1167 = vmatpush.bf16.msra.mxu0 0
    %1168 = vmatpush.bf16.msra.mxu0 0
    %1169 = vmatpush.bf16.msra.mxu0 0
    %1170 = vmatpush.bf16.msra.mxu0 0
    %1171 = vmatpush.bf16.msra.mxu0 0
    %1172 = vmatpush.bf16.msra.mxu0 0
    %1173 = vmatpush.bf16.msra.mxu0 %v1158
    %1174 = vmatmul.bf16.gmra.mxu0 %v1161
    %v1175 = vpop.f32.mrf.mxu0
    %v1176 = vadd.f32 0.0, %v1175
    %v1177 = vpop.f32.mrf.mxu0
    %v1178 = vadd.f32 0.0, %v1177
    %1179 = vmatmul.bf16.gmra.mxu0 %v1164
    %v1180 = vpop.f32.mrf.mxu0
    %v1181 = vadd.f32 0.0, %v1180
    %v1182 = vpop.f32.mrf.mxu0
    %v1183 = vadd.f32 0.0, %v1182
    %1184 = vdwg.mxu0
    %v1187 = vunpack.c.l.b16 %v873
    %v1188 = vunpack.c.l.b16 %v874
    %v1189 = vpack.c.b16 %v1188, %v1187
    %v1192 = vsel %vm716, %v871, 0
    %v1195 = vsel %vm716, %v872, 0
    %1197 = vmatpush.bf16.msra.mxu0 0
    %1198 = vmatpush.bf16.msra.mxu0 0
    %1199 = vmatpush.bf16.msra.mxu0 0
    %1200 = vmatpush.bf16.msra.mxu0 0
    %1201 = vmatpush.bf16.msra.mxu0 0
    %1202 = vmatpush.bf16.msra.mxu0 0
    %1203 = vmatpush.bf16.msra.mxu0 0
    %1204 = vmatpush.bf16.msra.mxu0 %v1189
    %1205 = vmatmul.bf16.gmra.mxu0 %v1192
    %v1206 = vpop.f32.mrf.mxu0
    %v1207 = vadd.f32 %v1176, %v1206
    %v1208 = vpop.f32.mrf.mxu0
    %v1209 = vadd.f32 %v1178, %v1208
    %1210 = vmatmul.bf16.gmra.mxu0 %v1195
    %v1211 = vpop.f32.mrf.mxu0
    %v1212 = vadd.f32 %v1181, %v1211
    %v1213 = vpop.f32.mrf.mxu0
    %v1214 = vadd.f32 %v1183, %v1213
    %1215 = vdwg.mxu0
    %v1216 = vadd.f32 %v485, %v1207
    %v1217 = vadd.f32 %v486, %v1209
    %v1218 = vadd.f32 %v487, %v1212
    %v1219 = vadd.f32 %v488, %v1214
    %v1220 = vperm.slane %v490, 4
    %v1221 = vadd.f32 %v1216, %v1220
    %v1222 = vadd.f32 %v1217, %v1220
    %v1223 = vadd.f32 %v1218, %v1220
    %v1224 = vadd.f32 %v1219, %v1220
    %v1225 = vsel %vm383, %v1221, 0.0
    %1226 = vadd.xlane.f32.xlu0 %v1225
    %v1227 = vpop.xlane.xlu0 %1226
    %v1228 = vsel %vm383, %v1222, 0.0
    %1229 = vadd.xlane.f32.xlu0 %v1228
    %v1230 = vpop.xlane.xlu0 %1229
    %v1231 = vsel %vm383, %v1223, 0.0
    %1232 = vadd.xlane.f32.xlu0 %v1231
    %v1233 = vpop.xlane.xlu0 %1232
    %v1234 = vsel %vm383, %v1224, 0.0
    %1235 = vadd.xlane.f32.xlu0 %v1234
    %v1236 = vpop.xlane.xlu0 %1235
    %v1237 = vmul.f32 %v1227, %v402
    %v1238 = vmul.f32 %v1230, %v402
    %v1239 = vmul.f32 %v1233, %v402
    %v1240 = vmul.f32 %v1236, %v402
    %v1241 = vsub.f32 %v1221, %v1237
    %v1242 = vsub.f32 %v1222, %v1238
    %v1243 = vsub.f32 %v1223, %v1239
    %v1244 = vsub.f32 %v1224, %v1240
    %v1245 = vmul.f32 %v1241, %v1241
    %v1246 = vmul.f32 %v1242, %v1242
    %v1247 = vmul.f32 %v1243, %v1243
    %v1248 = vmul.f32 %v1244, %v1244
    %v1249 = vsel %vm383, %v1245, 0.0
    %1250 = vadd.xlane.f32.xlu0 %v1249
    %v1251 = vpop.xlane.xlu0 %1250
    %v1252 = vsel %vm383, %v1246, 0.0
    %1253 = vadd.xlane.f32.xlu0 %v1252
    %v1254 = vpop.xlane.xlu0 %1253
    %v1255 = vsel %vm383, %v1247, 0.0
    %1256 = vadd.xlane.f32.xlu0 %v1255
    %v1257 = vpop.xlane.xlu0 %1256
    %v1258 = vsel %vm383, %v1248, 0.0
    %1259 = vadd.xlane.f32.xlu0 %v1258
    %v1260 = vpop.xlane.xlu0 %1259
    %v1261 = vmul.f32 %v1251, %v402
    %v1262 = vmul.f32 %v1254, %v402
    %v1263 = vmul.f32 %v1257, %v402
    %v1264 = vmul.f32 %v1260, %v402
    %v1265 = vadd.f32 %v1261, 1e-05
    %v1266 = vadd.f32 %v1262, 1e-05
    %v1267 = vadd.f32 %v1263, 1e-05
    %v1268 = vadd.f32 %v1264, 1e-05
    %v1269 = vrsqrt.pop %v1265
    %v1270 = vmul.f32 %v1269, %v1265
    %v1271 = vmul.f32 %v1270, %v1269
    %v1272 = vmul.f32 0.5, %v1271
    %v1273 = vsub.f32 1.5, %v1272
    %v1274 = vmul.f32 %v1269, %v1273
    %vm1275 = vweird.f32 %v1265
    %vm1276 = vweird.f32 %v1269
    %vm1277 = vmor %vm1275, %vm1276
    %v1278 = vsel %vm1277, %v1269, %v1274
    %v1279 = vrsqrt.pop %v1266
    %v1280 = vmul.f32 %v1279, %v1266
    %v1281 = vmul.f32 %v1280, %v1279
    %v1282 = vmul.f32 0.5, %v1281
    %v1283 = vsub.f32 1.5, %v1282
    %v1284 = vmul.f32 %v1279, %v1283
    %vm1285 = vweird.f32 %v1266
    %vm1286 = vweird.f32 %v1279
    %vm1287 = vmor %vm1285, %vm1286
    %v1288 = vsel %vm1287, %v1279, %v1284
    %v1289 = vrsqrt.pop %v1267
    %v1290 = vmul.f32 %v1289, %v1267
    %v1291 = vmul.f32 %v1290, %v1289
    %v1292 = vmul.f32 0.5, %v1291
    %v1293 = vsub.f32 1.5, %v1292
    %v1294 = vmul.f32 %v1289, %v1293
    %vm1295 = vweird.f32 %v1267
    %vm1296 = vweird.f32 %v1289
    %vm1297 = vmor %vm1295, %vm1296
    %v1298 = vsel %vm1297, %v1289, %v1294
    %v1299 = vrsqrt.pop %v1268
    %v1300 = vmul.f32 %v1299, %v1268
    %v1301 = vmul.f32 %v1300, %v1299
    %v1302 = vmul.f32 0.5, %v1301
    %v1303 = vsub.f32 1.5, %v1302
    %v1304 = vmul.f32 %v1299, %v1303
    %vm1305 = vweird.f32 %v1268
    %vm1306 = vweird.f32 %v1299
    %vm1307 = vmor %vm1305, %vm1306
    %v1308 = vsel %vm1307, %v1299, %v1304
    %v1309 = vmul.f32 %v1241, %v1278
    %v1310 = vmul.f32 %v1242, %v1288
    %v1311 = vmul.f32 %v1243, %v1298
    %v1312 = vmul.f32 %v1244, %v1308
    %v1313 = vperm.slane %v490, 2
    %v1314 = vmul.f32 %v1309, %v1313
    %v1315 = vmul.f32 %v1310, %v1313
    %v1316 = vmul.f32 %v1311, %v1313
    %v1317 = vmul.f32 %v1312, %v1313
    %v1318 = vperm.slane %v490, 3
    %v1319 = vadd.f32 %v1314, %v1318
    %v1320 = vadd.f32 %v1315, %v1318
    %v1321 = vadd.f32 %v1316, %v1318
    %v1322 = vadd.f32 %v1317, %v1318
    %v1323 = vpack.c.bf16 %v1320, %v1319
    %v1324 = vpack.c.bf16 %v1322, %v1321
    %v1325 = vld [vmem:[#allocation7] sm:$0xf]
    %v1326 = vld [vmem:[#allocation7 + $0x4] sm:$0xf]
    %v1327 = vld [vmem:[#allocation7 + $0x8] sm:$0xf]
    %v1328 = vld [vmem:[#allocation7 + $0xc] sm:$0xf]
    %v1330 = vperm.slane %v491, 0
    %v1336 = vunpack.c.l.b16 %v1325
    %v1337 = vunpack.c.l.b16 %v1326
    %v1338 = vunpack.c.l.b16 %v1327
    %v1339 = vunpack.c.l.b16 %v1328
    %v1340 = vpack.c.b16 %v1337, %v1336
    %v1341 = vpack.c.b16 %v1339, %v1338
    %v1345 = vsel %vm383, %v1323, 0
    %v1348 = vsel %vm383, %v1324, 0
    %1350 = vmatpush.bf16.msra.mxu0 0
    %1351 = vmatpush.bf16.msra.mxu0 0
    %1352 = vmatpush.bf16.msra.mxu0 0
    %1353 = vmatpush.bf16.msra.mxu0 0
    %1354 = vmatpush.bf16.msra.mxu0 0
    %1355 = vmatpush.bf16.msra.mxu0 0
    %1356 = vmatpush.bf16.msra.mxu0 %v1341
    %1357 = vmatpush.bf16.msra.mxu0 %v1340
    %1358 = vmatmul.bf16.gmra.mxu0 %v1345
    %v1359 = vpop.f32.mrf.mxu0
    %v1360 = vadd.f32 %v1330, %v1359
    %v1361 = vpop.f32.mrf.mxu0
    %v1362 = vadd.f32 %v1330, %v1361
    %1363 = vmatmul.bf16.gmra.mxu0 %v1348
    %v1364 = vpop.f32.mrf.mxu0
    %v1365 = vadd.f32 %v1330, %v1364
    %v1366 = vpop.f32.mrf.mxu0
    %v1367 = vadd.f32 %v1330, %v1366
    %1368 = vdwg.mxu0
    %v1369 = vmul.f32 %v1360, %v1360
    %v1370 = vmul.f32 %v1362, %v1362
    %v1371 = vmul.f32 %v1365, %v1365
    %v1372 = vmul.f32 %v1367, %v1367
    %v1373 = vmul.f32 %v1360, %v1369
    %v1374 = vmul.f32 %v1362, %v1370
    %v1375 = vmul.f32 %v1365, %v1371
    %v1376 = vmul.f32 %v1367, %v1372
    %v1377 = vmul.f32 %v1373, 0.044715
    %v1378 = vmul.f32 %v1374, 0.044715
    %v1379 = vmul.f32 %v1375, 0.044715
    %v1380 = vmul.f32 %v1376, 0.044715
    %v1381 = vadd.f32 %v1360, %v1377
    %v1382 = vadd.f32 %v1362, %v1378
    %v1383 = vadd.f32 %v1365, %v1379
    %v1384 = vadd.f32 %v1367, %v1380
    %v1385 = vmul.f32 %v1381, 0.7978846
    %v1386 = vmul.f32 %v1382, 0.7978846
    %v1387 = vmul.f32 %v1383, 0.7978846
    %v1388 = vmul.f32 %v1384, 0.7978846
    %v1389 = vtanh.pop %v1385
    %v1390 = vtanh.pop %v1386
    %v1391 = vtanh.pop %v1387
    %v1392 = vtanh.pop %v1388
    %v1393 = vadd.f32 %v1389, 1.0
    %v1394 = vadd.f32 %v1390, 1.0
    %v1395 = vadd.f32 %v1391, 1.0
    %v1396 = vadd.f32 %v1392, 1.0
    %v1397 = vmul.f32 %v1393, 0.5
    %v1398 = vmul.f32 %v1394, 0.5
    %v1399 = vmul.f32 %v1395, 0.5
    %v1400 = vmul.f32 %v1396, 0.5
    %v1401 = vmul.f32 %v1360, %v1397
    %v1402 = vmul.f32 %v1362, %v1398
    %v1403 = vmul.f32 %v1365, %v1399
    %v1404 = vmul.f32 %v1367, %v1400
    %v1405 = vpack.c.bf16 %v1402, %v1401
    %v1406 = vpack.c.bf16 %v1404, %v1403
    %v1407 = vld [vmem:[%s17] sm:$0xf]
    %v1408 = vld [vmem:[%s17 + $0x4] sm:$0xf]
    %v1409 = vld [vmem:[%s17 + $0x8] sm:$0xf]
    %v1410 = vld [vmem:[%s17 + $0xc] sm:$0xf]
    %v1411 = vld [vmem:[%s17 + $0x10] sm:$0xf]
    %v1412 = vld [vmem:[%s17 + $0x14] sm:$0xf]
    %v1413 = vld [vmem:[%s17 + $0x18] sm:$0xf]
    %v1414 = vld [vmem:[%s17 + $0x1c] sm:$0xf]
    %v1415 = vld [vmem:[%s17 + $0x20] sm:$0xf]
    %v1416 = vld [vmem:[%s17 + $0x24] sm:$0xf]
    %v1417 = vld [vmem:[%s17 + $0x28] sm:$0xf]
    %v1418 = vld [vmem:[%s17 + $0x2c] sm:$0xf]
    %v1419 = vld [vmem:[%s17 + $0x30] sm:$0xf]
    %v1420 = vld [vmem:[%s17 + $0x34] sm:$0xf]
    %v1421 = vld [vmem:[%s17 + $0x38] sm:$0xf]
    %v1422 = vld [vmem:[%s17 + $0x3c] sm:$0xf]
    %v1439 = vunpack.c.l.b16 %v1407
    %v1440 = vunpack.c.l.b16 %v1408
    %v1441 = vunpack.c.l.b16 %v1409
    %v1442 = vunpack.c.l.b16 %v1410
    %v1443 = vunpack.c.l.b16 %v1411
    %v1444 = vunpack.c.l.b16 %v1412
    %v1445 = vunpack.c.l.b16 %v1413
    %v1446 = vunpack.c.l.b16 %v1414
    %v1447 = vunpack.c.l.b16 %v1415
    %v1448 = vunpack.c.l.b16 %v1416
    %v1449 = vunpack.c.l.b16 %v1417
    %v1450 = vunpack.c.l.b16 %v1418
    %v1451 = vunpack.c.l.b16 %v1419
    %v1452 = vunpack.c.l.b16 %v1420
    %v1453 = vunpack.c.l.b16 %v1421
    %v1454 = vunpack.c.l.b16 %v1422
    %v1455 = vpack.c.b16 %v1440, %v1439
    %v1456 = vpack.c.b16 %v1442, %v1441
    %v1457 = vpack.c.b16 %v1444, %v1443
    %v1458 = vpack.c.b16 %v1446, %v1445
    %v1459 = vpack.c.b16 %v1448, %v1447
    %v1460 = vpack.c.b16 %v1450, %v1449
    %v1461 = vpack.c.b16 %v1452, %v1451
    %v1462 = vpack.c.b16 %v1454, %v1453
    %1471 = vmatpush.bf16.msra.mxu0 %v1462
    %1472 = vmatpush.bf16.msra.mxu0 %v1461
    %1473 = vmatpush.bf16.msra.mxu0 %v1460
    %1474 = vmatpush.bf16.msra.mxu0 %v1459
    %1475 = vmatpush.bf16.msra.mxu0 %v1458
    %1476 = vmatpush.bf16.msra.mxu0 %v1457
    %1477 = vmatpush.bf16.msra.mxu0 %v1456
    %1478 = vmatpush.bf16.msra.mxu0 %v1455
    %1479 = vmatmul.bf16.gmra.mxu0 %v1405
    %v1480 = vpop.f32.mrf.mxu0
    %v1481 = vadd.f32 0.0, %v1480
    %v1482 = vpop.f32.mrf.mxu0
    %v1483 = vadd.f32 0.0, %v1482
    %1484 = vmatmul.bf16.gmra.mxu0 %v1406
    %v1485 = vpop.f32.mrf.mxu0
    %v1486 = vadd.f32 0.0, %v1485
    %v1487 = vpop.f32.mrf.mxu0
    %v1488 = vadd.f32 0.0, %v1487
    %1489 = vdwg.mxu0
    %v1490 = vadd.f32 %v1221, %v1481
    %v1491 = vadd.f32 %v1222, %v1483
    %v1492 = vadd.f32 %v1223, %v1486
    %v1493 = vadd.f32 %v1224, %v1488
    %v1494 = vperm.slane %v490, 5
    %v1495 = vadd.f32 %v1490, %v1494
    %v1496 = vadd.f32 %v1491, %v1494
    %v1497 = vadd.f32 %v1492, %v1494
    %v1498 = vadd.f32 %v1493, %v1494
    %v1499 = vld [vmem:[%s25] sm:$0x3]
    %v1500 = vld [vmem:[%s35] sm:$0x3f]
    %v1501 = vld [vmem:[%s37] sm:$0x1]
    %v1502 = vsel %vm383, %v1495, 0.0
    %1503 = vadd.xlane.f32.xlu0 %v1502
    %v1504 = vpop.xlane.xlu0 %1503
    %v1505 = vsel %vm383, %v1496, 0.0
    %1506 = vadd.xlane.f32.xlu0 %v1505
    %v1507 = vpop.xlane.xlu0 %1506
    %v1508 = vsel %vm383, %v1497, 0.0
    %1509 = vadd.xlane.f32.xlu0 %v1508
    %v1510 = vpop.xlane.xlu0 %1509
    %v1511 = vsel %vm383, %v1498, 0.0
    %1512 = vadd.xlane.f32.xlu0 %v1511
    %v1513 = vpop.xlane.xlu0 %1512
    %v1514 = vmul.f32 %v1504, %v402
    %v1515 = vmul.f32 %v1507, %v402
    %v1516 = vmul.f32 %v1510, %v402
    %v1517 = vmul.f32 %v1513, %v402
    %v1518 = vsub.f32 %v1495, %v1514
    %v1519 = vsub.f32 %v1496, %v1515
    %v1520 = vsub.f32 %v1497, %v1516
    %v1521 = vsub.f32 %v1498, %v1517
    %v1522 = vmul.f32 %v1518, %v1518
    %v1523 = vmul.f32 %v1519, %v1519
    %v1524 = vmul.f32 %v1520, %v1520
    %v1525 = vmul.f32 %v1521, %v1521
    %v1526 = vsel %vm383, %v1522, 0.0
    %1527 = vadd.xlane.f32.xlu0 %v1526
    %v1528 = vpop.xlane.xlu0 %1527
    %v1529 = vsel %vm383, %v1523, 0.0
    %1530 = vadd.xlane.f32.xlu0 %v1529
    %v1531 = vpop.xlane.xlu0 %1530
    %v1532 = vsel %vm383, %v1524, 0.0
    %1533 = vadd.xlane.f32.xlu0 %v1532
    %v1534 = vpop.xlane.xlu0 %1533
    %v1535 = vsel %vm383, %v1525, 0.0
    %1536 = vadd.xlane.f32.xlu0 %v1535
    %v1537 = vpop.xlane.xlu0 %1536
    %v1538 = vmul.f32 %v1528, %v402
    %v1539 = vmul.f32 %v1531, %v402
    %v1540 = vmul.f32 %v1534, %v402
    %v1541 = vmul.f32 %v1537, %v402
    %v1542 = vadd.f32 %v1538, 1e-05
    %v1543 = vadd.f32 %v1539, 1e-05
    %v1544 = vadd.f32 %v1540, 1e-05
    %v1545 = vadd.f32 %v1541, 1e-05
    %v1546 = vrsqrt.pop %v1542
    %v1547 = vmul.f32 %v1546, %v1542
    %v1548 = vmul.f32 %v1547, %v1546
    %v1549 = vmul.f32 0.5, %v1548
    %v1550 = vsub.f32 1.5, %v1549
    %v1551 = vmul.f32 %v1546, %v1550
    %vm1552 = vweird.f32 %v1542
    %vm1553 = vweird.f32 %v1546
    %vm1554 = vmor %vm1552, %vm1553
    %v1555 = vsel %vm1554, %v1546, %v1551
    %v1556 = vrsqrt.pop %v1543
    %v1557 = vmul.f32 %v1556, %v1543
    %v1558 = vmul.f32 %v1557, %v1556
    %v1559 = vmul.f32 0.5, %v1558
    %v1560 = vsub.f32 1.5, %v1559
    %v1561 = vmul.f32 %v1556, %v1560
    %vm1562 = vweird.f32 %v1543
    %vm1563 = vweird.f32 %v1556
    %vm1564 = vmor %vm1562, %vm1563
    %v1565 = vsel %vm1564, %v1556, %v1561
    %v1566 = vrsqrt.pop %v1544
    %v1567 = vmul.f32 %v1566, %v1544
    %v1568 = vmul.f32 %v1567, %v1566
    %v1569 = vmul.f32 0.5, %v1568
    %v1570 = vsub.f32 1.5, %v1569
    %v1571 = vmul.f32 %v1566, %v1570
    %vm1572 = vweird.f32 %v1544
    %vm1573 = vweird.f32 %v1566
    %vm1574 = vmor %vm1572, %vm1573
    %v1575 = vsel %vm1574, %v1566, %v1571
    %v1576 = vrsqrt.pop %v1545
    %v1577 = vmul.f32 %v1576, %v1545
    %v1578 = vmul.f32 %v1577, %v1576
    %v1579 = vmul.f32 0.5, %v1578
    %v1580 = vsub.f32 1.5, %v1579
    %v1581 = vmul.f32 %v1576, %v1580
    %vm1582 = vweird.f32 %v1545
    %vm1583 = vweird.f32 %v1576
    %vm1584 = vmor %vm1582, %vm1583
    %v1585 = vsel %vm1584, %v1576, %v1581
    %v1586 = vmul.f32 %v1518, %v1555
    %v1587 = vmul.f32 %v1519, %v1565
    %v1588 = vmul.f32 %v1520, %v1575
    %v1589 = vmul.f32 %v1521, %v1585
    %v1590 = vperm.slane %v1500, 0
    %v1591 = vmul.f32 %v1586, %v1590
    %v1592 = vmul.f32 %v1587, %v1590
    %v1593 = vmul.f32 %v1588, %v1590
    %v1594 = vmul.f32 %v1589, %v1590
    %v1595 = vperm.slane %v1500, 1
    %v1596 = vadd.f32 %v1591, %v1595
    %v1597 = vadd.f32 %v1592, %v1595
    %v1598 = vadd.f32 %v1593, %v1595
    %v1599 = vadd.f32 %v1594, %v1595
    %v1600 = vpack.c.bf16 %v1597, %v1596
    %v1601 = vpack.c.bf16 %v1599, %v1598
    %v1602 = vld [vmem:[%s23] sm:$0xf]
    %v1603 = vld [vmem:[%s23 + $0x4] sm:$0xf]
    %v1604 = vld [vmem:[%s23 + $0x8] sm:$0xf]
    %v1605 = vld [vmem:[%s23 + $0xc] sm:$0xf]
    %v1606 = vperm.slane %v1499, 0
    %v1611 = vunpack.c.l.b16 %v1602
    %v1612 = vunpack.c.l.b16 %v1603
    %v1613 = vunpack.c.l.b16 %v1604
    %v1614 = vunpack.c.l.b16 %v1605
    %v1615 = vpack.c.b16 %v1612, %v1611
    %v1616 = vpack.c.b16 %v1614, %v1613
    %v1620 = vsel %vm383, %v1600, 0
    %v1623 = vsel %vm383, %v1601, 0
    %1625 = vmatpush.bf16.msra.mxu0 0
    %1626 = vmatpush.bf16.msra.mxu0 0
    %1627 = vmatpush.bf16.msra.mxu0 0
    %1628 = vmatpush.bf16.msra.mxu0 0
    %1629 = vmatpush.bf16.msra.mxu0 0
    %1630 = vmatpush.bf16.msra.mxu0 0
    %1631 = vmatpush.bf16.msra.mxu0 %v1616
    %1632 = vmatpush.bf16.msra.mxu0 %v1615
    %1633 = vmatmul.bf16.gmra.mxu0 %v1620
    %v1634 = vpop.f32.mrf.mxu0
    %v1635 = vadd.f32 %v1606, %v1634
    %v1636 = vpop.f32.mrf.mxu0
    %v1637 = vadd.f32 %v1606, %v1636
    %1638 = vmatmul.bf16.gmra.mxu0 %v1623
    %v1639 = vpop.f32.mrf.mxu0
    %v1640 = vadd.f32 %v1606, %v1639
    %v1641 = vpop.f32.mrf.mxu0
    %v1642 = vadd.f32 %v1606, %v1641
    %1643 = vdwg.mxu0
    %v1644 = vpack.c.bf16 %v1637, %v1635
    %v1645 = vpack.c.bf16 %v1642, %v1640
    %s1646 = scalar_lea.vmem %s23, 32
    %v1647 = vld [vmem:[%s1646] sm:$0xf]
    %v1648 = vld [vmem:[%s1646 + $0x4] sm:$0xf]
    %v1649 = vld [vmem:[%s1646 + $0x8] sm:$0xf]
    %v1650 = vld [vmem:[%s1646 + $0xc] sm:$0xf]
    %v1655 = vunpack.c.l.b16 %v1647
    %v1656 = vunpack.c.l.b16 %v1648
    %v1657 = vunpack.c.l.b16 %v1649
    %v1658 = vunpack.c.l.b16 %v1650
    %v1659 = vpack.c.b16 %v1656, %v1655
    %v1660 = vpack.c.b16 %v1658, %v1657
    %1663 = vmatpush.bf16.msra.mxu0 0
    %1664 = vmatpush.bf16.msra.mxu0 0
    %1665 = vmatpush.bf16.msra.mxu0 0
    %1666 = vmatpush.bf16.msra.mxu0 0
    %1667 = vmatpush.bf16.msra.mxu0 0
    %1668 = vmatpush.bf16.msra.mxu0 0
    %1669 = vmatpush.bf16.msra.mxu0 %v1660
    %1670 = vmatpush.bf16.msra.mxu0 %v1659
    %1671 = vmatmul.bf16.gmra.mxu0 %v1620
    %v1672 = vpop.f32.mrf.mxu0
    %v1673 = vadd.f32 0.0, %v1672
    %v1674 = vpop.f32.mrf.mxu0
    %v1675 = vadd.f32 0.0, %v1674
    %1676 = vmatmul.bf16.gmra.mxu0 %v1623
    %v1677 = vpop.f32.mrf.mxu0
    %v1678 = vadd.f32 0.0, %v1677
    %v1679 = vpop.f32.mrf.mxu0
    %v1680 = vadd.f32 0.0, %v1679
    %1681 = vdwg.mxu0
    %v1682 = vpack.c.bf16 %v1675, %v1673
    %v1683 = vpack.c.bf16 %v1680, %v1678
    %s1684 = scalar_lea.vmem %s23, 64
    %v1685 = vld [vmem:[%s1684] sm:$0xf]
    %v1686 = vld [vmem:[%s1684 + $0x4] sm:$0xf]
    %v1687 = vld [vmem:[%s1684 + $0x8] sm:$0xf]
    %v1688 = vld [vmem:[%s1684 + $0xc] sm:$0xf]
    %v1693 = vunpack.c.l.b16 %v1685
    %v1694 = vunpack.c.l.b16 %v1686
    %v1695 = vunpack.c.l.b16 %v1687
    %v1696 = vunpack.c.l.b16 %v1688
    %v1697 = vpack.c.b16 %v1694, %v1693
    %v1698 = vpack.c.b16 %v1696, %v1695
    %1701 = vmatpush.bf16.msra.mxu0 0
    %1702 = vmatpush.bf16.msra.mxu0 0
    %1703 = vmatpush.bf16.msra.mxu0 0
    %1704 = vmatpush.bf16.msra.mxu0 0
    %1705 = vmatpush.bf16.msra.mxu0 0
    %1706 = vmatpush.bf16.msra.mxu0 0
    %1707 = vmatpush.bf16.msra.mxu0 %v1698
    %1708 = vmatpush.bf16.msra.mxu0 %v1697
    %1709 = vmatmul.bf16.gmra.mxu0 %v1620
    %v1710 = vpop.f32.mrf.mxu0
    %v1711 = vadd.f32 0.0, %v1710
    %v1712 = vpop.f32.mrf.mxu0
    %v1713 = vadd.f32 0.0, %v1712
    %1714 = vmatmul.bf16.gmra.mxu0 %v1623
    %v1715 = vpop.f32.mrf.mxu0
    %v1716 = vadd.f32 0.0, %v1715
    %v1717 = vpop.f32.mrf.mxu0
    %v1718 = vadd.f32 0.0, %v1717
    %1719 = vdwg.mxu0
    %v1720 = vpack.c.bf16 %v1713, %v1711
    %v1721 = vpack.c.bf16 %v1718, %v1716
    %v1722 = vld [vmem:[%s27] sm:$0xff]
    %v1723 = vld [vmem:[%s27 + $0x8] sm:$0xff]
    %v1724 = vld [vmem:[%s27 + $0x10] sm:$0xff]
    %v1725 = vld [vmem:[%s27 + $0x18] sm:$0xff]
    %v1727 = vsel %vm716, %v1644, 0
    %v1730 = vsel %vm716, %v1645, 0
    %v1733 = vsel %vm716, %v1682, 0
    %v1736 = vsel %vm716, %v1683, 0
    %1738 = vmatpush.bf16.xpose.msra.mxu0 0
    %1739 = vmatpush.bf16.xpose.msra.mxu0 0
    %1740 = vmatpush.bf16.xpose.msra.mxu0 0
    %1741 = vmatpush.bf16.xpose.msra.mxu0 0
    %1742 = vmatpush.bf16.xpose.msra.mxu0 0
    %1743 = vmatpush.bf16.xpose.msra.mxu0 0
    %1744 = vmatpush.bf16.xpose.msra.mxu0 %v1736
    %1745 = vmatpush.bf16.xpose.msra.mxu0 %v1733
    %1746 = vmatmul.bf16.gmra.mxu0 %v1727
    %v1747 = vpop.f32.mrf.mxu0
    %v1748 = vadd.f32 %v1722, %v1747
    %v1749 = vpop.f32.mrf.mxu0
    %v1750 = vadd.f32 %v1723, %v1749
    %1751 = vmatmul.bf16.gmra.mxu0 %v1730
    %v1752 = vpop.f32.mrf.mxu0
    %v1753 = vadd.f32 %v1724, %v1752
    %v1754 = vpop.f32.mrf.mxu0
    %v1755 = vadd.f32 %v1725, %v1754
    %1756 = vdwg.mxu0
    %v1757 = vsel %vm383, %v1748, -inf
    %1758 = vmax.xlane.f32.xlu0 %v1757
    %v1759 = vpop.xlane.xlu0 %1758
    %v1760 = vsel %vm383, %v1750, -inf
    %1761 = vmax.xlane.f32.xlu0 %v1760
    %v1762 = vpop.xlane.xlu0 %1761
    %v1763 = vsel %vm383, %v1753, -inf
    %1764 = vmax.xlane.f32.xlu0 %v1763
    %v1765 = vpop.xlane.xlu0 %1764
    %v1766 = vsel %vm383, %v1755, -inf
    %1767 = vmax.xlane.f32.xlu0 %v1766
    %v1768 = vpop.xlane.xlu0 %1767
    %v1769 = vsub.f32 %v1748, %v1759
    %v1770 = vsub.f32 %v1750, %v1762
    %v1771 = vsub.f32 %v1753, %v1765
    %v1772 = vsub.f32 %v1755, %v1768
    %v1773 = vmul.f32 %v1769, 1.442695
    %v1774 = vpow.pop %v1773
    %v1775 = vmul.f32 %v1770, 1.442695
    %v1776 = vpow.pop %v1775
    %v1777 = vmul.f32 %v1771, 1.442695
    %v1778 = vpow.pop %v1777
    %v1779 = vmul.f32 %v1772, 1.442695
    %v1780 = vpow.pop %v1779
    %v1781 = vsel %vm383, %v1774, 0.0
    %1782 = vadd.xlane.f32.xlu0 %v1781
    %v1783 = vpop.xlane.xlu0 %1782
    %v1784 = vsel %vm383, %v1776, 0.0
    %1785 = vadd.xlane.f32.xlu0 %v1784
    %v1786 = vpop.xlane.xlu0 %1785
    %v1787 = vsel %vm383, %v1778, 0.0
    %1788 = vadd.xlane.f32.xlu0 %v1787
    %v1789 = vpop.xlane.xlu0 %1788
    %v1790 = vsel %vm383, %v1780, 0.0
    %1791 = vadd.xlane.f32.xlu0 %v1790
    %v1792 = vpop.xlane.xlu0 %1791
    %v1793 = vrcp.pop %v1783
    %v1794 = vmul.f32 %v1783, %v1793
    %v1795 = vsub.f32 1.0, %v1794
    %v1796 = vmul.f32 %v1793, %v1795
    %v1797 = vadd.f32 %v1793, %v1796
    %vm1798 = vweird.f32 %v1783
    %vm1799 = vweird.f32 %v1793
    %vm1800 = vmor %vm1798, %vm1799
    %v1801 = vsel %vm1800, %v1793, %v1797
    %v1802 = vand.u32 2147483647, %v1783
    %vm1803 = vcmp.eq.f32.partialorder %v1802, 8.507059e+37
    %v1804 = vand.u32 %v1783, 2147483648
    %v1805 = vor.u32 1.1754944e-38, %v1804
    %v1806 = vsel %vm1803, %v1805, %v1801
    %v1807 = vmul.f32 %v1774, %v1806
    %v1808 = vrcp.pop %v1786
    %v1809 = vmul.f32 %v1786, %v1808
    %v1810 = vsub.f32 1.0, %v1809
    %v1811 = vmul.f32 %v1808, %v1810
    %v1812 = vadd.f32 %v1808, %v1811
    %vm1813 = vweird.f32 %v1786
    %vm1814 = vweird.f32 %v1808
    %vm1815 = vmor %vm1813, %vm1814
    %v1816 = vsel %vm1815, %v1808, %v1812
    %v1817 = vand.u32 2147483647, %v1786
    %vm1818 = vcmp.eq.f32.partialorder %v1817, 8.507059e+37
    %v1819 = vand.u32 %v1786, 2147483648
    %v1820 = vor.u32 1.1754944e-38, %v1819
    %v1821 = vsel %vm1818, %v1820, %v1816
    %v1822 = vmul.f32 %v1776, %v1821
    %v1823 = vrcp.pop %v1789
    %v1824 = vmul.f32 %v1789, %v1823
    %v1825 = vsub.f32 1.0, %v1824
    %v1826 = vmul.f32 %v1823, %v1825
    %v1827 = vadd.f32 %v1823, %v1826
    %vm1828 = vweird.f32 %v1789
    %vm1829 = vweird.f32 %v1823
    %vm1830 = vmor %vm1828, %vm1829
    %v1831 = vsel %vm1830, %v1823, %v1827
    %v1832 = vand.u32 2147483647, %v1789
    %vm1833 = vcmp.eq.f32.partialorder %v1832, 8.507059e+37
    %v1834 = vand.u32 %v1789, 2147483648
    %v1835 = vor.u32 1.1754944e-38, %v1834
    %v1836 = vsel %vm1833, %v1835, %v1831
    %v1837 = vmul.f32 %v1778, %v1836
    %v1838 = vrcp.pop %v1792
    %v1839 = vmul.f32 %v1792, %v1838
    %v1840 = vsub.f32 1.0, %v1839
    %v1841 = vmul.f32 %v1838, %v1840
    %v1842 = vadd.f32 %v1838, %v1841
    %vm1843 = vweird.f32 %v1792
    %vm1844 = vweird.f32 %v1838
    %vm1845 = vmor %vm1843, %vm1844
    %v1846 = vsel %vm1845, %v1838, %v1842
    %v1847 = vand.u32 2147483647, %v1792
    %vm1848 = vcmp.eq.f32.partialorder %v1847, 8.507059e+37
    %v1849 = vand.u32 %v1792, 2147483648
    %v1850 = vor.u32 1.1754944e-38, %v1849
    %v1851 = vsel %vm1848, %v1850, %v1846
    %v1852 = vmul.f32 %v1780, %v1851
    %v1853 = vpack.c.bf16 %v1822, %v1807
    %v1854 = vpack.c.bf16 %v1852, %v1837
    %v1856 = vsel %vm383, %v1853, 0
    %v1859 = vsel %vm383, %v1854, 0
    %1861 = vmatpush.bf16.msra.mxu0 0
    %1862 = vmatpush.bf16.msra.mxu0 0
    %1863 = vmatpush.bf16.msra.mxu0 0
    %1864 = vmatpush.bf16.msra.mxu0 0
    %1865 = vmatpush.bf16.msra.mxu0 0
    %1866 = vmatpush.bf16.msra.mxu0 0
    %1867 = vmatpush.bf16.msra.mxu0 %v1721
    %1868 = vmatpush.bf16.msra.mxu0 %v1720
    %1869 = vmatmul.bf16.gmra.mxu0 %v1856
    %v1870 = vpop.f32.mrf.mxu0
    %v1871 = vadd.f32 0.0, %v1870
    %v1872 = vpop.f32.mrf.mxu0
    %v1873 = vadd.f32 0.0, %v1872
    %1874 = vmatmul.bf16.gmra.mxu0 %v1859
    %v1875 = vpop.f32.mrf.mxu0
    %v1876 = vadd.f32 0.0, %v1875
    %v1877 = vpop.f32.mrf.mxu0
    %v1878 = vadd.f32 0.0, %v1877
    %1879 = vdwg.mxu0
    %v1880 = vpack.c.bf16 %v1873, %v1871
    %v1881 = vpack.c.bf16 %v1878, %v1876
    %v1882 = vld [vmem:[#allocation8] sm:$0xf]
    %v1883 = vld [vmem:[#allocation8 + $0x4] sm:$0xf]
    %s1884 = scalar_lea.vmem %s23, 16
    %v1885 = vld [vmem:[%s1884] sm:$0xf]
    %v1886 = vld [vmem:[%s1884 + $0x4] sm:$0xf]
    %v1887 = vld [vmem:[%s1884 + $0x8] sm:$0xf]
    %v1888 = vld [vmem:[%s1884 + $0xc] sm:$0xf]
    %v1889 = vperm.slane %v1499, 1
    %v1894 = vunpack.c.l.b16 %v1885
    %v1895 = vunpack.c.l.b16 %v1886
    %v1896 = vunpack.c.l.b16 %v1887
    %v1897 = vunpack.c.l.b16 %v1888
    %v1898 = vpack.c.b16 %v1895, %v1894
    %v1899 = vpack.c.b16 %v1897, %v1896
    %1902 = vmatpush.bf16.msra.mxu0 0
    %1903 = vmatpush.bf16.msra.mxu0 0
    %1904 = vmatpush.bf16.msra.mxu0 0
    %1905 = vmatpush.bf16.msra.mxu0 0
    %1906 = vmatpush.bf16.msra.mxu0 0
    %1907 = vmatpush.bf16.msra.mxu0 0
    %1908 = vmatpush.bf16.msra.mxu0 %v1899
    %1909 = vmatpush.bf16.msra.mxu0 %v1898
    %1910 = vmatmul.bf16.gmra.mxu0 %v1620
    %v1911 = vpop.f32.mrf.mxu0
    %v1912 = vadd.f32 %v1889, %v1911
    %v1913 = vpop.f32.mrf.mxu0
    %v1914 = vadd.f32 %v1889, %v1913
    %1915 = vmatmul.bf16.gmra.mxu0 %v1623
    %v1916 = vpop.f32.mrf.mxu0
    %v1917 = vadd.f32 %v1889, %v1916
    %v1918 = vpop.f32.mrf.mxu0
    %v1919 = vadd.f32 %v1889, %v1918
    %1920 = vdwg.mxu0
    %v1921 = vpack.c.bf16 %v1914, %v1912
    %v1922 = vpack.c.bf16 %v1919, %v1917
    %s1923 = scalar_lea.vmem %s23, 48
    %v1924 = vld [vmem:[%s1923] sm:$0xf]
    %v1925 = vld [vmem:[%s1923 + $0x4] sm:$0xf]
    %v1926 = vld [vmem:[%s1923 + $0x8] sm:$0xf]
    %v1927 = vld [vmem:[%s1923 + $0xc] sm:$0xf]
    %v1932 = vunpack.c.l.b16 %v1924
    %v1933 = vunpack.c.l.b16 %v1925
    %v1934 = vunpack.c.l.b16 %v1926
    %v1935 = vunpack.c.l.b16 %v1927
    %v1936 = vpack.c.b16 %v1933, %v1932
    %v1937 = vpack.c.b16 %v1935, %v1934
    %1940 = vmatpush.bf16.msra.mxu0 0
    %1941 = vmatpush.bf16.msra.mxu0 0
    %1942 = vmatpush.bf16.msra.mxu0 0
    %1943 = vmatpush.bf16.msra.mxu0 0
    %1944 = vmatpush.bf16.msra.mxu0 0
    %1945 = vmatpush.bf16.msra.mxu0 0
    %1946 = vmatpush.bf16.msra.mxu0 %v1937
    %1947 = vmatpush.bf16.msra.mxu0 %v1936
    %1948 = vmatmul.bf16.gmra.mxu0 %v1620
    %v1949 = vpop.f32.mrf.mxu0
    %v1950 = vadd.f32 0.0, %v1949
    %v1951 = vpop.f32.mrf.mxu0
    %v1952 = vadd.f32 0.0, %v1951
    %1953 = vmatmul.bf16.gmra.mxu0 %v1623
    %v1954 = vpop.f32.mrf.mxu0
    %v1955 = vadd.f32 0.0, %v1954
    %v1956 = vpop.f32.mrf.mxu0
    %v1957 = vadd.f32 0.0, %v1956
    %1958 = vdwg.mxu0
    %v1959 = vpack.c.bf16 %v1952, %v1950
    %v1960 = vpack.c.bf16 %v1957, %v1955
    %s1961 = scalar_lea.vmem %s23, 80
    %v1962 = vld [vmem:[%s1961] sm:$0xf]
    %v1963 = vld [vmem:[%s1961 + $0x4] sm:$0xf]
    %v1964 = vld [vmem:[%s1961 + $0x8] sm:$0xf]
    %v1965 = vld [vmem:[%s1961 + $0xc] sm:$0xf]
    %v1970 = vunpack.c.l.b16 %v1962
    %v1971 = vunpack.c.l.b16 %v1963
    %v1972 = vunpack.c.l.b16 %v1964
    %v1973 = vunpack.c.l.b16 %v1965
    %v1974 = vpack.c.b16 %v1971, %v1970
    %v1975 = vpack.c.b16 %v1973, %v1972
    %1978 = vmatpush.bf16.msra.mxu0 0
    %1979 = vmatpush.bf16.msra.mxu0 0
    %1980 = vmatpush.bf16.msra.mxu0 0
    %1981 = vmatpush.bf16.msra.mxu0 0
    %1982 = vmatpush.bf16.msra.mxu0 0
    %1983 = vmatpush.bf16.msra.mxu0 0
    %1984 = vmatpush.bf16.msra.mxu0 %v1975
    %1985 = vmatpush.bf16.msra.mxu0 %v1974
    %1986 = vmatmul.bf16.gmra.mxu0 %v1620
    %v1987 = vpop.f32.mrf.mxu0
    %v1988 = vadd.f32 0.0, %v1987
    %v1989 = vpop.f32.mrf.mxu0
    %v1990 = vadd.f32 0.0, %v1989
    %1991 = vmatmul.bf16.gmra.mxu0 %v1623
    %v1992 = vpop.f32.mrf.mxu0
    %v1993 = vadd.f32 0.0, %v1992
    %v1994 = vpop.f32.mrf.mxu0
    %v1995 = vadd.f32 0.0, %v1994
    %1996 = vdwg.mxu0
    %v1997 = vpack.c.bf16 %v1990, %v1988
    %v1998 = vpack.c.bf16 %v1995, %v1993
    %s1999 = scalar_lea.vmem %s27, 32
    %v2000 = vld [vmem:[%s1999] sm:$0xff]
    %v2001 = vld [vmem:[%s1999 + $0x8] sm:$0xff]
    %v2002 = vld [vmem:[%s1999 + $0x10] sm:$0xff]
    %v2003 = vld [vmem:[%s1999 + $0x18] sm:$0xff]
    %v2005 = vsel %vm716, %v1921, 0
    %v2008 = vsel %vm716, %v1922, 0
    %v2011 = vsel %vm716, %v1959, 0
    %v2014 = vsel %vm716, %v1960, 0
    %2016 = vmatpush.bf16.xpose.msra.mxu0 0
    %2017 = vmatpush.bf16.xpose.msra.mxu0 0
    %2018 = vmatpush.bf16.xpose.msra.mxu0 0
    %2019 = vmatpush.bf16.xpose.msra.mxu0 0
    %2020 = vmatpush.bf16.xpose.msra.mxu0 0
    %2021 = vmatpush.bf16.xpose.msra.mxu0 0
    %2022 = vmatpush.bf16.xpose.msra.mxu0 %v2014
    %2023 = vmatpush.bf16.xpose.msra.mxu0 %v2011
    %2024 = vmatmul.bf16.gmra.mxu0 %v2005
    %v2025 = vpop.f32.mrf.mxu0
    %v2026 = vadd.f32 %v2000, %v2025
    %v2027 = vpop.f32.mrf.mxu0
    %v2028 = vadd.f32 %v2001, %v2027
    %2029 = vmatmul.bf16.gmra.mxu0 %v2008
    %v2030 = vpop.f32.mrf.mxu0
    %v2031 = vadd.f32 %v2002, %v2030
    %v2032 = vpop.f32.mrf.mxu0
    %v2033 = vadd.f32 %v2003, %v2032
    %2034 = vdwg.mxu0
    %v2035 = vsel %vm383, %v2026, -inf
    %2036 = vmax.xlane.f32.xlu0 %v2035
    %v2037 = vpop.xlane.xlu0 %2036
    %v2038 = vsel %vm383, %v2028, -inf
    %2039 = vmax.xlane.f32.xlu0 %v2038
    %v2040 = vpop.xlane.xlu0 %2039
    %v2041 = vsel %vm383, %v2031, -inf
    %2042 = vmax.xlane.f32.xlu0 %v2041
    %v2043 = vpop.xlane.xlu0 %2042
    %v2044 = vsel %vm383, %v2033, -inf
    %2045 = vmax.xlane.f32.xlu0 %v2044
    %v2046 = vpop.xlane.xlu0 %2045
    %v2047 = vsub.f32 %v2026, %v2037
    %v2048 = vsub.f32 %v2028, %v2040
    %v2049 = vsub.f32 %v2031, %v2043
    %v2050 = vsub.f32 %v2033, %v2046
    %v2051 = vmul.f32 %v2047, 1.442695
    %v2052 = vpow.pop %v2051
    %v2053 = vmul.f32 %v2048, 1.442695
    %v2054 = vpow.pop %v2053
    %v2055 = vmul.f32 %v2049, 1.442695
    %v2056 = vpow.pop %v2055
    %v2057 = vmul.f32 %v2050, 1.442695
    %v2058 = vpow.pop %v2057
    %v2059 = vsel %vm383, %v2052, 0.0
    %2060 = vadd.xlane.f32.xlu0 %v2059
    %v2061 = vpop.xlane.xlu0 %2060
    %v2062 = vsel %vm383, %v2054, 0.0
    %2063 = vadd.xlane.f32.xlu0 %v2062
    %v2064 = vpop.xlane.xlu0 %2063
    %v2065 = vsel %vm383, %v2056, 0.0
    %2066 = vadd.xlane.f32.xlu0 %v2065
    %v2067 = vpop.xlane.xlu0 %2066
    %v2068 = vsel %vm383, %v2058, 0.0
    %2069 = vadd.xlane.f32.xlu0 %v2068
    %v2070 = vpop.xlane.xlu0 %2069
    %v2071 = vrcp.pop %v2061
    %v2072 = vmul.f32 %v2061, %v2071
    %v2073 = vsub.f32 1.0, %v2072
    %v2074 = vmul.f32 %v2071, %v2073
    %v2075 = vadd.f32 %v2071, %v2074
    %vm2076 = vweird.f32 %v2061
    %vm2077 = vweird.f32 %v2071
    %vm2078 = vmor %vm2076, %vm2077
    %v2079 = vsel %vm2078, %v2071, %v2075
    %v2080 = vand.u32 2147483647, %v2061
    %vm2081 = vcmp.eq.f32.partialorder %v2080, 8.507059e+37
    %v2082 = vand.u32 %v2061, 2147483648
    %v2083 = vor.u32 1.1754944e-38, %v2082
    %v2084 = vsel %vm2081, %v2083, %v2079
    %v2085 = vmul.f32 %v2052, %v2084
    %v2086 = vrcp.pop %v2064
    %v2087 = vmul.f32 %v2064, %v2086
    %v2088 = vsub.f32 1.0, %v2087
    %v2089 = vmul.f32 %v2086, %v2088
    %v2090 = vadd.f32 %v2086, %v2089
    %vm2091 = vweird.f32 %v2064
    %vm2092 = vweird.f32 %v2086
    %vm2093 = vmor %vm2091, %vm2092
    %v2094 = vsel %vm2093, %v2086, %v2090
    %v2095 = vand.u32 2147483647, %v2064
    %vm2096 = vcmp.eq.f32.partialorder %v2095, 8.507059e+37
    %v2097 = vand.u32 %v2064, 2147483648
    %v2098 = vor.u32 1.1754944e-38, %v2097
    %v2099 = vsel %vm2096, %v2098, %v2094
    %v2100 = vmul.f32 %v2054, %v2099
    %v2101 = vrcp.pop %v2067
    %v2102 = vmul.f32 %v2067, %v2101
    %v2103 = vsub.f32 1.0, %v2102
    %v2104 = vmul.f32 %v2101, %v2103
    %v2105 = vadd.f32 %v2101, %v2104
    %vm2106 = vweird.f32 %v2067
    %vm2107 = vweird.f32 %v2101
    %vm2108 = vmor %vm2106, %vm2107
    %v2109 = vsel %vm2108, %v2101, %v2105
    %v2110 = vand.u32 2147483647, %v2067
    %vm2111 = vcmp.eq.f32.partialorder %v2110, 8.507059e+37
    %v2112 = vand.u32 %v2067, 2147483648
    %v2113 = vor.u32 1.1754944e-38, %v2112
    %v2114 = vsel %vm2111, %v2113, %v2109
    %v2115 = vmul.f32 %v2056, %v2114
    %v2116 = vrcp.pop %v2070
    %v2117 = vmul.f32 %v2070, %v2116
    %v2118 = vsub.f32 1.0, %v2117
    %v2119 = vmul.f32 %v2116, %v2118
    %v2120 = vadd.f32 %v2116, %v2119
    %vm2121 = vweird.f32 %v2070
    %vm2122 = vweird.f32 %v2116
    %vm2123 = vmor %vm2121, %vm2122
    %v2124 = vsel %vm2123, %v2116, %v2120
    %v2125 = vand.u32 2147483647, %v2070
    %vm2126 = vcmp.eq.f32.partialorder %v2125, 8.507059e+37
    %v2127 = vand.u32 %v2070, 2147483648
    %v2128 = vor.u32 1.1754944e-38, %v2127
    %v2129 = vsel %vm2126, %v2128, %v2124
    %v2130 = vmul.f32 %v2058, %v2129
    %v2131 = vpack.c.bf16 %v2100, %v2085
    %v2132 = vpack.c.bf16 %v2130, %v2115
    %v2134 = vsel %vm383, %v2131, 0
    %v2137 = vsel %vm383, %v2132, 0
    %2139 = vmatpush.bf16.msra.mxu0 0
    %2140 = vmatpush.bf16.msra.mxu0 0
    %2141 = vmatpush.bf16.msra.mxu0 0
    %2142 = vmatpush.bf16.msra.mxu0 0
    %2143 = vmatpush.bf16.msra.mxu0 0
    %2144 = vmatpush.bf16.msra.mxu0 0
    %2145 = vmatpush.bf16.msra.mxu0 %v1998
    %2146 = vmatpush.bf16.msra.mxu0 %v1997
    %2147 = vmatmul.bf16.gmra.mxu0 %v2134
    %v2148 = vpop.f32.mrf.mxu0
    %v2149 = vadd.f32 0.0, %v2148
    %v2150 = vpop.f32.mrf.mxu0
    %v2151 = vadd.f32 0.0, %v2150
    %2152 = vmatmul.bf16.gmra.mxu0 %v2137
    %v2153 = vpop.f32.mrf.mxu0
    %v2154 = vadd.f32 0.0, %v2153
    %v2155 = vpop.f32.mrf.mxu0
    %v2156 = vadd.f32 0.0, %v2155
    %2157 = vdwg.mxu0
    %v2158 = vpack.c.bf16 %v2151, %v2149
    %v2159 = vpack.c.bf16 %v2156, %v2154
    %s2160 = scalar_lea.vmem [#allocation8], 8
    %v2161 = vld [vmem:[%s2160] sm:$0xf]
    %v2162 = vld [vmem:[%s2160 + $0x4] sm:$0xf]
    %v2165 = vunpack.c.l.b16 %v2161
    %v2166 = vunpack.c.l.b16 %v2162
    %v2167 = vpack.c.b16 %v2166, %v2165
    %v2170 = vsel %vm716, %v2158, 0
    %v2173 = vsel %vm716, %v2159, 0
    %2175 = vmatpush.bf16.msra.mxu0 0
    %2176 = vmatpush.bf16.msra.mxu0 0
    %2177 = vmatpush.bf16.msra.mxu0 0
    %2178 = vmatpush.bf16.msra.mxu0 0
    %2179 = vmatpush.bf16.msra.mxu0 0
    %2180 = vmatpush.bf16.msra.mxu0 0
    %2181 = vmatpush.bf16.msra.mxu0 0
    %2182 = vmatpush.bf16.msra.mxu0 %v2167
    %2183 = vmatmul.bf16.gmra.mxu0 %v2170
    %v2184 = vpop.f32.mrf.mxu0
    %v2185 = vadd.f32 0.0, %v2184
    %v2186 = vpop.f32.mrf.mxu0
    %v2187 = vadd.f32 0.0, %v2186
    %2188 = vmatmul.bf16.gmra.mxu0 %v2173
    %v2189 = vpop.f32.mrf.mxu0
    %v2190 = vadd.f32 0.0, %v2189
    %v2191 = vpop.f32.mrf.mxu0
    %v2192 = vadd.f32 0.0, %v2191
    %2193 = vdwg.mxu0
    %v2196 = vunpack.c.l.b16 %v1882
    %v2197 = vunpack.c.l.b16 %v1883
    %v2198 = vpack.c.b16 %v2197, %v2196
    %v2201 = vsel %vm716, %v1880, 0
    %v2204 = vsel %vm716, %v1881, 0
    %2206 = vmatpush.bf16.msra.mxu0 0
    %2207 = vmatpush.bf16.msra.mxu0 0
    %2208 = vmatpush.bf16.msra.mxu0 0
    %2209 = vmatpush.bf16.msra.mxu0 0
    %2210 = vmatpush.bf16.msra.mxu0 0
    %2211 = vmatpush.bf16.msra.mxu0 0
    %2212 = vmatpush.bf16.msra.mxu0 0
    %2213 = vmatpush.bf16.msra.mxu0 %v2198
    %2214 = vmatmul.bf16.gmra.mxu0 %v2201
    %v2215 = vpop.f32.mrf.mxu0
    %v2216 = vadd.f32 %v2185, %v2215
    %v2217 = vpop.f32.mrf.mxu0
    %v2218 = vadd.f32 %v2187, %v2217
    %2219 = vmatmul.bf16.gmra.mxu0 %v2204
    %v2220 = vpop.f32.mrf.mxu0
    %v2221 = vadd.f32 %v2190, %v2220
    %v2222 = vpop.f32.mrf.mxu0
    %v2223 = vadd.f32 %v2192, %v2222
    %2224 = vdwg.mxu0
    %v2225 = vadd.f32 %v1495, %v2216
    %v2226 = vadd.f32 %v1496, %v2218
    %v2227 = vadd.f32 %v1497, %v2221
    %v2228 = vadd.f32 %v1498, %v2223
    %v2229 = vperm.slane %v1500, 4
    %v2230 = vadd.f32 %v2225, %v2229
    %v2231 = vadd.f32 %v2226, %v2229
    %v2232 = vadd.f32 %v2227, %v2229
    %v2233 = vadd.f32 %v2228, %v2229
    %v2234 = vsel %vm383, %v2230, 0.0
    %2235 = vadd.xlane.f32.xlu0 %v2234
    %v2236 = vpop.xlane.xlu0 %2235
    %v2237 = vsel %vm383, %v2231, 0.0
    %2238 = vadd.xlane.f32.xlu0 %v2237
    %v2239 = vpop.xlane.xlu0 %2238
    %v2240 = vsel %vm383, %v2232, 0.0
    %2241 = vadd.xlane.f32.xlu0 %v2240
    %v2242 = vpop.xlane.xlu0 %2241
    %v2243 = vsel %vm383, %v2233, 0.0
    %2244 = vadd.xlane.f32.xlu0 %v2243
    %v2245 = vpop.xlane.xlu0 %2244
    %v2246 = vmul.f32 %v2236, %v402
    %v2247 = vmul.f32 %v2239, %v402
    %v2248 = vmul.f32 %v2242, %v402
    %v2249 = vmul.f32 %v2245, %v402
    %v2250 = vsub.f32 %v2230, %v2246
    %v2251 = vsub.f32 %v2231, %v2247
    %v2252 = vsub.f32 %v2232, %v2248
    %v2253 = vsub.f32 %v2233, %v2249
    %v2254 = vmul.f32 %v2250, %v2250
    %v2255 = vmul.f32 %v2251, %v2251
    %v2256 = vmul.f32 %v2252, %v2252
    %v2257 = vmul.f32 %v2253, %v2253
    %v2258 = vsel %vm383, %v2254, 0.0
    %2259 = vadd.xlane.f32.xlu0 %v2258
    %v2260 = vpop.xlane.xlu0 %2259
    %v2261 = vsel %vm383, %v2255, 0.0
    %2262 = vadd.xlane.f32.xlu0 %v2261
    %v2263 = vpop.xlane.xlu0 %2262
    %v2264 = vsel %vm383, %v2256, 0.0
    %2265 = vadd.xlane.f32.xlu0 %v2264
    %v2266 = vpop.xlane.xlu0 %2265
    %v2267 = vsel %vm383, %v2257, 0.0
    %2268 = vadd.xlane.f32.xlu0 %v2267
    %v2269 = vpop.xlane.xlu0 %2268
    %v2270 = vmul.f32 %v2260, %v402
    %v2271 = vmul.f32 %v2263, %v402
    %v2272 = vmul.f32 %v2266, %v402
    %v2273 = vmul.f32 %v2269, %v402
    %v2274 = vadd.f32 %v2270, 1e-05
    %v2275 = vadd.f32 %v2271, 1e-05
    %v2276 = vadd.f32 %v2272, 1e-05
    %v2277 = vadd.f32 %v2273, 1e-05
    %v2278 = vrsqrt.pop %v2274
    %v2279 = vmul.f32 %v2278, %v2274
    %v2280 = vmul.f32 %v2279, %v2278
    %v2281 = vmul.f32 0.5, %v2280
    %v2282 = vsub.f32 1.5, %v2281
    %v2283 = vmul.f32 %v2278, %v2282
    %vm2284 = vweird.f32 %v2274
    %vm2285 = vweird.f32 %v2278
    %vm2286 = vmor %vm2284, %vm2285
    %v2287 = vsel %vm2286, %v2278, %v2283
    %v2288 = vrsqrt.pop %v2275
    %v2289 = vmul.f32 %v2288, %v2275
    %v2290 = vmul.f32 %v2289, %v2288
    %v2291 = vmul.f32 0.5, %v2290
    %v2292 = vsub.f32 1.5, %v2291
    %v2293 = vmul.f32 %v2288, %v2292
    %vm2294 = vweird.f32 %v2275
    %vm2295 = vweird.f32 %v2288
    %vm2296 = vmor %vm2294, %vm2295
    %v2297 = vsel %vm2296, %v2288, %v2293
    %v2298 = vrsqrt.pop %v2276
    %v2299 = vmul.f32 %v2298, %v2276
    %v2300 = vmul.f32 %v2299, %v2298
    %v2301 = vmul.f32 0.5, %v2300
    %v2302 = vsub.f32 1.5, %v2301
    %v2303 = vmul.f32 %v2298, %v2302
    %vm2304 = vweird.f32 %v2276
    %vm2305 = vweird.f32 %v2298
    %vm2306 = vmor %vm2304, %vm2305
    %v2307 = vsel %vm2306, %v2298, %v2303
    %v2308 = vrsqrt.pop %v2277
    %v2309 = vmul.f32 %v2308, %v2277
    %v2310 = vmul.f32 %v2309, %v2308
    %v2311 = vmul.f32 0.5, %v2310
    %v2312 = vsub.f32 1.5, %v2311
    %v2313 = vmul.f32 %v2308, %v2312
    %vm2314 = vweird.f32 %v2277
    %vm2315 = vweird.f32 %v2308
    %vm2316 = vmor %vm2314, %vm2315
    %v2317 = vsel %vm2316, %v2308, %v2313
    %v2318 = vmul.f32 %v2250, %v2287
    %v2319 = vmul.f32 %v2251, %v2297
    %v2320 = vmul.f32 %v2252, %v2307
    %v2321 = vmul.f32 %v2253, %v2317
    %v2322 = vperm.slane %v1500, 2
    %v2323 = vmul.f32 %v2318, %v2322
    %v2324 = vmul.f32 %v2319, %v2322
    %v2325 = vmul.f32 %v2320, %v2322
    %v2326 = vmul.f32 %v2321, %v2322
    %v2327 = vperm.slane %v1500, 3
    %v2328 = vadd.f32 %v2323, %v2327
    %v2329 = vadd.f32 %v2324, %v2327
    %v2330 = vadd.f32 %v2325, %v2327
    %v2331 = vadd.f32 %v2326, %v2327
    %v2332 = vpack.c.bf16 %v2329, %v2328
    %v2333 = vpack.c.bf16 %v2331, %v2330
    %v2334 = vld [vmem:[#allocation10] sm:$0xf]
    %v2335 = vld [vmem:[#allocation10 + $0x4] sm:$0xf]
    %v2336 = vld [vmem:[#allocation10 + $0x8] sm:$0xf]
    %v2337 = vld [vmem:[#allocation10 + $0xc] sm:$0xf]
    %v2339 = vperm.slane %v1501, 0
    %v2345 = vunpack.c.l.b16 %v2334
    %v2346 = vunpack.c.l.b16 %v2335
    %v2347 = vunpack.c.l.b16 %v2336
    %v2348 = vunpack.c.l.b16 %v2337
    %v2349 = vpack.c.b16 %v2346, %v2345
    %v2350 = vpack.c.b16 %v2348, %v2347
    %v2354 = vsel %vm383, %v2332, 0
    %v2357 = vsel %vm383, %v2333, 0
    %2359 = vmatpush.bf16.msra.mxu0 0
    %2360 = vmatpush.bf16.msra.mxu0 0
    %2361 = vmatpush.bf16.msra.mxu0 0
    %2362 = vmatpush.bf16.msra.mxu0 0
    %2363 = vmatpush.bf16.msra.mxu0 0
    %2364 = vmatpush.bf16.msra.mxu0 0
    %2365 = vmatpush.bf16.msra.mxu0 %v2350
    %2366 = vmatpush.bf16.msra.mxu0 %v2349
    %2367 = vmatmul.bf16.gmra.mxu0 %v2354
    %v2368 = vpop.f32.mrf.mxu0
    %v2369 = vadd.f32 %v2339, %v2368
    %v2370 = vpop.f32.mrf.mxu0
    %v2371 = vadd.f32 %v2339, %v2370
    %2372 = vmatmul.bf16.gmra.mxu0 %v2357
    %v2373 = vpop.f32.mrf.mxu0
    %v2374 = vadd.f32 %v2339, %v2373
    %v2375 = vpop.f32.mrf.mxu0
    %v2376 = vadd.f32 %v2339, %v2375
    %2377 = vdwg.mxu0
    %v2378 = vmul.f32 %v2369, %v2369
    %v2379 = vmul.f32 %v2371, %v2371
    %v2380 = vmul.f32 %v2374, %v2374
    %v2381 = vmul.f32 %v2376, %v2376
    %v2382 = vmul.f32 %v2369, %v2378
    %v2383 = vmul.f32 %v2371, %v2379
    %v2384 = vmul.f32 %v2374, %v2380
    %v2385 = vmul.f32 %v2376, %v2381
    %v2386 = vmul.f32 %v2382, 0.044715
    %v2387 = vmul.f32 %v2383, 0.044715
    %v2388 = vmul.f32 %v2384, 0.044715
    %v2389 = vmul.f32 %v2385, 0.044715
    %v2390 = vadd.f32 %v2369, %v2386
    %v2391 = vadd.f32 %v2371, %v2387
    %v2392 = vadd.f32 %v2374, %v2388
    %v2393 = vadd.f32 %v2376, %v2389
    %v2394 = vmul.f32 %v2390, 0.7978846
    %v2395 = vmul.f32 %v2391, 0.7978846
    %v2396 = vmul.f32 %v2392, 0.7978846
    %v2397 = vmul.f32 %v2393, 0.7978846
    %v2398 = vtanh.pop %v2394
    %v2399 = vtanh.pop %v2395
    %v2400 = vtanh.pop %v2396
    %v2401 = vtanh.pop %v2397
    %v2402 = vadd.f32 %v2398, 1.0
    %v2403 = vadd.f32 %v2399, 1.0
    %v2404 = vadd.f32 %v2400, 1.0
    %v2405 = vadd.f32 %v2401, 1.0
    %v2406 = vmul.f32 %v2402, 0.5
    %v2407 = vmul.f32 %v2403, 0.5
    %v2408 = vmul.f32 %v2404, 0.5
    %v2409 = vmul.f32 %v2405, 0.5
    %v2410 = vmul.f32 %v2369, %v2406
    %v2411 = vmul.f32 %v2371, %v2407
    %v2412 = vmul.f32 %v2374, %v2408
    %v2413 = vmul.f32 %v2376, %v2409
    %v2414 = vpack.c.bf16 %v2411, %v2410
    %v2415 = vpack.c.bf16 %v2413, %v2412
    %v2416 = vld [vmem:[%s33] sm:$0xf]
    %v2417 = vld [vmem:[%s33 + $0x4] sm:$0xf]
    %v2418 = vld [vmem:[%s33 + $0x8] sm:$0xf]
    %v2419 = vld [vmem:[%s33 + $0xc] sm:$0xf]
    %v2420 = vld [vmem:[%s33 + $0x10] sm:$0xf]
    %v2421 = vld [vmem:[%s33 + $0x14] sm:$0xf]
    %v2422 = vld [vmem:[%s33 + $0x18] sm:$0xf]
    %v2423 = vld [vmem:[%s33 + $0x1c] sm:$0xf]
    %v2424 = vld [vmem:[%s33 + $0x20] sm:$0xf]
    %v2425 = vld [vmem:[%s33 + $0x24] sm:$0xf]
    %v2426 = vld [vmem:[%s33 + $0x28] sm:$0xf]
    %v2427 = vld [vmem:[%s33 + $0x2c] sm:$0xf]
    %v2428 = vld [vmem:[%s33 + $0x30] sm:$0xf]
    %v2429 = vld [vmem:[%s33 + $0x34] sm:$0xf]
    %v2430 = vld [vmem:[%s33 + $0x38] sm:$0xf]
    %v2431 = vld [vmem:[%s33 + $0x3c] sm:$0xf]
    %v2448 = vunpack.c.l.b16 %v2416
    %v2449 = vunpack.c.l.b16 %v2417
    %v2450 = vunpack.c.l.b16 %v2418
    %v2451 = vunpack.c.l.b16 %v2419
    %v2452 = vunpack.c.l.b16 %v2420
    %v2453 = vunpack.c.l.b16 %v2421
    %v2454 = vunpack.c.l.b16 %v2422
    %v2455 = vunpack.c.l.b16 %v2423
    %v2456 = vunpack.c.l.b16 %v2424
    %v2457 = vunpack.c.l.b16 %v2425
    %v2458 = vunpack.c.l.b16 %v2426
    %v2459 = vunpack.c.l.b16 %v2427
    %v2460 = vunpack.c.l.b16 %v2428
    %v2461 = vunpack.c.l.b16 %v2429
    %v2462 = vunpack.c.l.b16 %v2430
    %v2463 = vunpack.c.l.b16 %v2431
    %v2464 = vpack.c.b16 %v2449, %v2448
    %v2465 = vpack.c.b16 %v2451, %v2450
    %v2466 = vpack.c.b16 %v2453, %v2452
    %v2467 = vpack.c.b16 %v2455, %v2454
    %v2468 = vpack.c.b16 %v2457, %v2456
    %v2469 = vpack.c.b16 %v2459, %v2458
    %v2470 = vpack.c.b16 %v2461, %v2460
    %v2471 = vpack.c.b16 %v2463, %v2462
    %2480 = vmatpush.bf16.msra.mxu0 %v2471
    %2481 = vmatpush.bf16.msra.mxu0 %v2470
    %2482 = vmatpush.bf16.msra.mxu0 %v2469
    %2483 = vmatpush.bf16.msra.mxu0 %v2468
    %2484 = vmatpush.bf16.msra.mxu0 %v2467
    %2485 = vmatpush.bf16.msra.mxu0 %v2466
    %2486 = vmatpush.bf16.msra.mxu0 %v2465
    %2487 = vmatpush.bf16.msra.mxu0 %v2464
    %2488 = vmatmul.bf16.gmra.mxu0 %v2414
    %v2489 = vpop.f32.mrf.mxu0
    %v2490 = vadd.f32 0.0, %v2489
    %v2491 = vpop.f32.mrf.mxu0
    %v2492 = vadd.f32 0.0, %v2491
    %2493 = vmatmul.bf16.gmra.mxu0 %v2415
    %v2494 = vpop.f32.mrf.mxu0
    %v2495 = vadd.f32 0.0, %v2494
    %v2496 = vpop.f32.mrf.mxu0
    %v2497 = vadd.f32 0.0, %v2496
    %2498 = vdwg.mxu0
    %v2499 = vadd.f32 %v2230, %v2490
    %v2500 = vadd.f32 %v2231, %v2492
    %v2501 = vadd.f32 %v2232, %v2495
    %v2502 = vadd.f32 %v2233, %v2497
    %v2503 = vperm.slane %v1500, 5
    %v2504 = vadd.f32 %v2499, %v2503
    %v2505 = vadd.f32 %v2500, %v2503
    %v2506 = vadd.f32 %v2501, %v2503
    %v2507 = vadd.f32 %v2502, %v2503
    %v2508 = vld [vmem:[#allocation11] sm:$0x3]
    %v2509 = vld [vmem:[%s39] sm:$0xff]
    %v2511 = vsel %vm383, %v2509, 0
    %2513 = vmatpush.msra.mxu0 0.0
    %2514 = vmatpush.msra.mxu0 0.0
    %2515 = vmatpush.msra.mxu0 0.0
    %2516 = vmatpush.msra.mxu0 0.0
    %2517 = vmatpush.msra.mxu0 0.0
    %2518 = vmatpush.msra.mxu0 0.0
    %2519 = vmatpush.msra.mxu0 0.0
    %2520 = vmatpush.msra.mxu0 0.0
    %2521 = vmatpush.msra.mxu0 0.0
    %2522 = vmatpush.msra.mxu0 0.0
    %2523 = vmatpush.msra.mxu0 0.0
    %2524 = vmatpush.msra.mxu0 0.0
    %2525 = vmatpush.msra.mxu0 %v2507
    %2526 = vmatpush.msra.mxu0 %v2506
    %2527 = vmatpush.msra.mxu0 %v2505
    %2528 = vmatpush.msra.mxu0 %v2504
    %2529 = vmatmul.f32.gmra.mxu0 %v2511
    %v2530 = vpop.f32.mrf.mxu0
    %v2531 = vadd.f32 0.0, %v2530
    %2532 = vdwg.mxu0
    %s2533 = scalar_lea.vmem %s39, 8
    %v2534 = vld [vmem:[%s2533] sm:$0xff]
    %v2536 = vsel %vm383, %v2534, 0
    %2538 = vmatpush.msra.mxu0 0.0
    %2539 = vmatpush.msra.mxu0 0.0
    %2540 = vmatpush.msra.mxu0 0.0
    %2541 = vmatpush.msra.mxu0 0.0
    %2542 = vmatpush.msra.mxu0 0.0
    %2543 = vmatpush.msra.mxu0 0.0
    %2544 = vmatpush.msra.mxu0 0.0
    %2545 = vmatpush.msra.mxu0 0.0
    %2546 = vmatpush.msra.mxu0 0.0
    %2547 = vmatpush.msra.mxu0 0.0
    %2548 = vmatpush.msra.mxu0 0.0
    %2549 = vmatpush.msra.mxu0 0.0
    %2550 = vmatpush.msra.mxu0 %v2507
    %2551 = vmatpush.msra.mxu0 %v2506
    %2552 = vmatpush.msra.mxu0 %v2505
    %2553 = vmatpush.msra.mxu0 %v2504
    %2554 = vmatmul.f32.gmra.mxu0 %v2536
    %v2555 = vpop.f32.mrf.mxu0
    %v2556 = vadd.f32 0.0, %v2555
    %2557 = vdwg.mxu0
    %s2558 = scalar_lea.vmem %s39, 16
    %v2559 = vld [vmem:[%s2558] sm:$0xff]
    %v2561 = vsel %vm383, %v2559, 0
    %2563 = vmatpush.msra.mxu0 0.0
    %2564 = vmatpush.msra.mxu0 0.0
    %2565 = vmatpush.msra.mxu0 0.0
    %2566 = vmatpush.msra.mxu0 0.0
    %2567 = vmatpush.msra.mxu0 0.0
    %2568 = vmatpush.msra.mxu0 0.0
    %2569 = vmatpush.msra.mxu0 0.0
    %2570 = vmatpush.msra.mxu0 0.0
    %2571 = vmatpush.msra.mxu0 0.0
    %2572 = vmatpush.msra.mxu0 0.0
    %2573 = vmatpush.msra.mxu0 0.0
    %2574 = vmatpush.msra.mxu0 0.0
    %2575 = vmatpush.msra.mxu0 %v2507
    %2576 = vmatpush.msra.mxu0 %v2506
    %2577 = vmatpush.msra.mxu0 %v2505
    %2578 = vmatpush.msra.mxu0 %v2504
    %2579 = vmatmul.f32.gmra.mxu0 %v2561
    %v2580 = vpop.f32.mrf.mxu0
    %v2581 = vadd.f32 0.0, %v2580
    %2582 = vdwg.mxu0
    %s2583 = scalar_lea.vmem %s39, 24
    %v2584 = vld [vmem:[%s2583] sm:$0xff]
    %v2586 = vsel %vm383, %v2584, 0
    %2588 = vmatpush.msra.mxu0 0.0
    %2589 = vmatpush.msra.mxu0 0.0
    %2590 = vmatpush.msra.mxu0 0.0
    %2591 = vmatpush.msra.mxu0 0.0
    %2592 = vmatpush.msra.mxu0 0.0
    %2593 = vmatpush.msra.mxu0 0.0
    %2594 = vmatpush.msra.mxu0 0.0
    %2595 = vmatpush.msra.mxu0 0.0
    %2596 = vmatpush.msra.mxu0 0.0
    %2597 = vmatpush.msra.mxu0 0.0
    %2598 = vmatpush.msra.mxu0 0.0
    %2599 = vmatpush.msra.mxu0 0.0
    %2600 = vmatpush.msra.mxu0 %v2507
    %2601 = vmatpush.msra.mxu0 %v2506
    %2602 = vmatpush.msra.mxu0 %v2505
    %2603 = vmatpush.msra.mxu0 %v2504
    %2604 = vmatmul.f32.gmra.mxu0 %v2586
    %v2605 = vpop.f32.mrf.mxu0
    %v2606 = vadd.f32 0.0, %v2605
    %2607 = vdwg.mxu0
    %2609 = vrot.lane.b32.xlu0 %v2556, 32
    %v2610 = vpop.permute.xlu0 %2609
    %2613 = vrot.lane.b32.xlu0 %v2581, 64
    %v2614 = vpop.permute.xlu0 %2613
    %2617 = vrot.lane.b32.xlu0 %v2606, 96
    %v2618 = vpop.permute.xlu0 %2617
    %v2620 = vsel %vm383, %v2531, %v2610
    %vm2621 = vcmask 523264
    %v2622 = vsel %vm2621, %v2620, %v2614
    %vm2623 = vcmask 785408
    %v2624 = vsel %vm2623, %v2622, %v2618
    %2625 = vadd.xlane.f32.xlu0 %v2624
    %v2626 = vpop.xlane.xlu0 %2625
    %v2627 = vrcp.pop 128.0
    %v2628 = vmul.f32 128.0, %v2627
    %v2629 = vsub.f32 1.0, %v2628
    %v2630 = vmul.f32 %v2627, %v2629
    %v2631 = vadd.f32 %v2627, %v2630
    %vm2632 = vweird.f32 %v2627
    %v2633 = vsel %vm2632, %v2627, %v2631
    %v2634 = vmul.f32 %v2626, %v2633
    %v2635 = vsub.f32 %v2624, %v2634
    %v2636 = vmul.f32 %v2635, %v2635
    %2637 = vadd.xlane.f32.xlu0 %v2636
    %v2638 = vpop.xlane.xlu0 %2637
    %v2639 = vmul.f32 %v2638, %v2633
    %v2640 = vadd.f32 %v2639, 1e-05
    %v2641 = vrsqrt.pop %v2640
    %v2642 = vmul.f32 %v2641, %v2640
    %v2643 = vmul.f32 %v2642, %v2641
    %v2644 = vmul.f32 0.5, %v2643
    %v2645 = vsub.f32 1.5, %v2644
    %v2646 = vmul.f32 %v2641, %v2645
    %vm2647 = vweird.f32 %v2640
    %vm2648 = vweird.f32 %v2641
    %vm2649 = vmor %vm2647, %vm2648
    %v2650 = vsel %vm2649, %v2641, %v2646
    %v2651 = vmul.f32 %v2635, %v2650
    %v2652 = vperm.slane %v2508, 0
    %v2653 = vmul.f32 %v2651, %v2652
    %v2654 = vperm.slane %v2508, 1
    %v2655 = vadd.f32 %v2653, %v2654
    %v2656 = vpack.c.bf16 %v2655, %v2655
    %v2657 = vld [vmem:[%s43] sm:$0xf]
    %v2658 = vld [vmem:[%s43 + $0x4] sm:$0xf]
    %v2659 = vld [vmem:[%s43 + $0x8] sm:$0xf]
    %v2660 = vld [vmem:[%s43 + $0xc] sm:$0xf]
    %v2661 = vld [vmem:[%s43 + $0x10] sm:$0xf]
    %v2662 = vld [vmem:[%s43 + $0x14] sm:$0xf]
    %v2663 = vld [vmem:[%s43 + $0x18] sm:$0xf]
    %v2664 = vld [vmem:[%s43 + $0x1c] sm:$0xf]
    %v2665 = vld [vmem:[%s43 + $0x20] sm:$0xf]
    %v2666 = vld [vmem:[%s43 + $0x24] sm:$0xf]
    %v2667 = vld [vmem:[%s43 + $0x28] sm:$0xf]
    %v2668 = vld [vmem:[%s43 + $0x2c] sm:$0xf]
    %v2669 = vld [vmem:[%s43 + $0x30] sm:$0xf]
    %v2670 = vld [vmem:[%s43 + $0x34] sm:$0xf]
    %v2671 = vld [vmem:[%s43 + $0x38] sm:$0xf]
    %v2672 = vld [vmem:[%s43 + $0x3c] sm:$0xf]
    %v2689 = vunpack.c.l.b16 %v2657
    %v2690 = vunpack.c.l.b16 %v2658
    %v2691 = vunpack.c.l.b16 %v2659
    %v2692 = vunpack.c.l.b16 %v2660
    %v2693 = vunpack.c.l.b16 %v2661
    %v2694 = vunpack.c.l.b16 %v2662
    %v2695 = vunpack.c.l.b16 %v2663
    %v2696 = vunpack.c.l.b16 %v2664
    %v2697 = vunpack.c.l.b16 %v2665
    %v2698 = vunpack.c.l.b16 %v2666
    %v2699 = vunpack.c.l.b16 %v2667
    %v2700 = vunpack.c.l.b16 %v2668
    %v2701 = vunpack.c.l.b16 %v2669
    %v2702 = vunpack.c.l.b16 %v2670
    %v2703 = vunpack.c.l.b16 %v2671
    %v2704 = vunpack.c.l.b16 %v2672
    %v2705 = vpack.c.b16 %v2690, %v2689
    %v2706 = vpack.c.b16 %v2692, %v2691
    %v2707 = vpack.c.b16 %v2694, %v2693
    %v2708 = vpack.c.b16 %v2696, %v2695
    %v2709 = vpack.c.b16 %v2698, %v2697
    %v2710 = vpack.c.b16 %v2700, %v2699
    %v2711 = vpack.c.b16 %v2702, %v2701
    %v2712 = vpack.c.b16 %v2704, %v2703
    %2721 = vmatpush.bf16.msra.mxu0 %v2712
    %2722 = vmatpush.bf16.msra.mxu0 %v2711
    %2723 = vmatpush.bf16.msra.mxu0 %v2710
    %2724 = vmatpush.bf16.msra.mxu0 %v2709
    %2725 = vmatpush.bf16.msra.mxu0 %v2708
    %2726 = vmatpush.bf16.msra.mxu0 %v2707
    %2727 = vmatpush.bf16.msra.mxu0 %v2706
    %2728 = vmatpush.bf16.msra.mxu0 %v2705
    %2729 = vmatmul.bf16.gmra.mxu0 %v2656
    %v2730 = vpop.f32.mrf.mxu0
    %v2731 = vadd.f32 0.0, %v2730
    %v2732 = vpop.f32.mrf.mxu0
    %2733 = vdwg.mxu0
    %v2734 = vld [vmem:[%s47] sm:$0xf]
    %v2735 = vld [vmem:[#allocation13] sm:$0x3f]
    %v2736 = vld [vmem:[%s59] sm:$0x3]
    %v2737 = vsel %vm2621, %v2731, 0.0
    %2738 = vadd.xlane.f32.xlu0 %v2737
    %v2739 = vpop.xlane.xlu0 %2738
    %v2740 = vrcp.pop 64.0
    %v2741 = vmul.f32 64.0, %v2740
    %v2742 = vsub.f32 1.0, %v2741
    %v2743 = vmul.f32 %v2740, %v2742
    %v2744 = vadd.f32 %v2740, %v2743
    %vm2745 = vweird.f32 %v2740
    %v2746 = vsel %vm2745, %v2740, %v2744
    %v2747 = vmul.f32 %v2739, %v2746
    %v2748 = vsub.f32 %v2731, %v2747
    %v2749 = vmul.f32 %v2748, %v2748
    %v2750 = vsel %vm2621, %v2749, 0.0
    %2751 = vadd.xlane.f32.xlu0 %v2750
    %v2752 = vpop.xlane.xlu0 %2751
    %v2753 = vmul.f32 %v2752, %v2746
    %v2754 = vadd.f32 %v2753, 1e-05
    %v2755 = vrsqrt.pop %v2754
    %v2756 = vmul.f32 %v2755, %v2754
    %v2757 = vmul.f32 %v2756, %v2755
    %v2758 = vmul.f32 0.5, %v2757
    %v2759 = vsub.f32 1.5, %v2758
    %v2760 = vmul.f32 %v2755, %v2759
    %vm2761 = vweird.f32 %v2754
    %vm2762 = vweird.f32 %v2755
    %vm2763 = vmor %vm2761, %vm2762
    %v2764 = vsel %vm2763, %v2755, %v2760
    %v2765 = vmul.f32 %v2748, %v2764
    %v2766 = vperm.slane %v2735, 0
    %v2767 = vmul.f32 %v2765, %v2766
    %v2768 = vperm.slane %v2735, 1
    %v2769 = vadd.f32 %v2767, %v2768
    %v2770 = vpack.c.bf16 %v2769, %v2769
    %v2771 = vld [vmem:[%s45] sm:$0xf]
    %v2772 = vld [vmem:[%s45 + $0x4] sm:$0xf]
    %v2773 = vld [vmem:[%s45 + $0x8] sm:$0xf]
    %v2774 = vld [vmem:[%s45 + $0xc] sm:$0xf]
    %v2775 = vld [vmem:[%s45 + $0x10] sm:$0xf]
    %v2776 = vld [vmem:[%s45 + $0x14] sm:$0xf]
    %v2777 = vld [vmem:[%s45 + $0x18] sm:$0xf]
    %v2778 = vld [vmem:[%s45 + $0x1c] sm:$0xf]
    %v2779 = vperm.slane %v2734, 0
    %v2788 = vunpack.c.l.b16 %v2771
    %v2789 = vunpack.c.l.b16 %v2772
    %v2790 = vunpack.c.l.b16 %v2773
    %v2791 = vunpack.c.l.b16 %v2774
    %v2792 = vunpack.c.l.b16 %v2775
    %v2793 = vunpack.c.l.b16 %v2776
    %v2794 = vunpack.c.l.b16 %v2777
    %v2795 = vunpack.c.l.b16 %v2778
    %v2796 = vpack.c.b16 %v2789, %v2788
    %v2797 = vpack.c.b16 %v2791, %v2790
    %v2798 = vpack.c.b16 %v2793, %v2792
    %v2799 = vpack.c.b16 %v2795, %v2794
    %v2805 = vsel %vm2621, %v2770, 0
    %2807 = vmatpush.bf16.msra.mxu0 0
    %2808 = vmatpush.bf16.msra.mxu0 0
    %2809 = vmatpush.bf16.msra.mxu0 0
    %2810 = vmatpush.bf16.msra.mxu0 0
    %2811 = vmatpush.bf16.msra.mxu0 %v2799
    %2812 = vmatpush.bf16.msra.mxu0 %v2798
    %2813 = vmatpush.bf16.msra.mxu0 %v2797
    %2814 = vmatpush.bf16.msra.mxu0 %v2796
    %2815 = vmatmul.bf16.gmra.mxu0 %v2805
    %v2816 = vpop.f32.mrf.mxu0
    %v2817 = vadd.f32 %v2779, %v2816
    %v2818 = vpop.f32.mrf.mxu0
    %2819 = vdwg.mxu0
    %v2820 = vpack.c.bf16 %v2817, %v2817
    %s2821 = scalar_lea.vmem %s45, 128
    %v2822 = vld [vmem:[%s2821] sm:$0xf]
    %v2823 = vld [vmem:[%s2821 + $0x4] sm:$0xf]
    %v2824 = vld [vmem:[%s2821 + $0x8] sm:$0xf]
    %v2825 = vld [vmem:[%s2821 + $0xc] sm:$0xf]
    %v2826 = vld [vmem:[%s2821 + $0x10] sm:$0xf]
    %v2827 = vld [vmem:[%s2821 + $0x14] sm:$0xf]
    %v2828 = vld [vmem:[%s2821 + $0x18] sm:$0xf]
    %v2829 = vld [vmem:[%s2821 + $0x1c] sm:$0xf]
    %v2838 = vunpack.c.l.b16 %v2822
    %v2839 = vunpack.c.l.b16 %v2823
    %v2840 = vunpack.c.l.b16 %v2824
    %v2841 = vunpack.c.l.b16 %v2825
    %v2842 = vunpack.c.l.b16 %v2826
    %v2843 = vunpack.c.l.b16 %v2827
    %v2844 = vunpack.c.l.b16 %v2828
    %v2845 = vunpack.c.l.b16 %v2829
    %v2846 = vpack.c.b16 %v2839, %v2838
    %v2847 = vpack.c.b16 %v2841, %v2840
    %v2848 = vpack.c.b16 %v2843, %v2842
    %v2849 = vpack.c.b16 %v2845, %v2844
    %2854 = vmatpush.bf16.msra.mxu0 0
    %2855 = vmatpush.bf16.msra.mxu0 0
    %2856 = vmatpush.bf16.msra.mxu0 0
    %2857 = vmatpush.bf16.msra.mxu0 0
    %2858 = vmatpush.bf16.msra.mxu0 %v2849
    %2859 = vmatpush.bf16.msra.mxu0 %v2848
    %2860 = vmatpush.bf16.msra.mxu0 %v2847
    %2861 = vmatpush.bf16.msra.mxu0 %v2846
    %2862 = vmatmul.bf16.gmra.mxu0 %v2805
    %v2863 = vpop.f32.mrf.mxu0
    %v2864 = vadd.f32 0.0, %v2863
    %v2865 = vpop.f32.mrf.mxu0
    %2866 = vdwg.mxu0
    %v2867 = vpack.c.bf16 %v2864, %v2864
    %s2868 = scalar_lea.vmem %s45, 256
    %v2869 = vld [vmem:[%s2868] sm:$0xf]
    %v2870 = vld [vmem:[%s2868 + $0x4] sm:$0xf]
    %v2871 = vld [vmem:[%s2868 + $0x8] sm:$0xf]
    %v2872 = vld [vmem:[%s2868 + $0xc] sm:$0xf]
    %v2873 = vld [vmem:[%s2868 + $0x10] sm:$0xf]
    %v2874 = vld [vmem:[%s2868 + $0x14] sm:$0xf]
    %v2875 = vld [vmem:[%s2868 + $0x18] sm:$0xf]
    %v2876 = vld [vmem:[%s2868 + $0x1c] sm:$0xf]
    %v2885 = vunpack.c.l.b16 %v2869
    %v2886 = vunpack.c.l.b16 %v2870
    %v2887 = vunpack.c.l.b16 %v2871
    %v2888 = vunpack.c.l.b16 %v2872
    %v2889 = vunpack.c.l.b16 %v2873
    %v2890 = vunpack.c.l.b16 %v2874
    %v2891 = vunpack.c.l.b16 %v2875
    %v2892 = vunpack.c.l.b16 %v2876
    %v2893 = vpack.c.b16 %v2886, %v2885
    %v2894 = vpack.c.b16 %v2888, %v2887
    %v2895 = vpack.c.b16 %v2890, %v2889
    %v2896 = vpack.c.b16 %v2892, %v2891
    %2901 = vmatpush.bf16.msra.mxu0 0
    %2902 = vmatpush.bf16.msra.mxu0 0
    %2903 = vmatpush.bf16.msra.mxu0 0
    %2904 = vmatpush.bf16.msra.mxu0 0
    %2905 = vmatpush.bf16.msra.mxu0 %v2896
    %2906 = vmatpush.bf16.msra.mxu0 %v2895
    %2907 = vmatpush.bf16.msra.mxu0 %v2894
    %2908 = vmatpush.bf16.msra.mxu0 %v2893
    %2909 = vmatmul.bf16.gmra.mxu0 %v2805
    %v2910 = vpop.f32.mrf.mxu0
    %v2911 = vadd.f32 0.0, %v2910
    %v2912 = vpop.f32.mrf.mxu0
    %2913 = vdwg.mxu0
    %v2914 = vpack.c.bf16 %v2911, %v2911
    %v2915 = vld [vmem:[%s49] sm:$0xff]
    %v2917 = vsel %vm716, %v2820, 0
    %v2920 = vsel %vm716, %v2867, 0
    %2922 = vmatpush.bf16.xpose.msra.mxu0 0
    %2923 = vmatpush.bf16.xpose.msra.mxu0 0
    %2924 = vmatpush.bf16.xpose.msra.mxu0 0
    %2925 = vmatpush.bf16.xpose.msra.mxu0 0
    %2926 = vmatpush.bf16.xpose.msra.mxu0 0
    %2927 = vmatpush.bf16.xpose.msra.mxu0 0
    %2928 = vmatpush.bf16.xpose.msra.mxu0 0
    %2929 = vmatpush.bf16.xpose.msra.mxu0 %v2920
    %2930 = vmatmul.bf16.gmra.mxu0 %v2917
    %v2931 = vpop.f32.mrf.mxu0
    %v2932 = vadd.f32 %v2915, %v2931
    %v2933 = vpop.f32.mrf.mxu0
    %2934 = vdwg.mxu0
    %vm2935 = vcmask 64512
    %v2936 = vsel %vm2935, %v2932, -inf
    %2937 = vmax.xlane.f32.xlu0 %v2936
    %v2938 = vpop.xlane.xlu0 %2937
    %v2939 = vsub.f32 %v2932, %v2938
    %v2940 = vmul.f32 %v2939, 1.442695
    %v2941 = vpow.pop %v2940
    %v2942 = vsel %vm2935, %v2941, 0.0
    %2943 = vadd.xlane.f32.xlu0 %v2942
    %v2944 = vpop.xlane.xlu0 %2943
    %v2945 = vrcp.pop %v2944
    %v2946 = vmul.f32 %v2944, %v2945
    %v2947 = vsub.f32 1.0, %v2946
    %v2948 = vmul.f32 %v2945, %v2947
    %v2949 = vadd.f32 %v2945, %v2948
    %vm2950 = vweird.f32 %v2944
    %vm2951 = vweird.f32 %v2945
    %vm2952 = vmor %vm2950, %vm2951
    %v2953 = vsel %vm2952, %v2945, %v2949
    %v2954 = vand.u32 2147483647, %v2944
    %vm2955 = vcmp.eq.f32.partialorder %v2954, 8.507059e+37
    %v2956 = vand.u32 %v2944, 2147483648
    %v2957 = vor.u32 1.1754944e-38, %v2956
    %v2958 = vsel %vm2955, %v2957, %v2953
    %v2959 = vmul.f32 %v2941, %v2958
    %v2960 = vpack.c.bf16 %v2959, %v2959
    %v2962 = vsel %vm2935, %v2960, 0
    %vm2964 = vcmask 1043456
    %v2966 = vsel %vm2964, %v2914, 0
    %2968 = vmatpush.bf16.msra.mxu0 0
    %2969 = vmatpush.bf16.msra.mxu0 0
    %2970 = vmatpush.bf16.msra.mxu0 0
    %2971 = vmatpush.bf16.msra.mxu0 0
    %2972 = vmatpush.bf16.msra.mxu0 0
    %2973 = vmatpush.bf16.msra.mxu0 0
    %2974 = vmatpush.bf16.msra.mxu0 0
    %2975 = vmatpush.bf16.msra.mxu0 %v2966
    %2976 = vmatmul.bf16.gmra.mxu0 %v2962
    %v2977 = vpop.f32.mrf.mxu0
    %v2978 = vadd.f32 0.0, %v2977
    %v2979 = vpop.f32.mrf.mxu0
    %2980 = vdwg.mxu0
    %v2981 = vpack.c.bf16 %v2978, %v2978
    %v2982 = vld [vmem:[%s51] sm:$0xf]
    %v2983 = vld [vmem:[%s51 + $0x4] sm:$0xf]
    %s2984 = scalar_lea.vmem %s45, 32
    %v2985 = vld [vmem:[%s2984] sm:$0xf]
    %v2986 = vld [vmem:[%s2984 + $0x4] sm:$0xf]
    %v2987 = vld [vmem:[%s2984 + $0x8] sm:$0xf]
    %v2988 = vld [vmem:[%s2984 + $0xc] sm:$0xf]
    %v2989 = vld [vmem:[%s2984 + $0x10] sm:$0xf]
    %v2990 = vld [vmem:[%s2984 + $0x14] sm:$0xf]
    %v2991 = vld [vmem:[%s2984 + $0x18] sm:$0xf]
    %v2992 = vld [vmem:[%s2984 + $0x1c] sm:$0xf]
    %v2993 = vperm.slane %v2734, 1
    %v3002 = vunpack.c.l.b16 %v2985
    %v3003 = vunpack.c.l.b16 %v2986
    %v3004 = vunpack.c.l.b16 %v2987
    %v3005 = vunpack.c.l.b16 %v2988
    %v3006 = vunpack.c.l.b16 %v2989
    %v3007 = vunpack.c.l.b16 %v2990
    %v3008 = vunpack.c.l.b16 %v2991
    %v3009 = vunpack.c.l.b16 %v2992
    %v3010 = vpack.c.b16 %v3003, %v3002
    %v3011 = vpack.c.b16 %v3005, %v3004
    %v3012 = vpack.c.b16 %v3007, %v3006
    %v3013 = vpack.c.b16 %v3009, %v3008
    %3018 = vmatpush.bf16.msra.mxu0 0
    %3019 = vmatpush.bf16.msra.mxu0 0
    %3020 = vmatpush.bf16.msra.mxu0 0
    %3021 = vmatpush.bf16.msra.mxu0 0
    %3022 = vmatpush.bf16.msra.mxu0 %v3013
    %3023 = vmatpush.bf16.msra.mxu0 %v3012
    %3024 = vmatpush.bf16.msra.mxu0 %v3011
    %3025 = vmatpush.bf16.msra.mxu0 %v3010
    %3026 = vmatmul.bf16.gmra.mxu0 %v2805
    %v3027 = vpop.f32.mrf.mxu0
    %v3028 = vadd.f32 %v2993, %v3027
    %v3029 = vpop.f32.mrf.mxu0
    %3030 = vdwg.mxu0
    %v3031 = vpack.c.bf16 %v3028, %v3028
    %s3032 = scalar_lea.vmem %s45, 160
    %v3033 = vld [vmem:[%s3032] sm:$0xf]
    %v3034 = vld [vmem:[%s3032 + $0x4] sm:$0xf]
    %v3035 = vld [vmem:[%s3032 + $0x8] sm:$0xf]
    %v3036 = vld [vmem:[%s3032 + $0xc] sm:$0xf]
    %v3037 = vld [vmem:[%s3032 + $0x10] sm:$0xf]
    %v3038 = vld [vmem:[%s3032 + $0x14] sm:$0xf]
    %v3039 = vld [vmem:[%s3032 + $0x18] sm:$0xf]
    %v3040 = vld [vmem:[%s3032 + $0x1c] sm:$0xf]
    %v3049 = vunpack.c.l.b16 %v3033
    %v3050 = vunpack.c.l.b16 %v3034
    %v3051 = vunpack.c.l.b16 %v3035
    %v3052 = vunpack.c.l.b16 %v3036
    %v3053 = vunpack.c.l.b16 %v3037
    %v3054 = vunpack.c.l.b16 %v3038
    %v3055 = vunpack.c.l.b16 %v3039
    %v3056 = vunpack.c.l.b16 %v3040
    %v3057 = vpack.c.b16 %v3050, %v3049
    %v3058 = vpack.c.b16 %v3052, %v3051
    %v3059 = vpack.c.b16 %v3054, %v3053
    %v3060 = vpack.c.b16 %v3056, %v3055
    %3065 = vmatpush.bf16.msra.mxu0 0
    %3066 = vmatpush.bf16.msra.mxu0 0
    %3067 = vmatpush.bf16.msra.mxu0 0
    %3068 = vmatpush.bf16.msra.mxu0 0
    %3069 = vmatpush.bf16.msra.mxu0 %v3060
    %3070 = vmatpush.bf16.msra.mxu0 %v3059
    %3071 = vmatpush.bf16.msra.mxu0 %v3058
    %3072 = vmatpush.bf16.msra.mxu0 %v3057
    %3073 = vmatmul.bf16.gmra.mxu0 %v2805
    %v3074 = vpop.f32.mrf.mxu0
    %v3075 = vadd.f32 0.0, %v3074
    %v3076 = vpop.f32.mrf.mxu0
    %3077 = vdwg.mxu0
    %v3078 = vpack.c.bf16 %v3075, %v3075
    %s3079 = scalar_lea.vmem %s45, 288
    %v3080 = vld [vmem:[%s3079] sm:$0xf]
    %v3081 = vld [vmem:[%s3079 + $0x4] sm:$0xf]
    %v3082 = vld [vmem:[%s3079 + $0x8] sm:$0xf]
    %v3083 = vld [vmem:[%s3079 + $0xc] sm:$0xf]
    %v3084 = vld [vmem:[%s3079 + $0x10] sm:$0xf]
    %v3085 = vld [vmem:[%s3079 + $0x14] sm:$0xf]
    %v3086 = vld [vmem:[%s3079 + $0x18] sm:$0xf]
    %v3087 = vld [vmem:[%s3079 + $0x1c] sm:$0xf]
    %v3096 = vunpack.c.l.b16 %v3080
    %v3097 = vunpack.c.l.b16 %v3081
    %v3098 = vunpack.c.l.b16 %v3082
    %v3099 = vunpack.c.l.b16 %v3083
    %v3100 = vunpack.c.l.b16 %v3084
    %v3101 = vunpack.c.l.b16 %v3085
    %v3102 = vunpack.c.l.b16 %v3086
    %v3103 = vunpack.c.l.b16 %v3087
    %v3104 = vpack.c.b16 %v3097, %v3096
    %v3105 = vpack.c.b16 %v3099, %v3098
    %v3106 = vpack.c.b16 %v3101, %v3100
    %v3107 = vpack.c.b16 %v3103, %v3102
    %3112 = vmatpush.bf16.msra.mxu0 0
    %3113 = vmatpush.bf16.msra.mxu0 0
    %3114 = vmatpush.bf16.msra.mxu0 0
    %3115 = vmatpush.bf16.msra.mxu0 0
    %3116 = vmatpush.bf16.msra.mxu0 %v3107
    %3117 = vmatpush.bf16.msra.mxu0 %v3106
    %3118 = vmatpush.bf16.msra.mxu0 %v3105
    %3119 = vmatpush.bf16.msra.mxu0 %v3104
    %3120 = vmatmul.bf16.gmra.mxu0 %v2805
    %v3121 = vpop.f32.mrf.mxu0
    %v3122 = vadd.f32 0.0, %v3121
    %v3123 = vpop.f32.mrf.mxu0
    %3124 = vdwg.mxu0
    %v3125 = vpack.c.bf16 %v3122, %v3122
    %s3126 = scalar_lea.vmem %s49, 8
    %v3127 = vld [vmem:[%s3126] sm:$0xff]
    %v3129 = vsel %vm716, %v3031, 0
    %v3132 = vsel %vm716, %v3078, 0
    %3134 = vmatpush.bf16.xpose.msra.mxu0 0
    %3135 = vmatpush.bf16.xpose.msra.mxu0 0
    %3136 = vmatpush.bf16.xpose.msra.mxu0 0
    %3137 = vmatpush.bf16.xpose.msra.mxu0 0
    %3138 = vmatpush.bf16.xpose.msra.mxu0 0
    %3139 = vmatpush.bf16.xpose.msra.mxu0 0
    %3140 = vmatpush.bf16.xpose.msra.mxu0 0
    %3141 = vmatpush.bf16.xpose.msra.mxu0 %v3132
    %3142 = vmatmul.bf16.gmra.mxu0 %v3129
    %v3143 = vpop.f32.mrf.mxu0
    %v3144 = vadd.f32 %v3127, %v3143
    %v3145 = vpop.f32.mrf.mxu0
    %3146 = vdwg.mxu0
    %v3147 = vsel %vm2935, %v3144, -inf
    %3148 = vmax.xlane.f32.xlu0 %v3147
    %v3149 = vpop.xlane.xlu0 %3148
    %v3150 = vsub.f32 %v3144, %v3149
    %v3151 = vmul.f32 %v3150, 1.442695
    %v3152 = vpow.pop %v3151
    %v3153 = vsel %vm2935, %v3152, 0.0
    %3154 = vadd.xlane.f32.xlu0 %v3153
    %v3155 = vpop.xlane.xlu0 %3154
    %v3156 = vrcp.pop %v3155
    %v3157 = vmul.f32 %v3155, %v3156
    %v3158 = vsub.f32 1.0, %v3157
    %v3159 = vmul.f32 %v3156, %v3158
    %v3160 = vadd.f32 %v3156, %v3159
    %vm3161 = vweird.f32 %v3155
    %vm3162 = vweird.f32 %v3156
    %vm3163 = vmor %vm3161, %vm3162
    %v3164 = vsel %vm3163, %v3156, %v3160
    %v3165 = vand.u32 2147483647, %v3155
    %vm3166 = vcmp.eq.f32.partialorder %v3165, 8.507059e+37
    %v3167 = vand.u32 %v3155, 2147483648
    %v3168 = vor.u32 1.1754944e-38, %v3167
    %v3169 = vsel %vm3166, %v3168, %v3164
    %v3170 = vmul.f32 %v3152, %v3169
    %v3171 = vpack.c.bf16 %v3170, %v3170
    %v3173 = vsel %vm2935, %v3171, 0
    %v3176 = vsel %vm2964, %v3125, 0
    %3178 = vmatpush.bf16.msra.mxu0 0
    %3179 = vmatpush.bf16.msra.mxu0 0
    %3180 = vmatpush.bf16.msra.mxu0 0
    %3181 = vmatpush.bf16.msra.mxu0 0
    %3182 = vmatpush.bf16.msra.mxu0 0
    %3183 = vmatpush.bf16.msra.mxu0 0
    %3184 = vmatpush.bf16.msra.mxu0 0
    %3185 = vmatpush.bf16.msra.mxu0 %v3176
    %3186 = vmatmul.bf16.gmra.mxu0 %v3173
    %v3187 = vpop.f32.mrf.mxu0
    %v3188 = vadd.f32 0.0, %v3187
    %v3189 = vpop.f32.mrf.mxu0
    %3190 = vdwg.mxu0
    %v3191 = vpack.c.bf16 %v3188, %v3188
    %s3192 = scalar_lea.vmem %s51, 8
    %v3193 = vld [vmem:[%s3192] sm:$0xf]
    %v3194 = vld [vmem:[%s3192 + $0x4] sm:$0xf]
    %v3197 = vunpack.c.l.b16 %v3193
    %v3198 = vunpack.c.l.b16 %v3194
    %v3199 = vpack.c.b16 %v3198, %v3197
    %v3202 = vsel %vm716, %v3191, 0
    %3204 = vmatpush.bf16.msra.mxu0 0
    %3205 = vmatpush.bf16.msra.mxu0 0
    %3206 = vmatpush.bf16.msra.mxu0 0
    %3207 = vmatpush.bf16.msra.mxu0 0
    %3208 = vmatpush.bf16.msra.mxu0 0
    %3209 = vmatpush.bf16.msra.mxu0 0
    %3210 = vmatpush.bf16.msra.mxu0 0
    %3211 = vmatpush.bf16.msra.mxu0 %v3199
    %3212 = vmatmul.bf16.gmra.mxu0 %v3202
    %v3213 = vpop.f32.mrf.mxu0
    %v3214 = vadd.f32 0.0, %v3213
    %v3215 = vpop.f32.mrf.mxu0
    %3216 = vdwg.mxu0
    %v3219 = vunpack.c.l.b16 %v2982
    %v3220 = vunpack.c.l.b16 %v2983
    %v3221 = vpack.c.b16 %v3220, %v3219
    %v3224 = vsel %vm716, %v2981, 0
    %3226 = vmatpush.bf16.msra.mxu0 0
    %3227 = vmatpush.bf16.msra.mxu0 0
    %3228 = vmatpush.bf16.msra.mxu0 0
    %3229 = vmatpush.bf16.msra.mxu0 0
    %3230 = vmatpush.bf16.msra.mxu0 0
    %3231 = vmatpush.bf16.msra.mxu0 0
    %3232 = vmatpush.bf16.msra.mxu0 0
    %3233 = vmatpush.bf16.msra.mxu0 %v3221
    %3234 = vmatmul.bf16.gmra.mxu0 %v3224
    %v3235 = vpop.f32.mrf.mxu0
    %v3236 = vadd.f32 %v3214, %v3235
    %v3237 = vpop.f32.mrf.mxu0
    %3238 = vdwg.mxu0
    %s3239 = scalar_lea.vmem %s45, 64
    %v3240 = vld [vmem:[%s3239] sm:$0xf]
    %v3241 = vld [vmem:[%s3239 + $0x4] sm:$0xf]
    %v3242 = vld [vmem:[%s3239 + $0x8] sm:$0xf]
    %v3243 = vld [vmem:[%s3239 + $0xc] sm:$0xf]
    %v3244 = vld [vmem:[%s3239 + $0x10] sm:$0xf]
    %v3245 = vld [vmem:[%s3239 + $0x14] sm:$0xf]
    %v3246 = vld [vmem:[%s3239 + $0x18] sm:$0xf]
    %v3247 = vld [vmem:[%s3239 + $0x1c] sm:$0xf]
    %v3248 = vperm.slane %v2734, 2
    %v3257 = vunpack.c.l.b16 %v3240
    %v3258 = vunpack.c.l.b16 %v3241
    %v3259 = vunpack.c.l.b16 %v3242
    %v3260 = vunpack.c.l.b16 %v3243
    %v3261 = vunpack.c.l.b16 %v3244
    %v3262 = vunpack.c.l.b16 %v3245
    %v3263 = vunpack.c.l.b16 %v3246
    %v3264 = vunpack.c.l.b16 %v3247
    %v3265 = vpack.c.b16 %v3258, %v3257
    %v3266 = vpack.c.b16 %v3260, %v3259
    %v3267 = vpack.c.b16 %v3262, %v3261
    %v3268 = vpack.c.b16 %v3264, %v3263
    %3273 = vmatpush.bf16.msra.mxu0 0
    %3274 = vmatpush.bf16.msra.mxu0 0
    %3275 = vmatpush.bf16.msra.mxu0 0
    %3276 = vmatpush.bf16.msra.mxu0 0
    %3277 = vmatpush.bf16.msra.mxu0 %v3268
    %3278 = vmatpush.bf16.msra.mxu0 %v3267
    %3279 = vmatpush.bf16.msra.mxu0 %v3266
    %3280 = vmatpush.bf16.msra.mxu0 %v3265
    %3281 = vmatmul.bf16.gmra.mxu0 %v2805
    %v3282 = vpop.f32.mrf.mxu0
    %v3283 = vadd.f32 %v3248, %v3282
    %v3284 = vpop.f32.mrf.mxu0
    %3285 = vdwg.mxu0
    %v3286 = vpack.c.bf16 %v3283, %v3283
    %s3287 = scalar_lea.vmem %s45, 192
    %v3288 = vld [vmem:[%s3287] sm:$0xf]
    %v3289 = vld [vmem:[%s3287 + $0x4] sm:$0xf]
    %v3290 = vld [vmem:[%s3287 + $0x8] sm:$0xf]
    %v3291 = vld [vmem:[%s3287 + $0xc] sm:$0xf]
    %v3292 = vld [vmem:[%s3287 + $0x10] sm:$0xf]
    %v3293 = vld [vmem:[%s3287 + $0x14] sm:$0xf]
    %v3294 = vld [vmem:[%s3287 + $0x18] sm:$0xf]
    %v3295 = vld [vmem:[%s3287 + $0x1c] sm:$0xf]
    %v3304 = vunpack.c.l.b16 %v3288
    %v3305 = vunpack.c.l.b16 %v3289
    %v3306 = vunpack.c.l.b16 %v3290
    %v3307 = vunpack.c.l.b16 %v3291
    %v3308 = vunpack.c.l.b16 %v3292
    %v3309 = vunpack.c.l.b16 %v3293
    %v3310 = vunpack.c.l.b16 %v3294
    %v3311 = vunpack.c.l.b16 %v3295
    %v3312 = vpack.c.b16 %v3305, %v3304
    %v3313 = vpack.c.b16 %v3307, %v3306
    %v3314 = vpack.c.b16 %v3309, %v3308
    %v3315 = vpack.c.b16 %v3311, %v3310
    %3320 = vmatpush.bf16.msra.mxu0 0
    %3321 = vmatpush.bf16.msra.mxu0 0
    %3322 = vmatpush.bf16.msra.mxu0 0
    %3323 = vmatpush.bf16.msra.mxu0 0
    %3324 = vmatpush.bf16.msra.mxu0 %v3315
    %3325 = vmatpush.bf16.msra.mxu0 %v3314
    %3326 = vmatpush.bf16.msra.mxu0 %v3313
    %3327 = vmatpush.bf16.msra.mxu0 %v3312
    %3328 = vmatmul.bf16.gmra.mxu0 %v2805
    %v3329 = vpop.f32.mrf.mxu0
    %v3330 = vadd.f32 0.0, %v3329
    %v3331 = vpop.f32.mrf.mxu0
    %3332 = vdwg.mxu0
    %v3333 = vpack.c.bf16 %v3330, %v3330
    %s3334 = scalar_lea.vmem %s45, 320
    %v3335 = vld [vmem:[%s3334] sm:$0xf]
    %v3336 = vld [vmem:[%s3334 + $0x4] sm:$0xf]
    %v3337 = vld [vmem:[%s3334 + $0x8] sm:$0xf]
    %v3338 = vld [vmem:[%s3334 + $0xc] sm:$0xf]
    %v3339 = vld [vmem:[%s3334 + $0x10] sm:$0xf]
    %v3340 = vld [vmem:[%s3334 + $0x14] sm:$0xf]
    %v3341 = vld [vmem:[%s3334 + $0x18] sm:$0xf]
    %v3342 = vld [vmem:[%s3334 + $0x1c] sm:$0xf]
    %v3351 = vunpack.c.l.b16 %v3335
    %v3352 = vunpack.c.l.b16 %v3336
    %v3353 = vunpack.c.l.b16 %v3337
    %v3354 = vunpack.c.l.b16 %v3338
    %v3355 = vunpack.c.l.b16 %v3339
    %v3356 = vunpack.c.l.b16 %v3340
    %v3357 = vunpack.c.l.b16 %v3341
    %v3358 = vunpack.c.l.b16 %v3342
    %v3359 = vpack.c.b16 %v3352, %v3351
    %v3360 = vpack.c.b16 %v3354, %v3353
    %v3361 = vpack.c.b16 %v3356, %v3355
    %v3362 = vpack.c.b16 %v3358, %v3357
    %3367 = vmatpush.bf16.msra.mxu0 0
    %3368 = vmatpush.bf16.msra.mxu0 0
    %3369 = vmatpush.bf16.msra.mxu0 0
    %3370 = vmatpush.bf16.msra.mxu0 0
    %3371 = vmatpush.bf16.msra.mxu0 %v3362
    %3372 = vmatpush.bf16.msra.mxu0 %v3361
    %3373 = vmatpush.bf16.msra.mxu0 %v3360
    %3374 = vmatpush.bf16.msra.mxu0 %v3359
    %3375 = vmatmul.bf16.gmra.mxu0 %v2805
    %v3376 = vpop.f32.mrf.mxu0
    %v3377 = vadd.f32 0.0, %v3376
    %v3378 = vpop.f32.mrf.mxu0
    %3379 = vdwg.mxu0
    %v3380 = vpack.c.bf16 %v3377, %v3377
    %s3381 = scalar_lea.vmem %s49, 16
    %v3382 = vld [vmem:[%s3381] sm:$0xff]
    %v3384 = vsel %vm716, %v3286, 0
    %v3387 = vsel %vm716, %v3333, 0
    %3389 = vmatpush.bf16.xpose.msra.mxu0 0
    %3390 = vmatpush.bf16.xpose.msra.mxu0 0
    %3391 = vmatpush.bf16.xpose.msra.mxu0 0
    %3392 = vmatpush.bf16.xpose.msra.mxu0 0
    %3393 = vmatpush.bf16.xpose.msra.mxu0 0
    %3394 = vmatpush.bf16.xpose.msra.mxu0 0
    %3395 = vmatpush.bf16.xpose.msra.mxu0 0
    %3396 = vmatpush.bf16.xpose.msra.mxu0 %v3387
    %3397 = vmatmul.bf16.gmra.mxu0 %v3384
    %v3398 = vpop.f32.mrf.mxu0
    %v3399 = vadd.f32 %v3382, %v3398
    %v3400 = vpop.f32.mrf.mxu0
    %3401 = vdwg.mxu0
    %v3402 = vsel %vm2935, %v3399, -inf
    %3403 = vmax.xlane.f32.xlu0 %v3402
    %v3404 = vpop.xlane.xlu0 %3403
    %v3405 = vsub.f32 %v3399, %v3404
    %v3406 = vmul.f32 %v3405, 1.442695
    %v3407 = vpow.pop %v3406
    %v3408 = vsel %vm2935, %v3407, 0.0
    %3409 = vadd.xlane.f32.xlu0 %v3408
    %v3410 = vpop.xlane.xlu0 %3409
    %v3411 = vrcp.pop %v3410
    %v3412 = vmul.f32 %v3410, %v3411
    %v3413 = vsub.f32 1.0, %v3412
    %v3414 = vmul.f32 %v3411, %v3413
    %v3415 = vadd.f32 %v3411, %v3414
    %vm3416 = vweird.f32 %v3410
    %vm3417 = vweird.f32 %v3411
    %vm3418 = vmor %vm3416, %vm3417
    %v3419 = vsel %vm3418, %v3411, %v3415
    %v3420 = vand.u32 2147483647, %v3410
    %vm3421 = vcmp.eq.f32.partialorder %v3420, 8.507059e+37
    %v3422 = vand.u32 %v3410, 2147483648
    %v3423 = vor.u32 1.1754944e-38, %v3422
    %v3424 = vsel %vm3421, %v3423, %v3419
    %v3425 = vmul.f32 %v3407, %v3424
    %v3426 = vpack.c.bf16 %v3425, %v3425
    %v3428 = vsel %vm2935, %v3426, 0
    %v3431 = vsel %vm2964, %v3380, 0
    %3433 = vmatpush.bf16.msra.mxu0 0
    %3434 = vmatpush.bf16.msra.mxu0 0
    %3435 = vmatpush.bf16.msra.mxu0 0
    %3436 = vmatpush.bf16.msra.mxu0 0
    %3437 = vmatpush.bf16.msra.mxu0 0
    %3438 = vmatpush.bf16.msra.mxu0 0
    %3439 = vmatpush.bf16.msra.mxu0 0
    %3440 = vmatpush.bf16.msra.mxu0 %v3431
    %3441 = vmatmul.bf16.gmra.mxu0 %v3428
    %v3442 = vpop.f32.mrf.mxu0
    %v3443 = vadd.f32 0.0, %v3442
    %v3444 = vpop.f32.mrf.mxu0
    %3445 = vdwg.mxu0
    %v3446 = vpack.c.bf16 %v3443, %v3443
    %s3447 = scalar_lea.vmem %s51, 16
    %v3448 = vld [vmem:[%s3447] sm:$0xf]
    %v3449 = vld [vmem:[%s3447 + $0x4] sm:$0xf]
    %v3452 = vunpack.c.l.b16 %v3448
    %v3453 = vunpack.c.l.b16 %v3449
    %v3454 = vpack.c.b16 %v3453, %v3452
    %v3457 = vsel %vm716, %v3446, 0
    %3459 = vmatpush.bf16.msra.mxu0 0
    %3460 = vmatpush.bf16.msra.mxu0 0
    %3461 = vmatpush.bf16.msra.mxu0 0
    %3462 = vmatpush.bf16.msra.mxu0 0
    %3463 = vmatpush.bf16.msra.mxu0 0
    %3464 = vmatpush.bf16.msra.mxu0 0
    %3465 = vmatpush.bf16.msra.mxu0 0
    %3466 = vmatpush.bf16.msra.mxu0 %v3454
    %3467 = vmatmul.bf16.gmra.mxu0 %v3457
    %v3468 = vpop.f32.mrf.mxu0
    %v3469 = vadd.f32 0.0, %v3468
    %v3470 = vpop.f32.mrf.mxu0
    %3471 = vdwg.mxu0
    %v3472 = vadd.f32 %v3236, %v3469
    %s3473 = scalar_lea.vmem %s45, 96
    %v3474 = vld [vmem:[%s3473] sm:$0xf]
    %v3475 = vld [vmem:[%s3473 + $0x4] sm:$0xf]
    %v3476 = vld [vmem:[%s3473 + $0x8] sm:$0xf]
    %v3477 = vld [vmem:[%s3473 + $0xc] sm:$0xf]
    %v3478 = vld [vmem:[%s3473 + $0x10] sm:$0xf]
    %v3479 = vld [vmem:[%s3473 + $0x14] sm:$0xf]
    %v3480 = vld [vmem:[%s3473 + $0x18] sm:$0xf]
    %v3481 = vld [vmem:[%s3473 + $0x1c] sm:$0xf]
    %v3482 = vperm.slane %v2734, 3
    %v3491 = vunpack.c.l.b16 %v3474
    %v3492 = vunpack.c.l.b16 %v3475
    %v3493 = vunpack.c.l.b16 %v3476
    %v3494 = vunpack.c.l.b16 %v3477
    %v3495 = vunpack.c.l.b16 %v3478
    %v3496 = vunpack.c.l.b16 %v3479
    %v3497 = vunpack.c.l.b16 %v3480
    %v3498 = vunpack.c.l.b16 %v3481
    %v3499 = vpack.c.b16 %v3492, %v3491
    %v3500 = vpack.c.b16 %v3494, %v3493
    %v3501 = vpack.c.b16 %v3496, %v3495
    %v3502 = vpack.c.b16 %v3498, %v3497
    %3507 = vmatpush.bf16.msra.mxu0 0
    %3508 = vmatpush.bf16.msra.mxu0 0
    %3509 = vmatpush.bf16.msra.mxu0 0
    %3510 = vmatpush.bf16.msra.mxu0 0
    %3511 = vmatpush.bf16.msra.mxu0 %v3502
    %3512 = vmatpush.bf16.msra.mxu0 %v3501
    %3513 = vmatpush.bf16.msra.mxu0 %v3500
    %3514 = vmatpush.bf16.msra.mxu0 %v3499
    %3515 = vmatmul.bf16.gmra.mxu0 %v2805
    %v3516 = vpop.f32.mrf.mxu0
    %v3517 = vadd.f32 %v3482, %v3516
    %v3518 = vpop.f32.mrf.mxu0
    %3519 = vdwg.mxu0
    %v3520 = vpack.c.bf16 %v3517, %v3517
    %s3521 = scalar_lea.vmem %s45, 224
    %v3522 = vld [vmem:[%s3521] sm:$0xf]
    %v3523 = vld [vmem:[%s3521 + $0x4] sm:$0xf]
    %v3524 = vld [vmem:[%s3521 + $0x8] sm:$0xf]
    %v3525 = vld [vmem:[%s3521 + $0xc] sm:$0xf]
    %v3526 = vld [vmem:[%s3521 + $0x10] sm:$0xf]
    %v3527 = vld [vmem:[%s3521 + $0x14] sm:$0xf]
    %v3528 = vld [vmem:[%s3521 + $0x18] sm:$0xf]
    %v3529 = vld [vmem:[%s3521 + $0x1c] sm:$0xf]
    %v3538 = vunpack.c.l.b16 %v3522
    %v3539 = vunpack.c.l.b16 %v3523
    %v3540 = vunpack.c.l.b16 %v3524
    %v3541 = vunpack.c.l.b16 %v3525
    %v3542 = vunpack.c.l.b16 %v3526
    %v3543 = vunpack.c.l.b16 %v3527
    %v3544 = vunpack.c.l.b16 %v3528
    %v3545 = vunpack.c.l.b16 %v3529
    %v3546 = vpack.c.b16 %v3539, %v3538
    %v3547 = vpack.c.b16 %v3541, %v3540
    %v3548 = vpack.c.b16 %v3543, %v3542
    %v3549 = vpack.c.b16 %v3545, %v3544
    %3554 = vmatpush.bf16.msra.mxu0 0
    %3555 = vmatpush.bf16.msra.mxu0 0
    %3556 = vmatpush.bf16.msra.mxu0 0
    %3557 = vmatpush.bf16.msra.mxu0 0
    %3558 = vmatpush.bf16.msra.mxu0 %v3549
    %3559 = vmatpush.bf16.msra.mxu0 %v3548
    %3560 = vmatpush.bf16.msra.mxu0 %v3547
    %3561 = vmatpush.bf16.msra.mxu0 %v3546
    %3562 = vmatmul.bf16.gmra.mxu0 %v2805
    %v3563 = vpop.f32.mrf.mxu0
    %v3564 = vadd.f32 0.0, %v3563
    %v3565 = vpop.f32.mrf.mxu0
    %3566 = vdwg.mxu0
    %v3567 = vpack.c.bf16 %v3564, %v3564
    %s3568 = scalar_lea.vmem %s45, 352
    %v3569 = vld [vmem:[%s3568] sm:$0xf]
    %v3570 = vld [vmem:[%s3568 + $0x4] sm:$0xf]
    %v3571 = vld [vmem:[%s3568 + $0x8] sm:$0xf]
    %v3572 = vld [vmem:[%s3568 + $0xc] sm:$0xf]
    %v3573 = vld [vmem:[%s3568 + $0x10] sm:$0xf]
    %v3574 = vld [vmem:[%s3568 + $0x14] sm:$0xf]
    %v3575 = vld [vmem:[%s3568 + $0x18] sm:$0xf]
    %v3576 = vld [vmem:[%s3568 + $0x1c] sm:$0xf]
    %v3585 = vunpack.c.l.b16 %v3569
    %v3586 = vunpack.c.l.b16 %v3570
    %v3587 = vunpack.c.l.b16 %v3571
    %v3588 = vunpack.c.l.b16 %v3572
    %v3589 = vunpack.c.l.b16 %v3573
    %v3590 = vunpack.c.l.b16 %v3574
    %v3591 = vunpack.c.l.b16 %v3575
    %v3592 = vunpack.c.l.b16 %v3576
    %v3593 = vpack.c.b16 %v3586, %v3585
    %v3594 = vpack.c.b16 %v3588, %v3587
    %v3595 = vpack.c.b16 %v3590, %v3589
    %v3596 = vpack.c.b16 %v3592, %v3591
    %3601 = vmatpush.bf16.msra.mxu0 0
    %3602 = vmatpush.bf16.msra.mxu0 0
    %3603 = vmatpush.bf16.msra.mxu0 0
    %3604 = vmatpush.bf16.msra.mxu0 0
    %3605 = vmatpush.bf16.msra.mxu0 %v3596
    %3606 = vmatpush.bf16.msra.mxu0 %v3595
    %3607 = vmatpush.bf16.msra.mxu0 %v3594
    %3608 = vmatpush.bf16.msra.mxu0 %v3593
    %3609 = vmatmul.bf16.gmra.mxu0 %v2805
    %v3610 = vpop.f32.mrf.mxu0
    %v3611 = vadd.f32 0.0, %v3610
    %v3612 = vpop.f32.mrf.mxu0
    %3613 = vdwg.mxu0
    %v3614 = vpack.c.bf16 %v3611, %v3611
    %s3615 = scalar_lea.vmem %s49, 24
    %v3616 = vld [vmem:[%s3615] sm:$0xff]
    %v3618 = vsel %vm716, %v3520, 0
    %v3621 = vsel %vm716, %v3567, 0
    %3623 = vmatpush.bf16.xpose.msra.mxu0 0
    %3624 = vmatpush.bf16.xpose.msra.mxu0 0
    %3625 = vmatpush.bf16.xpose.msra.mxu0 0
    %3626 = vmatpush.bf16.xpose.msra.mxu0 0
    %3627 = vmatpush.bf16.xpose.msra.mxu0 0
    %3628 = vmatpush.bf16.xpose.msra.mxu0 0
    %3629 = vmatpush.bf16.xpose.msra.mxu0 0
    %3630 = vmatpush.bf16.xpose.msra.mxu0 %v3621
    %3631 = vmatmul.bf16.gmra.mxu0 %v3618
    %v3632 = vpop.f32.mrf.mxu0
    %v3633 = vadd.f32 %v3616, %v3632
    %v3634 = vpop.f32.mrf.mxu0
    %3635 = vdwg.mxu0
    %v3636 = vsel %vm2935, %v3633, -inf
    %3637 = vmax.xlane.f32.xlu0 %v3636
    %v3638 = vpop.xlane.xlu0 %3637
    %v3639 = vsub.f32 %v3633, %v3638
    %v3640 = vmul.f32 %v3639, 1.442695
    %v3641 = vpow.pop %v3640
    %v3642 = vsel %vm2935, %v3641, 0.0
    %3643 = vadd.xlane.f32.xlu0 %v3642
    %v3644 = vpop.xlane.xlu0 %3643
    %v3645 = vrcp.pop %v3644
    %v3646 = vmul.f32 %v3644, %v3645
    %v3647 = vsub.f32 1.0, %v3646
    %v3648 = vmul.f32 %v3645, %v3647
    %v3649 = vadd.f32 %v3645, %v3648
    %vm3650 = vweird.f32 %v3644
    %vm3651 = vweird.f32 %v3645
    %vm3652 = vmor %vm3650, %vm3651
    %v3653 = vsel %vm3652, %v3645, %v3649
    %v3654 = vand.u32 2147483647, %v3644
    %vm3655 = vcmp.eq.f32.partialorder %v3654, 8.507059e+37
    %v3656 = vand.u32 %v3644, 2147483648
    %v3657 = vor.u32 1.1754944e-38, %v3656
    %v3658 = vsel %vm3655, %v3657, %v3653
    %v3659 = vmul.f32 %v3641, %v3658
    %v3660 = vpack.c.bf16 %v3659, %v3659
    %v3662 = vsel %vm2935, %v3660, 0
    %v3665 = vsel %vm2964, %v3614, 0
    %3667 = vmatpush.bf16.msra.mxu0 0
    %3668 = vmatpush.bf16.msra.mxu0 0
    %3669 = vmatpush.bf16.msra.mxu0 0
    %3670 = vmatpush.bf16.msra.mxu0 0
    %3671 = vmatpush.bf16.msra.mxu0 0
    %3672 = vmatpush.bf16.msra.mxu0 0
    %3673 = vmatpush.bf16.msra.mxu0 0
    %3674 = vmatpush.bf16.msra.mxu0 %v3665
    %3675 = vmatmul.bf16.gmra.mxu0 %v3662
    %v3676 = vpop.f32.mrf.mxu0
    %v3677 = vadd.f32 0.0, %v3676
    %v3678 = vpop.f32.mrf.mxu0
    %3679 = vdwg.mxu0
    %v3680 = vpack.c.bf16 %v3677, %v3677
    %s3681 = scalar_lea.vmem %s51, 24
    %v3682 = vld [vmem:[%s3681] sm:$0xf]
    %v3683 = vld [vmem:[%s3681 + $0x4] sm:$0xf]
    %v3686 = vunpack.c.l.b16 %v3682
    %v3687 = vunpack.c.l.b16 %v3683
    %v3688 = vpack.c.b16 %v3687, %v3686
    %v3691 = vsel %vm716, %v3680, 0
    %3693 = vmatpush.bf16.msra.mxu0 0
    %3694 = vmatpush.bf16.msra.mxu0 0
    %3695 = vmatpush.bf16.msra.mxu0 0
    %3696 = vmatpush.bf16.msra.mxu0 0
    %3697 = vmatpush.bf16.msra.mxu0 0
    %3698 = vmatpush.bf16.msra.mxu0 0
    %3699 = vmatpush.bf16.msra.mxu0 0
    %3700 = vmatpush.bf16.msra.mxu0 %v3688
    %3701 = vmatmul.bf16.gmra.mxu0 %v3691
    %v3702 = vpop.f32.mrf.mxu0
    %v3703 = vadd.f32 0.0, %v3702
    %v3704 = vpop.f32.mrf.mxu0
    %3705 = vdwg.mxu0
    %v3706 = vadd.f32 %v3472, %v3703
    %v3707 = vadd.f32 %v2731, %v3706
    %v3708 = vperm.slane %v2735, 4
    %v3709 = vadd.f32 %v3707, %v3708
    %v3710 = vsel %vm2621, %v3709, 0.0
    %3711 = vadd.xlane.f32.xlu0 %v3710
    %v3712 = vpop.xlane.xlu0 %3711
    %v3713 = vmul.f32 %v3712, %v2746
    %v3714 = vsub.f32 %v3709, %v3713
    %v3715 = vmul.f32 %v3714, %v3714
    %v3716 = vsel %vm2621, %v3715, 0.0
    %3717 = vadd.xlane.f32.xlu0 %v3716
    %v3718 = vpop.xlane.xlu0 %3717
    %v3719 = vmul.f32 %v3718, %v2746
    %v3720 = vadd.f32 %v3719, 1e-05
    %v3721 = vrsqrt.pop %v3720
    %v3722 = vmul.f32 %v3721, %v3720
    %v3723 = vmul.f32 %v3722, %v3721
    %v3724 = vmul.f32 0.5, %v3723
    %v3725 = vsub.f32 1.5, %v3724
    %v3726 = vmul.f32 %v3721, %v3725
    %vm3727 = vweird.f32 %v3720
    %vm3728 = vweird.f32 %v3721
    %vm3729 = vmor %vm3727, %vm3728
    %v3730 = vsel %vm3729, %v3721, %v3726
    %v3731 = vmul.f32 %v3714, %v3730
    %v3732 = vperm.slane %v2735, 2
    %v3733 = vmul.f32 %v3731, %v3732
    %v3734 = vperm.slane %v2735, 3
    %v3735 = vadd.f32 %v3733, %v3734
    %v3736 = vpack.c.bf16 %v3735, %v3735
    %v3737 = vld [vmem:[%s53] sm:$0xff]
    %v3738 = vld [vmem:[%s53 + $0x8] sm:$0xff]
    %v3739 = vld [vmem:[%s53 + $0x10] sm:$0xff]
    %v3740 = vld [vmem:[%s53 + $0x18] sm:$0xff]
    %v3741 = vld [vmem:[%s53 + $0x20] sm:$0xff]
    %v3742 = vld [vmem:[%s53 + $0x28] sm:$0xff]
    %v3743 = vld [vmem:[%s53 + $0x30] sm:$0xff]
    %v3744 = vld [vmem:[%s53 + $0x38] sm:$0xff]
    %v3746 = vperm.slane %v2736, 0
    %v3747 = vperm.slane %v2736, 1
    %v3758 = vunpack.c.l.b16 %v3737
    %v3759 = vunpack.c.h.b16 %v3737
    %v3760 = vunpack.c.l.b16 %v3738
    %v3761 = vunpack.c.h.b16 %v3738
    %v3762 = vunpack.c.l.b16 %v3739
    %v3763 = vunpack.c.h.b16 %v3739
    %v3764 = vunpack.c.l.b16 %v3740
    %v3765 = vunpack.c.h.b16 %v3740
    %v3766 = vunpack.c.l.b16 %v3741
    %v3767 = vunpack.c.h.b16 %v3741
    %v3768 = vunpack.c.l.b16 %v3742
    %v3769 = vunpack.c.h.b16 %v3742
    %v3770 = vunpack.c.l.b16 %v3743
    %v3771 = vunpack.c.h.b16 %v3743
    %v3772 = vunpack.c.l.b16 %v3744
    %v3773 = vunpack.c.h.b16 %v3744
    %v3774 = vpack.c.b16 %v3760, %v3758
    %v3775 = vpack.c.b16 %v3761, %v3759
    %v3776 = vpack.c.b16 %v3764, %v3762
    %v3777 = vpack.c.b16 %v3765, %v3763
    %v3778 = vpack.c.b16 %v3768, %v3766
    %v3779 = vpack.c.b16 %v3769, %v3767
    %v3780 = vpack.c.b16 %v3772, %v3770
    %v3781 = vpack.c.b16 %v3773, %v3771
    %v3791 = vsel %vm2621, %v3736, 0
    %3793 = vmatpush.bf16.msra.mxu0 0
    %3794 = vmatpush.bf16.msra.mxu0 0
    %3795 = vmatpush.bf16.msra.mxu0 0
    %3796 = vmatpush.bf16.msra.mxu0 0
    %3797 = vmatpush.bf16.msra.mxu0 %v3780
    %3798 = vmatpush.bf16.msra.mxu0 %v3778
    %3799 = vmatpush.bf16.msra.mxu0 %v3776
    %3800 = vmatpush.bf16.msra.mxu0 %v3774
    %3801 = vmatmul.bf16.gmra.mxu0 %v3791
    %v3802 = vpop.f32.mrf.mxu0
    %v3803 = vadd.f32 %v3746, %v3802
    %v3804 = vpop.f32.mrf.mxu0
    %3805 = vdwg.mxu0
    %3806 = vmatpush.bf16.msra.mxu0 0
    %3807 = vmatpush.bf16.msra.mxu0 0
    %3808 = vmatpush.bf16.msra.mxu0 0
    %3809 = vmatpush.bf16.msra.mxu0 0
    %3810 = vmatpush.bf16.msra.mxu0 %v3781
    %3811 = vmatpush.bf16.msra.mxu0 %v3779
    %3812 = vmatpush.bf16.msra.mxu0 %v3777
    %3813 = vmatpush.bf16.msra.mxu0 %v3775
    %3814 = vmatmul.bf16.gmra.mxu0 %v3791
    %v3815 = vpop.f32.mrf.mxu0
    %v3816 = vadd.f32 %v3747, %v3815
    %v3817 = vpop.f32.mrf.mxu0
    %3818 = vdwg.mxu0
    %v3819 = vmul.f32 %v3803, %v3803
    %v3820 = vmul.f32 %v3816, %v3816
    %v3821 = vmul.f32 %v3803, %v3819
    %v3822 = vmul.f32 %v3816, %v3820
    %v3823 = vmul.f32 %v3821, 0.044715
    %v3824 = vmul.f32 %v3822, 0.044715
    %v3825 = vadd.f32 %v3803, %v3823
    %v3826 = vadd.f32 %v3816, %v3824
    %v3827 = vmul.f32 %v3825, 0.7978846
    %v3828 = vmul.f32 %v3826, 0.7978846
    %v3829 = vtanh.pop %v3827
    %v3830 = vtanh.pop %v3828
    %v3831 = vadd.f32 %v3829, 1.0
    %v3832 = vadd.f32 %v3830, 1.0
    %v3833 = vmul.f32 %v3831, 0.5
    %v3834 = vmul.f32 %v3832, 0.5
    %v3835 = vmul.f32 %v3803, %v3833
    %v3836 = vmul.f32 %v3816, %v3834
    %v3837 = vpack.c.bf16 %v3835, %v3835
    %v3838 = vpack.c.bf16 %v3836, %v3836
    %v3839 = vld [vmem:[%s55] sm:$0xf]
    %v3840 = vld [vmem:[%s55 + $0x4] sm:$0xf]
    %v3841 = vld [vmem:[%s55 + $0x8] sm:$0xf]
    %v3842 = vld [vmem:[%s55 + $0xc] sm:$0xf]
    %v3843 = vld [vmem:[%s55 + $0x10] sm:$0xf]
    %v3844 = vld [vmem:[%s55 + $0x14] sm:$0xf]
    %v3845 = vld [vmem:[%s55 + $0x18] sm:$0xf]
    %v3846 = vld [vmem:[%s55 + $0x1c] sm:$0xf]
    %v3847 = vld [vmem:[%s55 + $0x20] sm:$0xf]
    %v3848 = vld [vmem:[%s55 + $0x24] sm:$0xf]
    %v3849 = vld [vmem:[%s55 + $0x28] sm:$0xf]
    %v3850 = vld [vmem:[%s55 + $0x2c] sm:$0xf]
    %v3851 = vld [vmem:[%s55 + $0x30] sm:$0xf]
    %v3852 = vld [vmem:[%s55 + $0x34] sm:$0xf]
    %v3853 = vld [vmem:[%s55 + $0x38] sm:$0xf]
    %v3854 = vld [vmem:[%s55 + $0x3c] sm:$0xf]
    %v3855 = vld [vmem:[%s55 + $0x40] sm:$0xf]
    %v3856 = vld [vmem:[%s55 + $0x44] sm:$0xf]
    %v3857 = vld [vmem:[%s55 + $0x48] sm:$0xf]
    %v3858 = vld [vmem:[%s55 + $0x4c] sm:$0xf]
    %v3859 = vld [vmem:[%s55 + $0x50] sm:$0xf]
    %v3860 = vld [vmem:[%s55 + $0x54] sm:$0xf]
    %v3861 = vld [vmem:[%s55 + $0x58] sm:$0xf]
    %v3862 = vld [vmem:[%s55 + $0x5c] sm:$0xf]
    %v3863 = vld [vmem:[%s55 + $0x60] sm:$0xf]
    %v3864 = vld [vmem:[%s55 + $0x64] sm:$0xf]
    %v3865 = vld [vmem:[%s55 + $0x68] sm:$0xf]
    %v3866 = vld [vmem:[%s55 + $0x6c] sm:$0xf]
    %v3867 = vld [vmem:[%s55 + $0x70] sm:$0xf]
    %v3868 = vld [vmem:[%s55 + $0x74] sm:$0xf]
    %v3869 = vld [vmem:[%s55 + $0x78] sm:$0xf]
    %v3870 = vld [vmem:[%s55 + $0x7c] sm:$0xf]
    %v3903 = vunpack.c.l.b16 %v3839
    %v3904 = vunpack.c.l.b16 %v3840
    %v3905 = vunpack.c.l.b16 %v3841
    %v3906 = vunpack.c.l.b16 %v3842
    %v3907 = vunpack.c.l.b16 %v3843
    %v3908 = vunpack.c.l.b16 %v3844
    %v3909 = vunpack.c.l.b16 %v3845
    %v3910 = vunpack.c.l.b16 %v3846
    %v3911 = vunpack.c.l.b16 %v3847
    %v3912 = vunpack.c.l.b16 %v3848
    %v3913 = vunpack.c.l.b16 %v3849
    %v3914 = vunpack.c.l.b16 %v3850
    %v3915 = vunpack.c.l.b16 %v3851
    %v3916 = vunpack.c.l.b16 %v3852
    %v3917 = vunpack.c.l.b16 %v3853
    %v3918 = vunpack.c.l.b16 %v3854
    %v3919 = vunpack.c.l.b16 %v3855
    %v3920 = vunpack.c.l.b16 %v3856
    %v3921 = vunpack.c.l.b16 %v3857
    %v3922 = vunpack.c.l.b16 %v3858
    %v3923 = vunpack.c.l.b16 %v3859
    %v3924 = vunpack.c.l.b16 %v3860
    %v3925 = vunpack.c.l.b16 %v3861
    %v3926 = vunpack.c.l.b16 %v3862
    %v3927 = vunpack.c.l.b16 %v3863
    %v3928 = vunpack.c.l.b16 %v3864
    %v3929 = vunpack.c.l.b16 %v3865
    %v3930 = vunpack.c.l.b16 %v3866
    %v3931 = vunpack.c.l.b16 %v3867
    %v3932 = vunpack.c.l.b16 %v3868
    %v3933 = vunpack.c.l.b16 %v3869
    %v3934 = vunpack.c.l.b16 %v3870
    %v3935 = vpack.c.b16 %v3904, %v3903
    %v3936 = vpack.c.b16 %v3906, %v3905
    %v3937 = vpack.c.b16 %v3908, %v3907
    %v3938 = vpack.c.b16 %v3910, %v3909
    %v3939 = vpack.c.b16 %v3912, %v3911
    %v3940 = vpack.c.b16 %v3914, %v3913
    %v3941 = vpack.c.b16 %v3916, %v3915
    %v3942 = vpack.c.b16 %v3918, %v3917
    %v3943 = vpack.c.b16 %v3920, %v3919
    %v3944 = vpack.c.b16 %v3922, %v3921
    %v3945 = vpack.c.b16 %v3924, %v3923
    %v3946 = vpack.c.b16 %v3926, %v3925
    %v3947 = vpack.c.b16 %v3928, %v3927
    %v3948 = vpack.c.b16 %v3930, %v3929
    %v3949 = vpack.c.b16 %v3932, %v3931
    %v3950 = vpack.c.b16 %v3934, %v3933
    %3967 = vmatpush.bf16.msra.mxu0 %v3942
    %3968 = vmatpush.bf16.msra.mxu0 %v3941
    %3969 = vmatpush.bf16.msra.mxu0 %v3940
    %3970 = vmatpush.bf16.msra.mxu0 %v3939
    %3971 = vmatpush.bf16.msra.mxu0 %v3938
    %3972 = vmatpush.bf16.msra.mxu0 %v3937
    %3973 = vmatpush.bf16.msra.mxu0 %v3936
    %3974 = vmatpush.bf16.msra.mxu0 %v3935
    %3975 = vmatmul.bf16.gmra.mxu0 %v3837
    %v3976 = vpop.f32.mrf.mxu0
    %v3977 = vadd.f32 0.0, %v3976
    %v3978 = vpop.f32.mrf.mxu0
    %3979 = vdwg.mxu0
    %3980 = vmatpush.bf16.msra.mxu0 %v3950
    %3981 = vmatpush.bf16.msra.mxu0 %v3949
    %3982 = vmatpush.bf16.msra.mxu0 %v3948
    %3983 = vmatpush.bf16.msra.mxu0 %v3947
    %3984 = vmatpush.bf16.msra.mxu0 %v3946
    %3985 = vmatpush.bf16.msra.mxu0 %v3945
    %3986 = vmatpush.bf16.msra.mxu0 %v3944
    %3987 = vmatpush.bf16.msra.mxu0 %v3943
    %3988 = vmatmul.bf16.gmra.mxu0 %v3838
    %v3989 = vpop.f32.mrf.mxu0
    %v3990 = vadd.f32 %v3977, %v3989
    %v3991 = vpop.f32.mrf.mxu0
    %3992 = vdwg.mxu0
    %v3993 = vadd.f32 %v3709, %v3990
    %v3994 = vperm.slane %v2735, 5
    %v3995 = vadd.f32 %v3993, %v3994
    %v3996 = vld [vmem:[%s63] sm:$0xf]
    %v3997 = vld [vmem:[#allocation17] sm:$0x3f]
    %v3998 = vld [vmem:[%s75] sm:$0x3]
    %v3999 = vsel %vm2621, %v3995, 0.0
    %4000 = vadd.xlane.f32.xlu0 %v3999
    %v4001 = vpop.xlane.xlu0 %4000
    %v4002 = vmul.f32 %v4001, %v2746
    %v4003 = vsub.f32 %v3995, %v4002
    %v4004 = vmul.f32 %v4003, %v4003
    %v4005 = vsel %vm2621, %v4004, 0.0
    %4006 = vadd.xlane.f32.xlu0 %v4005
    %v4007 = vpop.xlane.xlu0 %4006
    %v4008 = vmul.f32 %v4007, %v2746
    %v4009 = vadd.f32 %v4008, 1e-05
    %v4010 = vrsqrt.pop %v4009
    %v4011 = vmul.f32 %v4010, %v4009
    %v4012 = vmul.f32 %v4011, %v4010
    %v4013 = vmul.f32 0.5, %v4012
    %v4014 = vsub.f32 1.5, %v4013
    %v4015 = vmul.f32 %v4010, %v4014
    %vm4016 = vweird.f32 %v4009
    %vm4017 = vweird.f32 %v4010
    %vm4018 = vmor %vm4016, %vm4017
    %v4019 = vsel %vm4018, %v4010, %v4015
    %v4020 = vmul.f32 %v4003, %v4019
    %v4021 = vperm.slane %v3997, 0
    %v4022 = vmul.f32 %v4020, %v4021
    %v4023 = vperm.slane %v3997, 1
    %v4024 = vadd.f32 %v4022, %v4023
    %v4025 = vpack.c.bf16 %v4024, %v4024
    %v4026 = vld [vmem:[%s61] sm:$0xf]
    %v4027 = vld [vmem:[%s61 + $0x4] sm:$0xf]
    %v4028 = vld [vmem:[%s61 + $0x8] sm:$0xf]
    %v4029 = vld [vmem:[%s61 + $0xc] sm:$0xf]
    %v4030 = vld [vmem:[%s61 + $0x10] sm:$0xf]
    %v4031 = vld [vmem:[%s61 + $0x14] sm:$0xf]
    %v4032 = vld [vmem:[%s61 + $0x18] sm:$0xf]
    %v4033 = vld [vmem:[%s61 + $0x1c] sm:$0xf]
    %v4034 = vperm.slane %v3996, 0
    %v4043 = vunpack.c.l.b16 %v4026
    %v4044 = vunpack.c.l.b16 %v4027
    %v4045 = vunpack.c.l.b16 %v4028
    %v4046 = vunpack.c.l.b16 %v4029
    %v4047 = vunpack.c.l.b16 %v4030
    %v4048 = vunpack.c.l.b16 %v4031
    %v4049 = vunpack.c.l.b16 %v4032
    %v4050 = vunpack.c.l.b16 %v4033
    %v4051 = vpack.c.b16 %v4044, %v4043
    %v4052 = vpack.c.b16 %v4046, %v4045
    %v4053 = vpack.c.b16 %v4048, %v4047
    %v4054 = vpack.c.b16 %v4050, %v4049
    %v4060 = vsel %vm2621, %v4025, 0
    %4062 = vmatpush.bf16.msra.mxu0 0
    %4063 = vmatpush.bf16.msra.mxu0 0
    %4064 = vmatpush.bf16.msra.mxu0 0
    %4065 = vmatpush.bf16.msra.mxu0 0
    %4066 = vmatpush.bf16.msra.mxu0 %v4054
    %4067 = vmatpush.bf16.msra.mxu0 %v4053
    %4068 = vmatpush.bf16.msra.mxu0 %v4052
    %4069 = vmatpush.bf16.msra.mxu0 %v4051
    %4070 = vmatmul.bf16.gmra.mxu0 %v4060
    %v4071 = vpop.f32.mrf.mxu0
    %v4072 = vadd.f32 %v4034, %v4071
    %v4073 = vpop.f32.mrf.mxu0
    %4074 = vdwg.mxu0
    %v4075 = vpack.c.bf16 %v4072, %v4072
    %s4076 = scalar_lea.vmem %s61, 128
    %v4077 = vld [vmem:[%s4076] sm:$0xf]
    %v4078 = vld [vmem:[%s4076 + $0x4] sm:$0xf]
    %v4079 = vld [vmem:[%s4076 + $0x8] sm:$0xf]
    %v4080 = vld [vmem:[%s4076 + $0xc] sm:$0xf]
    %v4081 = vld [vmem:[%s4076 + $0x10] sm:$0xf]
    %v4082 = vld [vmem:[%s4076 + $0x14] sm:$0xf]
    %v4083 = vld [vmem:[%s4076 + $0x18] sm:$0xf]
    %v4084 = vld [vmem:[%s4076 + $0x1c] sm:$0xf]
    %v4093 = vunpack.c.l.b16 %v4077
    %v4094 = vunpack.c.l.b16 %v4078
    %v4095 = vunpack.c.l.b16 %v4079
    %v4096 = vunpack.c.l.b16 %v4080
    %v4097 = vunpack.c.l.b16 %v4081
    %v4098 = vunpack.c.l.b16 %v4082
    %v4099 = vunpack.c.l.b16 %v4083
    %v4100 = vunpack.c.l.b16 %v4084
    %v4101 = vpack.c.b16 %v4094, %v4093
    %v4102 = vpack.c.b16 %v4096, %v4095
    %v4103 = vpack.c.b16 %v4098, %v4097
    %v4104 = vpack.c.b16 %v4100, %v4099
    %4109 = vmatpush.bf16.msra.mxu0 0
    %4110 = vmatpush.bf16.msra.mxu0 0
    %4111 = vmatpush.bf16.msra.mxu0 0
    %4112 = vmatpush.bf16.msra.mxu0 0
    %4113 = vmatpush.bf16.msra.mxu0 %v4104
    %4114 = vmatpush.bf16.msra.mxu0 %v4103
    %4115 = vmatpush.bf16.msra.mxu0 %v4102
    %4116 = vmatpush.bf16.msra.mxu0 %v4101
    %4117 = vmatmul.bf16.gmra.mxu0 %v4060
    %v4118 = vpop.f32.mrf.mxu0
    %v4119 = vadd.f32 0.0, %v4118
    %v4120 = vpop.f32.mrf.mxu0
    %4121 = vdwg.mxu0
    %v4122 = vpack.c.bf16 %v4119, %v4119
    %s4123 = scalar_lea.vmem %s61, 256
    %v4124 = vld [vmem:[%s4123] sm:$0xf]
    %v4125 = vld [vmem:[%s4123 + $0x4] sm:$0xf]
    %v4126 = vld [vmem:[%s4123 + $0x8] sm:$0xf]
    %v4127 = vld [vmem:[%s4123 + $0xc] sm:$0xf]
    %v4128 = vld [vmem:[%s4123 + $0x10] sm:$0xf]
    %v4129 = vld [vmem:[%s4123 + $0x14] sm:$0xf]
    %v4130 = vld [vmem:[%s4123 + $0x18] sm:$0xf]
    %v4131 = vld [vmem:[%s4123 + $0x1c] sm:$0xf]
    %v4140 = vunpack.c.l.b16 %v4124
    %v4141 = vunpack.c.l.b16 %v4125
    %v4142 = vunpack.c.l.b16 %v4126
    %v4143 = vunpack.c.l.b16 %v4127
    %v4144 = vunpack.c.l.b16 %v4128
    %v4145 = vunpack.c.l.b16 %v4129
    %v4146 = vunpack.c.l.b16 %v4130
    %v4147 = vunpack.c.l.b16 %v4131
    %v4148 = vpack.c.b16 %v4141, %v4140
    %v4149 = vpack.c.b16 %v4143, %v4142
    %v4150 = vpack.c.b16 %v4145, %v4144
    %v4151 = vpack.c.b16 %v4147, %v4146
    %4156 = vmatpush.bf16.msra.mxu0 0
    %4157 = vmatpush.bf16.msra.mxu0 0
    %4158 = vmatpush.bf16.msra.mxu0 0
    %4159 = vmatpush.bf16.msra.mxu0 0
    %4160 = vmatpush.bf16.msra.mxu0 %v4151
    %4161 = vmatpush.bf16.msra.mxu0 %v4150
    %4162 = vmatpush.bf16.msra.mxu0 %v4149
    %4163 = vmatpush.bf16.msra.mxu0 %v4148
    %4164 = vmatmul.bf16.gmra.mxu0 %v4060
    %v4165 = vpop.f32.mrf.mxu0
    %v4166 = vadd.f32 0.0, %v4165
    %v4167 = vpop.f32.mrf.mxu0
    %4168 = vdwg.mxu0
    %v4169 = vpack.c.bf16 %v4166, %v4166
    %v4170 = vld [vmem:[#allocation14] sm:$0xff]
    %v4172 = vsel %vm716, %v4075, 0
    %v4175 = vsel %vm716, %v4122, 0
    %4177 = vmatpush.bf16.xpose.msra.mxu0 0
    %4178 = vmatpush.bf16.xpose.msra.mxu0 0
    %4179 = vmatpush.bf16.xpose.msra.mxu0 0
    %4180 = vmatpush.bf16.xpose.msra.mxu0 0
    %4181 = vmatpush.bf16.xpose.msra.mxu0 0
    %4182 = vmatpush.bf16.xpose.msra.mxu0 0
    %4183 = vmatpush.bf16.xpose.msra.mxu0 0
    %4184 = vmatpush.bf16.xpose.msra.mxu0 %v4175
    %4185 = vmatmul.bf16.gmra.mxu0 %v4172
    %v4186 = vpop.f32.mrf.mxu0
    %v4187 = vadd.f32 %v4170, %v4186
    %v4188 = vpop.f32.mrf.mxu0
    %4189 = vdwg.mxu0
    %v4190 = vsel %vm2935, %v4187, -inf
    %4191 = vmax.xlane.f32.xlu0 %v4190
    %v4192 = vpop.xlane.xlu0 %4191
    %v4193 = vsub.f32 %v4187, %v4192
    %v4194 = vmul.f32 %v4193, 1.442695
    %v4195 = vpow.pop %v4194
    %v4196 = vsel %vm2935, %v4195, 0.0
    %4197 = vadd.xlane.f32.xlu0 %v4196
    %v4198 = vpop.xlane.xlu0 %4197
    %v4199 = vrcp.pop %v4198
    %v4200 = vmul.f32 %v4198, %v4199
    %v4201 = vsub.f32 1.0, %v4200
    %v4202 = vmul.f32 %v4199, %v4201
    %v4203 = vadd.f32 %v4199, %v4202
    %vm4204 = vweird.f32 %v4198
    %vm4205 = vweird.f32 %v4199
    %vm4206 = vmor %vm4204, %vm4205
    %v4207 = vsel %vm4206, %v4199, %v4203
    %v4208 = vand.u32 2147483647, %v4198
    %vm4209 = vcmp.eq.f32.partialorder %v4208, 8.507059e+37
    %v4210 = vand.u32 %v4198, 2147483648
    %v4211 = vor.u32 1.1754944e-38, %v4210
    %v4212 = vsel %vm4209, %v4211, %v4207
    %v4213 = vmul.f32 %v4195, %v4212
    %v4214 = vpack.c.bf16 %v4213, %v4213
    %v4216 = vsel %vm2935, %v4214, 0
    %v4219 = vsel %vm2964, %v4169, 0
    %4221 = vmatpush.bf16.msra.mxu0 0
    %4222 = vmatpush.bf16.msra.mxu0 0
    %4223 = vmatpush.bf16.msra.mxu0 0
    %4224 = vmatpush.bf16.msra.mxu0 0
    %4225 = vmatpush.bf16.msra.mxu0 0
    %4226 = vmatpush.bf16.msra.mxu0 0
    %4227 = vmatpush.bf16.msra.mxu0 0
    %4228 = vmatpush.bf16.msra.mxu0 %v4219
    %4229 = vmatmul.bf16.gmra.mxu0 %v4216
    %v4230 = vpop.f32.mrf.mxu0
    %v4231 = vadd.f32 0.0, %v4230
    %v4232 = vpop.f32.mrf.mxu0
    %4233 = vdwg.mxu0
    %v4234 = vpack.c.bf16 %v4231, %v4231
    %v4235 = vld [vmem:[#allocation16] sm:$0xf]
    %v4236 = vld [vmem:[#allocation16 + $0x4] sm:$0xf]
    %s4237 = scalar_lea.vmem %s61, 32
    %v4238 = vld [vmem:[%s4237] sm:$0xf]
    %v4239 = vld [vmem:[%s4237 + $0x4] sm:$0xf]
    %v4240 = vld [vmem:[%s4237 + $0x8] sm:$0xf]
    %v4241 = vld [vmem:[%s4237 + $0xc] sm:$0xf]
    %v4242 = vld [vmem:[%s4237 + $0x10] sm:$0xf]
    %v4243 = vld [vmem:[%s4237 + $0x14] sm:$0xf]
    %v4244 = vld [vmem:[%s4237 + $0x18] sm:$0xf]
    %v4245 = vld [vmem:[%s4237 + $0x1c] sm:$0xf]
    %v4246 = vperm.slane %v3996, 1
    %v4255 = vunpack.c.l.b16 %v4238
    %v4256 = vunpack.c.l.b16 %v4239
    %v4257 = vunpack.c.l.b16 %v4240
    %v4258 = vunpack.c.l.b16 %v4241
    %v4259 = vunpack.c.l.b16 %v4242
    %v4260 = vunpack.c.l.b16 %v4243
    %v4261 = vunpack.c.l.b16 %v4244
    %v4262 = vunpack.c.l.b16 %v4245
    %v4263 = vpack.c.b16 %v4256, %v4255
    %v4264 = vpack.c.b16 %v4258, %v4257
    %v4265 = vpack.c.b16 %v4260, %v4259
    %v4266 = vpack.c.b16 %v4262, %v4261
    %4271 = vmatpush.bf16.msra.mxu0 0
    %4272 = vmatpush.bf16.msra.mxu0 0
    %4273 = vmatpush.bf16.msra.mxu0 0
    %4274 = vmatpush.bf16.msra.mxu0 0
    %4275 = vmatpush.bf16.msra.mxu0 %v4266
    %4276 = vmatpush.bf16.msra.mxu0 %v4265
    %4277 = vmatpush.bf16.msra.mxu0 %v4264
    %4278 = vmatpush.bf16.msra.mxu0 %v4263
    %4279 = vmatmul.bf16.gmra.mxu0 %v4060
    %v4280 = vpop.f32.mrf.mxu0
    %v4281 = vadd.f32 %v4246, %v4280
    %v4282 = vpop.f32.mrf.mxu0
    %4283 = vdwg.mxu0
    %v4284 = vpack.c.bf16 %v4281, %v4281
    %s4285 = scalar_lea.vmem %s61, 160
    %v4286 = vld [vmem:[%s4285] sm:$0xf]
    %v4287 = vld [vmem:[%s4285 + $0x4] sm:$0xf]
    %v4288 = vld [vmem:[%s4285 + $0x8] sm:$0xf]
    %v4289 = vld [vmem:[%s4285 + $0xc] sm:$0xf]
    %v4290 = vld [vmem:[%s4285 + $0x10] sm:$0xf]
    %v4291 = vld [vmem:[%s4285 + $0x14] sm:$0xf]
    %v4292 = vld [vmem:[%s4285 + $0x18] sm:$0xf]
    %v4293 = vld [vmem:[%s4285 + $0x1c] sm:$0xf]
    %v4302 = vunpack.c.l.b16 %v4286
    %v4303 = vunpack.c.l.b16 %v4287
    %v4304 = vunpack.c.l.b16 %v4288
    %v4305 = vunpack.c.l.b16 %v4289
    %v4306 = vunpack.c.l.b16 %v4290
    %v4307 = vunpack.c.l.b16 %v4291
    %v4308 = vunpack.c.l.b16 %v4292
    %v4309 = vunpack.c.l.b16 %v4293
    %v4310 = vpack.c.b16 %v4303, %v4302
    %v4311 = vpack.c.b16 %v4305, %v4304
    %v4312 = vpack.c.b16 %v4307, %v4306
    %v4313 = vpack.c.b16 %v4309, %v4308
    %4318 = vmatpush.bf16.msra.mxu0 0
    %4319 = vmatpush.bf16.msra.mxu0 0
    %4320 = vmatpush.bf16.msra.mxu0 0
    %4321 = vmatpush.bf16.msra.mxu0 0
    %4322 = vmatpush.bf16.msra.mxu0 %v4313
    %4323 = vmatpush.bf16.msra.mxu0 %v4312
    %4324 = vmatpush.bf16.msra.mxu0 %v4311
    %4325 = vmatpush.bf16.msra.mxu0 %v4310
    %4326 = vmatmul.bf16.gmra.mxu0 %v4060
    %v4327 = vpop.f32.mrf.mxu0
    %v4328 = vadd.f32 0.0, %v4327
    %v4329 = vpop.f32.mrf.mxu0
    %4330 = vdwg.mxu0
    %v4331 = vpack.c.bf16 %v4328, %v4328
    %s4332 = scalar_lea.vmem %s61, 288
    %v4333 = vld [vmem:[%s4332] sm:$0xf]
    %v4334 = vld [vmem:[%s4332 + $0x4] sm:$0xf]
    %v4335 = vld [vmem:[%s4332 + $0x8] sm:$0xf]
    %v4336 = vld [vmem:[%s4332 + $0xc] sm:$0xf]
    %v4337 = vld [vmem:[%s4332 + $0x10] sm:$0xf]
    %v4338 = vld [vmem:[%s4332 + $0x14] sm:$0xf]
    %v4339 = vld [vmem:[%s4332 + $0x18] sm:$0xf]
    %v4340 = vld [vmem:[%s4332 + $0x1c] sm:$0xf]
    %v4349 = vunpack.c.l.b16 %v4333
    %v4350 = vunpack.c.l.b16 %v4334
    %v4351 = vunpack.c.l.b16 %v4335
    %v4352 = vunpack.c.l.b16 %v4336
    %v4353 = vunpack.c.l.b16 %v4337
    %v4354 = vunpack.c.l.b16 %v4338
    %v4355 = vunpack.c.l.b16 %v4339
    %v4356 = vunpack.c.l.b16 %v4340
    %v4357 = vpack.c.b16 %v4350, %v4349
    %v4358 = vpack.c.b16 %v4352, %v4351
    %v4359 = vpack.c.b16 %v4354, %v4353
    %v4360 = vpack.c.b16 %v4356, %v4355
    %4365 = vmatpush.bf16.msra.mxu0 0
    %4366 = vmatpush.bf16.msra.mxu0 0
    %4367 = vmatpush.bf16.msra.mxu0 0
    %4368 = vmatpush.bf16.msra.mxu0 0
    %4369 = vmatpush.bf16.msra.mxu0 %v4360
    %4370 = vmatpush.bf16.msra.mxu0 %v4359
    %4371 = vmatpush.bf16.msra.mxu0 %v4358
    %4372 = vmatpush.bf16.msra.mxu0 %v4357
    %4373 = vmatmul.bf16.gmra.mxu0 %v4060
    %v4374 = vpop.f32.mrf.mxu0
    %v4375 = vadd.f32 0.0, %v4374
    %v4376 = vpop.f32.mrf.mxu0
    %4377 = vdwg.mxu0
    %v4378 = vpack.c.bf16 %v4375, %v4375
    %s4379 = scalar_lea.vmem [#allocation14], 8
    %v4380 = vld [vmem:[%s4379] sm:$0xff]
    %v4382 = vsel %vm716, %v4284, 0
    %v4385 = vsel %vm716, %v4331, 0
    %4387 = vmatpush.bf16.xpose.msra.mxu0 0
    %4388 = vmatpush.bf16.xpose.msra.mxu0 0
    %4389 = vmatpush.bf16.xpose.msra.mxu0 0
    %4390 = vmatpush.bf16.xpose.msra.mxu0 0
    %4391 = vmatpush.bf16.xpose.msra.mxu0 0
    %4392 = vmatpush.bf16.xpose.msra.mxu0 0
    %4393 = vmatpush.bf16.xpose.msra.mxu0 0
    %4394 = vmatpush.bf16.xpose.msra.mxu0 %v4385
    %4395 = vmatmul.bf16.gmra.mxu0 %v4382
    %v4396 = vpop.f32.mrf.mxu0
    %v4397 = vadd.f32 %v4380, %v4396
    %v4398 = vpop.f32.mrf.mxu0
    %4399 = vdwg.mxu0
    %v4400 = vsel %vm2935, %v4397, -inf
    %4401 = vmax.xlane.f32.xlu0 %v4400
    %v4402 = vpop.xlane.xlu0 %4401
    %v4403 = vsub.f32 %v4397, %v4402
    %v4404 = vmul.f32 %v4403, 1.442695
    %v4405 = vpow.pop %v4404
    %v4406 = vsel %vm2935, %v4405, 0.0
    %4407 = vadd.xlane.f32.xlu0 %v4406
    %v4408 = vpop.xlane.xlu0 %4407
    %v4409 = vrcp.pop %v4408
    %v4410 = vmul.f32 %v4408, %v4409
    %v4411 = vsub.f32 1.0, %v4410
    %v4412 = vmul.f32 %v4409, %v4411
    %v4413 = vadd.f32 %v4409, %v4412
    %vm4414 = vweird.f32 %v4408
    %vm4415 = vweird.f32 %v4409
    %vm4416 = vmor %vm4414, %vm4415
    %v4417 = vsel %vm4416, %v4409, %v4413
    %v4418 = vand.u32 2147483647, %v4408
    %vm4419 = vcmp.eq.f32.partialorder %v4418, 8.507059e+37
    %v4420 = vand.u32 %v4408, 2147483648
    %v4421 = vor.u32 1.1754944e-38, %v4420
    %v4422 = vsel %vm4419, %v4421, %v4417
    %v4423 = vmul.f32 %v4405, %v4422
    %v4424 = vpack.c.bf16 %v4423, %v4423
    %v4426 = vsel %vm2935, %v4424, 0
    %v4429 = vsel %vm2964, %v4378, 0
    %4431 = vmatpush.bf16.msra.mxu0 0
    %4432 = vmatpush.bf16.msra.mxu0 0
    %4433 = vmatpush.bf16.msra.mxu0 0
    %4434 = vmatpush.bf16.msra.mxu0 0
    %4435 = vmatpush.bf16.msra.mxu0 0
    %4436 = vmatpush.bf16.msra.mxu0 0
    %4437 = vmatpush.bf16.msra.mxu0 0
    %4438 = vmatpush.bf16.msra.mxu0 %v4429
    %4439 = vmatmul.bf16.gmra.mxu0 %v4426
    %v4440 = vpop.f32.mrf.mxu0
    %v4441 = vadd.f32 0.0, %v4440
    %v4442 = vpop.f32.mrf.mxu0
    %4443 = vdwg.mxu0
    %v4444 = vpack.c.bf16 %v4441, %v4441
    %s4445 = scalar_lea.vmem [#allocation16], 8
    %v4446 = vld [vmem:[%s4445] sm:$0xf]
    %v4447 = vld [vmem:[%s4445 + $0x4] sm:$0xf]
    %v4450 = vunpack.c.l.b16 %v4446
    %v4451 = vunpack.c.l.b16 %v4447
    %v4452 = vpack.c.b16 %v4451, %v4450
    %v4455 = vsel %vm716, %v4444, 0
    %4457 = vmatpush.bf16.msra.mxu0 0
    %4458 = vmatpush.bf16.msra.mxu0 0
    %4459 = vmatpush.bf16.msra.mxu0 0
    %4460 = vmatpush.bf16.msra.mxu0 0
    %4461 = vmatpush.bf16.msra.mxu0 0
    %4462 = vmatpush.bf16.msra.mxu0 0
    %4463 = vmatpush.bf16.msra.mxu0 0
    %4464 = vmatpush.bf16.msra.mxu0 %v4452
    %4465 = vmatmul.bf16.gmra.mxu0 %v4455
    %v4466 = vpop.f32.mrf.mxu0
    %v4467 = vadd.f32 0.0, %v4466
    %v4468 = vpop.f32.mrf.mxu0
    %4469 = vdwg.mxu0
    %v4472 = vunpack.c.l.b16 %v4235
    %v4473 = vunpack.c.l.b16 %v4236
    %v4474 = vpack.c.b16 %v4473, %v4472
    %v4477 = vsel %vm716, %v4234, 0
    %4479 = vmatpush.bf16.msra.mxu0 0
    %4480 = vmatpush.bf16.msra.mxu0 0
    %4481 = vmatpush.bf16.msra.mxu0 0
    %4482 = vmatpush.bf16.msra.mxu0 0
    %4483 = vmatpush.bf16.msra.mxu0 0
    %4484 = vmatpush.bf16.msra.mxu0 0
    %4485 = vmatpush.bf16.msra.mxu0 0
    %4486 = vmatpush.bf16.msra.mxu0 %v4474
    %4487 = vmatmul.bf16.gmra.mxu0 %v4477
    %v4488 = vpop.f32.mrf.mxu0
    %v4489 = vadd.f32 %v4467, %v4488
    %v4490 = vpop.f32.mrf.mxu0
    %4491 = vdwg.mxu0
    %s4492 = scalar_lea.vmem %s61, 64
    %v4493 = vld [vmem:[%s4492] sm:$0xf]
    %v4494 = vld [vmem:[%s4492 + $0x4] sm:$0xf]
    %v4495 = vld [vmem:[%s4492 + $0x8] sm:$0xf]
    %v4496 = vld [vmem:[%s4492 + $0xc] sm:$0xf]
    %v4497 = vld [vmem:[%s4492 + $0x10] sm:$0xf]
    %v4498 = vld [vmem:[%s4492 + $0x14] sm:$0xf]
    %v4499 = vld [vmem:[%s4492 + $0x18] sm:$0xf]
    %v4500 = vld [vmem:[%s4492 + $0x1c] sm:$0xf]
    %v4501 = vperm.slane %v3996, 2
    %v4510 = vunpack.c.l.b16 %v4493
    %v4511 = vunpack.c.l.b16 %v4494
    %v4512 = vunpack.c.l.b16 %v4495
    %v4513 = vunpack.c.l.b16 %v4496
    %v4514 = vunpack.c.l.b16 %v4497
    %v4515 = vunpack.c.l.b16 %v4498
    %v4516 = vunpack.c.l.b16 %v4499
    %v4517 = vunpack.c.l.b16 %v4500
    %v4518 = vpack.c.b16 %v4511, %v4510
    %v4519 = vpack.c.b16 %v4513, %v4512
    %v4520 = vpack.c.b16 %v4515, %v4514
    %v4521 = vpack.c.b16 %v4517, %v4516
    %4526 = vmatpush.bf16.msra.mxu0 0
    %4527 = vmatpush.bf16.msra.mxu0 0
    %4528 = vmatpush.bf16.msra.mxu0 0
    %4529 = vmatpush.bf16.msra.mxu0 0
    %4530 = vmatpush.bf16.msra.mxu0 %v4521
    %4531 = vmatpush.bf16.msra.mxu0 %v4520
    %4532 = vmatpush.bf16.msra.mxu0 %v4519
    %4533 = vmatpush.bf16.msra.mxu0 %v4518
    %4534 = vmatmul.bf16.gmra.mxu0 %v4060
    %v4535 = vpop.f32.mrf.mxu0
    %v4536 = vadd.f32 %v4501, %v4535
    %v4537 = vpop.f32.mrf.mxu0
    %4538 = vdwg.mxu0
    %v4539 = vpack.c.bf16 %v4536, %v4536
    %s4540 = scalar_lea.vmem %s61, 192
    %v4541 = vld [vmem:[%s4540] sm:$0xf]
    %v4542 = vld [vmem:[%s4540 + $0x4] sm:$0xf]
    %v4543 = vld [vmem:[%s4540 + $0x8] sm:$0xf]
    %v4544 = vld [vmem:[%s4540 + $0xc] sm:$0xf]
    %v4545 = vld [vmem:[%s4540 + $0x10] sm:$0xf]
    %v4546 = vld [vmem:[%s4540 + $0x14] sm:$0xf]
    %v4547 = vld [vmem:[%s4540 + $0x18] sm:$0xf]
    %v4548 = vld [vmem:[%s4540 + $0x1c] sm:$0xf]
    %v4557 = vunpack.c.l.b16 %v4541
    %v4558 = vunpack.c.l.b16 %v4542
    %v4559 = vunpack.c.l.b16 %v4543
    %v4560 = vunpack.c.l.b16 %v4544
    %v4561 = vunpack.c.l.b16 %v4545
    %v4562 = vunpack.c.l.b16 %v4546
    %v4563 = vunpack.c.l.b16 %v4547
    %v4564 = vunpack.c.l.b16 %v4548
    %v4565 = vpack.c.b16 %v4558, %v4557
    %v4566 = vpack.c.b16 %v4560, %v4559
    %v4567 = vpack.c.b16 %v4562, %v4561
    %v4568 = vpack.c.b16 %v4564, %v4563
    %4573 = vmatpush.bf16.msra.mxu0 0
    %4574 = vmatpush.bf16.msra.mxu0 0
    %4575 = vmatpush.bf16.msra.mxu0 0
    %4576 = vmatpush.bf16.msra.mxu0 0
    %4577 = vmatpush.bf16.msra.mxu0 %v4568
    %4578 = vmatpush.bf16.msra.mxu0 %v4567
    %4579 = vmatpush.bf16.msra.mxu0 %v4566
    %4580 = vmatpush.bf16.msra.mxu0 %v4565
    %4581 = vmatmul.bf16.gmra.mxu0 %v4060
    %v4582 = vpop.f32.mrf.mxu0
    %v4583 = vadd.f32 0.0, %v4582
    %v4584 = vpop.f32.mrf.mxu0
    %4585 = vdwg.mxu0
    %v4586 = vpack.c.bf16 %v4583, %v4583
    %s4587 = scalar_lea.vmem %s61, 320
    %v4588 = vld [vmem:[%s4587] sm:$0xf]
    %v4589 = vld [vmem:[%s4587 + $0x4] sm:$0xf]
    %v4590 = vld [vmem:[%s4587 + $0x8] sm:$0xf]
    %v4591 = vld [vmem:[%s4587 + $0xc] sm:$0xf]
    %v4592 = vld [vmem:[%s4587 + $0x10] sm:$0xf]
    %v4593 = vld [vmem:[%s4587 + $0x14] sm:$0xf]
    %v4594 = vld [vmem:[%s4587 + $0x18] sm:$0xf]
    %v4595 = vld [vmem:[%s4587 + $0x1c] sm:$0xf]
    %v4604 = vunpack.c.l.b16 %v4588
    %v4605 = vunpack.c.l.b16 %v4589
    %v4606 = vunpack.c.l.b16 %v4590
    %v4607 = vunpack.c.l.b16 %v4591
    %v4608 = vunpack.c.l.b16 %v4592
    %v4609 = vunpack.c.l.b16 %v4593
    %v4610 = vunpack.c.l.b16 %v4594
    %v4611 = vunpack.c.l.b16 %v4595
    %v4612 = vpack.c.b16 %v4605, %v4604
    %v4613 = vpack.c.b16 %v4607, %v4606
    %v4614 = vpack.c.b16 %v4609, %v4608
    %v4615 = vpack.c.b16 %v4611, %v4610
    %4620 = vmatpush.bf16.msra.mxu0 0
    %4621 = vmatpush.bf16.msra.mxu0 0
    %4622 = vmatpush.bf16.msra.mxu0 0
    %4623 = vmatpush.bf16.msra.mxu0 0
    %4624 = vmatpush.bf16.msra.mxu0 %v4615
    %4625 = vmatpush.bf16.msra.mxu0 %v4614
    %4626 = vmatpush.bf16.msra.mxu0 %v4613
    %4627 = vmatpush.bf16.msra.mxu0 %v4612
    %4628 = vmatmul.bf16.gmra.mxu0 %v4060
    %v4629 = vpop.f32.mrf.mxu0
    %v4630 = vadd.f32 0.0, %v4629
    %v4631 = vpop.f32.mrf.mxu0
    %4632 = vdwg.mxu0
    %v4633 = vpack.c.bf16 %v4630, %v4630
    %s4634 = scalar_lea.vmem [#allocation14], 16
    %v4635 = vld [vmem:[%s4634] sm:$0xff]
    %v4637 = vsel %vm716, %v4539, 0
    %v4640 = vsel %vm716, %v4586, 0
    %4642 = vmatpush.bf16.xpose.msra.mxu0 0
    %4643 = vmatpush.bf16.xpose.msra.mxu0 0
    %4644 = vmatpush.bf16.xpose.msra.mxu0 0
    %4645 = vmatpush.bf16.xpose.msra.mxu0 0
    %4646 = vmatpush.bf16.xpose.msra.mxu0 0
    %4647 = vmatpush.bf16.xpose.msra.mxu0 0
    %4648 = vmatpush.bf16.xpose.msra.mxu0 0
    %4649 = vmatpush.bf16.xpose.msra.mxu0 %v4640
    %4650 = vmatmul.bf16.gmra.mxu0 %v4637
    %v4651 = vpop.f32.mrf.mxu0
    %v4652 = vadd.f32 %v4635, %v4651
    %v4653 = vpop.f32.mrf.mxu0
    %4654 = vdwg.mxu0
    %v4655 = vsel %vm2935, %v4652, -inf
    %4656 = vmax.xlane.f32.xlu0 %v4655
    %v4657 = vpop.xlane.xlu0 %4656
    %v4658 = vsub.f32 %v4652, %v4657
    %v4659 = vmul.f32 %v4658, 1.442695
    %v4660 = vpow.pop %v4659
    %v4661 = vsel %vm2935, %v4660, 0.0
    %4662 = vadd.xlane.f32.xlu0 %v4661
    %v4663 = vpop.xlane.xlu0 %4662
    %v4664 = vrcp.pop %v4663
    %v4665 = vmul.f32 %v4663, %v4664
    %v4666 = vsub.f32 1.0, %v4665
    %v4667 = vmul.f32 %v4664, %v4666
    %v4668 = vadd.f32 %v4664, %v4667
    %vm4669 = vweird.f32 %v4663
    %vm4670 = vweird.f32 %v4664
    %vm4671 = vmor %vm4669, %vm4670
    %v4672 = vsel %vm4671, %v4664, %v4668
    %v4673 = vand.u32 2147483647, %v4663
    %vm4674 = vcmp.eq.f32.partialorder %v4673, 8.507059e+37
    %v4675 = vand.u32 %v4663, 2147483648
    %v4676 = vor.u32 1.1754944e-38, %v4675
    %v4677 = vsel %vm4674, %v4676, %v4672
    %v4678 = vmul.f32 %v4660, %v4677
    %v4679 = vpack.c.bf16 %v4678, %v4678
    %v4681 = vsel %vm2935, %v4679, 0
    %v4684 = vsel %vm2964, %v4633, 0
    %4686 = vmatpush.bf16.msra.mxu0 0
    %4687 = vmatpush.bf16.msra.mxu0 0
    %4688 = vmatpush.bf16.msra.mxu0 0
    %4689 = vmatpush.bf16.msra.mxu0 0
    %4690 = vmatpush.bf16.msra.mxu0 0
    %4691 = vmatpush.bf16.msra.mxu0 0
    %4692 = vmatpush.bf16.msra.mxu0 0
    %4693 = vmatpush.bf16.msra.mxu0 %v4684
    %4694 = vmatmul.bf16.gmra.mxu0 %v4681
    %v4695 = vpop.f32.mrf.mxu0
    %v4696 = vadd.f32 0.0, %v4695
    %v4697 = vpop.f32.mrf.mxu0
    %4698 = vdwg.mxu0
    %v4699 = vpack.c.bf16 %v4696, %v4696
    %s4700 = scalar_lea.vmem [#allocation16], 16
    %v4701 = vld [vmem:[%s4700] sm:$0xf]
    %v4702 = vld [vmem:[%s4700 + $0x4] sm:$0xf]
    %v4705 = vunpack.c.l.b16 %v4701
    %v4706 = vunpack.c.l.b16 %v4702
    %v4707 = vpack.c.b16 %v4706, %v4705
    %v4710 = vsel %vm716, %v4699, 0
    %4712 = vmatpush.bf16.msra.mxu0 0
    %4713 = vmatpush.bf16.msra.mxu0 0
    %4714 = vmatpush.bf16.msra.mxu0 0
    %4715 = vmatpush.bf16.msra.mxu0 0
    %4716 = vmatpush.bf16.msra.mxu0 0
    %4717 = vmatpush.bf16.msra.mxu0 0
    %4718 = vmatpush.bf16.msra.mxu0 0
    %4719 = vmatpush.bf16.msra.mxu0 %v4707
    %4720 = vmatmul.bf16.gmra.mxu0 %v4710
    %v4721 = vpop.f32.mrf.mxu0
    %v4722 = vadd.f32 0.0, %v4721
    %v4723 = vpop.f32.mrf.mxu0
    %4724 = vdwg.mxu0
    %v4725 = vadd.f32 %v4489, %v4722
    %s4726 = scalar_lea.vmem %s61, 96
    %v4727 = vld [vmem:[%s4726] sm:$0xf]
    %v4728 = vld [vmem:[%s4726 + $0x4] sm:$0xf]
    %v4729 = vld [vmem:[%s4726 + $0x8] sm:$0xf]
    %v4730 = vld [vmem:[%s4726 + $0xc] sm:$0xf]
    %v4731 = vld [vmem:[%s4726 + $0x10] sm:$0xf]
    %v4732 = vld [vmem:[%s4726 + $0x14] sm:$0xf]
    %v4733 = vld [vmem:[%s4726 + $0x18] sm:$0xf]
    %v4734 = vld [vmem:[%s4726 + $0x1c] sm:$0xf]
    %v4735 = vperm.slane %v3996, 3
    %v4744 = vunpack.c.l.b16 %v4727
    %v4745 = vunpack.c.l.b16 %v4728
    %v4746 = vunpack.c.l.b16 %v4729
    %v4747 = vunpack.c.l.b16 %v4730
    %v4748 = vunpack.c.l.b16 %v4731
    %v4749 = vunpack.c.l.b16 %v4732
    %v4750 = vunpack.c.l.b16 %v4733
    %v4751 = vunpack.c.l.b16 %v4734
    %v4752 = vpack.c.b16 %v4745, %v4744
    %v4753 = vpack.c.b16 %v4747, %v4746
    %v4754 = vpack.c.b16 %v4749, %v4748
    %v4755 = vpack.c.b16 %v4751, %v4750
    %4760 = vmatpush.bf16.msra.mxu0 0
    %4761 = vmatpush.bf16.msra.mxu0 0
    %4762 = vmatpush.bf16.msra.mxu0 0
    %4763 = vmatpush.bf16.msra.mxu0 0
    %4764 = vmatpush.bf16.msra.mxu0 %v4755
    %4765 = vmatpush.bf16.msra.mxu0 %v4754
    %4766 = vmatpush.bf16.msra.mxu0 %v4753
    %4767 = vmatpush.bf16.msra.mxu0 %v4752
    %4768 = vmatmul.bf16.gmra.mxu0 %v4060
    %v4769 = vpop.f32.mrf.mxu0
    %v4770 = vadd.f32 %v4735, %v4769
    %v4771 = vpop.f32.mrf.mxu0
    %4772 = vdwg.mxu0
    %v4773 = vpack.c.bf16 %v4770, %v4770
    %s4774 = scalar_lea.vmem %s61, 224
    %v4775 = vld [vmem:[%s4774] sm:$0xf]
    %v4776 = vld [vmem:[%s4774 + $0x4] sm:$0xf]
    %v4777 = vld [vmem:[%s4774 + $0x8] sm:$0xf]
    %v4778 = vld [vmem:[%s4774 + $0xc] sm:$0xf]
    %v4779 = vld [vmem:[%s4774 + $0x10] sm:$0xf]
    %v4780 = vld [vmem:[%s4774 + $0x14] sm:$0xf]
    %v4781 = vld [vmem:[%s4774 + $0x18] sm:$0xf]
    %v4782 = vld [vmem:[%s4774 + $0x1c] sm:$0xf]
    %v4791 = vunpack.c.l.b16 %v4775
    %v4792 = vunpack.c.l.b16 %v4776
    %v4793 = vunpack.c.l.b16 %v4777
    %v4794 = vunpack.c.l.b16 %v4778
    %v4795 = vunpack.c.l.b16 %v4779
    %v4796 = vunpack.c.l.b16 %v4780
    %v4797 = vunpack.c.l.b16 %v4781
    %v4798 = vunpack.c.l.b16 %v4782
    %v4799 = vpack.c.b16 %v4792, %v4791
    %v4800 = vpack.c.b16 %v4794, %v4793
    %v4801 = vpack.c.b16 %v4796, %v4795
    %v4802 = vpack.c.b16 %v4798, %v4797
    %4807 = vmatpush.bf16.msra.mxu0 0
    %4808 = vmatpush.bf16.msra.mxu0 0
    %4809 = vmatpush.bf16.msra.mxu0 0
    %4810 = vmatpush.bf16.msra.mxu0 0
    %4811 = vmatpush.bf16.msra.mxu0 %v4802
    %4812 = vmatpush.bf16.msra.mxu0 %v4801
    %4813 = vmatpush.bf16.msra.mxu0 %v4800
    %4814 = vmatpush.bf16.msra.mxu0 %v4799
    %4815 = vmatmul.bf16.gmra.mxu0 %v4060
    %v4816 = vpop.f32.mrf.mxu0
    %v4817 = vadd.f32 0.0, %v4816
    %v4818 = vpop.f32.mrf.mxu0
    %4819 = vdwg.mxu0
    %v4820 = vpack.c.bf16 %v4817, %v4817
    %s4821 = scalar_lea.vmem %s61, 352
    %v4822 = vld [vmem:[%s4821] sm:$0xf]
    %v4823 = vld [vmem:[%s4821 + $0x4] sm:$0xf]
    %v4824 = vld [vmem:[%s4821 + $0x8] sm:$0xf]
    %v4825 = vld [vmem:[%s4821 + $0xc] sm:$0xf]
    %v4826 = vld [vmem:[%s4821 + $0x10] sm:$0xf]
    %v4827 = vld [vmem:[%s4821 + $0x14] sm:$0xf]
    %v4828 = vld [vmem:[%s4821 + $0x18] sm:$0xf]
    %v4829 = vld [vmem:[%s4821 + $0x1c] sm:$0xf]
    %v4838 = vunpack.c.l.b16 %v4822
    %v4839 = vunpack.c.l.b16 %v4823
    %v4840 = vunpack.c.l.b16 %v4824
    %v4841 = vunpack.c.l.b16 %v4825
    %v4842 = vunpack.c.l.b16 %v4826
    %v4843 = vunpack.c.l.b16 %v4827
    %v4844 = vunpack.c.l.b16 %v4828
    %v4845 = vunpack.c.l.b16 %v4829
    %v4846 = vpack.c.b16 %v4839, %v4838
    %v4847 = vpack.c.b16 %v4841, %v4840
    %v4848 = vpack.c.b16 %v4843, %v4842
    %v4849 = vpack.c.b16 %v4845, %v4844
    %4854 = vmatpush.bf16.msra.mxu0 0
    %4855 = vmatpush.bf16.msra.mxu0 0
    %4856 = vmatpush.bf16.msra.mxu0 0
    %4857 = vmatpush.bf16.msra.mxu0 0
    %4858 = vmatpush.bf16.msra.mxu0 %v4849
    %4859 = vmatpush.bf16.msra.mxu0 %v4848
    %4860 = vmatpush.bf16.msra.mxu0 %v4847
    %4861 = vmatpush.bf16.msra.mxu0 %v4846
    %4862 = vmatmul.bf16.gmra.mxu0 %v4060
    %v4863 = vpop.f32.mrf.mxu0
    %v4864 = vadd.f32 0.0, %v4863
    %v4865 = vpop.f32.mrf.mxu0
    %4866 = vdwg.mxu0
    %v4867 = vpack.c.bf16 %v4864, %v4864
    %s4868 = scalar_lea.vmem [#allocation14], 24
    %v4869 = vld [vmem:[%s4868] sm:$0xff]
    %v4871 = vsel %vm716, %v4773, 0
    %v4874 = vsel %vm716, %v4820, 0
    %4876 = vmatpush.bf16.xpose.msra.mxu0 0
    %4877 = vmatpush.bf16.xpose.msra.mxu0 0
    %4878 = vmatpush.bf16.xpose.msra.mxu0 0
    %4879 = vmatpush.bf16.xpose.msra.mxu0 0
    %4880 = vmatpush.bf16.xpose.msra.mxu0 0
    %4881 = vmatpush.bf16.xpose.msra.mxu0 0
    %4882 = vmatpush.bf16.xpose.msra.mxu0 0
    %4883 = vmatpush.bf16.xpose.msra.mxu0 %v4874
    %4884 = vmatmul.bf16.gmra.mxu0 %v4871
    %v4885 = vpop.f32.mrf.mxu0
    %v4886 = vadd.f32 %v4869, %v4885
    %v4887 = vpop.f32.mrf.mxu0
    %4888 = vdwg.mxu0
    %v4889 = vsel %vm2935, %v4886, -inf
    %4890 = vmax.xlane.f32.xlu0 %v4889
    %v4891 = vpop.xlane.xlu0 %4890
    %v4892 = vsub.f32 %v4886, %v4891
    %v4893 = vmul.f32 %v4892, 1.442695
    %v4894 = vpow.pop %v4893
    %v4895 = vsel %vm2935, %v4894, 0.0
    %4896 = vadd.xlane.f32.xlu0 %v4895
    %v4897 = vpop.xlane.xlu0 %4896
    %v4898 = vrcp.pop %v4897
    %v4899 = vmul.f32 %v4897, %v4898
    %v4900 = vsub.f32 1.0, %v4899
    %v4901 = vmul.f32 %v4898, %v4900
    %v4902 = vadd.f32 %v4898, %v4901
    %vm4903 = vweird.f32 %v4897
    %vm4904 = vweird.f32 %v4898
    %vm4905 = vmor %vm4903, %vm4904
    %v4906 = vsel %vm4905, %v4898, %v4902
    %v4907 = vand.u32 2147483647, %v4897
    %vm4908 = vcmp.eq.f32.partialorder %v4907, 8.507059e+37
    %v4909 = vand.u32 %v4897, 2147483648
    %v4910 = vor.u32 1.1754944e-38, %v4909
    %v4911 = vsel %vm4908, %v4910, %v4906
    %v4912 = vmul.f32 %v4894, %v4911
    %v4913 = vpack.c.bf16 %v4912, %v4912
    %v4915 = vsel %vm2935, %v4913, 0
    %v4918 = vsel %vm2964, %v4867, 0
    %4920 = vmatpush.bf16.msra.mxu0 0
    %4921 = vmatpush.bf16.msra.mxu0 0
    %4922 = vmatpush.bf16.msra.mxu0 0
    %4923 = vmatpush.bf16.msra.mxu0 0
    %4924 = vmatpush.bf16.msra.mxu0 0
    %4925 = vmatpush.bf16.msra.mxu0 0
    %4926 = vmatpush.bf16.msra.mxu0 0
    %4927 = vmatpush.bf16.msra.mxu0 %v4918
    %4928 = vmatmul.bf16.gmra.mxu0 %v4915
    %v4929 = vpop.f32.mrf.mxu0
    %v4930 = vadd.f32 0.0, %v4929
    %v4931 = vpop.f32.mrf.mxu0
    %4932 = vdwg.mxu0
    %v4933 = vpack.c.bf16 %v4930, %v4930
    %s4934 = scalar_lea.vmem [#allocation16], 24
    %v4935 = vld [vmem:[%s4934] sm:$0xf]
    %v4936 = vld [vmem:[%s4934 + $0x4] sm:$0xf]
    %v4939 = vunpack.c.l.b16 %v4935
    %v4940 = vunpack.c.l.b16 %v4936
    %v4941 = vpack.c.b16 %v4940, %v4939
    %v4944 = vsel %vm716, %v4933, 0
    %4946 = vmatpush.bf16.msra.mxu0 0
    %4947 = vmatpush.bf16.msra.mxu0 0
    %4948 = vmatpush.bf16.msra.mxu0 0
    %4949 = vmatpush.bf16.msra.mxu0 0
    %4950 = vmatpush.bf16.msra.mxu0 0
    %4951 = vmatpush.bf16.msra.mxu0 0
    %4952 = vmatpush.bf16.msra.mxu0 0
    %4953 = vmatpush.bf16.msra.mxu0 %v4941
    %4954 = vmatmul.bf16.gmra.mxu0 %v4944
    %v4955 = vpop.f32.mrf.mxu0
    %v4956 = vadd.f32 0.0, %v4955
    %v4957 = vpop.f32.mrf.mxu0
    %4958 = vdwg.mxu0
    %v4959 = vadd.f32 %v4725, %v4956
    %v4960 = vadd.f32 %v3995, %v4959
    %v4961 = vperm.slane %v3997, 4
    %v4962 = vadd.f32 %v4960, %v4961
    %v4963 = vsel %vm2621, %v4962, 0.0
    %4964 = vadd.xlane.f32.xlu0 %v4963
    %v4965 = vpop.xlane.xlu0 %4964
    %v4966 = vmul.f32 %v4965, %v2746
    %v4967 = vsub.f32 %v4962, %v4966
    %v4968 = vmul.f32 %v4967, %v4967
    %v4969 = vsel %vm2621, %v4968, 0.0
    %4970 = vadd.xlane.f32.xlu0 %v4969
    %v4971 = vpop.xlane.xlu0 %4970
    %v4972 = vmul.f32 %v4971, %v2746
    %v4973 = vadd.f32 %v4972, 1e-05
    %v4974 = vrsqrt.pop %v4973
    %v4975 = vmul.f32 %v4974, %v4973
    %v4976 = vmul.f32 %v4975, %v4974
    %v4977 = vmul.f32 0.5, %v4976
    %v4978 = vsub.f32 1.5, %v4977
    %v4979 = vmul.f32 %v4974, %v4978
    %vm4980 = vweird.f32 %v4973
    %vm4981 = vweird.f32 %v4974
    %vm4982 = vmor %vm4980, %vm4981
    %v4983 = vsel %vm4982, %v4974, %v4979
    %v4984 = vmul.f32 %v4967, %v4983
    %v4985 = vperm.slane %v3997, 2
    %v4986 = vmul.f32 %v4984, %v4985
    %v4987 = vperm.slane %v3997, 3
    %v4988 = vadd.f32 %v4986, %v4987
    %v4989 = vpack.c.bf16 %v4988, %v4988
    %v4990 = vld [vmem:[%s69] sm:$0xff]
    %v4991 = vld [vmem:[%s69 + $0x8] sm:$0xff]
    %v4992 = vld [vmem:[%s69 + $0x10] sm:$0xff]
    %v4993 = vld [vmem:[%s69 + $0x18] sm:$0xff]
    %v4994 = vld [vmem:[%s69 + $0x20] sm:$0xff]
    %v4995 = vld [vmem:[%s69 + $0x28] sm:$0xff]
    %v4996 = vld [vmem:[%s69 + $0x30] sm:$0xff]
    %v4997 = vld [vmem:[%s69 + $0x38] sm:$0xff]
    %v4999 = vperm.slane %v3998, 0
    %v5000 = vperm.slane %v3998, 1
    %v5011 = vunpack.c.l.b16 %v4990
    %v5012 = vunpack.c.h.b16 %v4990
    %v5013 = vunpack.c.l.b16 %v4991
    %v5014 = vunpack.c.h.b16 %v4991
    %v5015 = vunpack.c.l.b16 %v4992
    %v5016 = vunpack.c.h.b16 %v4992
    %v5017 = vunpack.c.l.b16 %v4993
    %v5018 = vunpack.c.h.b16 %v4993
    %v5019 = vunpack.c.l.b16 %v4994
    %v5020 = vunpack.c.h.b16 %v4994
    %v5021 = vunpack.c.l.b16 %v4995
    %v5022 = vunpack.c.h.b16 %v4995
    %v5023 = vunpack.c.l.b16 %v4996
    %v5024 = vunpack.c.h.b16 %v4996
    %v5025 = vunpack.c.l.b16 %v4997
    %v5026 = vunpack.c.h.b16 %v4997
    %v5027 = vpack.c.b16 %v5013, %v5011
    %v5028 = vpack.c.b16 %v5014, %v5012
    %v5029 = vpack.c.b16 %v5017, %v5015
    %v5030 = vpack.c.b16 %v5018, %v5016
    %v5031 = vpack.c.b16 %v5021, %v5019
    %v5032 = vpack.c.b16 %v5022, %v5020
    %v5033 = vpack.c.b16 %v5025, %v5023
    %v5034 = vpack.c.b16 %v5026, %v5024
    %v5044 = vsel %vm2621, %v4989, 0
    %5046 = vmatpush.bf16.msra.mxu0 0
    %5047 = vmatpush.bf16.msra.mxu0 0
    %5048 = vmatpush.bf16.msra.mxu0 0
    %5049 = vmatpush.bf16.msra.mxu0 0
    %5050 = vmatpush.bf16.msra.mxu0 %v5033
    %5051 = vmatpush.bf16.msra.mxu0 %v5031
    %5052 = vmatpush.bf16.msra.mxu0 %v5029
    %5053 = vmatpush.bf16.msra.mxu0 %v5027
    %5054 = vmatmul.bf16.gmra.mxu0 %v5044
    %v5055 = vpop.f32.mrf.mxu0
    %v5056 = vadd.f32 %v4999, %v5055
    %v5057 = vpop.f32.mrf.mxu0
    %5058 = vdwg.mxu0
    %5059 = vmatpush.bf16.msra.mxu0 0
    %5060 = vmatpush.bf16.msra.mxu0 0
    %5061 = vmatpush.bf16.msra.mxu0 0
    %5062 = vmatpush.bf16.msra.mxu0 0
    %5063 = vmatpush.bf16.msra.mxu0 %v5034
    %5064 = vmatpush.bf16.msra.mxu0 %v5032
    %5065 = vmatpush.bf16.msra.mxu0 %v5030
    %5066 = vmatpush.bf16.msra.mxu0 %v5028
    %5067 = vmatmul.bf16.gmra.mxu0 %v5044
    %v5068 = vpop.f32.mrf.mxu0
    %v5069 = vadd.f32 %v5000, %v5068
    %v5070 = vpop.f32.mrf.mxu0
    %5071 = vdwg.mxu0
    %v5072 = vmul.f32 %v5056, %v5056
    %v5073 = vmul.f32 %v5069, %v5069
    %v5074 = vmul.f32 %v5056, %v5072
    %v5075 = vmul.f32 %v5069, %v5073
    %v5076 = vmul.f32 %v5074, 0.044715
    %v5077 = vmul.f32 %v5075, 0.044715
    %v5078 = vadd.f32 %v5056, %v5076
    %v5079 = vadd.f32 %v5069, %v5077
    %v5080 = vmul.f32 %v5078, 0.7978846
    %v5081 = vmul.f32 %v5079, 0.7978846
    %v5082 = vtanh.pop %v5080
    %v5083 = vtanh.pop %v5081
    %v5084 = vadd.f32 %v5082, 1.0
    %v5085 = vadd.f32 %v5083, 1.0
    %v5086 = vmul.f32 %v5084, 0.5
    %v5087 = vmul.f32 %v5085, 0.5
    %v5088 = vmul.f32 %v5056, %v5086
    %v5089 = vmul.f32 %v5069, %v5087
    %v5090 = vpack.c.bf16 %v5088, %v5088
    %v5091 = vpack.c.bf16 %v5089, %v5089
    %v5092 = vld [vmem:[%s71] sm:$0xf]
    %v5093 = vld [vmem:[%s71 + $0x4] sm:$0xf]
    %v5094 = vld [vmem:[%s71 + $0x8] sm:$0xf]
    %v5095 = vld [vmem:[%s71 + $0xc] sm:$0xf]
    %v5096 = vld [vmem:[%s71 + $0x10] sm:$0xf]
    %v5097 = vld [vmem:[%s71 + $0x14] sm:$0xf]
    %v5098 = vld [vmem:[%s71 + $0x18] sm:$0xf]
    %v5099 = vld [vmem:[%s71 + $0x1c] sm:$0xf]
    %v5100 = vld [vmem:[%s71 + $0x20] sm:$0xf]
    %v5101 = vld [vmem:[%s71 + $0x24] sm:$0xf]
    %v5102 = vld [vmem:[%s71 + $0x28] sm:$0xf]
    %v5103 = vld [vmem:[%s71 + $0x2c] sm:$0xf]
    %v5104 = vld [vmem:[%s71 + $0x30] sm:$0xf]
    %v5105 = vld [vmem:[%s71 + $0x34] sm:$0xf]
    %v5106 = vld [vmem:[%s71 + $0x38] sm:$0xf]
    %v5107 = vld [vmem:[%s71 + $0x3c] sm:$0xf]
    %v5108 = vld [vmem:[%s71 + $0x40] sm:$0xf]
    %v5109 = vld [vmem:[%s71 + $0x44] sm:$0xf]
    %v5110 = vld [vmem:[%s71 + $0x48] sm:$0xf]
    %v5111 = vld [vmem:[%s71 + $0x4c] sm:$0xf]
    %v5112 = vld [vmem:[%s71 + $0x50] sm:$0xf]
    %v5113 = vld [vmem:[%s71 + $0x54] sm:$0xf]
    %v5114 = vld [vmem:[%s71 + $0x58] sm:$0xf]
    %v5115 = vld [vmem:[%s71 + $0x5c] sm:$0xf]
    %v5116 = vld [vmem:[%s71 + $0x60] sm:$0xf]
    %v5117 = vld [vmem:[%s71 + $0x64] sm:$0xf]
    %v5118 = vld [vmem:[%s71 + $0x68] sm:$0xf]
    %v5119 = vld [vmem:[%s71 + $0x6c] sm:$0xf]
    %v5120 = vld [vmem:[%s71 + $0x70] sm:$0xf]
    %v5121 = vld [vmem:[%s71 + $0x74] sm:$0xf]
    %v5122 = vld [vmem:[%s71 + $0x78] sm:$0xf]
    %v5123 = vld [vmem:[%s71 + $0x7c] sm:$0xf]
    %v5156 = vunpack.c.l.b16 %v5092
    %v5157 = vunpack.c.l.b16 %v5093
    %v5158 = vunpack.c.l.b16 %v5094
    %v5159 = vunpack.c.l.b16 %v5095
    %v5160 = vunpack.c.l.b16 %v5096
    %v5161 = vunpack.c.l.b16 %v5097
    %v5162 = vunpack.c.l.b16 %v5098
    %v5163 = vunpack.c.l.b16 %v5099
    %v5164 = vunpack.c.l.b16 %v5100
    %v5165 = vunpack.c.l.b16 %v5101
    %v5166 = vunpack.c.l.b16 %v5102
    %v5167 = vunpack.c.l.b16 %v5103
    %v5168 = vunpack.c.l.b16 %v5104
    %v5169 = vunpack.c.l.b16 %v5105
    %v5170 = vunpack.c.l.b16 %v5106
    %v5171 = vunpack.c.l.b16 %v5107
    %v5172 = vunpack.c.l.b16 %v5108
    %v5173 = vunpack.c.l.b16 %v5109
    %v5174 = vunpack.c.l.b16 %v5110
    %v5175 = vunpack.c.l.b16 %v5111
    %v5176 = vunpack.c.l.b16 %v5112
    %v5177 = vunpack.c.l.b16 %v5113
    %v5178 = vunpack.c.l.b16 %v5114
    %v5179 = vunpack.c.l.b16 %v5115
    %v5180 = vunpack.c.l.b16 %v5116
    %v5181 = vunpack.c.l.b16 %v5117
    %v5182 = vunpack.c.l.b16 %v5118
    %v5183 = vunpack.c.l.b16 %v5119
    %v5184 = vunpack.c.l.b16 %v5120
    %v5185 = vunpack.c.l.b16 %v5121
    %v5186 = vunpack.c.l.b16 %v5122
    %v5187 = vunpack.c.l.b16 %v5123
    %v5188 = vpack.c.b16 %v5157, %v5156
    %v5189 = vpack.c.b16 %v5159, %v5158
    %v5190 = vpack.c.b16 %v5161, %v5160
    %v5191 = vpack.c.b16 %v5163, %v5162
    %v5192 = vpack.c.b16 %v5165, %v5164
    %v5193 = vpack.c.b16 %v5167, %v5166
    %v5194 = vpack.c.b16 %v5169, %v5168
    %v5195 = vpack.c.b16 %v5171, %v5170
    %v5196 = vpack.c.b16 %v5173, %v5172
    %v5197 = vpack.c.b16 %v5175, %v5174
    %v5198 = vpack.c.b16 %v5177, %v5176
    %v5199 = vpack.c.b16 %v5179, %v5178
    %v5200 = vpack.c.b16 %v5181, %v5180
    %v5201 = vpack.c.b16 %v5183, %v5182
    %v5202 = vpack.c.b16 %v5185, %v5184
    %v5203 = vpack.c.b16 %v5187, %v5186
    %5220 = vmatpush.bf16.msra.mxu0 %v5195
    %5221 = vmatpush.bf16.msra.mxu0 %v5194
    %5222 = vmatpush.bf16.msra.mxu0 %v5193
    %5223 = vmatpush.bf16.msra.mxu0 %v5192
    %5224 = vmatpush.bf16.msra.mxu0 %v5191
    %5225 = vmatpush.bf16.msra.mxu0 %v5190
    %5226 = vmatpush.bf16.msra.mxu0 %v5189
    %5227 = vmatpush.bf16.msra.mxu0 %v5188
    %5228 = vmatmul.bf16.gmra.mxu0 %v5090
    %v5229 = vpop.f32.mrf.mxu0
    %v5230 = vadd.f32 0.0, %v5229
    %v5231 = vpop.f32.mrf.mxu0
    %5232 = vdwg.mxu0
    %5233 = vmatpush.bf16.msra.mxu0 %v5203
    %5234 = vmatpush.bf16.msra.mxu0 %v5202
    %5235 = vmatpush.bf16.msra.mxu0 %v5201
    %5236 = vmatpush.bf16.msra.mxu0 %v5200
    %5237 = vmatpush.bf16.msra.mxu0 %v5199
    %5238 = vmatpush.bf16.msra.mxu0 %v5198
    %5239 = vmatpush.bf16.msra.mxu0 %v5197
    %5240 = vmatpush.bf16.msra.mxu0 %v5196
    %5241 = vmatmul.bf16.gmra.mxu0 %v5091
    %v5242 = vpop.f32.mrf.mxu0
    %v5243 = vadd.f32 %v5230, %v5242
    %v5244 = vpop.f32.mrf.mxu0
    %5245 = vdwg.mxu0
    %v5246 = vadd.f32 %v4962, %v5243
    %v5247 = vperm.slane %v3997, 5
    %v5248 = vadd.f32 %v5246, %v5247
    %v5249 = vld [vmem:[#allocation19] sm:$0x3]
    %v5250 = vsel %vm2621, %v5248, 0.0
    %5251 = vadd.xlane.f32.xlu0 %v5250
    %v5252 = vpop.xlane.xlu0 %5251
    %v5253 = vmul.f32 %v5252, %v2746
    %v5254 = vsub.f32 %v5248, %v5253
    %v5255 = vmul.f32 %v5254, %v5254
    %v5256 = vsel %vm2621, %v5255, 0.0
    %5257 = vadd.xlane.f32.xlu0 %v5256
    %v5258 = vpop.xlane.xlu0 %5257
    %v5259 = vmul.f32 %v5258, %v2746
    %v5260 = vadd.f32 %v5259, 1e-05
    %v5261 = vrsqrt.pop %v5260
    %v5262 = vmul.f32 %v5261, %v5260
    %v5263 = vmul.f32 %v5262, %v5261
    %v5264 = vmul.f32 0.5, %v5263
    %v5265 = vsub.f32 1.5, %v5264
    %v5266 = vmul.f32 %v5261, %v5265
    %vm5267 = vweird.f32 %v5260
    %vm5268 = vweird.f32 %v5261
    %vm5269 = vmor %vm5267, %vm5268
    %v5270 = vsel %vm5269, %v5261, %v5266
    %v5271 = vmul.f32 %v5254, %v5270
    %v5272 = vperm.slane %v5249, 0
    %v5273 = vmul.f32 %v5271, %v5272
    %v5274 = vperm.slane %v5249, 1
    %v5275 = vadd.f32 %v5273, %v5274
    %vm5276 = vcmask 519168
    %v5277 = vsel %vm5276, %v5275, 0.0
    %v5278 = vrot.slane %v5277, 4
    %v5279 = vadd.f32 %v5277, %v5278
    %v5280 = vrot.slane %v5279, 2
    %v5281 = vadd.f32 %v5279, %v5280
    %v5282 = vrot.slane %v5281, 1
    %v5283 = vadd.f32 %v5281, %v5282
    %v5284 = vrcp.pop 4.0
    %v5285 = vmul.f32 4.0, %v5284
    %v5286 = vsub.f32 1.0, %v5285
    %v5287 = vmul.f32 %v5284, %v5286
    %v5288 = vadd.f32 %v5284, %v5287
    %vm5289 = vweird.f32 %v5284
    %v5290 = vsel %vm5289, %v5284, %v5288
    %v5291 = vmul.f32 %v5283, %v5290
    %v5293 = vrot.slane %v5275, 4
    %v5295 = vsel %vm5276, %v5293, 0.0
    %v5296 = vrot.slane %v5295, 4
    %v5297 = vadd.f32 %v5295, %v5296
    %v5298 = vrot.slane %v5297, 2
    %v5299 = vadd.f32 %v5297, %v5298
    %v5300 = vrot.slane %v5299, 1
    %v5301 = vadd.f32 %v5299, %v5300
    %v5302 = vmul.f32 %v5301, %v5290
    %vm5303 = vcmask 1040384
    %v5304 = vsel %vm5303, %v5291, %v5302
    %vm5305 = vcmask 517120
    %5306 = vst.msk [vmem:[#allocation20] sm:$0x3] %vm5305, %v5304
    // Predicated region
    $region202: #{_lambda_.1} parent=1 // pred_check
      _
    $region203: #{_lambda_.1} parent=1 // pred_check_branch
      %5308 = sbr.rel (0) target = $region205
    $region204: #{_lambda_.1} parent=1 // pred_region
      %5310 = vsyncadd [#allocation4], 0
      %s5312 = sshll.u32 [#allocation20], 4
      %s5313 = int_to_ptr.vmem [resolvable:$true] %s5312
      %s5314 = sshll.u32 %s79, 4
      %s5315 = int_to_ptr.hbm [resolvable:$true] %s5314
      %5317 = dma.vmem_to_hbm [thread:$0]  %s5313, 32, %s5315, [#allocation4]
    $region205: #{_lambda_.1} parent=1 // pred_fallthru
      _
    // Predicated region
    $region206: #{_lambda_.1} parent=1 // pred_check
      _
    $region207: #{_lambda_.1} parent=1 // pred_check_branch
      %5319 = sbr.rel (0) target = $region209
    $region208: #{_lambda_.1} parent=1 // pred_region
      %5321 = dma.done [#allocation4], 32
    $region209: #{_lambda_.1} parent=1 // pred_fallthru
      _
    %5322 = vsyncpa [#allocation3], 1
    %5323 = vsyncpa [#allocation6], 1
    %5324 = vsyncpa [#allocation9], 1
    %5325 = vsyncpa [#allocation12], 1
    %5326 = vsyncpa [#allocation15], 1
    %5327 = vsyncpa [#allocation18], 1
    %5328 = vsyncpa [#allocation4], 1

</llo_original>
